<compile_context>
chip_gen: v7x
topology: tpu7x:2x2x1
jax: 0.10.0
libtpu: 0.0.40
codegen_flags: <defaults>
</compile_context>

<pallas_src>
import jax
import jax.numpy as jnp
from jax.experimental import pallas as pl
from jax.experimental.pallas import tpu as pltpu

EPS = 1e-5


# ----------------------------------------------------------------------------
# Fused kernel: conv1 -> BN1 -> ReLU -> conv2 -> BN2 -> +res -> ReLU
# ----------------------------------------------------------------------------
def _residual_block_kernel(x_ref, w1_ref, w2_ref, g1_ref, be1_ref,
                           g2_ref, be2_ref, o_ref, pad_ref, patch_ref):
    # x_ref     : (N, H, W, C)      f32  input, NHWC
    # w1/w2_ref : (9C, C)           bf16/f32 im2col conv weights (HWIO-flat)
    # g*/be*_ref: (1, C)            f32  BN gamma / beta
    # o_ref     : (N, H, W, C)      f32  output, NHWC
    # pad_ref   : (N, H+2, W+2, C)  f32  scratch: zero-padded activation
    # patch_ref : (N*H*W, 9C)       bf16/f32 scratch: im2col patches
    N, H, W, C = x_ref.shape
    M = N * H * W

    # Zero ONLY the 1-pixel border (4 thin slabs).  It stays zero for both
    # convs because only the interior is rewritten between them.
    zrow = jnp.zeros((N, 1, W + 2, C), pad_ref.dtype)
    zcol = jnp.zeros((N, H, 1, C), pad_ref.dtype)
    pad_ref[:, 0:1, :, :] = zrow
    pad_ref[:, H + 1:H + 2, :, :] = zrow
    pad_ref[:, 1:H + 1, 0:1, :] = zcol
    pad_ref[:, 1:H + 1, W + 1:W + 2, :] = zcol

    def conv3x3(w_ref):
        # One (M, 9C) @ (9C, C) MXU matmul; taps are written to the patch
        # scratch already cast to the compute dtype (f32 accumulation).
        k = 0
        for dy in range(3):
            for dx in range(3):
                tap = pad_ref[:, dy:dy + H, dx:dx + W, :]
                patch_ref[:, k * C:(k + 1) * C] = (
                    tap.reshape(M, C).astype(patch_ref.dtype))
                k += 1
        return jnp.dot(patch_ref[...], w_ref[...],
                       preferred_element_type=jnp.float32)        # (M, C) f32

    def bn_train(z, g_ref, be_ref):
        # Training-mode BN over the resident batch; stable two-pass variance.
        mean = jnp.mean(z, axis=0, keepdims=True)                  # (1, C)
        var = jnp.mean(jnp.square(z - mean), axis=0, keepdims=True)
        scale = g_ref[...] * jax.lax.rsqrt(var + EPS)
        return z * scale + (be_ref[...] - mean * scale)

    # conv1 -> BN1 -> ReLU   (conv bias is exactly absorbed by BN's mean)
    pad_ref[:, 1:H + 1, 1:W + 1, :] = x_ref[...]
    h = jnp.maximum(bn_train(conv3x3(w1_ref), g1_ref, be1_ref), 0.0)   # (M, C)

    # conv2 -> BN2 -> +residual -> ReLU   (residual read from resident x_ref)
    pad_ref[:, 1:H + 1, 1:W + 1, :] = h.reshape(N, H, W, C)
    z2 = bn_train(conv3x3(w2_ref), g2_ref, be2_ref)                     # (M, C)
    out = jnp.maximum(z2 + x_ref[...].reshape(M, C), 0.0)
    o_ref[...] = out.reshape(N, H, W, C)


# ----------------------------------------------------------------------------
# Wrapper
# ----------------------------------------------------------------------------
def residual_block(x_nchw, params, *, compute_dtype=jnp.bfloat16):
    """x_nchw: (N, C, H, W) float32 (PyTorch convention)."""
    w1, b1, g1, be1, w2, b2, g2, be2 = params
    # Conv biases are mathematically cancelled by training-mode BN (the batch
    # mean is subtracted immediately after each conv), so they are not passed
    # into the kernel at all.
    del b1, b2
    x = jnp.transpose(x_nchw, (0, 2, 3, 1)).astype(jnp.float32)   # NCHW -> NHWC
    N, H, W, C = x.shape
    w1m = w1.reshape(9 * C, C).astype(compute_dtype)              # im2col weights
    w2m = w2.reshape(9 * C, C).astype(compute_dtype)
    g1f = g1.reshape(1, C).astype(jnp.float32)
    be1f = be1.reshape(1, C).astype(jnp.float32)
    g2f = g2.reshape(1, C).astype(jnp.float32)
    be2f = be2.reshape(1, C).astype(jnp.float32)

    out_nhwc = pl.pallas_call(
        _residual_block_kernel,
        out_shape=jax.ShapeDtypeStruct((N, H, W, C), jnp.float32),
        scratch_shapes=[
            pltpu.VMEM((N, H + 2, W + 2, C), jnp.float32),   # shared padded buf
            pltpu.VMEM((N * H * W, 9 * C), compute_dtype),   # im2col patches
        ],
        compiler_params=pltpu.CompilerParams(
            vmem_limit_bytes=32 * 1024 * 1024),              # safe on v5e/v6e/v7x
    )(x, w1m, w2m, g1f, be1f, g2f, be2f)
    # Final NHWC -> NCHW layout change is a tiny XLA transpose fused outside.
    return jnp.transpose(out_nhwc, (0, 3, 1, 2))


# ----------------------------------------------------------------------------
# Parameters and pure-JAX reference
# ----------------------------------------------------------------------------
def make_params(c, key):
    k1, k2, k3, k4 = jax.random.split(key, 4)
    w1 = 0.1 * jax.random.normal(k1, (3, 3, c, c), jnp.float32)   # HWIO
    b1 = 0.01 * jax.random.normal(k2, (1, c), jnp.float32)
    w2 = 0.1 * jax.random.normal(k3, (3, 3, c, c), jnp.float32)
    b2 = 0.01 * jax.random.normal(k4, (1, c), jnp.float32)
    g1 = jnp.ones((1, c), jnp.float32)    # BN gamma init
    be1 = jnp.zeros((1, c), jnp.float32)  # BN beta init
    g2 = jnp.ones((1, c), jnp.float32)
    be2 = jnp.zeros((1, c), jnp.float32)
    return (w1, b1, g1, be1, w2, b2, g2, be2)


def ref_residual_block(x_nchw, params, *, compute_dtype=jnp.float32):
    """Pure-JAX reference (mirrors the PyTorch forward in train mode).

    `compute_dtype` casts the conv operands only (f32 accumulation, f32 BN),
    matching the kernel's MXU operand precision so the comparison is
    apples-to-apples.  Conv biases ARE applied here; training-mode BN cancels
    them, which is exactly why the kernel can drop them.
    """
    w1, b1, g1, be1, w2, b2, g2, be2 = params
    x = jnp.transpose(x_nchw, (0, 2, 3, 1)).astype(jnp.float32)

    def conv(h, w, b):
        y = jax.lax.conv_general_dilated(
            h.astype(compute_dtype), w.astype(compute_dtype),
            window_strides=(1, 1), padding='SAME',
            dimension_numbers=('NHWC', 'HWIO', 'NHWC'),
            preferred_element_type=jnp.float32)
        return y + b.reshape(1, 1, 1, -1)

    def bn(h, g, be):
        mean = jnp.mean(h, axis=(0, 1, 2), keepdims=True)
        var = jnp.mean((h - mean) ** 2, axis=(0, 1, 2), keepdims=True)
        return (h - mean) * jax.lax.rsqrt(var + EPS) * g.reshape(1, 1, 1, -1) \
            + be.reshape(1, 1, 1, -1)

    h = jax.nn.relu(bn(conv(x, w1, b1), g1, be1))
    y = jax.nn.relu(bn(conv(h, w2, b2), g2, be2) + x)
    return jnp.transpose(y, (0, 3, 1, 2))


if __name__ == "__main__":
    key = jax.random.PRNGKey(0)
    kx, kp = jax.random.split(key)

    N, C, H, W = 2, 4, 16, 16
    x = jax.random.normal(kx, (N, C, H, W), jnp.float32)
    params = make_params(C, kp)

    fwd = jax.jit(residual_block, static_argnames=("compute_dtype",))
    ref = jax.jit(ref_residual_block, static_argnames=("compute_dtype",))

    # 1) f32 MXU-operand path: matches the PyTorch fp32 forward.
    out32 = jax.block_until_ready(fwd(x, params, compute_dtype=jnp.float32))
    ref32 = jax.block_until_ready(ref(x, params, compute_dtype=jnp.float32))
    assert out32.shape == (N, C, H, W)
    assert jnp.allclose(out32, ref32, rtol=5e-3, atol=5e-3), \
        f"f32 max err {jnp.max(jnp.abs(out32 - ref32)):.3e}"

    # 2) bf16 MXU-operand path (f32 accumulation + f32 BN / elementwise): the
    #    v6e/v7x-optimized path, checked against a precision-matched reference.
    outbf = jax.block_until_ready(fwd(x, params, compute_dtype=jnp.bfloat16))
    refbf = jax.block_until_ready(ref(x, params, compute_dtype=jnp.bfloat16))
    assert jnp.allclose(outbf, refbf, rtol=1e-2, atol=1e-2), \
        f"bf16 max err {jnp.max(jnp.abs(outbf - refbf)):.3e}"

    print("KERNEL_OK")
</pallas_src>

<mosaic_0001>
module attributes {stable_mosaic.version = 11 : i64} {
  func.func @_residual_block_kernel(%arg0: memref<2x16x16x4xf32, #tpu.memory_space<vmem>>, %arg1: memref<36x4xf32, #tpu.memory_space<vmem>>, %arg2: memref<36x4xf32, #tpu.memory_space<vmem>>, %arg3: memref<1x4xf32, #tpu.memory_space<vmem>>, %arg4: memref<1x4xf32, #tpu.memory_space<vmem>>, %arg5: memref<1x4xf32, #tpu.memory_space<vmem>>, %arg6: memref<1x4xf32, #tpu.memory_space<vmem>>, %arg7: memref<2x16x16x4xf32, #tpu.memory_space<vmem>>, %arg8: memref<2x18x18x4xf32, #tpu.memory_space<vmem>>, %arg9: memref<512x36xf32, #tpu.memory_space<vmem>>) attributes {dimension_semantics = [], scalar_prefetch = 0 : i64, scratch_operands = 2 : i64, tpu.core_type = #tpu.core_type<tc>} {
    %cst = arith.constant 0.000000e+00 : f32
    %0 = vector.broadcast %cst : f32 to vector<2x1x18x4xf32>
    %cst_0 = arith.constant 0.000000e+00 : f32
    %1 = vector.broadcast %cst_0 : f32 to vector<2x16x1x4xf32>
    %c0 = arith.constant 0 : index
    %c0_1 = arith.constant 0 : index
    %c0_2 = arith.constant 0 : index
    %c0_3 = arith.constant 0 : index
    %2 = vector.load %arg8[%c0, %c0_1, %c0_2, %c0_3] : memref<2x18x18x4xf32, #tpu.memory_space<vmem>>, vector<2x1x18x4xf32>
    tpu.vector_store %arg8[%c0, %c0_1, %c0_2, %c0_3], %0 {strides = array<i32>} : memref<2x18x18x4xf32, #tpu.memory_space<vmem>>, vector<2x1x18x4xf32>,
    %c0_4 = arith.constant 0 : index
    %c17 = arith.constant 17 : index
    %c0_5 = arith.constant 0 : index
    %c0_6 = arith.constant 0 : index
    %3 = vector.load %arg8[%c0_4, %c17, %c0_5, %c0_6] : memref<2x18x18x4xf32, #tpu.memory_space<vmem>>, vector<2x1x18x4xf32>
    tpu.vector_store %arg8[%c0_4, %c17, %c0_5, %c0_6], %0 {strides = array<i32>} : memref<2x18x18x4xf32, #tpu.memory_space<vmem>>, vector<2x1x18x4xf32>,
    %c0_7 = arith.constant 0 : index
    %c1 = arith.constant 1 : index
    %c0_8 = arith.constant 0 : index
    %c0_9 = arith.constant 0 : index
    %4 = vector.load %arg8[%c0_7, %c1, %c0_8, %c0_9] : memref<2x18x18x4xf32, #tpu.memory_space<vmem>>, vector<2x16x1x4xf32>
    tpu.vector_store %arg8[%c0_7, %c1, %c0_8, %c0_9], %1 {strides = array<i32>} : memref<2x18x18x4xf32, #tpu.memory_space<vmem>>, vector<2x16x1x4xf32>,
    %c0_10 = arith.constant 0 : index
    %c1_11 = arith.constant 1 : index
    %c17_12 = arith.constant 17 : index
    %c0_13 = arith.constant 0 : index
    %5 = vector.load %arg8[%c0_10, %c1_11, %c17_12, %c0_13] : memref<2x18x18x4xf32, #tpu.memory_space<vmem>>, vector<2x16x1x4xf32>
    tpu.vector_store %arg8[%c0_10, %c1_11, %c17_12, %c0_13], %1 {strides = array<i32>} : memref<2x18x18x4xf32, #tpu.memory_space<vmem>>, vector<2x16x1x4xf32>,
    %c0_14 = arith.constant 0 : index
    %c0_15 = arith.constant 0 : index
    %c0_16 = arith.constant 0 : index
    %c0_17 = arith.constant 0 : index
    %6 = vector.load %arg0[%c0_14, %c0_15, %c0_16, %c0_17] : memref<2x16x16x4xf32, #tpu.memory_space<vmem>>, vector<2x16x16x4xf32>
    %c0_18 = arith.constant 0 : index
    %c1_19 = arith.constant 1 : index
    %c1_20 = arith.constant 1 : index
    %c0_21 = arith.constant 0 : index
    %7 = vector.load %arg8[%c0_18, %c1_19, %c1_20, %c0_21] : memref<2x18x18x4xf32, #tpu.memory_space<vmem>>, vector<2x16x16x4xf32>
    tpu.vector_store %arg8[%c0_18, %c1_19, %c1_20, %c0_21], %6 {strides = array<i32>} : memref<2x18x18x4xf32, #tpu.memory_space<vmem>>, vector<2x16x16x4xf32>,
    %c0_22 = arith.constant 0 : index
    %c0_23 = arith.constant 0 : index
    %c0_24 = arith.constant 0 : index
    %c0_25 = arith.constant 0 : index
    %8 = vector.load %arg8[%c0_22, %c0_23, %c0_24, %c0_25] : memref<2x18x18x4xf32, #tpu.memory_space<vmem>>, vector<2x16x16x4xf32>
    %9 = vector.shape_cast %8 : vector<2x16x16x4xf32> to vector<512x4xf32>
    %c0_26 = arith.constant 0 : index
    %c0_27 = arith.constant 0 : index
    %10 = vector.load %arg9[%c0_26, %c0_27] : memref<512x36xf32, #tpu.memory_space<vmem>>, vector<512x4xf32>
    tpu.vector_store %arg9[%c0_26, %c0_27], %9 {strides = array<i32>} : memref<512x36xf32, #tpu.memory_space<vmem>>, vector<512x4xf32>,
    %c0_28 = arith.constant 0 : index
    %c0_29 = arith.constant 0 : index
    %c1_30 = arith.constant 1 : index
    %c0_31 = arith.constant 0 : index
    %11 = vector.load %arg8[%c0_28, %c0_29, %c1_30, %c0_31] : memref<2x18x18x4xf32, #tpu.memory_space<vmem>>, vector<2x16x16x4xf32>
    %12 = vector.shape_cast %11 : vector<2x16x16x4xf32> to vector<512x4xf32>
    %c0_32 = arith.constant 0 : index
    %c4 = arith.constant 4 : index
    %13 = vector.load %arg9[%c0_32, %c4] : memref<512x36xf32, #tpu.memory_space<vmem>>, vector<512x4xf32>
    tpu.vector_store %arg9[%c0_32, %c4], %12 {strides = array<i32>} : memref<512x36xf32, #tpu.memory_space<vmem>>, vector<512x4xf32>,
    %c0_33 = arith.constant 0 : index
    %c0_34 = arith.constant 0 : index
    %c2 = arith.constant 2 : index
    %c0_35 = arith.constant 0 : index
    %14 = vector.load %arg8[%c0_33, %c0_34, %c2, %c0_35] : memref<2x18x18x4xf32, #tpu.memory_space<vmem>>, vector<2x16x16x4xf32>
    %15 = vector.shape_cast %14 : vector<2x16x16x4xf32> to vector<512x4xf32>
    %c0_36 = arith.constant 0 : index
    %c8 = arith.constant 8 : index
    %16 = vector.load %arg9[%c0_36, %c8] : memref<512x36xf32, #tpu.memory_space<vmem>>, vector<512x4xf32>
    tpu.vector_store %arg9[%c0_36, %c8], %15 {strides = array<i32>} : memref<512x36xf32, #tpu.memory_space<vmem>>, vector<512x4xf32>,
    %c0_37 = arith.constant 0 : index
    %c1_38 = arith.constant 1 : index
    %c0_39 = arith.constant 0 : index
    %c0_40 = arith.constant 0 : index
    %17 = vector.load %arg8[%c0_37, %c1_38, %c0_39, %c0_40] : memref<2x18x18x4xf32, #tpu.memory_space<vmem>>, vector<2x16x16x4xf32>
    %18 = vector.shape_cast %17 : vector<2x16x16x4xf32> to vector<512x4xf32>
    %c0_41 = arith.constant 0 : index
    %c12 = arith.constant 12 : index
    %19 = vector.load %arg9[%c0_41, %c12] : memref<512x36xf32, #tpu.memory_space<vmem>>, vector<512x4xf32>
    tpu.vector_store %arg9[%c0_41, %c12], %18 {strides = array<i32>} : memref<512x36xf32, #tpu.memory_space<vmem>>, vector<512x4xf32>,
    %c0_42 = arith.constant 0 : index
    %c1_43 = arith.constant 1 : index
    %c1_44 = arith.constant 1 : index
    %c0_45 = arith.constant 0 : index
    %20 = vector.load %arg8[%c0_42, %c1_43, %c1_44, %c0_45] : memref<2x18x18x4xf32, #tpu.memory_space<vmem>>, vector<2x16x16x4xf32>
    %21 = vector.shape_cast %20 : vector<2x16x16x4xf32> to vector<512x4xf32>
    %c0_46 = arith.constant 0 : index
    %c16 = arith.constant 16 : index
    %22 = vector.load %arg9[%c0_46, %c16] : memref<512x36xf32, #tpu.memory_space<vmem>>, vector<512x4xf32>
    tpu.vector_store %arg9[%c0_46, %c16], %21 {strides = array<i32>} : memref<512x36xf32, #tpu.memory_space<vmem>>, vector<512x4xf32>,
    %c0_47 = arith.constant 0 : index
    %c1_48 = arith.constant 1 : index
    %c2_49 = arith.constant 2 : index
    %c0_50 = arith.constant 0 : index
    %23 = vector.load %arg8[%c0_47, %c1_48, %c2_49, %c0_50] : memref<2x18x18x4xf32, #tpu.memory_space<vmem>>, vector<2x16x16x4xf32>
    %24 = vector.shape_cast %23 : vector<2x16x16x4xf32> to vector<512x4xf32>
    %c0_51 = arith.constant 0 : index
    %c20 = arith.constant 20 : index
    %25 = vector.load %arg9[%c0_51, %c20] : memref<512x36xf32, #tpu.memory_space<vmem>>, vector<512x4xf32>
    tpu.vector_store %arg9[%c0_51, %c20], %24 {strides = array<i32>} : memref<512x36xf32, #tpu.memory_space<vmem>>, vector<512x4xf32>,
    %c0_52 = arith.constant 0 : index
    %c2_53 = arith.constant 2 : index
    %c0_54 = arith.constant 0 : index
    %c0_55 = arith.constant 0 : index
    %26 = vector.load %arg8[%c0_52, %c2_53, %c0_54, %c0_55] : memref<2x18x18x4xf32, #tpu.memory_space<vmem>>, vector<2x16x16x4xf32>
    %27 = vector.shape_cast %26 : vector<2x16x16x4xf32> to vector<512x4xf32>
    %c0_56 = arith.constant 0 : index
    %c24 = arith.constant 24 : index
    %28 = vector.load %arg9[%c0_56, %c24] : memref<512x36xf32, #tpu.memory_space<vmem>>, vector<512x4xf32>
    tpu.vector_store %arg9[%c0_56, %c24], %27 {strides = array<i32>} : memref<512x36xf32, #tpu.memory_space<vmem>>, vector<512x4xf32>,
    %c0_57 = arith.constant 0 : index
    %c2_58 = arith.constant 2 : index
    %c1_59 = arith.constant 1 : index
    %c0_60 = arith.constant 0 : index
    %29 = vector.load %arg8[%c0_57, %c2_58, %c1_59, %c0_60] : memref<2x18x18x4xf32, #tpu.memory_space<vmem>>, vector<2x16x16x4xf32>
    %30 = vector.shape_cast %29 : vector<2x16x16x4xf32> to vector<512x4xf32>
    %c0_61 = arith.constant 0 : index
    %c28 = arith.constant 28 : index
    %31 = vector.load %arg9[%c0_61, %c28] : memref<512x36xf32, #tpu.memory_space<vmem>>, vector<512x4xf32>
    tpu.vector_store %arg9[%c0_61, %c28], %30 {strides = array<i32>} : memref<512x36xf32, #tpu.memory_space<vmem>>, vector<512x4xf32>,
    %c0_62 = arith.constant 0 : index
    %c2_63 = arith.constant 2 : index
    %c2_64 = arith.constant 2 : index
    %c0_65 = arith.constant 0 : index
    %32 = vector.load %arg8[%c0_62, %c2_63, %c2_64, %c0_65] : memref<2x18x18x4xf32, #tpu.memory_space<vmem>>, vector<2x16x16x4xf32>
    %33 = vector.shape_cast %32 : vector<2x16x16x4xf32> to vector<512x4xf32>
    %c0_66 = arith.constant 0 : index
    %c32 = arith.constant 32 : index
    %34 = vector.load %arg9[%c0_66, %c32] : memref<512x36xf32, #tpu.memory_space<vmem>>, vector<512x4xf32>
    tpu.vector_store %arg9[%c0_66, %c32], %33 {strides = array<i32>} : memref<512x36xf32, #tpu.memory_space<vmem>>, vector<512x4xf32>,
    %c0_67 = arith.constant 0 : index
    %c0_68 = arith.constant 0 : index
    %35 = vector.load %arg9[%c0_67, %c0_68] : memref<512x36xf32, #tpu.memory_space<vmem>>, vector<512x36xf32>
    %c0_69 = arith.constant 0 : index
    %c0_70 = arith.constant 0 : index
    %36 = vector.load %arg1[%c0_69, %c0_70] : memref<36x4xf32, #tpu.memory_space<vmem>>, vector<36x4xf32>
    %cst_71 = arith.constant dense<0.000000e+00> : vector<512x4xf32>
    %37 = tpu.matmul %35, %36, %cst_71 {dimension_numbers = #tpu.dot_dimension_numbers<[1], [0], [0], [1], [0, 0, 1, 1], [], []>} : vector<512x36xf32>, vector<36x4xf32>, vector<512x4xf32> -> vector<512x4xf32>
    %cst_72 = arith.constant dense<0.000000e+00> : vector<4xf32>
    %38 = vector.multi_reduction <add>, %37, %cst_72 [0] : vector<512x4xf32> to vector<4xf32>
    %39 = vector.shape_cast %38 : vector<4xf32> to vector<1x4xf32>
    %cst_73 = arith.constant 5.120000e+02 : f32
    %40 = vector.broadcast %cst_73 : f32 to vector<1x4xf32>
    %41 = arith.divf %39, %40 : vector<1x4xf32>
    %42 = vector.broadcast %41 : vector<1x4xf32> to vector<512x4xf32>
    %43 = arith.subf %37, %42 : vector<512x4xf32>
    %44 = arith.mulf %43, %43 : vector<512x4xf32>
    %cst_74 = arith.constant dense<0.000000e+00> : vector<4xf32>
    %45 = vector.multi_reduction <add>, %44, %cst_74 [0] : vector<512x4xf32> to vector<4xf32>
    %46 = vector.shape_cast %45 : vector<4xf32> to vector<1x4xf32>
    %cst_75 = arith.constant 5.120000e+02 : f32
    %47 = vector.broadcast %cst_75 : f32 to vector<1x4xf32>
    %48 = arith.divf %46, %47 : vector<1x4xf32>
    %c0_76 = arith.constant 0 : index
    %c0_77 = arith.constant 0 : index
    %49 = vector.load %arg3[%c0_76, %c0_77] : memref<1x4xf32, #tpu.memory_space<vmem>>, vector<1x4xf32>
    %cst_78 = arith.constant 9.99999974E-6 : f32
    %50 = vector.broadcast %cst_78 : f32 to vector<1x4xf32>
    %51 = arith.addf %48, %50 : vector<1x4xf32>
    %52 = math.rsqrt %51 : vector<1x4xf32>
    %53 = arith.mulf %49, %52 : vector<1x4xf32>
    %54 = vector.broadcast %53 : vector<1x4xf32> to vector<512x4xf32>
    %55 = arith.mulf %37, %54 : vector<512x4xf32>
    %c0_79 = arith.constant 0 : index
    %c0_80 = arith.constant 0 : index
    %56 = vector.load %arg4[%c0_79, %c0_80] : memref<1x4xf32, #tpu.memory_space<vmem>>, vector<1x4xf32>
    %57 = arith.mulf %41, %53 : vector<1x4xf32>
    %58 = arith.subf %56, %57 : vector<1x4xf32>
    %59 = vector.broadcast %58 : vector<1x4xf32> to vector<512x4xf32>
    %60 = arith.addf %55, %59 : vector<512x4xf32>
    %cst_81 = arith.constant 0.000000e+00 : f32
    %61 = vector.broadcast %cst_81 : f32 to vector<512x4xf32>
    %62 = arith.maximumf %60, %61 : vector<512x4xf32>
    %63 = vector.shape_cast %62 : vector<512x4xf32> to vector<2x16x16x4xf32>
    %c0_82 = arith.constant 0 : index
    %c1_83 = arith.constant 1 : index
    %c1_84 = arith.constant 1 : index
    %c0_85 = arith.constant 0 : index
    %64 = vector.load %arg8[%c0_82, %c1_83, %c1_84, %c0_85] : memref<2x18x18x4xf32, #tpu.memory_space<vmem>>, vector<2x16x16x4xf32>
    tpu.vector_store %arg8[%c0_82, %c1_83, %c1_84, %c0_85], %63 {strides = array<i32>} : memref<2x18x18x4xf32, #tpu.memory_space<vmem>>, vector<2x16x16x4xf32>,
    %c0_86 = arith.constant 0 : index
    %c0_87 = arith.constant 0 : index
    %c0_88 = arith.constant 0 : index
    %c0_89 = arith.constant 0 : index
    %65 = vector.load %arg8[%c0_86, %c0_87, %c0_88, %c0_89] : memref<2x18x18x4xf32, #tpu.memory_space<vmem>>, vector<2x16x16x4xf32>
    %66 = vector.shape_cast %65 : vector<2x16x16x4xf32> to vector<512x4xf32>
    %c0_90 = arith.constant 0 : index
    %c0_91 = arith.constant 0 : index
    %67 = vector.load %arg9[%c0_90, %c0_91] : memref<512x36xf32, #tpu.memory_space<vmem>>, vector<512x4xf32>
    tpu.vector_store %arg9[%c0_90, %c0_91], %66 {strides = array<i32>} : memref<512x36xf32, #tpu.memory_space<vmem>>, vector<512x4xf32>,
    %c0_92 = arith.constant 0 : index
    %c0_93 = arith.constant 0 : index
    %c1_94 = arith.constant 1 : index
    %c0_95 = arith.constant 0 : index
    %68 = vector.load %arg8[%c0_92, %c0_93, %c1_94, %c0_95] : memref<2x18x18x4xf32, #tpu.memory_space<vmem>>, vector<2x16x16x4xf32>
    %69 = vector.shape_cast %68 : vector<2x16x16x4xf32> to vector<512x4xf32>
    %c0_96 = arith.constant 0 : index
    %c4_97 = arith.constant 4 : index
    %70 = vector.load %arg9[%c0_96, %c4_97] : memref<512x36xf32, #tpu.memory_space<vmem>>, vector<512x4xf32>
    tpu.vector_store %arg9[%c0_96, %c4_97], %69 {strides = array<i32>} : memref<512x36xf32, #tpu.memory_space<vmem>>, vector<512x4xf32>,
    %c0_98 = arith.constant 0 : index
    %c0_99 = arith.constant 0 : index
    %c2_100 = arith.constant 2 : index
    %c0_101 = arith.constant 0 : index
    %71 = vector.load %arg8[%c0_98, %c0_99, %c2_100, %c0_101] : memref<2x18x18x4xf32, #tpu.memory_space<vmem>>, vector<2x16x16x4xf32>
    %72 = vector.shape_cast %71 : vector<2x16x16x4xf32> to vector<512x4xf32>
    %c0_102 = arith.constant 0 : index
    %c8_103 = arith.constant 8 : index
    %73 = vector.load %arg9[%c0_102, %c8_103] : memref<512x36xf32, #tpu.memory_space<vmem>>, vector<512x4xf32>
    tpu.vector_store %arg9[%c0_102, %c8_103], %72 {strides = array<i32>} : memref<512x36xf32, #tpu.memory_space<vmem>>, vector<512x4xf32>,
    %c0_104 = arith.constant 0 : index
    %c1_105 = arith.constant 1 : index
    %c0_106 = arith.constant 0 : index
    %c0_107 = arith.constant 0 : index
    %74 = vector.load %arg8[%c0_104, %c1_105, %c0_106, %c0_107] : memref<2x18x18x4xf32, #tpu.memory_space<vmem>>, vector<2x16x16x4xf32>
    %75 = vector.shape_cast %74 : vector<2x16x16x4xf32> to vector<512x4xf32>
    %c0_108 = arith.constant 0 : index
    %c12_109 = arith.constant 12 : index
    %76 = vector.load %arg9[%c0_108, %c12_109] : memref<512x36xf32, #tpu.memory_space<vmem>>, vector<512x4xf32>
    tpu.vector_store %arg9[%c0_108, %c12_109], %75 {strides = array<i32>} : memref<512x36xf32, #tpu.memory_space<vmem>>, vector<512x4xf32>,
    %c0_110 = arith.constant 0 : index
    %c1_111 = arith.constant 1 : index
    %c1_112 = arith.constant 1 : index
    %c0_113 = arith.constant 0 : index
    %77 = vector.load %arg8[%c0_110, %c1_111, %c1_112, %c0_113] : memref<2x18x18x4xf32, #tpu.memory_space<vmem>>, vector<2x16x16x4xf32>
    %78 = vector.shape_cast %77 : vector<2x16x16x4xf32> to vector<512x4xf32>
    %c0_114 = arith.constant 0 : index
    %c16_115 = arith.constant 16 : index
    %79 = vector.load %arg9[%c0_114, %c16_115] : memref<512x36xf32, #tpu.memory_space<vmem>>, vector<512x4xf32>
    tpu.vector_store %arg9[%c0_114, %c16_115], %78 {strides = array<i32>} : memref<512x36xf32, #tpu.memory_space<vmem>>, vector<512x4xf32>,
    %c0_116 = arith.constant 0 : index
    %c1_117 = arith.constant 1 : index
    %c2_118 = arith.constant 2 : index
    %c0_119 = arith.constant 0 : index
    %80 = vector.load %arg8[%c0_116, %c1_117, %c2_118, %c0_119] : memref<2x18x18x4xf32, #tpu.memory_space<vmem>>, vector<2x16x16x4xf32>
    %81 = vector.shape_cast %80 : vector<2x16x16x4xf32> to vector<512x4xf32>
    %c0_120 = arith.constant 0 : index
    %c20_121 = arith.constant 20 : index
    %82 = vector.load %arg9[%c0_120, %c20_121] : memref<512x36xf32, #tpu.memory_space<vmem>>, vector<512x4xf32>
    tpu.vector_store %arg9[%c0_120, %c20_121], %81 {strides = array<i32>} : memref<512x36xf32, #tpu.memory_space<vmem>>, vector<512x4xf32>,
    %c0_122 = arith.constant 0 : index
    %c2_123 = arith.constant 2 : index
    %c0_124 = arith.constant 0 : index
    %c0_125 = arith.constant 0 : index
    %83 = vector.load %arg8[%c0_122, %c2_123, %c0_124, %c0_125] : memref<2x18x18x4xf32, #tpu.memory_space<vmem>>, vector<2x16x16x4xf32>
    %84 = vector.shape_cast %83 : vector<2x16x16x4xf32> to vector<512x4xf32>
    %c0_126 = arith.constant 0 : index
    %c24_127 = arith.constant 24 : index
    %85 = vector.load %arg9[%c0_126, %c24_127] : memref<512x36xf32, #tpu.memory_space<vmem>>, vector<512x4xf32>
    tpu.vector_store %arg9[%c0_126, %c24_127], %84 {strides = array<i32>} : memref<512x36xf32, #tpu.memory_space<vmem>>, vector<512x4xf32>,
    %c0_128 = arith.constant 0 : index
    %c2_129 = arith.constant 2 : index
    %c1_130 = arith.constant 1 : index
    %c0_131 = arith.constant 0 : index
    %86 = vector.load %arg8[%c0_128, %c2_129, %c1_130, %c0_131] : memref<2x18x18x4xf32, #tpu.memory_space<vmem>>, vector<2x16x16x4xf32>
    %87 = vector.shape_cast %86 : vector<2x16x16x4xf32> to vector<512x4xf32>
    %c0_132 = arith.constant 0 : index
    %c28_133 = arith.constant 28 : index
    %88 = vector.load %arg9[%c0_132, %c28_133] : memref<512x36xf32, #tpu.memory_space<vmem>>, vector<512x4xf32>
    tpu.vector_store %arg9[%c0_132, %c28_133], %87 {strides = array<i32>} : memref<512x36xf32, #tpu.memory_space<vmem>>, vector<512x4xf32>,
    %c0_134 = arith.constant 0 : index
    %c2_135 = arith.constant 2 : index
    %c2_136 = arith.constant 2 : index
    %c0_137 = arith.constant 0 : index
    %89 = vector.load %arg8[%c0_134, %c2_135, %c2_136, %c0_137] : memref<2x18x18x4xf32, #tpu.memory_space<vmem>>, vector<2x16x16x4xf32>
    %90 = vector.shape_cast %89 : vector<2x16x16x4xf32> to vector<512x4xf32>
    %c0_138 = arith.constant 0 : index
    %c32_139 = arith.constant 32 : index
    %91 = vector.load %arg9[%c0_138, %c32_139] : memref<512x36xf32, #tpu.memory_space<vmem>>, vector<512x4xf32>
    tpu.vector_store %arg9[%c0_138, %c32_139], %90 {strides = array<i32>} : memref<512x36xf32, #tpu.memory_space<vmem>>, vector<512x4xf32>,
    %c0_140 = arith.constant 0 : index
    %c0_141 = arith.constant 0 : index
    %92 = vector.load %arg9[%c0_140, %c0_141] : memref<512x36xf32, #tpu.memory_space<vmem>>, vector<512x36xf32>
    %c0_142 = arith.constant 0 : index
    %c0_143 = arith.constant 0 : index
    %93 = vector.load %arg2[%c0_142, %c0_143] : memref<36x4xf32, #tpu.memory_space<vmem>>, vector<36x4xf32>
    %cst_144 = arith.constant dense<0.000000e+00> : vector<512x4xf32>
    %94 = tpu.matmul %92, %93, %cst_144 {dimension_numbers = #tpu.dot_dimension_numbers<[1], [0], [0], [1], [0, 0, 1, 1], [], []>} : vector<512x36xf32>, vector<36x4xf32>, vector<512x4xf32> -> vector<512x4xf32>
    %cst_145 = arith.constant dense<0.000000e+00> : vector<4xf32>
    %95 = vector.multi_reduction <add>, %94, %cst_145 [0] : vector<512x4xf32> to vector<4xf32>
    %96 = vector.shape_cast %95 : vector<4xf32> to vector<1x4xf32>
    %cst_146 = arith.constant 5.120000e+02 : f32
    %97 = vector.broadcast %cst_146 : f32 to vector<1x4xf32>
    %98 = arith.divf %96, %97 : vector<1x4xf32>
    %99 = vector.broadcast %98 : vector<1x4xf32> to vector<512x4xf32>
    %100 = arith.subf %94, %99 : vector<512x4xf32>
    %101 = arith.mulf %100, %100 : vector<512x4xf32>
    %cst_147 = arith.constant dense<0.000000e+00> : vector<4xf32>
    %102 = vector.multi_reduction <add>, %101, %cst_147 [0] : vector<512x4xf32> to vector<4xf32>
    %103 = vector.shape_cast %102 : vector<4xf32> to vector<1x4xf32>
    %cst_148 = arith.constant 5.120000e+02 : f32
    %104 = vector.broadcast %cst_148 : f32 to vector<1x4xf32>
    %105 = arith.divf %103, %104 : vector<1x4xf32>
    %c0_149 = arith.constant 0 : index
    %c0_150 = arith.constant 0 : index
    %106 = vector.load %arg5[%c0_149, %c0_150] : memref<1x4xf32, #tpu.memory_space<vmem>>, vector<1x4xf32>
    %cst_151 = arith.constant 9.99999974E-6 : f32
    %107 = vector.broadcast %cst_151 : f32 to vector<1x4xf32>
    %108 = arith.addf %105, %107 : vector<1x4xf32>
    %109 = math.rsqrt %108 : vector<1x4xf32>
    %110 = arith.mulf %106, %109 : vector<1x4xf32>
    %111 = vector.broadcast %110 : vector<1x4xf32> to vector<512x4xf32>
    %112 = arith.mulf %94, %111 : vector<512x4xf32>
    %c0_152 = arith.constant 0 : index
    %c0_153 = arith.constant 0 : index
    %113 = vector.load %arg6[%c0_152, %c0_153] : memref<1x4xf32, #tpu.memory_space<vmem>>, vector<1x4xf32>
    %114 = arith.mulf %98, %110 : vector<1x4xf32>
    %115 = arith.subf %113, %114 : vector<1x4xf32>
    %116 = vector.broadcast %115 : vector<1x4xf32> to vector<512x4xf32>
    %117 = arith.addf %112, %116 : vector<512x4xf32>
    %c0_154 = arith.constant 0 : index
    %c0_155 = arith.constant 0 : index
    %c0_156 = arith.constant 0 : index
    %c0_157 = arith.constant 0 : index
    %118 = vector.load %arg0[%c0_154, %c0_155, %c0_156, %c0_157] : memref<2x16x16x4xf32, #tpu.memory_space<vmem>>, vector<2x16x16x4xf32>
    %119 = vector.shape_cast %118 : vector<2x16x16x4xf32> to vector<512x4xf32>
    %120 = arith.addf %117, %119 : vector<512x4xf32>
    %cst_158 = arith.constant 0.000000e+00 : f32
    %121 = vector.broadcast %cst_158 : f32 to vector<512x4xf32>
    %122 = arith.maximumf %120, %121 : vector<512x4xf32>
    %123 = vector.shape_cast %122 : vector<512x4xf32> to vector<2x16x16x4xf32>
    %c0_159 = arith.constant 0 : index
    %c0_160 = arith.constant 0 : index
    %c0_161 = arith.constant 0 : index
    %c0_162 = arith.constant 0 : index
    %124 = vector.load %arg7[%c0_159, %c0_160, %c0_161, %c0_162] : memref<2x16x16x4xf32, #tpu.memory_space<vmem>>, vector<2x16x16x4xf32>
    tpu.vector_store %arg7[%c0_159, %c0_160, %c0_161, %c0_162], %123 {strides = array<i32>} : memref<2x16x16x4xf32, #tpu.memory_space<vmem>>, vector<2x16x16x4xf32>,
    return
  }
}

</mosaic_0001>

<llo_original>
// kernel: residual_block.1
$region0: #{residual_block.1}
  #allocation0 [shape = 'u32[]', space=smem, size = 0x4, offset = 0x4, fixed_abs, tag = 'smem constant byte address 0x4 - core index']
  #allocation1 [shape = 'u32[144,128]{1,0:T(1,128)}', space=vmem, size = 0x12000, scoped, tag = 'internal scratch']
  #allocation2 [shape = 'f32[2,18,18,4]{3,2,1,0:T(8,128)}', space=vmem, size = 0x6c000, scoped, tag = 'scratch operand']
  #allocation3 [shape = 'f32[512,36]{1,0:T(8,128)}', space=vmem, size = 0x40000, scoped, tag = 'scratch operand']
  %s0 = inlined_call_operand.vmem [shape: f32[2,16,16,4], index: 0, kind: input, shape index: {}]
  %s1 = inlined_call_operand.vmem [shape: f32[36,4], index: 1, kind: input, shape index: {}]
  %s2 = inlined_call_operand.vmem [shape: f32[36,4], index: 2, kind: input, shape index: {}]
  %s3 = inlined_call_operand.vmem [shape: f32[1,4], index: 3, kind: input, shape index: {}]
  %s4 = inlined_call_operand.vmem [shape: f32[1,4], index: 4, kind: input, shape index: {}]
  %s5 = inlined_call_operand.vmem [shape: f32[1,4], index: 5, kind: input, shape index: {}]
  %s6 = inlined_call_operand.vmem [shape: f32[1,4], index: 6, kind: input, shape index: {}]
  %s7 = inlined_call_operand.vmem [shape: f32[2,16,16,4], index: 7, kind: output, shape index: {}]
  %s8 = sld [smem:[#allocation0]]
  $region38: #{residual_block.1} parent=0
    _
  %s10 = ssub.s32 1, %s8
  %s11 = scalar_select 0, %s10, %s8
  // Predicated region
  $region2: #{residual_block.1} parent=0 // pred_check
    _
  $region3: #{residual_block.1} parent=0 // pred_check_branch
    %13 = sbr.rel (0) target = $region5
  $region4: #{residual_block.1} parent=0 // pred_region
    _
  $region5: #{residual_block.1} parent=0 // pred_fallthru
    _
  // Predicated region
  $region6: #{residual_block.1} parent=0 // pred_check
    _
  $region7: #{residual_block.1} parent=0 // pred_check_branch
    %15 = sbr.rel (0) target = $region9
  $region8: #{residual_block.1} parent=0 // pred_region
    _
  $region9: #{residual_block.1} parent=0 // pred_fallthru
    _
  // Predicated region
  $region10: #{residual_block.1} parent=0 // pred_check
    _
  $region11: #{residual_block.1} parent=0 // pred_check_branch
    %17 = sbr.rel (0) target = $region13
  $region12: #{residual_block.1} parent=0 // pred_region
    _
  $region13: #{residual_block.1} parent=0 // pred_fallthru
    _
  // Predicated region
  $region14: #{residual_block.1} parent=0 // pred_check
    _
  $region15: #{residual_block.1} parent=0 // pred_check_branch
    %19 = sbr.rel (0) target = $region17
  $region16: #{residual_block.1} parent=0 // pred_region
    _
  $region17: #{residual_block.1} parent=0 // pred_fallthru
    _
  // Predicated region
  $region18: #{residual_block.1} parent=0 // pred_check
    _
  $region19: #{residual_block.1} parent=0 // pred_check_branch
    %21 = sbr.rel (0) target = $region21
  $region20: #{residual_block.1} parent=0 // pred_region
    _
  $region21: #{residual_block.1} parent=0 // pred_fallthru
    _
  // Predicated region
  $region22: #{residual_block.1} parent=0 // pred_check
    _
  $region23: #{residual_block.1} parent=0 // pred_check_branch
    %23 = sbr.rel (0) target = $region25
  $region24: #{residual_block.1} parent=0 // pred_region
    _
  $region25: #{residual_block.1} parent=0 // pred_fallthru
    _
  // Predicated region
  $region26: #{residual_block.1} parent=0 // pred_check
    _
  $region27: #{residual_block.1} parent=0 // pred_check_branch
    %25 = sbr.rel (0) target = $region29
  $region28: #{residual_block.1} parent=0 // pred_region
    _
  $region29: #{residual_block.1} parent=0 // pred_fallthru
    _
  %vm26 = vcmask 31744
  %27 = vst.msk [vmem:[#allocation2] sm:$0xff] %vm26, 0.0
  %28 = vst.msk [vmem:[#allocation2 + $0x8] sm:$0xff] %vm26, 0.0
  %vm29 = vcmask 25600
  %30 = vst.msk [vmem:[#allocation2 + $0x10] sm:$0x3] %vm29, 0.0
  %31 = vst.msk [vmem:[#allocation2 + $0x1b0] sm:$0xff] %vm26, 0.0
  %32 = vst.msk [vmem:[#allocation2 + $0x1b8] sm:$0xff] %vm26, 0.0
  %33 = vst.msk [vmem:[#allocation2 + $0x1c0] sm:$0x3] %vm29, 0.0
  %s34 = scalar_lea.vmem [#allocation2], 408
  %35 = vst.msk [vmem:[%s34] sm:$0xff] %vm26, 0.0
  %36 = vst.msk [vmem:[%s34 + $0x8] sm:$0xff] %vm26, 0.0
  %37 = vst.msk [vmem:[%s34 + $0x10] sm:$0x3] %vm29, 0.0
  %38 = vst.msk [vmem:[%s34 + $0x1b0] sm:$0xff] %vm26, 0.0
  %39 = vst.msk [vmem:[%s34 + $0x1b8] sm:$0xff] %vm26, 0.0
  %40 = vst.msk [vmem:[%s34 + $0x1c0] sm:$0x3] %vm29, 0.0
  %s41 = scalar_lea.vmem [#allocation2], 24
  %vm42 = vcmask 24576
  %43 = vst.msk [vmem:[%s41] sm:$0x1] %vm42, 0.0
  %44 = vst.msk [vmem:[%s41 + $0x18] sm:$0x1] %vm42, 0.0
  %45 = vst.msk [vmem:[%s41 + $0x30] sm:$0x1] %vm42, 0.0
  %46 = vst.msk [vmem:[%s41 + $0x48] sm:$0x1] %vm42, 0.0
  %47 = vst.msk [vmem:[%s41 + $0x60] sm:$0x1] %vm42, 0.0
  %48 = vst.msk [vmem:[%s41 + $0x78] sm:$0x1] %vm42, 0.0
  %49 = vst.msk [vmem:[%s41 + $0x90] sm:$0x1] %vm42, 0.0
  %50 = vst.msk [vmem:[%s41 + $0xa8] sm:$0x1] %vm42, 0.0
  %51 = vst.msk [vmem:[%s41 + $0xc0] sm:$0x1] %vm42, 0.0
  %52 = vst.msk [vmem:[%s41 + $0xd8] sm:$0x1] %vm42, 0.0
  %53 = vst.msk [vmem:[%s41 + $0xf0] sm:$0x1] %vm42, 0.0
  %54 = vst.msk [vmem:[%s41 + $0x108] sm:$0x1] %vm42, 0.0
  %55 = vst.msk [vmem:[%s41 + $0x120] sm:$0x1] %vm42, 0.0
  %56 = vst.msk [vmem:[%s41 + $0x138] sm:$0x1] %vm42, 0.0
  %57 = vst.msk [vmem:[%s41 + $0x150] sm:$0x1] %vm42, 0.0
  %58 = vst.msk [vmem:[%s41 + $0x168] sm:$0x1] %vm42, 0.0
  %59 = vst.msk [vmem:[%s41 + $0x1b0] sm:$0x1] %vm42, 0.0
  %60 = vst.msk [vmem:[%s41 + $0x1c8] sm:$0x1] %vm42, 0.0
  %61 = vst.msk [vmem:[%s41 + $0x1e0] sm:$0x1] %vm42, 0.0
  %62 = vst.msk [vmem:[%s41 + $0x1f8] sm:$0x1] %vm42, 0.0
  %63 = vst.msk [vmem:[%s41 + $0x210] sm:$0x1] %vm42, 0.0
  %64 = vst.msk [vmem:[%s41 + $0x228] sm:$0x1] %vm42, 0.0
  %65 = vst.msk [vmem:[%s41 + $0x240] sm:$0x1] %vm42, 0.0
  %66 = vst.msk [vmem:[%s41 + $0x258] sm:$0x1] %vm42, 0.0
  %67 = vst.msk [vmem:[%s41 + $0x270] sm:$0x1] %vm42, 0.0
  %68 = vst.msk [vmem:[%s41 + $0x288] sm:$0x1] %vm42, 0.0
  %69 = vst.msk [vmem:[%s41 + $0x2a0] sm:$0x1] %vm42, 0.0
  %70 = vst.msk [vmem:[%s41 + $0x2b8] sm:$0x1] %vm42, 0.0
  %71 = vst.msk [vmem:[%s41 + $0x2d0] sm:$0x1] %vm42, 0.0
  %72 = vst.msk [vmem:[%s41 + $0x2e8] sm:$0x1] %vm42, 0.0
  %73 = vst.msk [vmem:[%s41 + $0x300] sm:$0x1] %vm42, 0.0
  %74 = vst.msk [vmem:[%s41 + $0x318] sm:$0x1] %vm42, 0.0
  %75 = vst.msk [vmem:[%s41 + $0x11] sm:$0x1] %vm42, 0.0
  %76 = vst.msk [vmem:[%s41 + $0x29] sm:$0x1] %vm42, 0.0
  %77 = vst.msk [vmem:[%s41 + $0x41] sm:$0x1] %vm42, 0.0
  %78 = vst.msk [vmem:[%s41 + $0x59] sm:$0x1] %vm42, 0.0
  %79 = vst.msk [vmem:[%s41 + $0x71] sm:$0x1] %vm42, 0.0
  %80 = vst.msk [vmem:[%s41 + $0x89] sm:$0x1] %vm42, 0.0
  %81 = vst.msk [vmem:[%s41 + $0xa1] sm:$0x1] %vm42, 0.0
  %82 = vst.msk [vmem:[%s41 + $0xb9] sm:$0x1] %vm42, 0.0
  %83 = vst.msk [vmem:[%s41 + $0xd1] sm:$0x1] %vm42, 0.0
  %84 = vst.msk [vmem:[%s41 + $0xe9] sm:$0x1] %vm42, 0.0
  %85 = vst.msk [vmem:[%s41 + $0x101] sm:$0x1] %vm42, 0.0
  %86 = vst.msk [vmem:[%s41 + $0x119] sm:$0x1] %vm42, 0.0
  %87 = vst.msk [vmem:[%s41 + $0x131] sm:$0x1] %vm42, 0.0
  %88 = vst.msk [vmem:[%s41 + $0x149] sm:$0x1] %vm42, 0.0
  %89 = vst.msk [vmem:[%s41 + $0x161] sm:$0x1] %vm42, 0.0
  %90 = vst.msk [vmem:[%s41 + $0x179] sm:$0x1] %vm42, 0.0
  %91 = vst.msk [vmem:[%s41 + $0x1c1] sm:$0x1] %vm42, 0.0
  %92 = vst.msk [vmem:[%s41 + $0x1d9] sm:$0x1] %vm42, 0.0
  %93 = vst.msk [vmem:[%s41 + $0x1f1] sm:$0x1] %vm42, 0.0
  %94 = vst.msk [vmem:[%s41 + $0x209] sm:$0x1] %vm42, 0.0
  %95 = vst.msk [vmem:[%s41 + $0x221] sm:$0x1] %vm42, 0.0
  %96 = vst.msk [vmem:[%s41 + $0x239] sm:$0x1] %vm42, 0.0
  %97 = vst.msk [vmem:[%s41 + $0x251] sm:$0x1] %vm42, 0.0
  %98 = vst.msk [vmem:[%s41 + $0x269] sm:$0x1] %vm42, 0.0
  %99 = vst.msk [vmem:[%s41 + $0x281] sm:$0x1] %vm42, 0.0
  %100 = vst.msk [vmem:[%s41 + $0x299] sm:$0x1] %vm42, 0.0
  %101 = vst.msk [vmem:[%s41 + $0x2b1] sm:$0x1] %vm42, 0.0
  %102 = vst.msk [vmem:[%s41 + $0x2c9] sm:$0x1] %vm42, 0.0
  %103 = vst.msk [vmem:[%s41 + $0x2e1] sm:$0x1] %vm42, 0.0
  %104 = vst.msk [vmem:[%s41 + $0x2f9] sm:$0x1] %vm42, 0.0
  %105 = vst.msk [vmem:[%s41 + $0x311] sm:$0x1] %vm42, 0.0
  %106 = vst.msk [vmem:[%s41 + $0x329] sm:$0x1] %vm42, 0.0
  %v107 = vld [vmem:[%s0] sm:$0xff]
  %v108 = vld [vmem:[%s0 + $0x8] sm:$0xff]
  %v109 = vld [vmem:[%s0 + $0x10] sm:$0xff]
  %v110 = vld [vmem:[%s0 + $0x18] sm:$0xff]
  %v111 = vld [vmem:[%s0 + $0x20] sm:$0xff]
  %v112 = vld [vmem:[%s0 + $0x28] sm:$0xff]
  %v113 = vld [vmem:[%s0 + $0x30] sm:$0xff]
  %v114 = vld [vmem:[%s0 + $0x38] sm:$0xff]
  %v115 = vld [vmem:[%s0 + $0x40] sm:$0xff]
  %v116 = vld [vmem:[%s0 + $0x48] sm:$0xff]
  %v117 = vld [vmem:[%s0 + $0x50] sm:$0xff]
  %v118 = vld [vmem:[%s0 + $0x58] sm:$0xff]
  %v119 = vld [vmem:[%s0 + $0x60] sm:$0xff]
  %v120 = vld [vmem:[%s0 + $0x68] sm:$0xff]
  %v121 = vld [vmem:[%s0 + $0x70] sm:$0xff]
  %v122 = vld [vmem:[%s0 + $0x78] sm:$0xff]
  %v123 = vld [vmem:[%s0 + $0x80] sm:$0xff]
  %v124 = vld [vmem:[%s0 + $0x88] sm:$0xff]
  %v125 = vld [vmem:[%s0 + $0x90] sm:$0xff]
  %v126 = vld [vmem:[%s0 + $0x98] sm:$0xff]
  %v127 = vld [vmem:[%s0 + $0xa0] sm:$0xff]
  %v128 = vld [vmem:[%s0 + $0xa8] sm:$0xff]
  %v129 = vld [vmem:[%s0 + $0xb0] sm:$0xff]
  %v130 = vld [vmem:[%s0 + $0xb8] sm:$0xff]
  %v131 = vld [vmem:[%s0 + $0xc0] sm:$0xff]
  %v132 = vld [vmem:[%s0 + $0xc8] sm:$0xff]
  %v133 = vld [vmem:[%s0 + $0xd0] sm:$0xff]
  %v134 = vld [vmem:[%s0 + $0xd8] sm:$0xff]
  %v135 = vld [vmem:[%s0 + $0xe0] sm:$0xff]
  %v136 = vld [vmem:[%s0 + $0xe8] sm:$0xff]
  %v137 = vld [vmem:[%s0 + $0xf0] sm:$0xff]
  %v138 = vld [vmem:[%s0 + $0xf8] sm:$0xff]
  %v139 = vld [vmem:[%s0 + $0x100] sm:$0xff]
  %v140 = vld [vmem:[%s0 + $0x108] sm:$0xff]
  %v141 = vld [vmem:[%s0 + $0x110] sm:$0xff]
  %v142 = vld [vmem:[%s0 + $0x118] sm:$0xff]
  %v143 = vld [vmem:[%s0 + $0x120] sm:$0xff]
  %v144 = vld [vmem:[%s0 + $0x128] sm:$0xff]
  %v145 = vld [vmem:[%s0 + $0x130] sm:$0xff]
  %v146 = vld [vmem:[%s0 + $0x138] sm:$0xff]
  %v147 = vld [vmem:[%s0 + $0x140] sm:$0xff]
  %v148 = vld [vmem:[%s0 + $0x148] sm:$0xff]
  %v149 = vld [vmem:[%s0 + $0x150] sm:$0xff]
  %v150 = vld [vmem:[%s0 + $0x158] sm:$0xff]
  %v151 = vld [vmem:[%s0 + $0x160] sm:$0xff]
  %v152 = vld [vmem:[%s0 + $0x168] sm:$0xff]
  %v153 = vld [vmem:[%s0 + $0x170] sm:$0xff]
  %v154 = vld [vmem:[%s0 + $0x178] sm:$0xff]
  %v155 = vld [vmem:[%s0 + $0x180] sm:$0xff]
  %v156 = vld [vmem:[%s0 + $0x188] sm:$0xff]
  %v157 = vld [vmem:[%s0 + $0x190] sm:$0xff]
  %v158 = vld [vmem:[%s0 + $0x198] sm:$0xff]
  %v159 = vld [vmem:[%s0 + $0x1a0] sm:$0xff]
  %v160 = vld [vmem:[%s0 + $0x1a8] sm:$0xff]
  %v161 = vld [vmem:[%s0 + $0x1b0] sm:$0xff]
  %v162 = vld [vmem:[%s0 + $0x1b8] sm:$0xff]
  %v163 = vld [vmem:[%s0 + $0x1c0] sm:$0xff]
  %v164 = vld [vmem:[%s0 + $0x1c8] sm:$0xff]
  %v165 = vld [vmem:[%s0 + $0x1d0] sm:$0xff]
  %v166 = vld [vmem:[%s0 + $0x1d8] sm:$0xff]
  %v167 = vld [vmem:[%s0 + $0x1e0] sm:$0xff]
  %v168 = vld [vmem:[%s0 + $0x1e8] sm:$0xff]
  %v169 = vld [vmem:[%s0 + $0x1f0] sm:$0xff]
  %v170 = vld [vmem:[%s0 + $0x1f8] sm:$0xff]
  %171 = vst.msk [vmem:[%s41 + $0x1] sm:$0xff] %vm26, %v107
  %172 = vst.msk [vmem:[%s41 + $0x9] sm:$0xff] %vm26, %v108
  %173 = vst.msk [vmem:[%s41 + $0x19] sm:$0xff] %vm26, %v109
  %174 = vst.msk [vmem:[%s41 + $0x21] sm:$0xff] %vm26, %v110
  %175 = vst.msk [vmem:[%s41 + $0x31] sm:$0xff] %vm26, %v111
  %176 = vst.msk [vmem:[%s41 + $0x39] sm:$0xff] %vm26, %v112
  %177 = vst.msk [vmem:[%s41 + $0x49] sm:$0xff] %vm26, %v113
  %178 = vst.msk [vmem:[%s41 + $0x51] sm:$0xff] %vm26, %v114
  %179 = vst.msk [vmem:[%s41 + $0x61] sm:$0xff] %vm26, %v115
  %180 = vst.msk [vmem:[%s41 + $0x69] sm:$0xff] %vm26, %v116
  %181 = vst.msk [vmem:[%s41 + $0x79] sm:$0xff] %vm26, %v117
  %182 = vst.msk [vmem:[%s41 + $0x81] sm:$0xff] %vm26, %v118
  %183 = vst.msk [vmem:[%s41 + $0x91] sm:$0xff] %vm26, %v119
  %184 = vst.msk [vmem:[%s41 + $0x99] sm:$0xff] %vm26, %v120
  %185 = vst.msk [vmem:[%s41 + $0xa9] sm:$0xff] %vm26, %v121
  %186 = vst.msk [vmem:[%s41 + $0xb1] sm:$0xff] %vm26, %v122
  %187 = vst.msk [vmem:[%s41 + $0xc1] sm:$0xff] %vm26, %v123
  %188 = vst.msk [vmem:[%s41 + $0xc9] sm:$0xff] %vm26, %v124
  %189 = vst.msk [vmem:[%s41 + $0xd9] sm:$0xff] %vm26, %v125
  %190 = vst.msk [vmem:[%s41 + $0xe1] sm:$0xff] %vm26, %v126
  %191 = vst.msk [vmem:[%s41 + $0xf1] sm:$0xff] %vm26, %v127
  %192 = vst.msk [vmem:[%s41 + $0xf9] sm:$0xff] %vm26, %v128
  %193 = vst.msk [vmem:[%s41 + $0x109] sm:$0xff] %vm26, %v129
  %194 = vst.msk [vmem:[%s41 + $0x111] sm:$0xff] %vm26, %v130
  %195 = vst.msk [vmem:[%s41 + $0x121] sm:$0xff] %vm26, %v131
  %196 = vst.msk [vmem:[%s41 + $0x129] sm:$0xff] %vm26, %v132
  %197 = vst.msk [vmem:[%s41 + $0x139] sm:$0xff] %vm26, %v133
  %198 = vst.msk [vmem:[%s41 + $0x141] sm:$0xff] %vm26, %v134
  %199 = vst.msk [vmem:[%s41 + $0x151] sm:$0xff] %vm26, %v135
  %200 = vst.msk [vmem:[%s41 + $0x159] sm:$0xff] %vm26, %v136
  %201 = vst.msk [vmem:[%s41 + $0x169] sm:$0xff] %vm26, %v137
  %202 = vst.msk [vmem:[%s41 + $0x171] sm:$0xff] %vm26, %v138
  %203 = vst.msk [vmem:[%s41 + $0x1b1] sm:$0xff] %vm26, %v139
  %204 = vst.msk [vmem:[%s41 + $0x1b9] sm:$0xff] %vm26, %v140
  %205 = vst.msk [vmem:[%s41 + $0x1c9] sm:$0xff] %vm26, %v141
  %206 = vst.msk [vmem:[%s41 + $0x1d1] sm:$0xff] %vm26, %v142
  %207 = vst.msk [vmem:[%s41 + $0x1e1] sm:$0xff] %vm26, %v143
  %208 = vst.msk [vmem:[%s41 + $0x1e9] sm:$0xff] %vm26, %v144
  %209 = vst.msk [vmem:[%s41 + $0x1f9] sm:$0xff] %vm26, %v145
  %210 = vst.msk [vmem:[%s41 + $0x201] sm:$0xff] %vm26, %v146
  %211 = vst.msk [vmem:[%s41 + $0x211] sm:$0xff] %vm26, %v147
  %212 = vst.msk [vmem:[%s41 + $0x219] sm:$0xff] %vm26, %v148
  %213 = vst.msk [vmem:[%s41 + $0x229] sm:$0xff] %vm26, %v149
  %214 = vst.msk [vmem:[%s41 + $0x231] sm:$0xff] %vm26, %v150
  %215 = vst.msk [vmem:[%s41 + $0x241] sm:$0xff] %vm26, %v151
  %216 = vst.msk [vmem:[%s41 + $0x249] sm:$0xff] %vm26, %v152
  %217 = vst.msk [vmem:[%s41 + $0x259] sm:$0xff] %vm26, %v153
  %218 = vst.msk [vmem:[%s41 + $0x261] sm:$0xff] %vm26, %v154
  %219 = vst.msk [vmem:[%s41 + $0x271] sm:$0xff] %vm26, %v155
  %220 = vst.msk [vmem:[%s41 + $0x279] sm:$0xff] %vm26, %v156
  %221 = vst.msk [vmem:[%s41 + $0x289] sm:$0xff] %vm26, %v157
  %222 = vst.msk [vmem:[%s41 + $0x291] sm:$0xff] %vm26, %v158
  %223 = vst.msk [vmem:[%s41 + $0x2a1] sm:$0xff] %vm26, %v159
  %224 = vst.msk [vmem:[%s41 + $0x2a9] sm:$0xff] %vm26, %v160
  %225 = vst.msk [vmem:[%s41 + $0x2b9] sm:$0xff] %vm26, %v161
  %226 = vst.msk [vmem:[%s41 + $0x2c1] sm:$0xff] %vm26, %v162
  %227 = vst.msk [vmem:[%s41 + $0x2d1] sm:$0xff] %vm26, %v163
  %228 = vst.msk [vmem:[%s41 + $0x2d9] sm:$0xff] %vm26, %v164
  %229 = vst.msk [vmem:[%s41 + $0x2e9] sm:$0xff] %vm26, %v165
  %230 = vst.msk [vmem:[%s41 + $0x2f1] sm:$0xff] %vm26, %v166
  %231 = vst.msk [vmem:[%s41 + $0x301] sm:$0xff] %vm26, %v167
  %232 = vst.msk [vmem:[%s41 + $0x309] sm:$0xff] %vm26, %v168
  %233 = vst.msk [vmem:[%s41 + $0x319] sm:$0xff] %vm26, %v169
  %234 = vst.msk [vmem:[%s41 + $0x321] sm:$0xff] %vm26, %v170
  %v235 = vld [vmem:[#allocation2] sm:$0xff]
  %v236 = vld [vmem:[#allocation2 + $0x8] sm:$0xff]
  %v237 = vld [vmem:[#allocation2 + $0x18] sm:$0xff]
  %v238 = vld [vmem:[#allocation2 + $0x20] sm:$0xff]
  %v239 = vld [vmem:[#allocation2 + $0x30] sm:$0xff]
  %v240 = vld [vmem:[#allocation2 + $0x38] sm:$0xff]
  %v241 = vld [vmem:[#allocation2 + $0x48] sm:$0xff]
  %v242 = vld [vmem:[#allocation2 + $0x50] sm:$0xff]
  %v243 = vld [vmem:[#allocation2 + $0x60] sm:$0xff]
  %v244 = vld [vmem:[#allocation2 + $0x68] sm:$0xff]
  %v245 = vld [vmem:[#allocation2 + $0x78] sm:$0xff]
  %v246 = vld [vmem:[#allocation2 + $0x80] sm:$0xff]
  %v247 = vld [vmem:[#allocation2 + $0x90] sm:$0xff]
  %v248 = vld [vmem:[#allocation2 + $0x98] sm:$0xff]
  %v249 = vld [vmem:[#allocation2 + $0xa8] sm:$0xff]
  %v250 = vld [vmem:[#allocation2 + $0xb0] sm:$0xff]
  %v251 = vld [vmem:[#allocation2 + $0xc0] sm:$0xff]
  %v252 = vld [vmem:[#allocation2 + $0xc8] sm:$0xff]
  %v253 = vld [vmem:[#allocation2 + $0xd8] sm:$0xff]
  %v254 = vld [vmem:[#allocation2 + $0xe0] sm:$0xff]
  %v255 = vld [vmem:[#allocation2 + $0xf0] sm:$0xff]
  %v256 = vld [vmem:[#allocation2 + $0xf8] sm:$0xff]
  %v257 = vld [vmem:[#allocation2 + $0x108] sm:$0xff]
  %v258 = vld [vmem:[#allocation2 + $0x110] sm:$0xff]
  %v259 = vld [vmem:[#allocation2 + $0x120] sm:$0xff]
  %v260 = vld [vmem:[#allocation2 + $0x128] sm:$0xff]
  %v261 = vld [vmem:[#allocation2 + $0x138] sm:$0xff]
  %v262 = vld [vmem:[#allocation2 + $0x140] sm:$0xff]
  %v263 = vld [vmem:[#allocation2 + $0x150] sm:$0xff]
  %v264 = vld [vmem:[#allocation2 + $0x158] sm:$0xff]
  %v265 = vld [vmem:[#allocation2 + $0x168] sm:$0xff]
  %v266 = vld [vmem:[#allocation2 + $0x170] sm:$0xff]
  %v267 = vld [vmem:[#allocation2 + $0x1b0] sm:$0xff]
  %v268 = vld [vmem:[#allocation2 + $0x1b8] sm:$0xff]
  %v269 = vld [vmem:[#allocation2 + $0x1c8] sm:$0xff]
  %v270 = vld [vmem:[#allocation2 + $0x1d0] sm:$0xff]
  %v271 = vld [vmem:[#allocation2 + $0x1e0] sm:$0xff]
  %v272 = vld [vmem:[#allocation2 + $0x1e8] sm:$0xff]
  %v273 = vld [vmem:[#allocation2 + $0x1f8] sm:$0xff]
  %v274 = vld [vmem:[#allocation2 + $0x200] sm:$0xff]
  %v275 = vld [vmem:[#allocation2 + $0x210] sm:$0xff]
  %v276 = vld [vmem:[#allocation2 + $0x218] sm:$0xff]
  %v277 = vld [vmem:[#allocation2 + $0x228] sm:$0xff]
  %v278 = vld [vmem:[#allocation2 + $0x230] sm:$0xff]
  %v279 = vld [vmem:[#allocation2 + $0x240] sm:$0xff]
  %v280 = vld [vmem:[#allocation2 + $0x248] sm:$0xff]
  %v281 = vld [vmem:[#allocation2 + $0x258] sm:$0xff]
  %v282 = vld [vmem:[#allocation2 + $0x260] sm:$0xff]
  %v283 = vld [vmem:[#allocation2 + $0x270] sm:$0xff]
  %v284 = vld [vmem:[#allocation2 + $0x278] sm:$0xff]
  %v285 = vld [vmem:[#allocation2 + $0x288] sm:$0xff]
  %v286 = vld [vmem:[#allocation2 + $0x290] sm:$0xff]
  %v287 = vld [vmem:[#allocation2 + $0x2a0] sm:$0xff]
  %v288 = vld [vmem:[#allocation2 + $0x2a8] sm:$0xff]
  %v289 = vld [vmem:[#allocation2 + $0x2b8] sm:$0xff]
  %v290 = vld [vmem:[#allocation2 + $0x2c0] sm:$0xff]
  %v291 = vld [vmem:[#allocation2 + $0x2d0] sm:$0xff]
  %v292 = vld [vmem:[#allocation2 + $0x2d8] sm:$0xff]
  %v293 = vld [vmem:[#allocation2 + $0x2e8] sm:$0xff]
  %v294 = vld [vmem:[#allocation2 + $0x2f0] sm:$0xff]
  %v295 = vld [vmem:[#allocation2 + $0x300] sm:$0xff]
  %v296 = vld [vmem:[#allocation2 + $0x308] sm:$0xff]
  %v297 = vld [vmem:[#allocation2 + $0x318] sm:$0xff]
  %v298 = vld [vmem:[#allocation2 + $0x320] sm:$0xff]
  %299 = vst.msk [vmem:[#allocation3] sm:$0xff] %vm26, %v235
  %300 = vst.msk [vmem:[#allocation3 + $0x8] sm:$0xff] %vm26, %v236
  %301 = vst.msk [vmem:[#allocation3 + $0x10] sm:$0xff] %vm26, %v237
  %302 = vst.msk [vmem:[#allocation3 + $0x18] sm:$0xff] %vm26, %v238
  %303 = vst.msk [vmem:[#allocation3 + $0x20] sm:$0xff] %vm26, %v239
  %304 = vst.msk [vmem:[#allocation3 + $0x28] sm:$0xff] %vm26, %v240
  %305 = vst.msk [vmem:[#allocation3 + $0x30] sm:$0xff] %vm26, %v241
  %306 = vst.msk [vmem:[#allocation3 + $0x38] sm:$0xff] %vm26, %v242
  %307 = vst.msk [vmem:[#allocation3 + $0x40] sm:$0xff] %vm26, %v243
  %308 = vst.msk [vmem:[#allocation3 + $0x48] sm:$0xff] %vm26, %v244
  %309 = vst.msk [vmem:[#allocation3 + $0x50] sm:$0xff] %vm26, %v245
  %310 = vst.msk [vmem:[#allocation3 + $0x58] sm:$0xff] %vm26, %v246
  %311 = vst.msk [vmem:[#allocation3 + $0x60] sm:$0xff] %vm26, %v247
  %312 = vst.msk [vmem:[#allocation3 + $0x68] sm:$0xff] %vm26, %v248
  %313 = vst.msk [vmem:[#allocation3 + $0x70] sm:$0xff] %vm26, %v249
  %314 = vst.msk [vmem:[#allocation3 + $0x78] sm:$0xff] %vm26, %v250
  %315 = vst.msk [vmem:[#allocation3 + $0x80] sm:$0xff] %vm26, %v251
  %316 = vst.msk [vmem:[#allocation3 + $0x88] sm:$0xff] %vm26, %v252
  %317 = vst.msk [vmem:[#allocation3 + $0x90] sm:$0xff] %vm26, %v253
  %318 = vst.msk [vmem:[#allocation3 + $0x98] sm:$0xff] %vm26, %v254
  %319 = vst.msk [vmem:[#allocation3 + $0xa0] sm:$0xff] %vm26, %v255
  %320 = vst.msk [vmem:[#allocation3 + $0xa8] sm:$0xff] %vm26, %v256
  %321 = vst.msk [vmem:[#allocation3 + $0xb0] sm:$0xff] %vm26, %v257
  %322 = vst.msk [vmem:[#allocation3 + $0xb8] sm:$0xff] %vm26, %v258
  %323 = vst.msk [vmem:[#allocation3 + $0xc0] sm:$0xff] %vm26, %v259
  %324 = vst.msk [vmem:[#allocation3 + $0xc8] sm:$0xff] %vm26, %v260
  %325 = vst.msk [vmem:[#allocation3 + $0xd0] sm:$0xff] %vm26, %v261
  %326 = vst.msk [vmem:[#allocation3 + $0xd8] sm:$0xff] %vm26, %v262
  %327 = vst.msk [vmem:[#allocation3 + $0xe0] sm:$0xff] %vm26, %v263
  %328 = vst.msk [vmem:[#allocation3 + $0xe8] sm:$0xff] %vm26, %v264
  %329 = vst.msk [vmem:[#allocation3 + $0xf0] sm:$0xff] %vm26, %v265
  %330 = vst.msk [vmem:[#allocation3 + $0xf8] sm:$0xff] %vm26, %v266
  %331 = vst.msk [vmem:[#allocation3 + $0x100] sm:$0xff] %vm26, %v267
  %332 = vst.msk [vmem:[#allocation3 + $0x108] sm:$0xff] %vm26, %v268
  %333 = vst.msk [vmem:[#allocation3 + $0x110] sm:$0xff] %vm26, %v269
  %334 = vst.msk [vmem:[#allocation3 + $0x118] sm:$0xff] %vm26, %v270
  %335 = vst.msk [vmem:[#allocation3 + $0x120] sm:$0xff] %vm26, %v271
  %336 = vst.msk [vmem:[#allocation3 + $0x128] sm:$0xff] %vm26, %v272
  %337 = vst.msk [vmem:[#allocation3 + $0x130] sm:$0xff] %vm26, %v273
  %338 = vst.msk [vmem:[#allocation3 + $0x138] sm:$0xff] %vm26, %v274
  %339 = vst.msk [vmem:[#allocation3 + $0x140] sm:$0xff] %vm26, %v275
  %340 = vst.msk [vmem:[#allocation3 + $0x148] sm:$0xff] %vm26, %v276
  %341 = vst.msk [vmem:[#allocation3 + $0x150] sm:$0xff] %vm26, %v277
  %342 = vst.msk [vmem:[#allocation3 + $0x158] sm:$0xff] %vm26, %v278
  %343 = vst.msk [vmem:[#allocation3 + $0x160] sm:$0xff] %vm26, %v279
  %344 = vst.msk [vmem:[#allocation3 + $0x168] sm:$0xff] %vm26, %v280
  %345 = vst.msk [vmem:[#allocation3 + $0x170] sm:$0xff] %vm26, %v281
  %346 = vst.msk [vmem:[#allocation3 + $0x178] sm:$0xff] %vm26, %v282
  %347 = vst.msk [vmem:[#allocation3 + $0x180] sm:$0xff] %vm26, %v283
  %348 = vst.msk [vmem:[#allocation3 + $0x188] sm:$0xff] %vm26, %v284
  %349 = vst.msk [vmem:[#allocation3 + $0x190] sm:$0xff] %vm26, %v285
  %350 = vst.msk [vmem:[#allocation3 + $0x198] sm:$0xff] %vm26, %v286
  %351 = vst.msk [vmem:[#allocation3 + $0x1a0] sm:$0xff] %vm26, %v287
  %352 = vst.msk [vmem:[#allocation3 + $0x1a8] sm:$0xff] %vm26, %v288
  %353 = vst.msk [vmem:[#allocation3 + $0x1b0] sm:$0xff] %vm26, %v289
  %354 = vst.msk [vmem:[#allocation3 + $0x1b8] sm:$0xff] %vm26, %v290
  %355 = vst.msk [vmem:[#allocation3 + $0x1c0] sm:$0xff] %vm26, %v291
  %356 = vst.msk [vmem:[#allocation3 + $0x1c8] sm:$0xff] %vm26, %v292
  %357 = vst.msk [vmem:[#allocation3 + $0x1d0] sm:$0xff] %vm26, %v293
  %358 = vst.msk [vmem:[#allocation3 + $0x1d8] sm:$0xff] %vm26, %v294
  %359 = vst.msk [vmem:[#allocation3 + $0x1e0] sm:$0xff] %vm26, %v295
  %360 = vst.msk [vmem:[#allocation3 + $0x1e8] sm:$0xff] %vm26, %v296
  %361 = vst.msk [vmem:[#allocation3 + $0x1f0] sm:$0xff] %vm26, %v297
  %362 = vst.msk [vmem:[#allocation3 + $0x1f8] sm:$0xff] %vm26, %v298
  %v363 = vld [vmem:[#allocation2 + $0x1] sm:$0xff]
  %v364 = vld [vmem:[#allocation2 + $0x9] sm:$0xff]
  %v365 = vld [vmem:[#allocation2 + $0x19] sm:$0xff]
  %v366 = vld [vmem:[#allocation2 + $0x21] sm:$0xff]
  %v367 = vld [vmem:[#allocation2 + $0x31] sm:$0xff]
  %v368 = vld [vmem:[#allocation2 + $0x39] sm:$0xff]
  %v369 = vld [vmem:[#allocation2 + $0x49] sm:$0xff]
  %v370 = vld [vmem:[#allocation2 + $0x51] sm:$0xff]
  %v371 = vld [vmem:[#allocation2 + $0x61] sm:$0xff]
  %v372 = vld [vmem:[#allocation2 + $0x69] sm:$0xff]
  %v373 = vld [vmem:[#allocation2 + $0x79] sm:$0xff]
  %v374 = vld [vmem:[#allocation2 + $0x81] sm:$0xff]
  %v375 = vld [vmem:[#allocation2 + $0x91] sm:$0xff]
  %v376 = vld [vmem:[#allocation2 + $0x99] sm:$0xff]
  %v377 = vld [vmem:[#allocation2 + $0xa9] sm:$0xff]
  %v378 = vld [vmem:[#allocation2 + $0xb1] sm:$0xff]
  %v379 = vld [vmem:[#allocation2 + $0xc1] sm:$0xff]
  %v380 = vld [vmem:[#allocation2 + $0xc9] sm:$0xff]
  %v381 = vld [vmem:[#allocation2 + $0xd9] sm:$0xff]
  %v382 = vld [vmem:[#allocation2 + $0xe1] sm:$0xff]
  %v383 = vld [vmem:[#allocation2 + $0xf1] sm:$0xff]
  %v384 = vld [vmem:[#allocation2 + $0xf9] sm:$0xff]
  %v385 = vld [vmem:[#allocation2 + $0x109] sm:$0xff]
  %v386 = vld [vmem:[#allocation2 + $0x111] sm:$0xff]
  %v387 = vld [vmem:[#allocation2 + $0x121] sm:$0xff]
  %v388 = vld [vmem:[#allocation2 + $0x129] sm:$0xff]
  %v389 = vld [vmem:[#allocation2 + $0x139] sm:$0xff]
  %v390 = vld [vmem:[#allocation2 + $0x141] sm:$0xff]
  %v391 = vld [vmem:[#allocation2 + $0x151] sm:$0xff]
  %v392 = vld [vmem:[#allocation2 + $0x159] sm:$0xff]
  %v393 = vld [vmem:[#allocation2 + $0x169] sm:$0xff]
  %v394 = vld [vmem:[#allocation2 + $0x171] sm:$0xff]
  %v395 = vld [vmem:[#allocation2 + $0x1b1] sm:$0xff]
  %v396 = vld [vmem:[#allocation2 + $0x1b9] sm:$0xff]
  %v397 = vld [vmem:[#allocation2 + $0x1c9] sm:$0xff]
  %v398 = vld [vmem:[#allocation2 + $0x1d1] sm:$0xff]
  %v399 = vld [vmem:[#allocation2 + $0x1e1] sm:$0xff]
  %v400 = vld [vmem:[#allocation2 + $0x1e9] sm:$0xff]
  %v401 = vld [vmem:[#allocation2 + $0x1f9] sm:$0xff]
  %v402 = vld [vmem:[#allocation2 + $0x201] sm:$0xff]
  %v403 = vld [vmem:[#allocation2 + $0x211] sm:$0xff]
  %v404 = vld [vmem:[#allocation2 + $0x219] sm:$0xff]
  %v405 = vld [vmem:[#allocation2 + $0x229] sm:$0xff]
  %v406 = vld [vmem:[#allocation2 + $0x231] sm:$0xff]
  %v407 = vld [vmem:[#allocation2 + $0x241] sm:$0xff]
  %v408 = vld [vmem:[#allocation2 + $0x249] sm:$0xff]
  %v409 = vld [vmem:[#allocation2 + $0x259] sm:$0xff]
  %v410 = vld [vmem:[#allocation2 + $0x261] sm:$0xff]
  %v411 = vld [vmem:[#allocation2 + $0x271] sm:$0xff]
  %v412 = vld [vmem:[#allocation2 + $0x279] sm:$0xff]
  %v413 = vld [vmem:[#allocation2 + $0x289] sm:$0xff]
  %v414 = vld [vmem:[#allocation2 + $0x291] sm:$0xff]
  %v415 = vld [vmem:[#allocation2 + $0x2a1] sm:$0xff]
  %v416 = vld [vmem:[#allocation2 + $0x2a9] sm:$0xff]
  %v417 = vld [vmem:[#allocation2 + $0x2b9] sm:$0xff]
  %v418 = vld [vmem:[#allocation2 + $0x2c1] sm:$0xff]
  %v419 = vld [vmem:[#allocation2 + $0x2d1] sm:$0xff]
  %v420 = vld [vmem:[#allocation2 + $0x2d9] sm:$0xff]
  %v421 = vld [vmem:[#allocation2 + $0x2e9] sm:$0xff]
  %v422 = vld [vmem:[#allocation2 + $0x2f1] sm:$0xff]
  %v423 = vld [vmem:[#allocation2 + $0x301] sm:$0xff]
  %v424 = vld [vmem:[#allocation2 + $0x309] sm:$0xff]
  %v425 = vld [vmem:[#allocation2 + $0x319] sm:$0xff]
  %v426 = vld [vmem:[#allocation2 + $0x321] sm:$0xff]
  %491 = vrot.lane.b32.xlu0 %v363, 4
  %v492 = vpop.permute.xlu0 %491
  %493 = vrot.lane.b32.xlu0 %v364, 4
  %v494 = vpop.permute.xlu0 %493
  %495 = vrot.lane.b32.xlu0 %v365, 4
  %v496 = vpop.permute.xlu0 %495
  %497 = vrot.lane.b32.xlu0 %v366, 4
  %v498 = vpop.permute.xlu0 %497
  %499 = vrot.lane.b32.xlu0 %v367, 4
  %v500 = vpop.permute.xlu0 %499
  %501 = vrot.lane.b32.xlu0 %v368, 4
  %v502 = vpop.permute.xlu0 %501
  %503 = vrot.lane.b32.xlu0 %v369, 4
  %v504 = vpop.permute.xlu0 %503
  %505 = vrot.lane.b32.xlu0 %v370, 4
  %v506 = vpop.permute.xlu0 %505
  %507 = vrot.lane.b32.xlu0 %v371, 4
  %v508 = vpop.permute.xlu0 %507
  %509 = vrot.lane.b32.xlu0 %v372, 4
  %v510 = vpop.permute.xlu0 %509
  %511 = vrot.lane.b32.xlu0 %v373, 4
  %v512 = vpop.permute.xlu0 %511
  %513 = vrot.lane.b32.xlu0 %v374, 4
  %v514 = vpop.permute.xlu0 %513
  %515 = vrot.lane.b32.xlu0 %v375, 4
  %v516 = vpop.permute.xlu0 %515
  %517 = vrot.lane.b32.xlu0 %v376, 4
  %v518 = vpop.permute.xlu0 %517
  %519 = vrot.lane.b32.xlu0 %v377, 4
  %v520 = vpop.permute.xlu0 %519
  %521 = vrot.lane.b32.xlu0 %v378, 4
  %v522 = vpop.permute.xlu0 %521
  %523 = vrot.lane.b32.xlu0 %v379, 4
  %v524 = vpop.permute.xlu0 %523
  %525 = vrot.lane.b32.xlu0 %v380, 4
  %v526 = vpop.permute.xlu0 %525
  %527 = vrot.lane.b32.xlu0 %v381, 4
  %v528 = vpop.permute.xlu0 %527
  %529 = vrot.lane.b32.xlu0 %v382, 4
  %v530 = vpop.permute.xlu0 %529
  %531 = vrot.lane.b32.xlu0 %v383, 4
  %v532 = vpop.permute.xlu0 %531
  %533 = vrot.lane.b32.xlu0 %v384, 4
  %v534 = vpop.permute.xlu0 %533
  %535 = vrot.lane.b32.xlu0 %v385, 4
  %v536 = vpop.permute.xlu0 %535
  %537 = vrot.lane.b32.xlu0 %v386, 4
  %v538 = vpop.permute.xlu0 %537
  %539 = vrot.lane.b32.xlu0 %v387, 4
  %v540 = vpop.permute.xlu0 %539
  %541 = vrot.lane.b32.xlu0 %v388, 4
  %v542 = vpop.permute.xlu0 %541
  %543 = vrot.lane.b32.xlu0 %v389, 4
  %v544 = vpop.permute.xlu0 %543
  %545 = vrot.lane.b32.xlu0 %v390, 4
  %v546 = vpop.permute.xlu0 %545
  %547 = vrot.lane.b32.xlu0 %v391, 4
  %v548 = vpop.permute.xlu0 %547
  %549 = vrot.lane.b32.xlu0 %v392, 4
  %v550 = vpop.permute.xlu0 %549
  %551 = vrot.lane.b32.xlu0 %v393, 4
  %v552 = vpop.permute.xlu0 %551
  %553 = vrot.lane.b32.xlu0 %v394, 4
  %v554 = vpop.permute.xlu0 %553
  %555 = vrot.lane.b32.xlu0 %v395, 4
  %v556 = vpop.permute.xlu0 %555
  %557 = vrot.lane.b32.xlu0 %v396, 4
  %v558 = vpop.permute.xlu0 %557
  %559 = vrot.lane.b32.xlu0 %v397, 4
  %v560 = vpop.permute.xlu0 %559
  %561 = vrot.lane.b32.xlu0 %v398, 4
  %v562 = vpop.permute.xlu0 %561
  %563 = vrot.lane.b32.xlu0 %v399, 4
  %v564 = vpop.permute.xlu0 %563
  %565 = vrot.lane.b32.xlu0 %v400, 4
  %v566 = vpop.permute.xlu0 %565
  %567 = vrot.lane.b32.xlu0 %v401, 4
  %v568 = vpop.permute.xlu0 %567
  %569 = vrot.lane.b32.xlu0 %v402, 4
  %v570 = vpop.permute.xlu0 %569
  %571 = vrot.lane.b32.xlu0 %v403, 4
  %v572 = vpop.permute.xlu0 %571
  %573 = vrot.lane.b32.xlu0 %v404, 4
  %v574 = vpop.permute.xlu0 %573
  %575 = vrot.lane.b32.xlu0 %v405, 4
  %v576 = vpop.permute.xlu0 %575
  %577 = vrot.lane.b32.xlu0 %v406, 4
  %v578 = vpop.permute.xlu0 %577
  %579 = vrot.lane.b32.xlu0 %v407, 4
  %v580 = vpop.permute.xlu0 %579
  %581 = vrot.lane.b32.xlu0 %v408, 4
  %v582 = vpop.permute.xlu0 %581
  %583 = vrot.lane.b32.xlu0 %v409, 4
  %v584 = vpop.permute.xlu0 %583
  %585 = vrot.lane.b32.xlu0 %v410, 4
  %v586 = vpop.permute.xlu0 %585
  %587 = vrot.lane.b32.xlu0 %v411, 4
  %v588 = vpop.permute.xlu0 %587
  %589 = vrot.lane.b32.xlu0 %v412, 4
  %v590 = vpop.permute.xlu0 %589
  %591 = vrot.lane.b32.xlu0 %v413, 4
  %v592 = vpop.permute.xlu0 %591
  %593 = vrot.lane.b32.xlu0 %v414, 4
  %v594 = vpop.permute.xlu0 %593
  %595 = vrot.lane.b32.xlu0 %v415, 4
  %v596 = vpop.permute.xlu0 %595
  %597 = vrot.lane.b32.xlu0 %v416, 4
  %v598 = vpop.permute.xlu0 %597
  %599 = vrot.lane.b32.xlu0 %v417, 4
  %v600 = vpop.permute.xlu0 %599
  %601 = vrot.lane.b32.xlu0 %v418, 4
  %v602 = vpop.permute.xlu0 %601
  %603 = vrot.lane.b32.xlu0 %v419, 4
  %v604 = vpop.permute.xlu0 %603
  %605 = vrot.lane.b32.xlu0 %v420, 4
  %v606 = vpop.permute.xlu0 %605
  %607 = vrot.lane.b32.xlu0 %v421, 4
  %v608 = vpop.permute.xlu0 %607
  %609 = vrot.lane.b32.xlu0 %v422, 4
  %v610 = vpop.permute.xlu0 %609
  %611 = vrot.lane.b32.xlu0 %v423, 4
  %v612 = vpop.permute.xlu0 %611
  %613 = vrot.lane.b32.xlu0 %v424, 4
  %v614 = vpop.permute.xlu0 %613
  %615 = vrot.lane.b32.xlu0 %v425, 4
  %v616 = vpop.permute.xlu0 %615
  %617 = vrot.lane.b32.xlu0 %v426, 4
  %v618 = vpop.permute.xlu0 %617
  %vm683 = vcmask 64544
  %684 = vst.msk [vmem:[#allocation3] sm:$0xff] %vm683, %v492
  %685 = vst.msk [vmem:[#allocation3 + $0x8] sm:$0xff] %vm683, %v494
  %686 = vst.msk [vmem:[#allocation3 + $0x10] sm:$0xff] %vm683, %v496
  %687 = vst.msk [vmem:[#allocation3 + $0x18] sm:$0xff] %vm683, %v498
  %688 = vst.msk [vmem:[#allocation3 + $0x20] sm:$0xff] %vm683, %v500
  %689 = vst.msk [vmem:[#allocation3 + $0x28] sm:$0xff] %vm683, %v502
  %690 = vst.msk [vmem:[#allocation3 + $0x30] sm:$0xff] %vm683, %v504
  %691 = vst.msk [vmem:[#allocation3 + $0x38] sm:$0xff] %vm683, %v506
  %692 = vst.msk [vmem:[#allocation3 + $0x40] sm:$0xff] %vm683, %v508
  %693 = vst.msk [vmem:[#allocation3 + $0x48] sm:$0xff] %vm683, %v510
  %694 = vst.msk [vmem:[#allocation3 + $0x50] sm:$0xff] %vm683, %v512
  %695 = vst.msk [vmem:[#allocation3 + $0x58] sm:$0xff] %vm683, %v514
  %696 = vst.msk [vmem:[#allocation3 + $0x60] sm:$0xff] %vm683, %v516
  %697 = vst.msk [vmem:[#allocation3 + $0x68] sm:$0xff] %vm683, %v518
  %698 = vst.msk [vmem:[#allocation3 + $0x70] sm:$0xff] %vm683, %v520
  %699 = vst.msk [vmem:[#allocation3 + $0x78] sm:$0xff] %vm683, %v522
  %700 = vst.msk [vmem:[#allocation3 + $0x80] sm:$0xff] %vm683, %v524
  %701 = vst.msk [vmem:[#allocation3 + $0x88] sm:$0xff] %vm683, %v526
  %702 = vst.msk [vmem:[#allocation3 + $0x90] sm:$0xff] %vm683, %v528
  %703 = vst.msk [vmem:[#allocation3 + $0x98] sm:$0xff] %vm683, %v530
  %704 = vst.msk [vmem:[#allocation3 + $0xa0] sm:$0xff] %vm683, %v532
  %705 = vst.msk [vmem:[#allocation3 + $0xa8] sm:$0xff] %vm683, %v534
  %706 = vst.msk [vmem:[#allocation3 + $0xb0] sm:$0xff] %vm683, %v536
  %707 = vst.msk [vmem:[#allocation3 + $0xb8] sm:$0xff] %vm683, %v538
  %708 = vst.msk [vmem:[#allocation3 + $0xc0] sm:$0xff] %vm683, %v540
  %709 = vst.msk [vmem:[#allocation3 + $0xc8] sm:$0xff] %vm683, %v542
  %710 = vst.msk [vmem:[#allocation3 + $0xd0] sm:$0xff] %vm683, %v544
  %711 = vst.msk [vmem:[#allocation3 + $0xd8] sm:$0xff] %vm683, %v546
  %712 = vst.msk [vmem:[#allocation3 + $0xe0] sm:$0xff] %vm683, %v548
  %713 = vst.msk [vmem:[#allocation3 + $0xe8] sm:$0xff] %vm683, %v550
  %714 = vst.msk [vmem:[#allocation3 + $0xf0] sm:$0xff] %vm683, %v552
  %715 = vst.msk [vmem:[#allocation3 + $0xf8] sm:$0xff] %vm683, %v554
  %716 = vst.msk [vmem:[#allocation3 + $0x100] sm:$0xff] %vm683, %v556
  %717 = vst.msk [vmem:[#allocation3 + $0x108] sm:$0xff] %vm683, %v558
  %718 = vst.msk [vmem:[#allocation3 + $0x110] sm:$0xff] %vm683, %v560
  %719 = vst.msk [vmem:[#allocation3 + $0x118] sm:$0xff] %vm683, %v562
  %720 = vst.msk [vmem:[#allocation3 + $0x120] sm:$0xff] %vm683, %v564
  %721 = vst.msk [vmem:[#allocation3 + $0x128] sm:$0xff] %vm683, %v566
  %722 = vst.msk [vmem:[#allocation3 + $0x130] sm:$0xff] %vm683, %v568
  %723 = vst.msk [vmem:[#allocation3 + $0x138] sm:$0xff] %vm683, %v570
  %724 = vst.msk [vmem:[#allocation3 + $0x140] sm:$0xff] %vm683, %v572
  %725 = vst.msk [vmem:[#allocation3 + $0x148] sm:$0xff] %vm683, %v574
  %726 = vst.msk [vmem:[#allocation3 + $0x150] sm:$0xff] %vm683, %v576
  %727 = vst.msk [vmem:[#allocation3 + $0x158] sm:$0xff] %vm683, %v578
  %728 = vst.msk [vmem:[#allocation3 + $0x160] sm:$0xff] %vm683, %v580
  %729 = vst.msk [vmem:[#allocation3 + $0x168] sm:$0xff] %vm683, %v582
  %730 = vst.msk [vmem:[#allocation3 + $0x170] sm:$0xff] %vm683, %v584
  %731 = vst.msk [vmem:[#allocation3 + $0x178] sm:$0xff] %vm683, %v586
  %732 = vst.msk [vmem:[#allocation3 + $0x180] sm:$0xff] %vm683, %v588
  %733 = vst.msk [vmem:[#allocation3 + $0x188] sm:$0xff] %vm683, %v590
  %734 = vst.msk [vmem:[#allocation3 + $0x190] sm:$0xff] %vm683, %v592
  %735 = vst.msk [vmem:[#allocation3 + $0x198] sm:$0xff] %vm683, %v594
  %736 = vst.msk [vmem:[#allocation3 + $0x1a0] sm:$0xff] %vm683, %v596
  %737 = vst.msk [vmem:[#allocation3 + $0x1a8] sm:$0xff] %vm683, %v598
  %738 = vst.msk [vmem:[#allocation3 + $0x1b0] sm:$0xff] %vm683, %v600
  %739 = vst.msk [vmem:[#allocation3 + $0x1b8] sm:$0xff] %vm683, %v602
  %740 = vst.msk [vmem:[#allocation3 + $0x1c0] sm:$0xff] %vm683, %v604
  %741 = vst.msk [vmem:[#allocation3 + $0x1c8] sm:$0xff] %vm683, %v606
  %742 = vst.msk [vmem:[#allocation3 + $0x1d0] sm:$0xff] %vm683, %v608
  %743 = vst.msk [vmem:[#allocation3 + $0x1d8] sm:$0xff] %vm683, %v610
  %744 = vst.msk [vmem:[#allocation3 + $0x1e0] sm:$0xff] %vm683, %v612
  %745 = vst.msk [vmem:[#allocation3 + $0x1e8] sm:$0xff] %vm683, %v614
  %746 = vst.msk [vmem:[#allocation3 + $0x1f0] sm:$0xff] %vm683, %v616
  %747 = vst.msk [vmem:[#allocation3 + $0x1f8] sm:$0xff] %vm683, %v618
  %v748 = vld [vmem:[#allocation2 + $0x2] sm:$0xff]
  %v749 = vld [vmem:[#allocation2 + $0xa] sm:$0xff]
  %v750 = vld [vmem:[#allocation2 + $0x1a] sm:$0xff]
  %v751 = vld [vmem:[#allocation2 + $0x22] sm:$0xff]
  %v752 = vld [vmem:[#allocation2 + $0x32] sm:$0xff]
  %v753 = vld [vmem:[#allocation2 + $0x3a] sm:$0xff]
  %v754 = vld [vmem:[#allocation2 + $0x4a] sm:$0xff]
  %v755 = vld [vmem:[#allocation2 + $0x52] sm:$0xff]
  %v756 = vld [vmem:[#allocation2 + $0x62] sm:$0xff]
  %v757 = vld [vmem:[#allocation2 + $0x6a] sm:$0xff]
  %v758 = vld [vmem:[#allocation2 + $0x7a] sm:$0xff]
  %v759 = vld [vmem:[#allocation2 + $0x82] sm:$0xff]
  %v760 = vld [vmem:[#allocation2 + $0x92] sm:$0xff]
  %v761 = vld [vmem:[#allocation2 + $0x9a] sm:$0xff]
  %v762 = vld [vmem:[#allocation2 + $0xaa] sm:$0xff]
  %v763 = vld [vmem:[#allocation2 + $0xb2] sm:$0xff]
  %v764 = vld [vmem:[#allocation2 + $0xc2] sm:$0xff]
  %v765 = vld [vmem:[#allocation2 + $0xca] sm:$0xff]
  %v766 = vld [vmem:[#allocation2 + $0xda] sm:$0xff]
  %v767 = vld [vmem:[#allocation2 + $0xe2] sm:$0xff]
  %v768 = vld [vmem:[#allocation2 + $0xf2] sm:$0xff]
  %v769 = vld [vmem:[#allocation2 + $0xfa] sm:$0xff]
  %v770 = vld [vmem:[#allocation2 + $0x10a] sm:$0xff]
  %v771 = vld [vmem:[#allocation2 + $0x112] sm:$0xff]
  %v772 = vld [vmem:[#allocation2 + $0x122] sm:$0xff]
  %v773 = vld [vmem:[#allocation2 + $0x12a] sm:$0xff]
  %v774 = vld [vmem:[#allocation2 + $0x13a] sm:$0xff]
  %v775 = vld [vmem:[#allocation2 + $0x142] sm:$0xff]
  %v776 = vld [vmem:[#allocation2 + $0x152] sm:$0xff]
  %v777 = vld [vmem:[#allocation2 + $0x15a] sm:$0xff]
  %v778 = vld [vmem:[#allocation2 + $0x16a] sm:$0xff]
  %v779 = vld [vmem:[#allocation2 + $0x172] sm:$0xff]
  %v780 = vld [vmem:[#allocation2 + $0x1b2] sm:$0xff]
  %v781 = vld [vmem:[#allocation2 + $0x1ba] sm:$0xff]
  %v782 = vld [vmem:[#allocation2 + $0x1ca] sm:$0xff]
  %v783 = vld [vmem:[#allocation2 + $0x1d2] sm:$0xff]
  %v784 = vld [vmem:[#allocation2 + $0x1e2] sm:$0xff]
  %v785 = vld [vmem:[#allocation2 + $0x1ea] sm:$0xff]
  %v786 = vld [vmem:[#allocation2 + $0x1fa] sm:$0xff]
  %v787 = vld [vmem:[#allocation2 + $0x202] sm:$0xff]
  %v788 = vld [vmem:[#allocation2 + $0x212] sm:$0xff]
  %v789 = vld [vmem:[#allocation2 + $0x21a] sm:$0xff]
  %v790 = vld [vmem:[#allocation2 + $0x22a] sm:$0xff]
  %v791 = vld [vmem:[#allocation2 + $0x232] sm:$0xff]
  %v792 = vld [vmem:[#allocation2 + $0x242] sm:$0xff]
  %v793 = vld [vmem:[#allocation2 + $0x24a] sm:$0xff]
  %v794 = vld [vmem:[#allocation2 + $0x25a] sm:$0xff]
  %v795 = vld [vmem:[#allocation2 + $0x262] sm:$0xff]
  %v796 = vld [vmem:[#allocation2 + $0x272] sm:$0xff]
  %v797 = vld [vmem:[#allocation2 + $0x27a] sm:$0xff]
  %v798 = vld [vmem:[#allocation2 + $0x28a] sm:$0xff]
  %v799 = vld [vmem:[#allocation2 + $0x292] sm:$0xff]
  %v800 = vld [vmem:[#allocation2 + $0x2a2] sm:$0xff]
  %v801 = vld [vmem:[#allocation2 + $0x2aa] sm:$0xff]
  %v802 = vld [vmem:[#allocation2 + $0x2ba] sm:$0xff]
  %v803 = vld [vmem:[#allocation2 + $0x2c2] sm:$0xff]
  %v804 = vld [vmem:[#allocation2 + $0x2d2] sm:$0xff]
  %v805 = vld [vmem:[#allocation2 + $0x2da] sm:$0xff]
  %v806 = vld [vmem:[#allocation2 + $0x2ea] sm:$0xff]
  %v807 = vld [vmem:[#allocation2 + $0x2f2] sm:$0xff]
  %v808 = vld [vmem:[#allocation2 + $0x302] sm:$0xff]
  %v809 = vld [vmem:[#allocation2 + $0x30a] sm:$0xff]
  %v810 = vld [vmem:[#allocation2 + $0x31a] sm:$0xff]
  %v811 = vld [vmem:[#allocation2 + $0x322] sm:$0xff]
  %876 = vrot.lane.b32.xlu0 %v748, 8
  %v877 = vpop.permute.xlu0 %876
  %878 = vrot.lane.b32.xlu0 %v749, 8
  %v879 = vpop.permute.xlu0 %878
  %880 = vrot.lane.b32.xlu0 %v750, 8
  %v881 = vpop.permute.xlu0 %880
  %882 = vrot.lane.b32.xlu0 %v751, 8
  %v883 = vpop.permute.xlu0 %882
  %884 = vrot.lane.b32.xlu0 %v752, 8
  %v885 = vpop.permute.xlu0 %884
  %886 = vrot.lane.b32.xlu0 %v753, 8
  %v887 = vpop.permute.xlu0 %886
  %888 = vrot.lane.b32.xlu0 %v754, 8
  %v889 = vpop.permute.xlu0 %888
  %890 = vrot.lane.b32.xlu0 %v755, 8
  %v891 = vpop.permute.xlu0 %890
  %892 = vrot.lane.b32.xlu0 %v756, 8
  %v893 = vpop.permute.xlu0 %892
  %894 = vrot.lane.b32.xlu0 %v757, 8
  %v895 = vpop.permute.xlu0 %894
  %896 = vrot.lane.b32.xlu0 %v758, 8
  %v897 = vpop.permute.xlu0 %896
  %898 = vrot.lane.b32.xlu0 %v759, 8
  %v899 = vpop.permute.xlu0 %898
  %900 = vrot.lane.b32.xlu0 %v760, 8
  %v901 = vpop.permute.xlu0 %900
  %902 = vrot.lane.b32.xlu0 %v761, 8
  %v903 = vpop.permute.xlu0 %902
  %904 = vrot.lane.b32.xlu0 %v762, 8
  %v905 = vpop.permute.xlu0 %904
  %906 = vrot.lane.b32.xlu0 %v763, 8
  %v907 = vpop.permute.xlu0 %906
  %908 = vrot.lane.b32.xlu0 %v764, 8
  %v909 = vpop.permute.xlu0 %908
  %910 = vrot.lane.b32.xlu0 %v765, 8
  %v911 = vpop.permute.xlu0 %910
  %912 = vrot.lane.b32.xlu0 %v766, 8
  %v913 = vpop.permute.xlu0 %912
  %914 = vrot.lane.b32.xlu0 %v767, 8
  %v915 = vpop.permute.xlu0 %914
  %916 = vrot.lane.b32.xlu0 %v768, 8
  %v917 = vpop.permute.xlu0 %916
  %918 = vrot.lane.b32.xlu0 %v769, 8
  %v919 = vpop.permute.xlu0 %918
  %920 = vrot.lane.b32.xlu0 %v770, 8
  %v921 = vpop.permute.xlu0 %920
  %922 = vrot.lane.b32.xlu0 %v771, 8
  %v923 = vpop.permute.xlu0 %922
  %924 = vrot.lane.b32.xlu0 %v772, 8
  %v925 = vpop.permute.xlu0 %924
  %926 = vrot.lane.b32.xlu0 %v773, 8
  %v927 = vpop.permute.xlu0 %926
  %928 = vrot.lane.b32.xlu0 %v774, 8
  %v929 = vpop.permute.xlu0 %928
  %930 = vrot.lane.b32.xlu0 %v775, 8
  %v931 = vpop.permute.xlu0 %930
  %932 = vrot.lane.b32.xlu0 %v776, 8
  %v933 = vpop.permute.xlu0 %932
  %934 = vrot.lane.b32.xlu0 %v777, 8
  %v935 = vpop.permute.xlu0 %934
  %936 = vrot.lane.b32.xlu0 %v778, 8
  %v937 = vpop.permute.xlu0 %936
  %938 = vrot.lane.b32.xlu0 %v779, 8
  %v939 = vpop.permute.xlu0 %938
  %940 = vrot.lane.b32.xlu0 %v780, 8
  %v941 = vpop.permute.xlu0 %940
  %942 = vrot.lane.b32.xlu0 %v781, 8
  %v943 = vpop.permute.xlu0 %942
  %944 = vrot.lane.b32.xlu0 %v782, 8
  %v945 = vpop.permute.xlu0 %944
  %946 = vrot.lane.b32.xlu0 %v783, 8
  %v947 = vpop.permute.xlu0 %946
  %948 = vrot.lane.b32.xlu0 %v784, 8
  %v949 = vpop.permute.xlu0 %948
  %950 = vrot.lane.b32.xlu0 %v785, 8
  %v951 = vpop.permute.xlu0 %950
  %952 = vrot.lane.b32.xlu0 %v786, 8
  %v953 = vpop.permute.xlu0 %952
  %954 = vrot.lane.b32.xlu0 %v787, 8
  %v955 = vpop.permute.xlu0 %954
  %956 = vrot.lane.b32.xlu0 %v788, 8
  %v957 = vpop.permute.xlu0 %956
  %958 = vrot.lane.b32.xlu0 %v789, 8
  %v959 = vpop.permute.xlu0 %958
  %960 = vrot.lane.b32.xlu0 %v790, 8
  %v961 = vpop.permute.xlu0 %960
  %962 = vrot.lane.b32.xlu0 %v791, 8
  %v963 = vpop.permute.xlu0 %962
  %964 = vrot.lane.b32.xlu0 %v792, 8
  %v965 = vpop.permute.xlu0 %964
  %966 = vrot.lane.b32.xlu0 %v793, 8
  %v967 = vpop.permute.xlu0 %966
  %968 = vrot.lane.b32.xlu0 %v794, 8
  %v969 = vpop.permute.xlu0 %968
  %970 = vrot.lane.b32.xlu0 %v795, 8
  %v971 = vpop.permute.xlu0 %970
  %972 = vrot.lane.b32.xlu0 %v796, 8
  %v973 = vpop.permute.xlu0 %972
  %974 = vrot.lane.b32.xlu0 %v797, 8
  %v975 = vpop.permute.xlu0 %974
  %976 = vrot.lane.b32.xlu0 %v798, 8
  %v977 = vpop.permute.xlu0 %976
  %978 = vrot.lane.b32.xlu0 %v799, 8
  %v979 = vpop.permute.xlu0 %978
  %980 = vrot.lane.b32.xlu0 %v800, 8
  %v981 = vpop.permute.xlu0 %980
  %982 = vrot.lane.b32.xlu0 %v801, 8
  %v983 = vpop.permute.xlu0 %982
  %984 = vrot.lane.b32.xlu0 %v802, 8
  %v985 = vpop.permute.xlu0 %984
  %986 = vrot.lane.b32.xlu0 %v803, 8
  %v987 = vpop.permute.xlu0 %986
  %988 = vrot.lane.b32.xlu0 %v804, 8
  %v989 = vpop.permute.xlu0 %988
  %990 = vrot.lane.b32.xlu0 %v805, 8
  %v991 = vpop.permute.xlu0 %990
  %992 = vrot.lane.b32.xlu0 %v806, 8
  %v993 = vpop.permute.xlu0 %992
  %994 = vrot.lane.b32.xlu0 %v807, 8
  %v995 = vpop.permute.xlu0 %994
  %996 = vrot.lane.b32.xlu0 %v808, 8
  %v997 = vpop.permute.xlu0 %996
  %998 = vrot.lane.b32.xlu0 %v809, 8
  %v999 = vpop.permute.xlu0 %998
  %1000 = vrot.lane.b32.xlu0 %v810, 8
  %v1001 = vpop.permute.xlu0 %1000
  %1002 = vrot.lane.b32.xlu0 %v811, 8
  %v1003 = vpop.permute.xlu0 %1002
  %vm1068 = vcmask 97344
  %1069 = vst.msk [vmem:[#allocation3] sm:$0xff] %vm1068, %v877
  %1070 = vst.msk [vmem:[#allocation3 + $0x8] sm:$0xff] %vm1068, %v879
  %1071 = vst.msk [vmem:[#allocation3 + $0x10] sm:$0xff] %vm1068, %v881
  %1072 = vst.msk [vmem:[#allocation3 + $0x18] sm:$0xff] %vm1068, %v883
  %1073 = vst.msk [vmem:[#allocation3 + $0x20] sm:$0xff] %vm1068, %v885
  %1074 = vst.msk [vmem:[#allocation3 + $0x28] sm:$0xff] %vm1068, %v887
  %1075 = vst.msk [vmem:[#allocation3 + $0x30] sm:$0xff] %vm1068, %v889
  %1076 = vst.msk [vmem:[#allocation3 + $0x38] sm:$0xff] %vm1068, %v891
  %1077 = vst.msk [vmem:[#allocation3 + $0x40] sm:$0xff] %vm1068, %v893
  %1078 = vst.msk [vmem:[#allocation3 + $0x48] sm:$0xff] %vm1068, %v895
  %1079 = vst.msk [vmem:[#allocation3 + $0x50] sm:$0xff] %vm1068, %v897
  %1080 = vst.msk [vmem:[#allocation3 + $0x58] sm:$0xff] %vm1068, %v899
  %1081 = vst.msk [vmem:[#allocation3 + $0x60] sm:$0xff] %vm1068, %v901
  %1082 = vst.msk [vmem:[#allocation3 + $0x68] sm:$0xff] %vm1068, %v903
  %1083 = vst.msk [vmem:[#allocation3 + $0x70] sm:$0xff] %vm1068, %v905
  %1084 = vst.msk [vmem:[#allocation3 + $0x78] sm:$0xff] %vm1068, %v907
  %1085 = vst.msk [vmem:[#allocation3 + $0x80] sm:$0xff] %vm1068, %v909
  %1086 = vst.msk [vmem:[#allocation3 + $0x88] sm:$0xff] %vm1068, %v911
  %1087 = vst.msk [vmem:[#allocation3 + $0x90] sm:$0xff] %vm1068, %v913
  %1088 = vst.msk [vmem:[#allocation3 + $0x98] sm:$0xff] %vm1068, %v915
  %1089 = vst.msk [vmem:[#allocation3 + $0xa0] sm:$0xff] %vm1068, %v917
  %1090 = vst.msk [vmem:[#allocation3 + $0xa8] sm:$0xff] %vm1068, %v919
  %1091 = vst.msk [vmem:[#allocation3 + $0xb0] sm:$0xff] %vm1068, %v921
  %1092 = vst.msk [vmem:[#allocation3 + $0xb8] sm:$0xff] %vm1068, %v923
  %1093 = vst.msk [vmem:[#allocation3 + $0xc0] sm:$0xff] %vm1068, %v925
  %1094 = vst.msk [vmem:[#allocation3 + $0xc8] sm:$0xff] %vm1068, %v927
  %1095 = vst.msk [vmem:[#allocation3 + $0xd0] sm:$0xff] %vm1068, %v929
  %1096 = vst.msk [vmem:[#allocation3 + $0xd8] sm:$0xff] %vm1068, %v931
  %1097 = vst.msk [vmem:[#allocation3 + $0xe0] sm:$0xff] %vm1068, %v933
  %1098 = vst.msk [vmem:[#allocation3 + $0xe8] sm:$0xff] %vm1068, %v935
  %1099 = vst.msk [vmem:[#allocation3 + $0xf0] sm:$0xff] %vm1068, %v937
  %1100 = vst.msk [vmem:[#allocation3 + $0xf8] sm:$0xff] %vm1068, %v939
  %1101 = vst.msk [vmem:[#allocation3 + $0x100] sm:$0xff] %vm1068, %v941
  %1102 = vst.msk [vmem:[#allocation3 + $0x108] sm:$0xff] %vm1068, %v943
  %1103 = vst.msk [vmem:[#allocation3 + $0x110] sm:$0xff] %vm1068, %v945
  %1104 = vst.msk [vmem:[#allocation3 + $0x118] sm:$0xff] %vm1068, %v947
  %1105 = vst.msk [vmem:[#allocation3 + $0x120] sm:$0xff] %vm1068, %v949
  %1106 = vst.msk [vmem:[#allocation3 + $0x128] sm:$0xff] %vm1068, %v951
  %1107 = vst.msk [vmem:[#allocation3 + $0x130] sm:$0xff] %vm1068, %v953
  %1108 = vst.msk [vmem:[#allocation3 + $0x138] sm:$0xff] %vm1068, %v955
  %1109 = vst.msk [vmem:[#allocation3 + $0x140] sm:$0xff] %vm1068, %v957
  %1110 = vst.msk [vmem:[#allocation3 + $0x148] sm:$0xff] %vm1068, %v959
  %1111 = vst.msk [vmem:[#allocation3 + $0x150] sm:$0xff] %vm1068, %v961
  %1112 = vst.msk [vmem:[#allocation3 + $0x158] sm:$0xff] %vm1068, %v963
  %1113 = vst.msk [vmem:[#allocation3 + $0x160] sm:$0xff] %vm1068, %v965
  %1114 = vst.msk [vmem:[#allocation3 + $0x168] sm:$0xff] %vm1068, %v967
  %1115 = vst.msk [vmem:[#allocation3 + $0x170] sm:$0xff] %vm1068, %v969
  %1116 = vst.msk [vmem:[#allocation3 + $0x178] sm:$0xff] %vm1068, %v971
  %1117 = vst.msk [vmem:[#allocation3 + $0x180] sm:$0xff] %vm1068, %v973
  %1118 = vst.msk [vmem:[#allocation3 + $0x188] sm:$0xff] %vm1068, %v975
  %1119 = vst.msk [vmem:[#allocation3 + $0x190] sm:$0xff] %vm1068, %v977
  %1120 = vst.msk [vmem:[#allocation3 + $0x198] sm:$0xff] %vm1068, %v979
  %1121 = vst.msk [vmem:[#allocation3 + $0x1a0] sm:$0xff] %vm1068, %v981
  %1122 = vst.msk [vmem:[#allocation3 + $0x1a8] sm:$0xff] %vm1068, %v983
  %1123 = vst.msk [vmem:[#allocation3 + $0x1b0] sm:$0xff] %vm1068, %v985
  %1124 = vst.msk [vmem:[#allocation3 + $0x1b8] sm:$0xff] %vm1068, %v987
  %1125 = vst.msk [vmem:[#allocation3 + $0x1c0] sm:$0xff] %vm1068, %v989
  %1126 = vst.msk [vmem:[#allocation3 + $0x1c8] sm:$0xff] %vm1068, %v991
  %1127 = vst.msk [vmem:[#allocation3 + $0x1d0] sm:$0xff] %vm1068, %v993
  %1128 = vst.msk [vmem:[#allocation3 + $0x1d8] sm:$0xff] %vm1068, %v995
  %1129 = vst.msk [vmem:[#allocation3 + $0x1e0] sm:$0xff] %vm1068, %v997
  %1130 = vst.msk [vmem:[#allocation3 + $0x1e8] sm:$0xff] %vm1068, %v999
  %1131 = vst.msk [vmem:[#allocation3 + $0x1f0] sm:$0xff] %vm1068, %v1001
  %1132 = vst.msk [vmem:[#allocation3 + $0x1f8] sm:$0xff] %vm1068, %v1003
  %v1133 = vld [vmem:[%s41] sm:$0xff]
  %v1134 = vld [vmem:[%s41 + $0x8] sm:$0xff]
  %v1135 = vld [vmem:[%s41 + $0x18] sm:$0xff]
  %v1136 = vld [vmem:[%s41 + $0x20] sm:$0xff]
  %v1137 = vld [vmem:[%s41 + $0x30] sm:$0xff]
  %v1138 = vld [vmem:[%s41 + $0x38] sm:$0xff]
  %v1139 = vld [vmem:[%s41 + $0x48] sm:$0xff]
  %v1140 = vld [vmem:[%s41 + $0x50] sm:$0xff]
  %v1141 = vld [vmem:[%s41 + $0x60] sm:$0xff]
  %v1142 = vld [vmem:[%s41 + $0x68] sm:$0xff]
  %v1143 = vld [vmem:[%s41 + $0x78] sm:$0xff]
  %v1144 = vld [vmem:[%s41 + $0x80] sm:$0xff]
  %v1145 = vld [vmem:[%s41 + $0x90] sm:$0xff]
  %v1146 = vld [vmem:[%s41 + $0x98] sm:$0xff]
  %v1147 = vld [vmem:[%s41 + $0xa8] sm:$0xff]
  %v1148 = vld [vmem:[%s41 + $0xb0] sm:$0xff]
  %v1149 = vld [vmem:[%s41 + $0xc0] sm:$0xff]
  %v1150 = vld [vmem:[%s41 + $0xc8] sm:$0xff]
  %v1151 = vld [vmem:[%s41 + $0xd8] sm:$0xff]
  %v1152 = vld [vmem:[%s41 + $0xe0] sm:$0xff]
  %v1153 = vld [vmem:[%s41 + $0xf0] sm:$0xff]
  %v1154 = vld [vmem:[%s41 + $0xf8] sm:$0xff]
  %v1155 = vld [vmem:[%s41 + $0x108] sm:$0xff]
  %v1156 = vld [vmem:[%s41 + $0x110] sm:$0xff]
  %v1157 = vld [vmem:[%s41 + $0x120] sm:$0xff]
  %v1158 = vld [vmem:[%s41 + $0x128] sm:$0xff]
  %v1159 = vld [vmem:[%s41 + $0x138] sm:$0xff]
  %v1160 = vld [vmem:[%s41 + $0x140] sm:$0xff]
  %v1161 = vld [vmem:[%s41 + $0x150] sm:$0xff]
  %v1162 = vld [vmem:[%s41 + $0x158] sm:$0xff]
  %v1163 = vld [vmem:[%s41 + $0x168] sm:$0xff]
  %v1164 = vld [vmem:[%s41 + $0x170] sm:$0xff]
  %v1165 = vld [vmem:[%s41 + $0x1b0] sm:$0xff]
  %v1166 = vld [vmem:[%s41 + $0x1b8] sm:$0xff]
  %v1167 = vld [vmem:[%s41 + $0x1c8] sm:$0xff]
  %v1168 = vld [vmem:[%s41 + $0x1d0] sm:$0xff]
  %v1169 = vld [vmem:[%s41 + $0x1e0] sm:$0xff]
  %v1170 = vld [vmem:[%s41 + $0x1e8] sm:$0xff]
  %v1171 = vld [vmem:[%s41 + $0x1f8] sm:$0xff]
  %v1172 = vld [vmem:[%s41 + $0x200] sm:$0xff]
  %v1173 = vld [vmem:[%s41 + $0x210] sm:$0xff]
  %v1174 = vld [vmem:[%s41 + $0x218] sm:$0xff]
  %v1175 = vld [vmem:[%s41 + $0x228] sm:$0xff]
  %v1176 = vld [vmem:[%s41 + $0x230] sm:$0xff]
  %v1177 = vld [vmem:[%s41 + $0x240] sm:$0xff]
  %v1178 = vld [vmem:[%s41 + $0x248] sm:$0xff]
  %v1179 = vld [vmem:[%s41 + $0x258] sm:$0xff]
  %v1180 = vld [vmem:[%s41 + $0x260] sm:$0xff]
  %v1181 = vld [vmem:[%s41 + $0x270] sm:$0xff]
  %v1182 = vld [vmem:[%s41 + $0x278] sm:$0xff]
  %v1183 = vld [vmem:[%s41 + $0x288] sm:$0xff]
  %v1184 = vld [vmem:[%s41 + $0x290] sm:$0xff]
  %v1185 = vld [vmem:[%s41 + $0x2a0] sm:$0xff]
  %v1186 = vld [vmem:[%s41 + $0x2a8] sm:$0xff]
  %v1187 = vld [vmem:[%s41 + $0x2b8] sm:$0xff]
  %v1188 = vld [vmem:[%s41 + $0x2c0] sm:$0xff]
  %v1189 = vld [vmem:[%s41 + $0x2d0] sm:$0xff]
  %v1190 = vld [vmem:[%s41 + $0x2d8] sm:$0xff]
  %v1191 = vld [vmem:[%s41 + $0x2e8] sm:$0xff]
  %v1192 = vld [vmem:[%s41 + $0x2f0] sm:$0xff]
  %v1193 = vld [vmem:[%s41 + $0x300] sm:$0xff]
  %v1194 = vld [vmem:[%s41 + $0x308] sm:$0xff]
  %v1195 = vld [vmem:[%s41 + $0x318] sm:$0xff]
  %v1196 = vld [vmem:[%s41 + $0x320] sm:$0xff]
  %1261 = vrot.lane.b32.xlu0 %v1133, 12
  %v1262 = vpop.permute.xlu0 %1261
  %1263 = vrot.lane.b32.xlu0 %v1134, 12
  %v1264 = vpop.permute.xlu0 %1263
  %1265 = vrot.lane.b32.xlu0 %v1135, 12
  %v1266 = vpop.permute.xlu0 %1265
  %1267 = vrot.lane.b32.xlu0 %v1136, 12
  %v1268 = vpop.permute.xlu0 %1267
  %1269 = vrot.lane.b32.xlu0 %v1137, 12
  %v1270 = vpop.permute.xlu0 %1269
  %1271 = vrot.lane.b32.xlu0 %v1138, 12
  %v1272 = vpop.permute.xlu0 %1271
  %1273 = vrot.lane.b32.xlu0 %v1139, 12
  %v1274 = vpop.permute.xlu0 %1273
  %1275 = vrot.lane.b32.xlu0 %v1140, 12
  %v1276 = vpop.permute.xlu0 %1275
  %1277 = vrot.lane.b32.xlu0 %v1141, 12
  %v1278 = vpop.permute.xlu0 %1277
  %1279 = vrot.lane.b32.xlu0 %v1142, 12
  %v1280 = vpop.permute.xlu0 %1279
  %1281 = vrot.lane.b32.xlu0 %v1143, 12
  %v1282 = vpop.permute.xlu0 %1281
  %1283 = vrot.lane.b32.xlu0 %v1144, 12
  %v1284 = vpop.permute.xlu0 %1283
  %1285 = vrot.lane.b32.xlu0 %v1145, 12
  %v1286 = vpop.permute.xlu0 %1285
  %1287 = vrot.lane.b32.xlu0 %v1146, 12
  %v1288 = vpop.permute.xlu0 %1287
  %1289 = vrot.lane.b32.xlu0 %v1147, 12
  %v1290 = vpop.permute.xlu0 %1289
  %1291 = vrot.lane.b32.xlu0 %v1148, 12
  %v1292 = vpop.permute.xlu0 %1291
  %1293 = vrot.lane.b32.xlu0 %v1149, 12
  %v1294 = vpop.permute.xlu0 %1293
  %1295 = vrot.lane.b32.xlu0 %v1150, 12
  %v1296 = vpop.permute.xlu0 %1295
  %1297 = vrot.lane.b32.xlu0 %v1151, 12
  %v1298 = vpop.permute.xlu0 %1297
  %1299 = vrot.lane.b32.xlu0 %v1152, 12
  %v1300 = vpop.permute.xlu0 %1299
  %1301 = vrot.lane.b32.xlu0 %v1153, 12
  %v1302 = vpop.permute.xlu0 %1301
  %1303 = vrot.lane.b32.xlu0 %v1154, 12
  %v1304 = vpop.permute.xlu0 %1303
  %1305 = vrot.lane.b32.xlu0 %v1155, 12
  %v1306 = vpop.permute.xlu0 %1305
  %1307 = vrot.lane.b32.xlu0 %v1156, 12
  %v1308 = vpop.permute.xlu0 %1307
  %1309 = vrot.lane.b32.xlu0 %v1157, 12
  %v1310 = vpop.permute.xlu0 %1309
  %1311 = vrot.lane.b32.xlu0 %v1158, 12
  %v1312 = vpop.permute.xlu0 %1311
  %1313 = vrot.lane.b32.xlu0 %v1159, 12
  %v1314 = vpop.permute.xlu0 %1313
  %1315 = vrot.lane.b32.xlu0 %v1160, 12
  %v1316 = vpop.permute.xlu0 %1315
  %1317 = vrot.lane.b32.xlu0 %v1161, 12
  %v1318 = vpop.permute.xlu0 %1317
  %1319 = vrot.lane.b32.xlu0 %v1162, 12
  %v1320 = vpop.permute.xlu0 %1319
  %1321 = vrot.lane.b32.xlu0 %v1163, 12
  %v1322 = vpop.permute.xlu0 %1321
  %1323 = vrot.lane.b32.xlu0 %v1164, 12
  %v1324 = vpop.permute.xlu0 %1323
  %1325 = vrot.lane.b32.xlu0 %v1165, 12
  %v1326 = vpop.permute.xlu0 %1325
  %1327 = vrot.lane.b32.xlu0 %v1166, 12
  %v1328 = vpop.permute.xlu0 %1327
  %1329 = vrot.lane.b32.xlu0 %v1167, 12
  %v1330 = vpop.permute.xlu0 %1329
  %1331 = vrot.lane.b32.xlu0 %v1168, 12
  %v1332 = vpop.permute.xlu0 %1331
  %1333 = vrot.lane.b32.xlu0 %v1169, 12
  %v1334 = vpop.permute.xlu0 %1333
  %1335 = vrot.lane.b32.xlu0 %v1170, 12
  %v1336 = vpop.permute.xlu0 %1335
  %1337 = vrot.lane.b32.xlu0 %v1171, 12
  %v1338 = vpop.permute.xlu0 %1337
  %1339 = vrot.lane.b32.xlu0 %v1172, 12
  %v1340 = vpop.permute.xlu0 %1339
  %1341 = vrot.lane.b32.xlu0 %v1173, 12
  %v1342 = vpop.permute.xlu0 %1341
  %1343 = vrot.lane.b32.xlu0 %v1174, 12
  %v1344 = vpop.permute.xlu0 %1343
  %1345 = vrot.lane.b32.xlu0 %v1175, 12
  %v1346 = vpop.permute.xlu0 %1345
  %1347 = vrot.lane.b32.xlu0 %v1176, 12
  %v1348 = vpop.permute.xlu0 %1347
  %1349 = vrot.lane.b32.xlu0 %v1177, 12
  %v1350 = vpop.permute.xlu0 %1349
  %1351 = vrot.lane.b32.xlu0 %v1178, 12
  %v1352 = vpop.permute.xlu0 %1351
  %1353 = vrot.lane.b32.xlu0 %v1179, 12
  %v1354 = vpop.permute.xlu0 %1353
  %1355 = vrot.lane.b32.xlu0 %v1180, 12
  %v1356 = vpop.permute.xlu0 %1355
  %1357 = vrot.lane.b32.xlu0 %v1181, 12
  %v1358 = vpop.permute.xlu0 %1357
  %1359 = vrot.lane.b32.xlu0 %v1182, 12
  %v1360 = vpop.permute.xlu0 %1359
  %1361 = vrot.lane.b32.xlu0 %v1183, 12
  %v1362 = vpop.permute.xlu0 %1361
  %1363 = vrot.lane.b32.xlu0 %v1184, 12
  %v1364 = vpop.permute.xlu0 %1363
  %1365 = vrot.lane.b32.xlu0 %v1185, 12
  %v1366 = vpop.permute.xlu0 %1365
  %1367 = vrot.lane.b32.xlu0 %v1186, 12
  %v1368 = vpop.permute.xlu0 %1367
  %1369 = vrot.lane.b32.xlu0 %v1187, 12
  %v1370 = vpop.permute.xlu0 %1369
  %1371 = vrot.lane.b32.xlu0 %v1188, 12
  %v1372 = vpop.permute.xlu0 %1371
  %1373 = vrot.lane.b32.xlu0 %v1189, 12
  %v1374 = vpop.permute.xlu0 %1373
  %1375 = vrot.lane.b32.xlu0 %v1190, 12
  %v1376 = vpop.permute.xlu0 %1375
  %1377 = vrot.lane.b32.xlu0 %v1191, 12
  %v1378 = vpop.permute.xlu0 %1377
  %1379 = vrot.lane.b32.xlu0 %v1192, 12
  %v1380 = vpop.permute.xlu0 %1379
  %1381 = vrot.lane.b32.xlu0 %v1193, 12
  %v1382 = vpop.permute.xlu0 %1381
  %1383 = vrot.lane.b32.xlu0 %v1194, 12
  %v1384 = vpop.permute.xlu0 %1383
  %1385 = vrot.lane.b32.xlu0 %v1195, 12
  %v1386 = vpop.permute.xlu0 %1385
  %1387 = vrot.lane.b32.xlu0 %v1196, 12
  %v1388 = vpop.permute.xlu0 %1387
  %vm1453 = vcmask 130144
  %1454 = vst.msk [vmem:[#allocation3] sm:$0xff] %vm1453, %v1262
  %1455 = vst.msk [vmem:[#allocation3 + $0x8] sm:$0xff] %vm1453, %v1264
  %1456 = vst.msk [vmem:[#allocation3 + $0x10] sm:$0xff] %vm1453, %v1266
  %1457 = vst.msk [vmem:[#allocation3 + $0x18] sm:$0xff] %vm1453, %v1268
  %1458 = vst.msk [vmem:[#allocation3 + $0x20] sm:$0xff] %vm1453, %v1270
  %1459 = vst.msk [vmem:[#allocation3 + $0x28] sm:$0xff] %vm1453, %v1272
  %1460 = vst.msk [vmem:[#allocation3 + $0x30] sm:$0xff] %vm1453, %v1274
  %1461 = vst.msk [vmem:[#allocation3 + $0x38] sm:$0xff] %vm1453, %v1276
  %1462 = vst.msk [vmem:[#allocation3 + $0x40] sm:$0xff] %vm1453, %v1278
  %1463 = vst.msk [vmem:[#allocation3 + $0x48] sm:$0xff] %vm1453, %v1280
  %1464 = vst.msk [vmem:[#allocation3 + $0x50] sm:$0xff] %vm1453, %v1282
  %1465 = vst.msk [vmem:[#allocation3 + $0x58] sm:$0xff] %vm1453, %v1284
  %1466 = vst.msk [vmem:[#allocation3 + $0x60] sm:$0xff] %vm1453, %v1286
  %1467 = vst.msk [vmem:[#allocation3 + $0x68] sm:$0xff] %vm1453, %v1288
  %1468 = vst.msk [vmem:[#allocation3 + $0x70] sm:$0xff] %vm1453, %v1290
  %1469 = vst.msk [vmem:[#allocation3 + $0x78] sm:$0xff] %vm1453, %v1292
  %1470 = vst.msk [vmem:[#allocation3 + $0x80] sm:$0xff] %vm1453, %v1294
  %1471 = vst.msk [vmem:[#allocation3 + $0x88] sm:$0xff] %vm1453, %v1296
  %1472 = vst.msk [vmem:[#allocation3 + $0x90] sm:$0xff] %vm1453, %v1298
  %1473 = vst.msk [vmem:[#allocation3 + $0x98] sm:$0xff] %vm1453, %v1300
  %1474 = vst.msk [vmem:[#allocation3 + $0xa0] sm:$0xff] %vm1453, %v1302
  %1475 = vst.msk [vmem:[#allocation3 + $0xa8] sm:$0xff] %vm1453, %v1304
  %1476 = vst.msk [vmem:[#allocation3 + $0xb0] sm:$0xff] %vm1453, %v1306
  %1477 = vst.msk [vmem:[#allocation3 + $0xb8] sm:$0xff] %vm1453, %v1308
  %1478 = vst.msk [vmem:[#allocation3 + $0xc0] sm:$0xff] %vm1453, %v1310
  %1479 = vst.msk [vmem:[#allocation3 + $0xc8] sm:$0xff] %vm1453, %v1312
  %1480 = vst.msk [vmem:[#allocation3 + $0xd0] sm:$0xff] %vm1453, %v1314
  %1481 = vst.msk [vmem:[#allocation3 + $0xd8] sm:$0xff] %vm1453, %v1316
  %1482 = vst.msk [vmem:[#allocation3 + $0xe0] sm:$0xff] %vm1453, %v1318
  %1483 = vst.msk [vmem:[#allocation3 + $0xe8] sm:$0xff] %vm1453, %v1320
  %1484 = vst.msk [vmem:[#allocation3 + $0xf0] sm:$0xff] %vm1453, %v1322
  %1485 = vst.msk [vmem:[#allocation3 + $0xf8] sm:$0xff] %vm1453, %v1324
  %1486 = vst.msk [vmem:[#allocation3 + $0x100] sm:$0xff] %vm1453, %v1326
  %1487 = vst.msk [vmem:[#allocation3 + $0x108] sm:$0xff] %vm1453, %v1328
  %1488 = vst.msk [vmem:[#allocation3 + $0x110] sm:$0xff] %vm1453, %v1330
  %1489 = vst.msk [vmem:[#allocation3 + $0x118] sm:$0xff] %vm1453, %v1332
  %1490 = vst.msk [vmem:[#allocation3 + $0x120] sm:$0xff] %vm1453, %v1334
  %1491 = vst.msk [vmem:[#allocation3 + $0x128] sm:$0xff] %vm1453, %v1336
  %1492 = vst.msk [vmem:[#allocation3 + $0x130] sm:$0xff] %vm1453, %v1338
  %1493 = vst.msk [vmem:[#allocation3 + $0x138] sm:$0xff] %vm1453, %v1340
  %1494 = vst.msk [vmem:[#allocation3 + $0x140] sm:$0xff] %vm1453, %v1342
  %1495 = vst.msk [vmem:[#allocation3 + $0x148] sm:$0xff] %vm1453, %v1344
  %1496 = vst.msk [vmem:[#allocation3 + $0x150] sm:$0xff] %vm1453, %v1346
  %1497 = vst.msk [vmem:[#allocation3 + $0x158] sm:$0xff] %vm1453, %v1348
  %1498 = vst.msk [vmem:[#allocation3 + $0x160] sm:$0xff] %vm1453, %v1350
  %1499 = vst.msk [vmem:[#allocation3 + $0x168] sm:$0xff] %vm1453, %v1352
  %1500 = vst.msk [vmem:[#allocation3 + $0x170] sm:$0xff] %vm1453, %v1354
  %1501 = vst.msk [vmem:[#allocation3 + $0x178] sm:$0xff] %vm1453, %v1356
  %1502 = vst.msk [vmem:[#allocation3 + $0x180] sm:$0xff] %vm1453, %v1358
  %1503 = vst.msk [vmem:[#allocation3 + $0x188] sm:$0xff] %vm1453, %v1360
  %1504 = vst.msk [vmem:[#allocation3 + $0x190] sm:$0xff] %vm1453, %v1362
  %1505 = vst.msk [vmem:[#allocation3 + $0x198] sm:$0xff] %vm1453, %v1364
  %1506 = vst.msk [vmem:[#allocation3 + $0x1a0] sm:$0xff] %vm1453, %v1366
  %1507 = vst.msk [vmem:[#allocation3 + $0x1a8] sm:$0xff] %vm1453, %v1368
  %1508 = vst.msk [vmem:[#allocation3 + $0x1b0] sm:$0xff] %vm1453, %v1370
  %1509 = vst.msk [vmem:[#allocation3 + $0x1b8] sm:$0xff] %vm1453, %v1372
  %1510 = vst.msk [vmem:[#allocation3 + $0x1c0] sm:$0xff] %vm1453, %v1374
  %1511 = vst.msk [vmem:[#allocation3 + $0x1c8] sm:$0xff] %vm1453, %v1376
  %1512 = vst.msk [vmem:[#allocation3 + $0x1d0] sm:$0xff] %vm1453, %v1378
  %1513 = vst.msk [vmem:[#allocation3 + $0x1d8] sm:$0xff] %vm1453, %v1380
  %1514 = vst.msk [vmem:[#allocation3 + $0x1e0] sm:$0xff] %vm1453, %v1382
  %1515 = vst.msk [vmem:[#allocation3 + $0x1e8] sm:$0xff] %vm1453, %v1384
  %1516 = vst.msk [vmem:[#allocation3 + $0x1f0] sm:$0xff] %vm1453, %v1386
  %1517 = vst.msk [vmem:[#allocation3 + $0x1f8] sm:$0xff] %vm1453, %v1388
  %v1518 = vld [vmem:[%s41 + $0x1] sm:$0xff]
  %v1519 = vld [vmem:[%s41 + $0x9] sm:$0xff]
  %v1520 = vld [vmem:[%s41 + $0x19] sm:$0xff]
  %v1521 = vld [vmem:[%s41 + $0x21] sm:$0xff]
  %v1522 = vld [vmem:[%s41 + $0x31] sm:$0xff]
  %v1523 = vld [vmem:[%s41 + $0x39] sm:$0xff]
  %v1524 = vld [vmem:[%s41 + $0x49] sm:$0xff]
  %v1525 = vld [vmem:[%s41 + $0x51] sm:$0xff]
  %v1526 = vld [vmem:[%s41 + $0x61] sm:$0xff]
  %v1527 = vld [vmem:[%s41 + $0x69] sm:$0xff]
  %v1528 = vld [vmem:[%s41 + $0x79] sm:$0xff]
  %v1529 = vld [vmem:[%s41 + $0x81] sm:$0xff]
  %v1530 = vld [vmem:[%s41 + $0x91] sm:$0xff]
  %v1531 = vld [vmem:[%s41 + $0x99] sm:$0xff]
  %v1532 = vld [vmem:[%s41 + $0xa9] sm:$0xff]
  %v1533 = vld [vmem:[%s41 + $0xb1] sm:$0xff]
  %v1534 = vld [vmem:[%s41 + $0xc1] sm:$0xff]
  %v1535 = vld [vmem:[%s41 + $0xc9] sm:$0xff]
  %v1536 = vld [vmem:[%s41 + $0xd9] sm:$0xff]
  %v1537 = vld [vmem:[%s41 + $0xe1] sm:$0xff]
  %v1538 = vld [vmem:[%s41 + $0xf1] sm:$0xff]
  %v1539 = vld [vmem:[%s41 + $0xf9] sm:$0xff]
  %v1540 = vld [vmem:[%s41 + $0x109] sm:$0xff]
  %v1541 = vld [vmem:[%s41 + $0x111] sm:$0xff]
  %v1542 = vld [vmem:[%s41 + $0x121] sm:$0xff]
  %v1543 = vld [vmem:[%s41 + $0x129] sm:$0xff]
  %v1544 = vld [vmem:[%s41 + $0x139] sm:$0xff]
  %v1545 = vld [vmem:[%s41 + $0x141] sm:$0xff]
  %v1546 = vld [vmem:[%s41 + $0x151] sm:$0xff]
  %v1547 = vld [vmem:[%s41 + $0x159] sm:$0xff]
  %v1548 = vld [vmem:[%s41 + $0x169] sm:$0xff]
  %v1549 = vld [vmem:[%s41 + $0x171] sm:$0xff]
  %v1550 = vld [vmem:[%s41 + $0x1b1] sm:$0xff]
  %v1551 = vld [vmem:[%s41 + $0x1b9] sm:$0xff]
  %v1552 = vld [vmem:[%s41 + $0x1c9] sm:$0xff]
  %v1553 = vld [vmem:[%s41 + $0x1d1] sm:$0xff]
  %v1554 = vld [vmem:[%s41 + $0x1e1] sm:$0xff]
  %v1555 = vld [vmem:[%s41 + $0x1e9] sm:$0xff]
  %v1556 = vld [vmem:[%s41 + $0x1f9] sm:$0xff]
  %v1557 = vld [vmem:[%s41 + $0x201] sm:$0xff]
  %v1558 = vld [vmem:[%s41 + $0x211] sm:$0xff]
  %v1559 = vld [vmem:[%s41 + $0x219] sm:$0xff]
  %v1560 = vld [vmem:[%s41 + $0x229] sm:$0xff]
  %v1561 = vld [vmem:[%s41 + $0x231] sm:$0xff]
  %v1562 = vld [vmem:[%s41 + $0x241] sm:$0xff]
  %v1563 = vld [vmem:[%s41 + $0x249] sm:$0xff]
  %v1564 = vld [vmem:[%s41 + $0x259] sm:$0xff]
  %v1565 = vld [vmem:[%s41 + $0x261] sm:$0xff]
  %v1566 = vld [vmem:[%s41 + $0x271] sm:$0xff]
  %v1567 = vld [vmem:[%s41 + $0x279] sm:$0xff]
  %v1568 = vld [vmem:[%s41 + $0x289] sm:$0xff]
  %v1569 = vld [vmem:[%s41 + $0x291] sm:$0xff]
  %v1570 = vld [vmem:[%s41 + $0x2a1] sm:$0xff]
  %v1571 = vld [vmem:[%s41 + $0x2a9] sm:$0xff]
  %v1572 = vld [vmem:[%s41 + $0x2b9] sm:$0xff]
  %v1573 = vld [vmem:[%s41 + $0x2c1] sm:$0xff]
  %v1574 = vld [vmem:[%s41 + $0x2d1] sm:$0xff]
  %v1575 = vld [vmem:[%s41 + $0x2d9] sm:$0xff]
  %v1576 = vld [vmem:[%s41 + $0x2e9] sm:$0xff]
  %v1577 = vld [vmem:[%s41 + $0x2f1] sm:$0xff]
  %v1578 = vld [vmem:[%s41 + $0x301] sm:$0xff]
  %v1579 = vld [vmem:[%s41 + $0x309] sm:$0xff]
  %v1580 = vld [vmem:[%s41 + $0x319] sm:$0xff]
  %v1581 = vld [vmem:[%s41 + $0x321] sm:$0xff]
  %1646 = vrot.lane.b32.xlu0 %v1518, 16
  %v1647 = vpop.permute.xlu0 %1646
  %1648 = vrot.lane.b32.xlu0 %v1519, 16
  %v1649 = vpop.permute.xlu0 %1648
  %1650 = vrot.lane.b32.xlu0 %v1520, 16
  %v1651 = vpop.permute.xlu0 %1650
  %1652 = vrot.lane.b32.xlu0 %v1521, 16
  %v1653 = vpop.permute.xlu0 %1652
  %1654 = vrot.lane.b32.xlu0 %v1522, 16
  %v1655 = vpop.permute.xlu0 %1654
  %1656 = vrot.lane.b32.xlu0 %v1523, 16
  %v1657 = vpop.permute.xlu0 %1656
  %1658 = vrot.lane.b32.xlu0 %v1524, 16
  %v1659 = vpop.permute.xlu0 %1658
  %1660 = vrot.lane.b32.xlu0 %v1525, 16
  %v1661 = vpop.permute.xlu0 %1660
  %1662 = vrot.lane.b32.xlu0 %v1526, 16
  %v1663 = vpop.permute.xlu0 %1662
  %1664 = vrot.lane.b32.xlu0 %v1527, 16
  %v1665 = vpop.permute.xlu0 %1664
  %1666 = vrot.lane.b32.xlu0 %v1528, 16
  %v1667 = vpop.permute.xlu0 %1666
  %1668 = vrot.lane.b32.xlu0 %v1529, 16
  %v1669 = vpop.permute.xlu0 %1668
  %1670 = vrot.lane.b32.xlu0 %v1530, 16
  %v1671 = vpop.permute.xlu0 %1670
  %1672 = vrot.lane.b32.xlu0 %v1531, 16
  %v1673 = vpop.permute.xlu0 %1672
  %1674 = vrot.lane.b32.xlu0 %v1532, 16
  %v1675 = vpop.permute.xlu0 %1674
  %1676 = vrot.lane.b32.xlu0 %v1533, 16
  %v1677 = vpop.permute.xlu0 %1676
  %1678 = vrot.lane.b32.xlu0 %v1534, 16
  %v1679 = vpop.permute.xlu0 %1678
  %1680 = vrot.lane.b32.xlu0 %v1535, 16
  %v1681 = vpop.permute.xlu0 %1680
  %1682 = vrot.lane.b32.xlu0 %v1536, 16
  %v1683 = vpop.permute.xlu0 %1682
  %1684 = vrot.lane.b32.xlu0 %v1537, 16
  %v1685 = vpop.permute.xlu0 %1684
  %1686 = vrot.lane.b32.xlu0 %v1538, 16
  %v1687 = vpop.permute.xlu0 %1686
  %1688 = vrot.lane.b32.xlu0 %v1539, 16
  %v1689 = vpop.permute.xlu0 %1688
  %1690 = vrot.lane.b32.xlu0 %v1540, 16
  %v1691 = vpop.permute.xlu0 %1690
  %1692 = vrot.lane.b32.xlu0 %v1541, 16
  %v1693 = vpop.permute.xlu0 %1692
  %1694 = vrot.lane.b32.xlu0 %v1542, 16
  %v1695 = vpop.permute.xlu0 %1694
  %1696 = vrot.lane.b32.xlu0 %v1543, 16
  %v1697 = vpop.permute.xlu0 %1696
  %1698 = vrot.lane.b32.xlu0 %v1544, 16
  %v1699 = vpop.permute.xlu0 %1698
  %1700 = vrot.lane.b32.xlu0 %v1545, 16
  %v1701 = vpop.permute.xlu0 %1700
  %1702 = vrot.lane.b32.xlu0 %v1546, 16
  %v1703 = vpop.permute.xlu0 %1702
  %1704 = vrot.lane.b32.xlu0 %v1547, 16
  %v1705 = vpop.permute.xlu0 %1704
  %1706 = vrot.lane.b32.xlu0 %v1548, 16
  %v1707 = vpop.permute.xlu0 %1706
  %1708 = vrot.lane.b32.xlu0 %v1549, 16
  %v1709 = vpop.permute.xlu0 %1708
  %1710 = vrot.lane.b32.xlu0 %v1550, 16
  %v1711 = vpop.permute.xlu0 %1710
  %1712 = vrot.lane.b32.xlu0 %v1551, 16
  %v1713 = vpop.permute.xlu0 %1712
  %1714 = vrot.lane.b32.xlu0 %v1552, 16
  %v1715 = vpop.permute.xlu0 %1714
  %1716 = vrot.lane.b32.xlu0 %v1553, 16
  %v1717 = vpop.permute.xlu0 %1716
  %1718 = vrot.lane.b32.xlu0 %v1554, 16
  %v1719 = vpop.permute.xlu0 %1718
  %1720 = vrot.lane.b32.xlu0 %v1555, 16
  %v1721 = vpop.permute.xlu0 %1720
  %1722 = vrot.lane.b32.xlu0 %v1556, 16
  %v1723 = vpop.permute.xlu0 %1722
  %1724 = vrot.lane.b32.xlu0 %v1557, 16
  %v1725 = vpop.permute.xlu0 %1724
  %1726 = vrot.lane.b32.xlu0 %v1558, 16
  %v1727 = vpop.permute.xlu0 %1726
  %1728 = vrot.lane.b32.xlu0 %v1559, 16
  %v1729 = vpop.permute.xlu0 %1728
  %1730 = vrot.lane.b32.xlu0 %v1560, 16
  %v1731 = vpop.permute.xlu0 %1730
  %1732 = vrot.lane.b32.xlu0 %v1561, 16
  %v1733 = vpop.permute.xlu0 %1732
  %1734 = vrot.lane.b32.xlu0 %v1562, 16
  %v1735 = vpop.permute.xlu0 %1734
  %1736 = vrot.lane.b32.xlu0 %v1563, 16
  %v1737 = vpop.permute.xlu0 %1736
  %1738 = vrot.lane.b32.xlu0 %v1564, 16
  %v1739 = vpop.permute.xlu0 %1738
  %1740 = vrot.lane.b32.xlu0 %v1565, 16
  %v1741 = vpop.permute.xlu0 %1740
  %1742 = vrot.lane.b32.xlu0 %v1566, 16
  %v1743 = vpop.permute.xlu0 %1742
  %1744 = vrot.lane.b32.xlu0 %v1567, 16
  %v1745 = vpop.permute.xlu0 %1744
  %1746 = vrot.lane.b32.xlu0 %v1568, 16
  %v1747 = vpop.permute.xlu0 %1746
  %1748 = vrot.lane.b32.xlu0 %v1569, 16
  %v1749 = vpop.permute.xlu0 %1748
  %1750 = vrot.lane.b32.xlu0 %v1570, 16
  %v1751 = vpop.permute.xlu0 %1750
  %1752 = vrot.lane.b32.xlu0 %v1571, 16
  %v1753 = vpop.permute.xlu0 %1752
  %1754 = vrot.lane.b32.xlu0 %v1572, 16
  %v1755 = vpop.permute.xlu0 %1754
  %1756 = vrot.lane.b32.xlu0 %v1573, 16
  %v1757 = vpop.permute.xlu0 %1756
  %1758 = vrot.lane.b32.xlu0 %v1574, 16
  %v1759 = vpop.permute.xlu0 %1758
  %1760 = vrot.lane.b32.xlu0 %v1575, 16
  %v1761 = vpop.permute.xlu0 %1760
  %1762 = vrot.lane.b32.xlu0 %v1576, 16
  %v1763 = vpop.permute.xlu0 %1762
  %1764 = vrot.lane.b32.xlu0 %v1577, 16
  %v1765 = vpop.permute.xlu0 %1764
  %1766 = vrot.lane.b32.xlu0 %v1578, 16
  %v1767 = vpop.permute.xlu0 %1766
  %1768 = vrot.lane.b32.xlu0 %v1579, 16
  %v1769 = vpop.permute.xlu0 %1768
  %1770 = vrot.lane.b32.xlu0 %v1580, 16
  %v1771 = vpop.permute.xlu0 %1770
  %1772 = vrot.lane.b32.xlu0 %v1581, 16
  %v1773 = vpop.permute.xlu0 %1772
  %vm1838 = vcmask 162944
  %1839 = vst.msk [vmem:[#allocation3] sm:$0xff] %vm1838, %v1647
  %1840 = vst.msk [vmem:[#allocation3 + $0x8] sm:$0xff] %vm1838, %v1649
  %1841 = vst.msk [vmem:[#allocation3 + $0x10] sm:$0xff] %vm1838, %v1651
  %1842 = vst.msk [vmem:[#allocation3 + $0x18] sm:$0xff] %vm1838, %v1653
  %1843 = vst.msk [vmem:[#allocation3 + $0x20] sm:$0xff] %vm1838, %v1655
  %1844 = vst.msk [vmem:[#allocation3 + $0x28] sm:$0xff] %vm1838, %v1657
  %1845 = vst.msk [vmem:[#allocation3 + $0x30] sm:$0xff] %vm1838, %v1659
  %1846 = vst.msk [vmem:[#allocation3 + $0x38] sm:$0xff] %vm1838, %v1661
  %1847 = vst.msk [vmem:[#allocation3 + $0x40] sm:$0xff] %vm1838, %v1663
  %1848 = vst.msk [vmem:[#allocation3 + $0x48] sm:$0xff] %vm1838, %v1665
  %1849 = vst.msk [vmem:[#allocation3 + $0x50] sm:$0xff] %vm1838, %v1667
  %1850 = vst.msk [vmem:[#allocation3 + $0x58] sm:$0xff] %vm1838, %v1669
  %1851 = vst.msk [vmem:[#allocation3 + $0x60] sm:$0xff] %vm1838, %v1671
  %1852 = vst.msk [vmem:[#allocation3 + $0x68] sm:$0xff] %vm1838, %v1673
  %1853 = vst.msk [vmem:[#allocation3 + $0x70] sm:$0xff] %vm1838, %v1675
  %1854 = vst.msk [vmem:[#allocation3 + $0x78] sm:$0xff] %vm1838, %v1677
  %1855 = vst.msk [vmem:[#allocation3 + $0x80] sm:$0xff] %vm1838, %v1679
  %1856 = vst.msk [vmem:[#allocation3 + $0x88] sm:$0xff] %vm1838, %v1681
  %1857 = vst.msk [vmem:[#allocation3 + $0x90] sm:$0xff] %vm1838, %v1683
  %1858 = vst.msk [vmem:[#allocation3 + $0x98] sm:$0xff] %vm1838, %v1685
  %1859 = vst.msk [vmem:[#allocation3 + $0xa0] sm:$0xff] %vm1838, %v1687
  %1860 = vst.msk [vmem:[#allocation3 + $0xa8] sm:$0xff] %vm1838, %v1689
  %1861 = vst.msk [vmem:[#allocation3 + $0xb0] sm:$0xff] %vm1838, %v1691
  %1862 = vst.msk [vmem:[#allocation3 + $0xb8] sm:$0xff] %vm1838, %v1693
  %1863 = vst.msk [vmem:[#allocation3 + $0xc0] sm:$0xff] %vm1838, %v1695
  %1864 = vst.msk [vmem:[#allocation3 + $0xc8] sm:$0xff] %vm1838, %v1697
  %1865 = vst.msk [vmem:[#allocation3 + $0xd0] sm:$0xff] %vm1838, %v1699
  %1866 = vst.msk [vmem:[#allocation3 + $0xd8] sm:$0xff] %vm1838, %v1701
  %1867 = vst.msk [vmem:[#allocation3 + $0xe0] sm:$0xff] %vm1838, %v1703
  %1868 = vst.msk [vmem:[#allocation3 + $0xe8] sm:$0xff] %vm1838, %v1705
  %1869 = vst.msk [vmem:[#allocation3 + $0xf0] sm:$0xff] %vm1838, %v1707
  %1870 = vst.msk [vmem:[#allocation3 + $0xf8] sm:$0xff] %vm1838, %v1709
  %1871 = vst.msk [vmem:[#allocation3 + $0x100] sm:$0xff] %vm1838, %v1711
  %1872 = vst.msk [vmem:[#allocation3 + $0x108] sm:$0xff] %vm1838, %v1713
  %1873 = vst.msk [vmem:[#allocation3 + $0x110] sm:$0xff] %vm1838, %v1715
  %1874 = vst.msk [vmem:[#allocation3 + $0x118] sm:$0xff] %vm1838, %v1717
  %1875 = vst.msk [vmem:[#allocation3 + $0x120] sm:$0xff] %vm1838, %v1719
  %1876 = vst.msk [vmem:[#allocation3 + $0x128] sm:$0xff] %vm1838, %v1721
  %1877 = vst.msk [vmem:[#allocation3 + $0x130] sm:$0xff] %vm1838, %v1723
  %1878 = vst.msk [vmem:[#allocation3 + $0x138] sm:$0xff] %vm1838, %v1725
  %1879 = vst.msk [vmem:[#allocation3 + $0x140] sm:$0xff] %vm1838, %v1727
  %1880 = vst.msk [vmem:[#allocation3 + $0x148] sm:$0xff] %vm1838, %v1729
  %1881 = vst.msk [vmem:[#allocation3 + $0x150] sm:$0xff] %vm1838, %v1731
  %1882 = vst.msk [vmem:[#allocation3 + $0x158] sm:$0xff] %vm1838, %v1733
  %1883 = vst.msk [vmem:[#allocation3 + $0x160] sm:$0xff] %vm1838, %v1735
  %1884 = vst.msk [vmem:[#allocation3 + $0x168] sm:$0xff] %vm1838, %v1737
  %1885 = vst.msk [vmem:[#allocation3 + $0x170] sm:$0xff] %vm1838, %v1739
  %1886 = vst.msk [vmem:[#allocation3 + $0x178] sm:$0xff] %vm1838, %v1741
  %1887 = vst.msk [vmem:[#allocation3 + $0x180] sm:$0xff] %vm1838, %v1743
  %1888 = vst.msk [vmem:[#allocation3 + $0x188] sm:$0xff] %vm1838, %v1745
  %1889 = vst.msk [vmem:[#allocation3 + $0x190] sm:$0xff] %vm1838, %v1747
  %1890 = vst.msk [vmem:[#allocation3 + $0x198] sm:$0xff] %vm1838, %v1749
  %1891 = vst.msk [vmem:[#allocation3 + $0x1a0] sm:$0xff] %vm1838, %v1751
  %1892 = vst.msk [vmem:[#allocation3 + $0x1a8] sm:$0xff] %vm1838, %v1753
  %1893 = vst.msk [vmem:[#allocation3 + $0x1b0] sm:$0xff] %vm1838, %v1755
  %1894 = vst.msk [vmem:[#allocation3 + $0x1b8] sm:$0xff] %vm1838, %v1757
  %1895 = vst.msk [vmem:[#allocation3 + $0x1c0] sm:$0xff] %vm1838, %v1759
  %1896 = vst.msk [vmem:[#allocation3 + $0x1c8] sm:$0xff] %vm1838, %v1761
  %1897 = vst.msk [vmem:[#allocation3 + $0x1d0] sm:$0xff] %vm1838, %v1763
  %1898 = vst.msk [vmem:[#allocation3 + $0x1d8] sm:$0xff] %vm1838, %v1765
  %1899 = vst.msk [vmem:[#allocation3 + $0x1e0] sm:$0xff] %vm1838, %v1767
  %1900 = vst.msk [vmem:[#allocation3 + $0x1e8] sm:$0xff] %vm1838, %v1769
  %1901 = vst.msk [vmem:[#allocation3 + $0x1f0] sm:$0xff] %vm1838, %v1771
  %1902 = vst.msk [vmem:[#allocation3 + $0x1f8] sm:$0xff] %vm1838, %v1773
  %v1903 = vld [vmem:[%s41 + $0x2] sm:$0xff]
  %v1904 = vld [vmem:[%s41 + $0xa] sm:$0xff]
  %v1905 = vld [vmem:[%s41 + $0x1a] sm:$0xff]
  %v1906 = vld [vmem:[%s41 + $0x22] sm:$0xff]
  %v1907 = vld [vmem:[%s41 + $0x32] sm:$0xff]
  %v1908 = vld [vmem:[%s41 + $0x3a] sm:$0xff]
  %v1909 = vld [vmem:[%s41 + $0x4a] sm:$0xff]
  %v1910 = vld [vmem:[%s41 + $0x52] sm:$0xff]
  %v1911 = vld [vmem:[%s41 + $0x62] sm:$0xff]
  %v1912 = vld [vmem:[%s41 + $0x6a] sm:$0xff]
  %v1913 = vld [vmem:[%s41 + $0x7a] sm:$0xff]
  %v1914 = vld [vmem:[%s41 + $0x82] sm:$0xff]
  %v1915 = vld [vmem:[%s41 + $0x92] sm:$0xff]
  %v1916 = vld [vmem:[%s41 + $0x9a] sm:$0xff]
  %v1917 = vld [vmem:[%s41 + $0xaa] sm:$0xff]
  %v1918 = vld [vmem:[%s41 + $0xb2] sm:$0xff]
  %v1919 = vld [vmem:[%s41 + $0xc2] sm:$0xff]
  %v1920 = vld [vmem:[%s41 + $0xca] sm:$0xff]
  %v1921 = vld [vmem:[%s41 + $0xda] sm:$0xff]
  %v1922 = vld [vmem:[%s41 + $0xe2] sm:$0xff]
  %v1923 = vld [vmem:[%s41 + $0xf2] sm:$0xff]
  %v1924 = vld [vmem:[%s41 + $0xfa] sm:$0xff]
  %v1925 = vld [vmem:[%s41 + $0x10a] sm:$0xff]
  %v1926 = vld [vmem:[%s41 + $0x112] sm:$0xff]
  %v1927 = vld [vmem:[%s41 + $0x122] sm:$0xff]
  %v1928 = vld [vmem:[%s41 + $0x12a] sm:$0xff]
  %v1929 = vld [vmem:[%s41 + $0x13a] sm:$0xff]
  %v1930 = vld [vmem:[%s41 + $0x142] sm:$0xff]
  %v1931 = vld [vmem:[%s41 + $0x152] sm:$0xff]
  %v1932 = vld [vmem:[%s41 + $0x15a] sm:$0xff]
  %v1933 = vld [vmem:[%s41 + $0x16a] sm:$0xff]
  %v1934 = vld [vmem:[%s41 + $0x172] sm:$0xff]
  %v1935 = vld [vmem:[%s41 + $0x1b2] sm:$0xff]
  %v1936 = vld [vmem:[%s41 + $0x1ba] sm:$0xff]
  %v1937 = vld [vmem:[%s41 + $0x1ca] sm:$0xff]
  %v1938 = vld [vmem:[%s41 + $0x1d2] sm:$0xff]
  %v1939 = vld [vmem:[%s41 + $0x1e2] sm:$0xff]
  %v1940 = vld [vmem:[%s41 + $0x1ea] sm:$0xff]
  %v1941 = vld [vmem:[%s41 + $0x1fa] sm:$0xff]
  %v1942 = vld [vmem:[%s41 + $0x202] sm:$0xff]
  %v1943 = vld [vmem:[%s41 + $0x212] sm:$0xff]
  %v1944 = vld [vmem:[%s41 + $0x21a] sm:$0xff]
  %v1945 = vld [vmem:[%s41 + $0x22a] sm:$0xff]
  %v1946 = vld [vmem:[%s41 + $0x232] sm:$0xff]
  %v1947 = vld [vmem:[%s41 + $0x242] sm:$0xff]
  %v1948 = vld [vmem:[%s41 + $0x24a] sm:$0xff]
  %v1949 = vld [vmem:[%s41 + $0x25a] sm:$0xff]
  %v1950 = vld [vmem:[%s41 + $0x262] sm:$0xff]
  %v1951 = vld [vmem:[%s41 + $0x272] sm:$0xff]
  %v1952 = vld [vmem:[%s41 + $0x27a] sm:$0xff]
  %v1953 = vld [vmem:[%s41 + $0x28a] sm:$0xff]
  %v1954 = vld [vmem:[%s41 + $0x292] sm:$0xff]
  %v1955 = vld [vmem:[%s41 + $0x2a2] sm:$0xff]
  %v1956 = vld [vmem:[%s41 + $0x2aa] sm:$0xff]
  %v1957 = vld [vmem:[%s41 + $0x2ba] sm:$0xff]
  %v1958 = vld [vmem:[%s41 + $0x2c2] sm:$0xff]
  %v1959 = vld [vmem:[%s41 + $0x2d2] sm:$0xff]
  %v1960 = vld [vmem:[%s41 + $0x2da] sm:$0xff]
  %v1961 = vld [vmem:[%s41 + $0x2ea] sm:$0xff]
  %v1962 = vld [vmem:[%s41 + $0x2f2] sm:$0xff]
  %v1963 = vld [vmem:[%s41 + $0x302] sm:$0xff]
  %v1964 = vld [vmem:[%s41 + $0x30a] sm:$0xff]
  %v1965 = vld [vmem:[%s41 + $0x31a] sm:$0xff]
  %v1966 = vld [vmem:[%s41 + $0x322] sm:$0xff]
  %2031 = vrot.lane.b32.xlu0 %v1903, 20
  %v2032 = vpop.permute.xlu0 %2031
  %2033 = vrot.lane.b32.xlu0 %v1904, 20
  %v2034 = vpop.permute.xlu0 %2033
  %2035 = vrot.lane.b32.xlu0 %v1905, 20
  %v2036 = vpop.permute.xlu0 %2035
  %2037 = vrot.lane.b32.xlu0 %v1906, 20
  %v2038 = vpop.permute.xlu0 %2037
  %2039 = vrot.lane.b32.xlu0 %v1907, 20
  %v2040 = vpop.permute.xlu0 %2039
  %2041 = vrot.lane.b32.xlu0 %v1908, 20
  %v2042 = vpop.permute.xlu0 %2041
  %2043 = vrot.lane.b32.xlu0 %v1909, 20
  %v2044 = vpop.permute.xlu0 %2043
  %2045 = vrot.lane.b32.xlu0 %v1910, 20
  %v2046 = vpop.permute.xlu0 %2045
  %2047 = vrot.lane.b32.xlu0 %v1911, 20
  %v2048 = vpop.permute.xlu0 %2047
  %2049 = vrot.lane.b32.xlu0 %v1912, 20
  %v2050 = vpop.permute.xlu0 %2049
  %2051 = vrot.lane.b32.xlu0 %v1913, 20
  %v2052 = vpop.permute.xlu0 %2051
  %2053 = vrot.lane.b32.xlu0 %v1914, 20
  %v2054 = vpop.permute.xlu0 %2053
  %2055 = vrot.lane.b32.xlu0 %v1915, 20
  %v2056 = vpop.permute.xlu0 %2055
  %2057 = vrot.lane.b32.xlu0 %v1916, 20
  %v2058 = vpop.permute.xlu0 %2057
  %2059 = vrot.lane.b32.xlu0 %v1917, 20
  %v2060 = vpop.permute.xlu0 %2059
  %2061 = vrot.lane.b32.xlu0 %v1918, 20
  %v2062 = vpop.permute.xlu0 %2061
  %2063 = vrot.lane.b32.xlu0 %v1919, 20
  %v2064 = vpop.permute.xlu0 %2063
  %2065 = vrot.lane.b32.xlu0 %v1920, 20
  %v2066 = vpop.permute.xlu0 %2065
  %2067 = vrot.lane.b32.xlu0 %v1921, 20
  %v2068 = vpop.permute.xlu0 %2067
  %2069 = vrot.lane.b32.xlu0 %v1922, 20
  %v2070 = vpop.permute.xlu0 %2069
  %2071 = vrot.lane.b32.xlu0 %v1923, 20
  %v2072 = vpop.permute.xlu0 %2071
  %2073 = vrot.lane.b32.xlu0 %v1924, 20
  %v2074 = vpop.permute.xlu0 %2073
  %2075 = vrot.lane.b32.xlu0 %v1925, 20
  %v2076 = vpop.permute.xlu0 %2075
  %2077 = vrot.lane.b32.xlu0 %v1926, 20
  %v2078 = vpop.permute.xlu0 %2077
  %2079 = vrot.lane.b32.xlu0 %v1927, 20
  %v2080 = vpop.permute.xlu0 %2079
  %2081 = vrot.lane.b32.xlu0 %v1928, 20
  %v2082 = vpop.permute.xlu0 %2081
  %2083 = vrot.lane.b32.xlu0 %v1929, 20
  %v2084 = vpop.permute.xlu0 %2083
  %2085 = vrot.lane.b32.xlu0 %v1930, 20
  %v2086 = vpop.permute.xlu0 %2085
  %2087 = vrot.lane.b32.xlu0 %v1931, 20
  %v2088 = vpop.permute.xlu0 %2087
  %2089 = vrot.lane.b32.xlu0 %v1932, 20
  %v2090 = vpop.permute.xlu0 %2089
  %2091 = vrot.lane.b32.xlu0 %v1933, 20
  %v2092 = vpop.permute.xlu0 %2091
  %2093 = vrot.lane.b32.xlu0 %v1934, 20
  %v2094 = vpop.permute.xlu0 %2093
  %2095 = vrot.lane.b32.xlu0 %v1935, 20
  %v2096 = vpop.permute.xlu0 %2095
  %2097 = vrot.lane.b32.xlu0 %v1936, 20
  %v2098 = vpop.permute.xlu0 %2097
  %2099 = vrot.lane.b32.xlu0 %v1937, 20
  %v2100 = vpop.permute.xlu0 %2099
  %2101 = vrot.lane.b32.xlu0 %v1938, 20
  %v2102 = vpop.permute.xlu0 %2101
  %2103 = vrot.lane.b32.xlu0 %v1939, 20
  %v2104 = vpop.permute.xlu0 %2103
  %2105 = vrot.lane.b32.xlu0 %v1940, 20
  %v2106 = vpop.permute.xlu0 %2105
  %2107 = vrot.lane.b32.xlu0 %v1941, 20
  %v2108 = vpop.permute.xlu0 %2107
  %2109 = vrot.lane.b32.xlu0 %v1942, 20
  %v2110 = vpop.permute.xlu0 %2109
  %2111 = vrot.lane.b32.xlu0 %v1943, 20
  %v2112 = vpop.permute.xlu0 %2111
  %2113 = vrot.lane.b32.xlu0 %v1944, 20
  %v2114 = vpop.permute.xlu0 %2113
  %2115 = vrot.lane.b32.xlu0 %v1945, 20
  %v2116 = vpop.permute.xlu0 %2115
  %2117 = vrot.lane.b32.xlu0 %v1946, 20
  %v2118 = vpop.permute.xlu0 %2117
  %2119 = vrot.lane.b32.xlu0 %v1947, 20
  %v2120 = vpop.permute.xlu0 %2119
  %2121 = vrot.lane.b32.xlu0 %v1948, 20
  %v2122 = vpop.permute.xlu0 %2121
  %2123 = vrot.lane.b32.xlu0 %v1949, 20
  %v2124 = vpop.permute.xlu0 %2123
  %2125 = vrot.lane.b32.xlu0 %v1950, 20
  %v2126 = vpop.permute.xlu0 %2125
  %2127 = vrot.lane.b32.xlu0 %v1951, 20
  %v2128 = vpop.permute.xlu0 %2127
  %2129 = vrot.lane.b32.xlu0 %v1952, 20
  %v2130 = vpop.permute.xlu0 %2129
  %2131 = vrot.lane.b32.xlu0 %v1953, 20
  %v2132 = vpop.permute.xlu0 %2131
  %2133 = vrot.lane.b32.xlu0 %v1954, 20
  %v2134 = vpop.permute.xlu0 %2133
  %2135 = vrot.lane.b32.xlu0 %v1955, 20
  %v2136 = vpop.permute.xlu0 %2135
  %2137 = vrot.lane.b32.xlu0 %v1956, 20
  %v2138 = vpop.permute.xlu0 %2137
  %2139 = vrot.lane.b32.xlu0 %v1957, 20
  %v2140 = vpop.permute.xlu0 %2139
  %2141 = vrot.lane.b32.xlu0 %v1958, 20
  %v2142 = vpop.permute.xlu0 %2141
  %2143 = vrot.lane.b32.xlu0 %v1959, 20
  %v2144 = vpop.permute.xlu0 %2143
  %2145 = vrot.lane.b32.xlu0 %v1960, 20
  %v2146 = vpop.permute.xlu0 %2145
  %2147 = vrot.lane.b32.xlu0 %v1961, 20
  %v2148 = vpop.permute.xlu0 %2147
  %2149 = vrot.lane.b32.xlu0 %v1962, 20
  %v2150 = vpop.permute.xlu0 %2149
  %2151 = vrot.lane.b32.xlu0 %v1963, 20
  %v2152 = vpop.permute.xlu0 %2151
  %2153 = vrot.lane.b32.xlu0 %v1964, 20
  %v2154 = vpop.permute.xlu0 %2153
  %2155 = vrot.lane.b32.xlu0 %v1965, 20
  %v2156 = vpop.permute.xlu0 %2155
  %2157 = vrot.lane.b32.xlu0 %v1966, 20
  %v2158 = vpop.permute.xlu0 %2157
  %vm2223 = vcmask 195744
  %2224 = vst.msk [vmem:[#allocation3] sm:$0xff] %vm2223, %v2032
  %2225 = vst.msk [vmem:[#allocation3 + $0x8] sm:$0xff] %vm2223, %v2034
  %2226 = vst.msk [vmem:[#allocation3 + $0x10] sm:$0xff] %vm2223, %v2036
  %2227 = vst.msk [vmem:[#allocation3 + $0x18] sm:$0xff] %vm2223, %v2038
  %2228 = vst.msk [vmem:[#allocation3 + $0x20] sm:$0xff] %vm2223, %v2040
  %2229 = vst.msk [vmem:[#allocation3 + $0x28] sm:$0xff] %vm2223, %v2042
  %2230 = vst.msk [vmem:[#allocation3 + $0x30] sm:$0xff] %vm2223, %v2044
  %2231 = vst.msk [vmem:[#allocation3 + $0x38] sm:$0xff] %vm2223, %v2046
  %2232 = vst.msk [vmem:[#allocation3 + $0x40] sm:$0xff] %vm2223, %v2048
  %2233 = vst.msk [vmem:[#allocation3 + $0x48] sm:$0xff] %vm2223, %v2050
  %2234 = vst.msk [vmem:[#allocation3 + $0x50] sm:$0xff] %vm2223, %v2052
  %2235 = vst.msk [vmem:[#allocation3 + $0x58] sm:$0xff] %vm2223, %v2054
  %2236 = vst.msk [vmem:[#allocation3 + $0x60] sm:$0xff] %vm2223, %v2056
  %2237 = vst.msk [vmem:[#allocation3 + $0x68] sm:$0xff] %vm2223, %v2058
  %2238 = vst.msk [vmem:[#allocation3 + $0x70] sm:$0xff] %vm2223, %v2060
  %2239 = vst.msk [vmem:[#allocation3 + $0x78] sm:$0xff] %vm2223, %v2062
  %2240 = vst.msk [vmem:[#allocation3 + $0x80] sm:$0xff] %vm2223, %v2064
  %2241 = vst.msk [vmem:[#allocation3 + $0x88] sm:$0xff] %vm2223, %v2066
  %2242 = vst.msk [vmem:[#allocation3 + $0x90] sm:$0xff] %vm2223, %v2068
  %2243 = vst.msk [vmem:[#allocation3 + $0x98] sm:$0xff] %vm2223, %v2070
  %2244 = vst.msk [vmem:[#allocation3 + $0xa0] sm:$0xff] %vm2223, %v2072
  %2245 = vst.msk [vmem:[#allocation3 + $0xa8] sm:$0xff] %vm2223, %v2074
  %2246 = vst.msk [vmem:[#allocation3 + $0xb0] sm:$0xff] %vm2223, %v2076
  %2247 = vst.msk [vmem:[#allocation3 + $0xb8] sm:$0xff] %vm2223, %v2078
  %2248 = vst.msk [vmem:[#allocation3 + $0xc0] sm:$0xff] %vm2223, %v2080
  %2249 = vst.msk [vmem:[#allocation3 + $0xc8] sm:$0xff] %vm2223, %v2082
  %2250 = vst.msk [vmem:[#allocation3 + $0xd0] sm:$0xff] %vm2223, %v2084
  %2251 = vst.msk [vmem:[#allocation3 + $0xd8] sm:$0xff] %vm2223, %v2086
  %2252 = vst.msk [vmem:[#allocation3 + $0xe0] sm:$0xff] %vm2223, %v2088
  %2253 = vst.msk [vmem:[#allocation3 + $0xe8] sm:$0xff] %vm2223, %v2090
  %2254 = vst.msk [vmem:[#allocation3 + $0xf0] sm:$0xff] %vm2223, %v2092
  %2255 = vst.msk [vmem:[#allocation3 + $0xf8] sm:$0xff] %vm2223, %v2094
  %2256 = vst.msk [vmem:[#allocation3 + $0x100] sm:$0xff] %vm2223, %v2096
  %2257 = vst.msk [vmem:[#allocation3 + $0x108] sm:$0xff] %vm2223, %v2098
  %2258 = vst.msk [vmem:[#allocation3 + $0x110] sm:$0xff] %vm2223, %v2100
  %2259 = vst.msk [vmem:[#allocation3 + $0x118] sm:$0xff] %vm2223, %v2102
  %2260 = vst.msk [vmem:[#allocation3 + $0x120] sm:$0xff] %vm2223, %v2104
  %2261 = vst.msk [vmem:[#allocation3 + $0x128] sm:$0xff] %vm2223, %v2106
  %2262 = vst.msk [vmem:[#allocation3 + $0x130] sm:$0xff] %vm2223, %v2108
  %2263 = vst.msk [vmem:[#allocation3 + $0x138] sm:$0xff] %vm2223, %v2110
  %2264 = vst.msk [vmem:[#allocation3 + $0x140] sm:$0xff] %vm2223, %v2112
  %2265 = vst.msk [vmem:[#allocation3 + $0x148] sm:$0xff] %vm2223, %v2114
  %2266 = vst.msk [vmem:[#allocation3 + $0x150] sm:$0xff] %vm2223, %v2116
  %2267 = vst.msk [vmem:[#allocation3 + $0x158] sm:$0xff] %vm2223, %v2118
  %2268 = vst.msk [vmem:[#allocation3 + $0x160] sm:$0xff] %vm2223, %v2120
  %2269 = vst.msk [vmem:[#allocation3 + $0x168] sm:$0xff] %vm2223, %v2122
  %2270 = vst.msk [vmem:[#allocation3 + $0x170] sm:$0xff] %vm2223, %v2124
  %2271 = vst.msk [vmem:[#allocation3 + $0x178] sm:$0xff] %vm2223, %v2126
  %2272 = vst.msk [vmem:[#allocation3 + $0x180] sm:$0xff] %vm2223, %v2128
  %2273 = vst.msk [vmem:[#allocation3 + $0x188] sm:$0xff] %vm2223, %v2130
  %2274 = vst.msk [vmem:[#allocation3 + $0x190] sm:$0xff] %vm2223, %v2132
  %2275 = vst.msk [vmem:[#allocation3 + $0x198] sm:$0xff] %vm2223, %v2134
  %2276 = vst.msk [vmem:[#allocation3 + $0x1a0] sm:$0xff] %vm2223, %v2136
  %2277 = vst.msk [vmem:[#allocation3 + $0x1a8] sm:$0xff] %vm2223, %v2138
  %2278 = vst.msk [vmem:[#allocation3 + $0x1b0] sm:$0xff] %vm2223, %v2140
  %2279 = vst.msk [vmem:[#allocation3 + $0x1b8] sm:$0xff] %vm2223, %v2142
  %2280 = vst.msk [vmem:[#allocation3 + $0x1c0] sm:$0xff] %vm2223, %v2144
  %2281 = vst.msk [vmem:[#allocation3 + $0x1c8] sm:$0xff] %vm2223, %v2146
  %2282 = vst.msk [vmem:[#allocation3 + $0x1d0] sm:$0xff] %vm2223, %v2148
  %2283 = vst.msk [vmem:[#allocation3 + $0x1d8] sm:$0xff] %vm2223, %v2150
  %2284 = vst.msk [vmem:[#allocation3 + $0x1e0] sm:$0xff] %vm2223, %v2152
  %2285 = vst.msk [vmem:[#allocation3 + $0x1e8] sm:$0xff] %vm2223, %v2154
  %2286 = vst.msk [vmem:[#allocation3 + $0x1f0] sm:$0xff] %vm2223, %v2156
  %2287 = vst.msk [vmem:[#allocation3 + $0x1f8] sm:$0xff] %vm2223, %v2158
  %s2288 = scalar_lea.vmem [#allocation2], 48
  %v2289 = vld [vmem:[%s2288] sm:$0xff]
  %v2290 = vld [vmem:[%s2288 + $0x8] sm:$0xff]
  %v2291 = vld [vmem:[%s2288 + $0x18] sm:$0xff]
  %v2292 = vld [vmem:[%s2288 + $0x20] sm:$0xff]
  %v2293 = vld [vmem:[%s2288 + $0x30] sm:$0xff]
  %v2294 = vld [vmem:[%s2288 + $0x38] sm:$0xff]
  %v2295 = vld [vmem:[%s2288 + $0x48] sm:$0xff]
  %v2296 = vld [vmem:[%s2288 + $0x50] sm:$0xff]
  %v2297 = vld [vmem:[%s2288 + $0x60] sm:$0xff]
  %v2298 = vld [vmem:[%s2288 + $0x68] sm:$0xff]
  %v2299 = vld [vmem:[%s2288 + $0x78] sm:$0xff]
  %v2300 = vld [vmem:[%s2288 + $0x80] sm:$0xff]
  %v2301 = vld [vmem:[%s2288 + $0x90] sm:$0xff]
  %v2302 = vld [vmem:[%s2288 + $0x98] sm:$0xff]
  %v2303 = vld [vmem:[%s2288 + $0xa8] sm:$0xff]
  %v2304 = vld [vmem:[%s2288 + $0xb0] sm:$0xff]
  %v2305 = vld [vmem:[%s2288 + $0xc0] sm:$0xff]
  %v2306 = vld [vmem:[%s2288 + $0xc8] sm:$0xff]
  %v2307 = vld [vmem:[%s2288 + $0xd8] sm:$0xff]
  %v2308 = vld [vmem:[%s2288 + $0xe0] sm:$0xff]
  %v2309 = vld [vmem:[%s2288 + $0xf0] sm:$0xff]
  %v2310 = vld [vmem:[%s2288 + $0xf8] sm:$0xff]
  %v2311 = vld [vmem:[%s2288 + $0x108] sm:$0xff]
  %v2312 = vld [vmem:[%s2288 + $0x110] sm:$0xff]
  %v2313 = vld [vmem:[%s2288 + $0x120] sm:$0xff]
  %v2314 = vld [vmem:[%s2288 + $0x128] sm:$0xff]
  %v2315 = vld [vmem:[%s2288 + $0x138] sm:$0xff]
  %v2316 = vld [vmem:[%s2288 + $0x140] sm:$0xff]
  %v2317 = vld [vmem:[%s2288 + $0x150] sm:$0xff]
  %v2318 = vld [vmem:[%s2288 + $0x158] sm:$0xff]
  %v2319 = vld [vmem:[%s2288 + $0x168] sm:$0xff]
  %v2320 = vld [vmem:[%s2288 + $0x170] sm:$0xff]
  %v2321 = vld [vmem:[%s2288 + $0x1b0] sm:$0xff]
  %v2322 = vld [vmem:[%s2288 + $0x1b8] sm:$0xff]
  %v2323 = vld [vmem:[%s2288 + $0x1c8] sm:$0xff]
  %v2324 = vld [vmem:[%s2288 + $0x1d0] sm:$0xff]
  %v2325 = vld [vmem:[%s2288 + $0x1e0] sm:$0xff]
  %v2326 = vld [vmem:[%s2288 + $0x1e8] sm:$0xff]
  %v2327 = vld [vmem:[%s2288 + $0x1f8] sm:$0xff]
  %v2328 = vld [vmem:[%s2288 + $0x200] sm:$0xff]
  %v2329 = vld [vmem:[%s2288 + $0x210] sm:$0xff]
  %v2330 = vld [vmem:[%s2288 + $0x218] sm:$0xff]
  %v2331 = vld [vmem:[%s2288 + $0x228] sm:$0xff]
  %v2332 = vld [vmem:[%s2288 + $0x230] sm:$0xff]
  %v2333 = vld [vmem:[%s2288 + $0x240] sm:$0xff]
  %v2334 = vld [vmem:[%s2288 + $0x248] sm:$0xff]
  %v2335 = vld [vmem:[%s2288 + $0x258] sm:$0xff]
  %v2336 = vld [vmem:[%s2288 + $0x260] sm:$0xff]
  %v2337 = vld [vmem:[%s2288 + $0x270] sm:$0xff]
  %v2338 = vld [vmem:[%s2288 + $0x278] sm:$0xff]
  %v2339 = vld [vmem:[%s2288 + $0x288] sm:$0xff]
  %v2340 = vld [vmem:[%s2288 + $0x290] sm:$0xff]
  %v2341 = vld [vmem:[%s2288 + $0x2a0] sm:$0xff]
  %v2342 = vld [vmem:[%s2288 + $0x2a8] sm:$0xff]
  %v2343 = vld [vmem:[%s2288 + $0x2b8] sm:$0xff]
  %v2344 = vld [vmem:[%s2288 + $0x2c0] sm:$0xff]
  %v2345 = vld [vmem:[%s2288 + $0x2d0] sm:$0xff]
  %v2346 = vld [vmem:[%s2288 + $0x2d8] sm:$0xff]
  %v2347 = vld [vmem:[%s2288 + $0x2e8] sm:$0xff]
  %v2348 = vld [vmem:[%s2288 + $0x2f0] sm:$0xff]
  %v2349 = vld [vmem:[%s2288 + $0x300] sm:$0xff]
  %v2350 = vld [vmem:[%s2288 + $0x308] sm:$0xff]
  %v2351 = vld [vmem:[%s2288 + $0x318] sm:$0xff]
  %v2352 = vld [vmem:[%s2288 + $0x320] sm:$0xff]
  %2417 = vrot.lane.b32.xlu0 %v2289, 24
  %v2418 = vpop.permute.xlu0 %2417
  %2419 = vrot.lane.b32.xlu0 %v2290, 24
  %v2420 = vpop.permute.xlu0 %2419
  %2421 = vrot.lane.b32.xlu0 %v2291, 24
  %v2422 = vpop.permute.xlu0 %2421
  %2423 = vrot.lane.b32.xlu0 %v2292, 24
  %v2424 = vpop.permute.xlu0 %2423
  %2425 = vrot.lane.b32.xlu0 %v2293, 24
  %v2426 = vpop.permute.xlu0 %2425
  %2427 = vrot.lane.b32.xlu0 %v2294, 24
  %v2428 = vpop.permute.xlu0 %2427
  %2429 = vrot.lane.b32.xlu0 %v2295, 24
  %v2430 = vpop.permute.xlu0 %2429
  %2431 = vrot.lane.b32.xlu0 %v2296, 24
  %v2432 = vpop.permute.xlu0 %2431
  %2433 = vrot.lane.b32.xlu0 %v2297, 24
  %v2434 = vpop.permute.xlu0 %2433
  %2435 = vrot.lane.b32.xlu0 %v2298, 24
  %v2436 = vpop.permute.xlu0 %2435
  %2437 = vrot.lane.b32.xlu0 %v2299, 24
  %v2438 = vpop.permute.xlu0 %2437
  %2439 = vrot.lane.b32.xlu0 %v2300, 24
  %v2440 = vpop.permute.xlu0 %2439
  %2441 = vrot.lane.b32.xlu0 %v2301, 24
  %v2442 = vpop.permute.xlu0 %2441
  %2443 = vrot.lane.b32.xlu0 %v2302, 24
  %v2444 = vpop.permute.xlu0 %2443
  %2445 = vrot.lane.b32.xlu0 %v2303, 24
  %v2446 = vpop.permute.xlu0 %2445
  %2447 = vrot.lane.b32.xlu0 %v2304, 24
  %v2448 = vpop.permute.xlu0 %2447
  %2449 = vrot.lane.b32.xlu0 %v2305, 24
  %v2450 = vpop.permute.xlu0 %2449
  %2451 = vrot.lane.b32.xlu0 %v2306, 24
  %v2452 = vpop.permute.xlu0 %2451
  %2453 = vrot.lane.b32.xlu0 %v2307, 24
  %v2454 = vpop.permute.xlu0 %2453
  %2455 = vrot.lane.b32.xlu0 %v2308, 24
  %v2456 = vpop.permute.xlu0 %2455
  %2457 = vrot.lane.b32.xlu0 %v2309, 24
  %v2458 = vpop.permute.xlu0 %2457
  %2459 = vrot.lane.b32.xlu0 %v2310, 24
  %v2460 = vpop.permute.xlu0 %2459
  %2461 = vrot.lane.b32.xlu0 %v2311, 24
  %v2462 = vpop.permute.xlu0 %2461
  %2463 = vrot.lane.b32.xlu0 %v2312, 24
  %v2464 = vpop.permute.xlu0 %2463
  %2465 = vrot.lane.b32.xlu0 %v2313, 24
  %v2466 = vpop.permute.xlu0 %2465
  %2467 = vrot.lane.b32.xlu0 %v2314, 24
  %v2468 = vpop.permute.xlu0 %2467
  %2469 = vrot.lane.b32.xlu0 %v2315, 24
  %v2470 = vpop.permute.xlu0 %2469
  %2471 = vrot.lane.b32.xlu0 %v2316, 24
  %v2472 = vpop.permute.xlu0 %2471
  %2473 = vrot.lane.b32.xlu0 %v2317, 24
  %v2474 = vpop.permute.xlu0 %2473
  %2475 = vrot.lane.b32.xlu0 %v2318, 24
  %v2476 = vpop.permute.xlu0 %2475
  %2477 = vrot.lane.b32.xlu0 %v2319, 24
  %v2478 = vpop.permute.xlu0 %2477
  %2479 = vrot.lane.b32.xlu0 %v2320, 24
  %v2480 = vpop.permute.xlu0 %2479
  %2481 = vrot.lane.b32.xlu0 %v2321, 24
  %v2482 = vpop.permute.xlu0 %2481
  %2483 = vrot.lane.b32.xlu0 %v2322, 24
  %v2484 = vpop.permute.xlu0 %2483
  %2485 = vrot.lane.b32.xlu0 %v2323, 24
  %v2486 = vpop.permute.xlu0 %2485
  %2487 = vrot.lane.b32.xlu0 %v2324, 24
  %v2488 = vpop.permute.xlu0 %2487
  %2489 = vrot.lane.b32.xlu0 %v2325, 24
  %v2490 = vpop.permute.xlu0 %2489
  %2491 = vrot.lane.b32.xlu0 %v2326, 24
  %v2492 = vpop.permute.xlu0 %2491
  %2493 = vrot.lane.b32.xlu0 %v2327, 24
  %v2494 = vpop.permute.xlu0 %2493
  %2495 = vrot.lane.b32.xlu0 %v2328, 24
  %v2496 = vpop.permute.xlu0 %2495
  %2497 = vrot.lane.b32.xlu0 %v2329, 24
  %v2498 = vpop.permute.xlu0 %2497
  %2499 = vrot.lane.b32.xlu0 %v2330, 24
  %v2500 = vpop.permute.xlu0 %2499
  %2501 = vrot.lane.b32.xlu0 %v2331, 24
  %v2502 = vpop.permute.xlu0 %2501
  %2503 = vrot.lane.b32.xlu0 %v2332, 24
  %v2504 = vpop.permute.xlu0 %2503
  %2505 = vrot.lane.b32.xlu0 %v2333, 24
  %v2506 = vpop.permute.xlu0 %2505
  %2507 = vrot.lane.b32.xlu0 %v2334, 24
  %v2508 = vpop.permute.xlu0 %2507
  %2509 = vrot.lane.b32.xlu0 %v2335, 24
  %v2510 = vpop.permute.xlu0 %2509
  %2511 = vrot.lane.b32.xlu0 %v2336, 24
  %v2512 = vpop.permute.xlu0 %2511
  %2513 = vrot.lane.b32.xlu0 %v2337, 24
  %v2514 = vpop.permute.xlu0 %2513
  %2515 = vrot.lane.b32.xlu0 %v2338, 24
  %v2516 = vpop.permute.xlu0 %2515
  %2517 = vrot.lane.b32.xlu0 %v2339, 24
  %v2518 = vpop.permute.xlu0 %2517
  %2519 = vrot.lane.b32.xlu0 %v2340, 24
  %v2520 = vpop.permute.xlu0 %2519
  %2521 = vrot.lane.b32.xlu0 %v2341, 24
  %v2522 = vpop.permute.xlu0 %2521
  %2523 = vrot.lane.b32.xlu0 %v2342, 24
  %v2524 = vpop.permute.xlu0 %2523
  %2525 = vrot.lane.b32.xlu0 %v2343, 24
  %v2526 = vpop.permute.xlu0 %2525
  %2527 = vrot.lane.b32.xlu0 %v2344, 24
  %v2528 = vpop.permute.xlu0 %2527
  %2529 = vrot.lane.b32.xlu0 %v2345, 24
  %v2530 = vpop.permute.xlu0 %2529
  %2531 = vrot.lane.b32.xlu0 %v2346, 24
  %v2532 = vpop.permute.xlu0 %2531
  %2533 = vrot.lane.b32.xlu0 %v2347, 24
  %v2534 = vpop.permute.xlu0 %2533
  %2535 = vrot.lane.b32.xlu0 %v2348, 24
  %v2536 = vpop.permute.xlu0 %2535
  %2537 = vrot.lane.b32.xlu0 %v2349, 24
  %v2538 = vpop.permute.xlu0 %2537
  %2539 = vrot.lane.b32.xlu0 %v2350, 24
  %v2540 = vpop.permute.xlu0 %2539
  %2541 = vrot.lane.b32.xlu0 %v2351, 24
  %v2542 = vpop.permute.xlu0 %2541
  %2543 = vrot.lane.b32.xlu0 %v2352, 24
  %v2544 = vpop.permute.xlu0 %2543
  %vm2609 = vcmask 228544
  %2610 = vst.msk [vmem:[#allocation3] sm:$0xff] %vm2609, %v2418
  %2611 = vst.msk [vmem:[#allocation3 + $0x8] sm:$0xff] %vm2609, %v2420
  %2612 = vst.msk [vmem:[#allocation3 + $0x10] sm:$0xff] %vm2609, %v2422
  %2613 = vst.msk [vmem:[#allocation3 + $0x18] sm:$0xff] %vm2609, %v2424
  %2614 = vst.msk [vmem:[#allocation3 + $0x20] sm:$0xff] %vm2609, %v2426
  %2615 = vst.msk [vmem:[#allocation3 + $0x28] sm:$0xff] %vm2609, %v2428
  %2616 = vst.msk [vmem:[#allocation3 + $0x30] sm:$0xff] %vm2609, %v2430
  %2617 = vst.msk [vmem:[#allocation3 + $0x38] sm:$0xff] %vm2609, %v2432
  %2618 = vst.msk [vmem:[#allocation3 + $0x40] sm:$0xff] %vm2609, %v2434
  %2619 = vst.msk [vmem:[#allocation3 + $0x48] sm:$0xff] %vm2609, %v2436
  %2620 = vst.msk [vmem:[#allocation3 + $0x50] sm:$0xff] %vm2609, %v2438
  %2621 = vst.msk [vmem:[#allocation3 + $0x58] sm:$0xff] %vm2609, %v2440
  %2622 = vst.msk [vmem:[#allocation3 + $0x60] sm:$0xff] %vm2609, %v2442
  %2623 = vst.msk [vmem:[#allocation3 + $0x68] sm:$0xff] %vm2609, %v2444
  %2624 = vst.msk [vmem:[#allocation3 + $0x70] sm:$0xff] %vm2609, %v2446
  %2625 = vst.msk [vmem:[#allocation3 + $0x78] sm:$0xff] %vm2609, %v2448
  %2626 = vst.msk [vmem:[#allocation3 + $0x80] sm:$0xff] %vm2609, %v2450
  %2627 = vst.msk [vmem:[#allocation3 + $0x88] sm:$0xff] %vm2609, %v2452
  %2628 = vst.msk [vmem:[#allocation3 + $0x90] sm:$0xff] %vm2609, %v2454
  %2629 = vst.msk [vmem:[#allocation3 + $0x98] sm:$0xff] %vm2609, %v2456
  %2630 = vst.msk [vmem:[#allocation3 + $0xa0] sm:$0xff] %vm2609, %v2458
  %2631 = vst.msk [vmem:[#allocation3 + $0xa8] sm:$0xff] %vm2609, %v2460
  %2632 = vst.msk [vmem:[#allocation3 + $0xb0] sm:$0xff] %vm2609, %v2462
  %2633 = vst.msk [vmem:[#allocation3 + $0xb8] sm:$0xff] %vm2609, %v2464
  %2634 = vst.msk [vmem:[#allocation3 + $0xc0] sm:$0xff] %vm2609, %v2466
  %2635 = vst.msk [vmem:[#allocation3 + $0xc8] sm:$0xff] %vm2609, %v2468
  %2636 = vst.msk [vmem:[#allocation3 + $0xd0] sm:$0xff] %vm2609, %v2470
  %2637 = vst.msk [vmem:[#allocation3 + $0xd8] sm:$0xff] %vm2609, %v2472
  %2638 = vst.msk [vmem:[#allocation3 + $0xe0] sm:$0xff] %vm2609, %v2474
  %2639 = vst.msk [vmem:[#allocation3 + $0xe8] sm:$0xff] %vm2609, %v2476
  %2640 = vst.msk [vmem:[#allocation3 + $0xf0] sm:$0xff] %vm2609, %v2478
  %2641 = vst.msk [vmem:[#allocation3 + $0xf8] sm:$0xff] %vm2609, %v2480
  %2642 = vst.msk [vmem:[#allocation3 + $0x100] sm:$0xff] %vm2609, %v2482
  %2643 = vst.msk [vmem:[#allocation3 + $0x108] sm:$0xff] %vm2609, %v2484
  %2644 = vst.msk [vmem:[#allocation3 + $0x110] sm:$0xff] %vm2609, %v2486
  %2645 = vst.msk [vmem:[#allocation3 + $0x118] sm:$0xff] %vm2609, %v2488
  %2646 = vst.msk [vmem:[#allocation3 + $0x120] sm:$0xff] %vm2609, %v2490
  %2647 = vst.msk [vmem:[#allocation3 + $0x128] sm:$0xff] %vm2609, %v2492
  %2648 = vst.msk [vmem:[#allocation3 + $0x130] sm:$0xff] %vm2609, %v2494
  %2649 = vst.msk [vmem:[#allocation3 + $0x138] sm:$0xff] %vm2609, %v2496
  %2650 = vst.msk [vmem:[#allocation3 + $0x140] sm:$0xff] %vm2609, %v2498
  %2651 = vst.msk [vmem:[#allocation3 + $0x148] sm:$0xff] %vm2609, %v2500
  %2652 = vst.msk [vmem:[#allocation3 + $0x150] sm:$0xff] %vm2609, %v2502
  %2653 = vst.msk [vmem:[#allocation3 + $0x158] sm:$0xff] %vm2609, %v2504
  %2654 = vst.msk [vmem:[#allocation3 + $0x160] sm:$0xff] %vm2609, %v2506
  %2655 = vst.msk [vmem:[#allocation3 + $0x168] sm:$0xff] %vm2609, %v2508
  %2656 = vst.msk [vmem:[#allocation3 + $0x170] sm:$0xff] %vm2609, %v2510
  %2657 = vst.msk [vmem:[#allocation3 + $0x178] sm:$0xff] %vm2609, %v2512
  %2658 = vst.msk [vmem:[#allocation3 + $0x180] sm:$0xff] %vm2609, %v2514
  %2659 = vst.msk [vmem:[#allocation3 + $0x188] sm:$0xff] %vm2609, %v2516
  %2660 = vst.msk [vmem:[#allocation3 + $0x190] sm:$0xff] %vm2609, %v2518
  %2661 = vst.msk [vmem:[#allocation3 + $0x198] sm:$0xff] %vm2609, %v2520
  %2662 = vst.msk [vmem:[#allocation3 + $0x1a0] sm:$0xff] %vm2609, %v2522
  %2663 = vst.msk [vmem:[#allocation3 + $0x1a8] sm:$0xff] %vm2609, %v2524
  %2664 = vst.msk [vmem:[#allocation3 + $0x1b0] sm:$0xff] %vm2609, %v2526
  %2665 = vst.msk [vmem:[#allocation3 + $0x1b8] sm:$0xff] %vm2609, %v2528
  %2666 = vst.msk [vmem:[#allocation3 + $0x1c0] sm:$0xff] %vm2609, %v2530
  %2667 = vst.msk [vmem:[#allocation3 + $0x1c8] sm:$0xff] %vm2609, %v2532
  %2668 = vst.msk [vmem:[#allocation3 + $0x1d0] sm:$0xff] %vm2609, %v2534
  %2669 = vst.msk [vmem:[#allocation3 + $0x1d8] sm:$0xff] %vm2609, %v2536
  %2670 = vst.msk [vmem:[#allocation3 + $0x1e0] sm:$0xff] %vm2609, %v2538
  %2671 = vst.msk [vmem:[#allocation3 + $0x1e8] sm:$0xff] %vm2609, %v2540
  %2672 = vst.msk [vmem:[#allocation3 + $0x1f0] sm:$0xff] %vm2609, %v2542
  %2673 = vst.msk [vmem:[#allocation3 + $0x1f8] sm:$0xff] %vm2609, %v2544
  %v2674 = vld [vmem:[%s2288 + $0x1] sm:$0xff]
  %v2675 = vld [vmem:[%s2288 + $0x9] sm:$0xff]
  %v2676 = vld [vmem:[%s2288 + $0x19] sm:$0xff]
  %v2677 = vld [vmem:[%s2288 + $0x21] sm:$0xff]
  %v2678 = vld [vmem:[%s2288 + $0x31] sm:$0xff]
  %v2679 = vld [vmem:[%s2288 + $0x39] sm:$0xff]
  %v2680 = vld [vmem:[%s2288 + $0x49] sm:$0xff]
  %v2681 = vld [vmem:[%s2288 + $0x51] sm:$0xff]
  %v2682 = vld [vmem:[%s2288 + $0x61] sm:$0xff]
  %v2683 = vld [vmem:[%s2288 + $0x69] sm:$0xff]
  %v2684 = vld [vmem:[%s2288 + $0x79] sm:$0xff]
  %v2685 = vld [vmem:[%s2288 + $0x81] sm:$0xff]
  %v2686 = vld [vmem:[%s2288 + $0x91] sm:$0xff]
  %v2687 = vld [vmem:[%s2288 + $0x99] sm:$0xff]
  %v2688 = vld [vmem:[%s2288 + $0xa9] sm:$0xff]
  %v2689 = vld [vmem:[%s2288 + $0xb1] sm:$0xff]
  %v2690 = vld [vmem:[%s2288 + $0xc1] sm:$0xff]
  %v2691 = vld [vmem:[%s2288 + $0xc9] sm:$0xff]
  %v2692 = vld [vmem:[%s2288 + $0xd9] sm:$0xff]
  %v2693 = vld [vmem:[%s2288 + $0xe1] sm:$0xff]
  %v2694 = vld [vmem:[%s2288 + $0xf1] sm:$0xff]
  %v2695 = vld [vmem:[%s2288 + $0xf9] sm:$0xff]
  %v2696 = vld [vmem:[%s2288 + $0x109] sm:$0xff]
  %v2697 = vld [vmem:[%s2288 + $0x111] sm:$0xff]
  %v2698 = vld [vmem:[%s2288 + $0x121] sm:$0xff]
  %v2699 = vld [vmem:[%s2288 + $0x129] sm:$0xff]
  %v2700 = vld [vmem:[%s2288 + $0x139] sm:$0xff]
  %v2701 = vld [vmem:[%s2288 + $0x141] sm:$0xff]
  %v2702 = vld [vmem:[%s2288 + $0x151] sm:$0xff]
  %v2703 = vld [vmem:[%s2288 + $0x159] sm:$0xff]
  %v2704 = vld [vmem:[%s2288 + $0x169] sm:$0xff]
  %v2705 = vld [vmem:[%s2288 + $0x171] sm:$0xff]
  %v2706 = vld [vmem:[%s2288 + $0x1b1] sm:$0xff]
  %v2707 = vld [vmem:[%s2288 + $0x1b9] sm:$0xff]
  %v2708 = vld [vmem:[%s2288 + $0x1c9] sm:$0xff]
  %v2709 = vld [vmem:[%s2288 + $0x1d1] sm:$0xff]
  %v2710 = vld [vmem:[%s2288 + $0x1e1] sm:$0xff]
  %v2711 = vld [vmem:[%s2288 + $0x1e9] sm:$0xff]
  %v2712 = vld [vmem:[%s2288 + $0x1f9] sm:$0xff]
  %v2713 = vld [vmem:[%s2288 + $0x201] sm:$0xff]
  %v2714 = vld [vmem:[%s2288 + $0x211] sm:$0xff]
  %v2715 = vld [vmem:[%s2288 + $0x219] sm:$0xff]
  %v2716 = vld [vmem:[%s2288 + $0x229] sm:$0xff]
  %v2717 = vld [vmem:[%s2288 + $0x231] sm:$0xff]
  %v2718 = vld [vmem:[%s2288 + $0x241] sm:$0xff]
  %v2719 = vld [vmem:[%s2288 + $0x249] sm:$0xff]
  %v2720 = vld [vmem:[%s2288 + $0x259] sm:$0xff]
  %v2721 = vld [vmem:[%s2288 + $0x261] sm:$0xff]
  %v2722 = vld [vmem:[%s2288 + $0x271] sm:$0xff]
  %v2723 = vld [vmem:[%s2288 + $0x279] sm:$0xff]
  %v2724 = vld [vmem:[%s2288 + $0x289] sm:$0xff]
  %v2725 = vld [vmem:[%s2288 + $0x291] sm:$0xff]
  %v2726 = vld [vmem:[%s2288 + $0x2a1] sm:$0xff]
  %v2727 = vld [vmem:[%s2288 + $0x2a9] sm:$0xff]
  %v2728 = vld [vmem:[%s2288 + $0x2b9] sm:$0xff]
  %v2729 = vld [vmem:[%s2288 + $0x2c1] sm:$0xff]
  %v2730 = vld [vmem:[%s2288 + $0x2d1] sm:$0xff]
  %v2731 = vld [vmem:[%s2288 + $0x2d9] sm:$0xff]
  %v2732 = vld [vmem:[%s2288 + $0x2e9] sm:$0xff]
  %v2733 = vld [vmem:[%s2288 + $0x2f1] sm:$0xff]
  %v2734 = vld [vmem:[%s2288 + $0x301] sm:$0xff]
  %v2735 = vld [vmem:[%s2288 + $0x309] sm:$0xff]
  %v2736 = vld [vmem:[%s2288 + $0x319] sm:$0xff]
  %v2737 = vld [vmem:[%s2288 + $0x321] sm:$0xff]
  %2802 = vrot.lane.b32.xlu0 %v2674, 28
  %v2803 = vpop.permute.xlu0 %2802
  %2804 = vrot.lane.b32.xlu0 %v2675, 28
  %v2805 = vpop.permute.xlu0 %2804
  %2806 = vrot.lane.b32.xlu0 %v2676, 28
  %v2807 = vpop.permute.xlu0 %2806
  %2808 = vrot.lane.b32.xlu0 %v2677, 28
  %v2809 = vpop.permute.xlu0 %2808
  %2810 = vrot.lane.b32.xlu0 %v2678, 28
  %v2811 = vpop.permute.xlu0 %2810
  %2812 = vrot.lane.b32.xlu0 %v2679, 28
  %v2813 = vpop.permute.xlu0 %2812
  %2814 = vrot.lane.b32.xlu0 %v2680, 28
  %v2815 = vpop.permute.xlu0 %2814
  %2816 = vrot.lane.b32.xlu0 %v2681, 28
  %v2817 = vpop.permute.xlu0 %2816
  %2818 = vrot.lane.b32.xlu0 %v2682, 28
  %v2819 = vpop.permute.xlu0 %2818
  %2820 = vrot.lane.b32.xlu0 %v2683, 28
  %v2821 = vpop.permute.xlu0 %2820
  %2822 = vrot.lane.b32.xlu0 %v2684, 28
  %v2823 = vpop.permute.xlu0 %2822
  %2824 = vrot.lane.b32.xlu0 %v2685, 28
  %v2825 = vpop.permute.xlu0 %2824
  %2826 = vrot.lane.b32.xlu0 %v2686, 28
  %v2827 = vpop.permute.xlu0 %2826
  %2828 = vrot.lane.b32.xlu0 %v2687, 28
  %v2829 = vpop.permute.xlu0 %2828
  %2830 = vrot.lane.b32.xlu0 %v2688, 28
  %v2831 = vpop.permute.xlu0 %2830
  %2832 = vrot.lane.b32.xlu0 %v2689, 28
  %v2833 = vpop.permute.xlu0 %2832
  %2834 = vrot.lane.b32.xlu0 %v2690, 28
  %v2835 = vpop.permute.xlu0 %2834
  %2836 = vrot.lane.b32.xlu0 %v2691, 28
  %v2837 = vpop.permute.xlu0 %2836
  %2838 = vrot.lane.b32.xlu0 %v2692, 28
  %v2839 = vpop.permute.xlu0 %2838
  %2840 = vrot.lane.b32.xlu0 %v2693, 28
  %v2841 = vpop.permute.xlu0 %2840
  %2842 = vrot.lane.b32.xlu0 %v2694, 28
  %v2843 = vpop.permute.xlu0 %2842
  %2844 = vrot.lane.b32.xlu0 %v2695, 28
  %v2845 = vpop.permute.xlu0 %2844
  %2846 = vrot.lane.b32.xlu0 %v2696, 28
  %v2847 = vpop.permute.xlu0 %2846
  %2848 = vrot.lane.b32.xlu0 %v2697, 28
  %v2849 = vpop.permute.xlu0 %2848
  %2850 = vrot.lane.b32.xlu0 %v2698, 28
  %v2851 = vpop.permute.xlu0 %2850
  %2852 = vrot.lane.b32.xlu0 %v2699, 28
  %v2853 = vpop.permute.xlu0 %2852
  %2854 = vrot.lane.b32.xlu0 %v2700, 28
  %v2855 = vpop.permute.xlu0 %2854
  %2856 = vrot.lane.b32.xlu0 %v2701, 28
  %v2857 = vpop.permute.xlu0 %2856
  %2858 = vrot.lane.b32.xlu0 %v2702, 28
  %v2859 = vpop.permute.xlu0 %2858
  %2860 = vrot.lane.b32.xlu0 %v2703, 28
  %v2861 = vpop.permute.xlu0 %2860
  %2862 = vrot.lane.b32.xlu0 %v2704, 28
  %v2863 = vpop.permute.xlu0 %2862
  %2864 = vrot.lane.b32.xlu0 %v2705, 28
  %v2865 = vpop.permute.xlu0 %2864
  %2866 = vrot.lane.b32.xlu0 %v2706, 28
  %v2867 = vpop.permute.xlu0 %2866
  %2868 = vrot.lane.b32.xlu0 %v2707, 28
  %v2869 = vpop.permute.xlu0 %2868
  %2870 = vrot.lane.b32.xlu0 %v2708, 28
  %v2871 = vpop.permute.xlu0 %2870
  %2872 = vrot.lane.b32.xlu0 %v2709, 28
  %v2873 = vpop.permute.xlu0 %2872
  %2874 = vrot.lane.b32.xlu0 %v2710, 28
  %v2875 = vpop.permute.xlu0 %2874
  %2876 = vrot.lane.b32.xlu0 %v2711, 28
  %v2877 = vpop.permute.xlu0 %2876
  %2878 = vrot.lane.b32.xlu0 %v2712, 28
  %v2879 = vpop.permute.xlu0 %2878
  %2880 = vrot.lane.b32.xlu0 %v2713, 28
  %v2881 = vpop.permute.xlu0 %2880
  %2882 = vrot.lane.b32.xlu0 %v2714, 28
  %v2883 = vpop.permute.xlu0 %2882
  %2884 = vrot.lane.b32.xlu0 %v2715, 28
  %v2885 = vpop.permute.xlu0 %2884
  %2886 = vrot.lane.b32.xlu0 %v2716, 28
  %v2887 = vpop.permute.xlu0 %2886
  %2888 = vrot.lane.b32.xlu0 %v2717, 28
  %v2889 = vpop.permute.xlu0 %2888
  %2890 = vrot.lane.b32.xlu0 %v2718, 28
  %v2891 = vpop.permute.xlu0 %2890
  %2892 = vrot.lane.b32.xlu0 %v2719, 28
  %v2893 = vpop.permute.xlu0 %2892
  %2894 = vrot.lane.b32.xlu0 %v2720, 28
  %v2895 = vpop.permute.xlu0 %2894
  %2896 = vrot.lane.b32.xlu0 %v2721, 28
  %v2897 = vpop.permute.xlu0 %2896
  %2898 = vrot.lane.b32.xlu0 %v2722, 28
  %v2899 = vpop.permute.xlu0 %2898
  %2900 = vrot.lane.b32.xlu0 %v2723, 28
  %v2901 = vpop.permute.xlu0 %2900
  %2902 = vrot.lane.b32.xlu0 %v2724, 28
  %v2903 = vpop.permute.xlu0 %2902
  %2904 = vrot.lane.b32.xlu0 %v2725, 28
  %v2905 = vpop.permute.xlu0 %2904
  %2906 = vrot.lane.b32.xlu0 %v2726, 28
  %v2907 = vpop.permute.xlu0 %2906
  %2908 = vrot.lane.b32.xlu0 %v2727, 28
  %v2909 = vpop.permute.xlu0 %2908
  %2910 = vrot.lane.b32.xlu0 %v2728, 28
  %v2911 = vpop.permute.xlu0 %2910
  %2912 = vrot.lane.b32.xlu0 %v2729, 28
  %v2913 = vpop.permute.xlu0 %2912
  %2914 = vrot.lane.b32.xlu0 %v2730, 28
  %v2915 = vpop.permute.xlu0 %2914
  %2916 = vrot.lane.b32.xlu0 %v2731, 28
  %v2917 = vpop.permute.xlu0 %2916
  %2918 = vrot.lane.b32.xlu0 %v2732, 28
  %v2919 = vpop.permute.xlu0 %2918
  %2920 = vrot.lane.b32.xlu0 %v2733, 28
  %v2921 = vpop.permute.xlu0 %2920
  %2922 = vrot.lane.b32.xlu0 %v2734, 28
  %v2923 = vpop.permute.xlu0 %2922
  %2924 = vrot.lane.b32.xlu0 %v2735, 28
  %v2925 = vpop.permute.xlu0 %2924
  %2926 = vrot.lane.b32.xlu0 %v2736, 28
  %v2927 = vpop.permute.xlu0 %2926
  %2928 = vrot.lane.b32.xlu0 %v2737, 28
  %v2929 = vpop.permute.xlu0 %2928
  %vm2994 = vcmask 261344
  %2995 = vst.msk [vmem:[#allocation3] sm:$0xff] %vm2994, %v2803
  %2996 = vst.msk [vmem:[#allocation3 + $0x8] sm:$0xff] %vm2994, %v2805
  %2997 = vst.msk [vmem:[#allocation3 + $0x10] sm:$0xff] %vm2994, %v2807
  %2998 = vst.msk [vmem:[#allocation3 + $0x18] sm:$0xff] %vm2994, %v2809
  %2999 = vst.msk [vmem:[#allocation3 + $0x20] sm:$0xff] %vm2994, %v2811
  %3000 = vst.msk [vmem:[#allocation3 + $0x28] sm:$0xff] %vm2994, %v2813
  %3001 = vst.msk [vmem:[#allocation3 + $0x30] sm:$0xff] %vm2994, %v2815
  %3002 = vst.msk [vmem:[#allocation3 + $0x38] sm:$0xff] %vm2994, %v2817
  %3003 = vst.msk [vmem:[#allocation3 + $0x40] sm:$0xff] %vm2994, %v2819
  %3004 = vst.msk [vmem:[#allocation3 + $0x48] sm:$0xff] %vm2994, %v2821
  %3005 = vst.msk [vmem:[#allocation3 + $0x50] sm:$0xff] %vm2994, %v2823
  %3006 = vst.msk [vmem:[#allocation3 + $0x58] sm:$0xff] %vm2994, %v2825
  %3007 = vst.msk [vmem:[#allocation3 + $0x60] sm:$0xff] %vm2994, %v2827
  %3008 = vst.msk [vmem:[#allocation3 + $0x68] sm:$0xff] %vm2994, %v2829
  %3009 = vst.msk [vmem:[#allocation3 + $0x70] sm:$0xff] %vm2994, %v2831
  %3010 = vst.msk [vmem:[#allocation3 + $0x78] sm:$0xff] %vm2994, %v2833
  %3011 = vst.msk [vmem:[#allocation3 + $0x80] sm:$0xff] %vm2994, %v2835
  %3012 = vst.msk [vmem:[#allocation3 + $0x88] sm:$0xff] %vm2994, %v2837
  %3013 = vst.msk [vmem:[#allocation3 + $0x90] sm:$0xff] %vm2994, %v2839
  %3014 = vst.msk [vmem:[#allocation3 + $0x98] sm:$0xff] %vm2994, %v2841
  %3015 = vst.msk [vmem:[#allocation3 + $0xa0] sm:$0xff] %vm2994, %v2843
  %3016 = vst.msk [vmem:[#allocation3 + $0xa8] sm:$0xff] %vm2994, %v2845
  %3017 = vst.msk [vmem:[#allocation3 + $0xb0] sm:$0xff] %vm2994, %v2847
  %3018 = vst.msk [vmem:[#allocation3 + $0xb8] sm:$0xff] %vm2994, %v2849
  %3019 = vst.msk [vmem:[#allocation3 + $0xc0] sm:$0xff] %vm2994, %v2851
  %3020 = vst.msk [vmem:[#allocation3 + $0xc8] sm:$0xff] %vm2994, %v2853
  %3021 = vst.msk [vmem:[#allocation3 + $0xd0] sm:$0xff] %vm2994, %v2855
  %3022 = vst.msk [vmem:[#allocation3 + $0xd8] sm:$0xff] %vm2994, %v2857
  %3023 = vst.msk [vmem:[#allocation3 + $0xe0] sm:$0xff] %vm2994, %v2859
  %3024 = vst.msk [vmem:[#allocation3 + $0xe8] sm:$0xff] %vm2994, %v2861
  %3025 = vst.msk [vmem:[#allocation3 + $0xf0] sm:$0xff] %vm2994, %v2863
  %3026 = vst.msk [vmem:[#allocation3 + $0xf8] sm:$0xff] %vm2994, %v2865
  %3027 = vst.msk [vmem:[#allocation3 + $0x100] sm:$0xff] %vm2994, %v2867
  %3028 = vst.msk [vmem:[#allocation3 + $0x108] sm:$0xff] %vm2994, %v2869
  %3029 = vst.msk [vmem:[#allocation3 + $0x110] sm:$0xff] %vm2994, %v2871
  %3030 = vst.msk [vmem:[#allocation3 + $0x118] sm:$0xff] %vm2994, %v2873
  %3031 = vst.msk [vmem:[#allocation3 + $0x120] sm:$0xff] %vm2994, %v2875
  %3032 = vst.msk [vmem:[#allocation3 + $0x128] sm:$0xff] %vm2994, %v2877
  %3033 = vst.msk [vmem:[#allocation3 + $0x130] sm:$0xff] %vm2994, %v2879
  %3034 = vst.msk [vmem:[#allocation3 + $0x138] sm:$0xff] %vm2994, %v2881
  %3035 = vst.msk [vmem:[#allocation3 + $0x140] sm:$0xff] %vm2994, %v2883
  %3036 = vst.msk [vmem:[#allocation3 + $0x148] sm:$0xff] %vm2994, %v2885
  %3037 = vst.msk [vmem:[#allocation3 + $0x150] sm:$0xff] %vm2994, %v2887
  %3038 = vst.msk [vmem:[#allocation3 + $0x158] sm:$0xff] %vm2994, %v2889
  %3039 = vst.msk [vmem:[#allocation3 + $0x160] sm:$0xff] %vm2994, %v2891
  %3040 = vst.msk [vmem:[#allocation3 + $0x168] sm:$0xff] %vm2994, %v2893
  %3041 = vst.msk [vmem:[#allocation3 + $0x170] sm:$0xff] %vm2994, %v2895
  %3042 = vst.msk [vmem:[#allocation3 + $0x178] sm:$0xff] %vm2994, %v2897
  %3043 = vst.msk [vmem:[#allocation3 + $0x180] sm:$0xff] %vm2994, %v2899
  %3044 = vst.msk [vmem:[#allocation3 + $0x188] sm:$0xff] %vm2994, %v2901
  %3045 = vst.msk [vmem:[#allocation3 + $0x190] sm:$0xff] %vm2994, %v2903
  %3046 = vst.msk [vmem:[#allocation3 + $0x198] sm:$0xff] %vm2994, %v2905
  %3047 = vst.msk [vmem:[#allocation3 + $0x1a0] sm:$0xff] %vm2994, %v2907
  %3048 = vst.msk [vmem:[#allocation3 + $0x1a8] sm:$0xff] %vm2994, %v2909
  %3049 = vst.msk [vmem:[#allocation3 + $0x1b0] sm:$0xff] %vm2994, %v2911
  %3050 = vst.msk [vmem:[#allocation3 + $0x1b8] sm:$0xff] %vm2994, %v2913
  %3051 = vst.msk [vmem:[#allocation3 + $0x1c0] sm:$0xff] %vm2994, %v2915
  %3052 = vst.msk [vmem:[#allocation3 + $0x1c8] sm:$0xff] %vm2994, %v2917
  %3053 = vst.msk [vmem:[#allocation3 + $0x1d0] sm:$0xff] %vm2994, %v2919
  %3054 = vst.msk [vmem:[#allocation3 + $0x1d8] sm:$0xff] %vm2994, %v2921
  %3055 = vst.msk [vmem:[#allocation3 + $0x1e0] sm:$0xff] %vm2994, %v2923
  %3056 = vst.msk [vmem:[#allocation3 + $0x1e8] sm:$0xff] %vm2994, %v2925
  %3057 = vst.msk [vmem:[#allocation3 + $0x1f0] sm:$0xff] %vm2994, %v2927
  %3058 = vst.msk [vmem:[#allocation3 + $0x1f8] sm:$0xff] %vm2994, %v2929
  %v3059 = vld [vmem:[%s2288 + $0x2] sm:$0xff]
  %v3060 = vld [vmem:[%s2288 + $0xa] sm:$0xff]
  %v3061 = vld [vmem:[%s2288 + $0x1a] sm:$0xff]
  %v3062 = vld [vmem:[%s2288 + $0x22] sm:$0xff]
  %v3063 = vld [vmem:[%s2288 + $0x32] sm:$0xff]
  %v3064 = vld [vmem:[%s2288 + $0x3a] sm:$0xff]
  %v3065 = vld [vmem:[%s2288 + $0x4a] sm:$0xff]
  %v3066 = vld [vmem:[%s2288 + $0x52] sm:$0xff]
  %v3067 = vld [vmem:[%s2288 + $0x62] sm:$0xff]
  %v3068 = vld [vmem:[%s2288 + $0x6a] sm:$0xff]
  %v3069 = vld [vmem:[%s2288 + $0x7a] sm:$0xff]
  %v3070 = vld [vmem:[%s2288 + $0x82] sm:$0xff]
  %v3071 = vld [vmem:[%s2288 + $0x92] sm:$0xff]
  %v3072 = vld [vmem:[%s2288 + $0x9a] sm:$0xff]
  %v3073 = vld [vmem:[%s2288 + $0xaa] sm:$0xff]
  %v3074 = vld [vmem:[%s2288 + $0xb2] sm:$0xff]
  %v3075 = vld [vmem:[%s2288 + $0xc2] sm:$0xff]
  %v3076 = vld [vmem:[%s2288 + $0xca] sm:$0xff]
  %v3077 = vld [vmem:[%s2288 + $0xda] sm:$0xff]
  %v3078 = vld [vmem:[%s2288 + $0xe2] sm:$0xff]
  %v3079 = vld [vmem:[%s2288 + $0xf2] sm:$0xff]
  %v3080 = vld [vmem:[%s2288 + $0xfa] sm:$0xff]
  %v3081 = vld [vmem:[%s2288 + $0x10a] sm:$0xff]
  %v3082 = vld [vmem:[%s2288 + $0x112] sm:$0xff]
  %v3083 = vld [vmem:[%s2288 + $0x122] sm:$0xff]
  %v3084 = vld [vmem:[%s2288 + $0x12a] sm:$0xff]
  %v3085 = vld [vmem:[%s2288 + $0x13a] sm:$0xff]
  %v3086 = vld [vmem:[%s2288 + $0x142] sm:$0xff]
  %v3087 = vld [vmem:[%s2288 + $0x152] sm:$0xff]
  %v3088 = vld [vmem:[%s2288 + $0x15a] sm:$0xff]
  %v3089 = vld [vmem:[%s2288 + $0x16a] sm:$0xff]
  %v3090 = vld [vmem:[%s2288 + $0x172] sm:$0xff]
  %v3091 = vld [vmem:[%s2288 + $0x1b2] sm:$0xff]
  %v3092 = vld [vmem:[%s2288 + $0x1ba] sm:$0xff]
  %v3093 = vld [vmem:[%s2288 + $0x1ca] sm:$0xff]
  %v3094 = vld [vmem:[%s2288 + $0x1d2] sm:$0xff]
  %v3095 = vld [vmem:[%s2288 + $0x1e2] sm:$0xff]
  %v3096 = vld [vmem:[%s2288 + $0x1ea] sm:$0xff]
  %v3097 = vld [vmem:[%s2288 + $0x1fa] sm:$0xff]
  %v3098 = vld [vmem:[%s2288 + $0x202] sm:$0xff]
  %v3099 = vld [vmem:[%s2288 + $0x212] sm:$0xff]
  %v3100 = vld [vmem:[%s2288 + $0x21a] sm:$0xff]
  %v3101 = vld [vmem:[%s2288 + $0x22a] sm:$0xff]
  %v3102 = vld [vmem:[%s2288 + $0x232] sm:$0xff]
  %v3103 = vld [vmem:[%s2288 + $0x242] sm:$0xff]
  %v3104 = vld [vmem:[%s2288 + $0x24a] sm:$0xff]
  %v3105 = vld [vmem:[%s2288 + $0x25a] sm:$0xff]
  %v3106 = vld [vmem:[%s2288 + $0x262] sm:$0xff]
  %v3107 = vld [vmem:[%s2288 + $0x272] sm:$0xff]
  %v3108 = vld [vmem:[%s2288 + $0x27a] sm:$0xff]
  %v3109 = vld [vmem:[%s2288 + $0x28a] sm:$0xff]
  %v3110 = vld [vmem:[%s2288 + $0x292] sm:$0xff]
  %v3111 = vld [vmem:[%s2288 + $0x2a2] sm:$0xff]
  %v3112 = vld [vmem:[%s2288 + $0x2aa] sm:$0xff]
  %v3113 = vld [vmem:[%s2288 + $0x2ba] sm:$0xff]
  %v3114 = vld [vmem:[%s2288 + $0x2c2] sm:$0xff]
  %v3115 = vld [vmem:[%s2288 + $0x2d2] sm:$0xff]
  %v3116 = vld [vmem:[%s2288 + $0x2da] sm:$0xff]
  %v3117 = vld [vmem:[%s2288 + $0x2ea] sm:$0xff]
  %v3118 = vld [vmem:[%s2288 + $0x2f2] sm:$0xff]
  %v3119 = vld [vmem:[%s2288 + $0x302] sm:$0xff]
  %v3120 = vld [vmem:[%s2288 + $0x30a] sm:$0xff]
  %v3121 = vld [vmem:[%s2288 + $0x31a] sm:$0xff]
  %v3122 = vld [vmem:[%s2288 + $0x322] sm:$0xff]
  %3187 = vrot.lane.b32.xlu0 %v3059, 32
  %v3188 = vpop.permute.xlu0 %3187
  %3189 = vrot.lane.b32.xlu0 %v3060, 32
  %v3190 = vpop.permute.xlu0 %3189
  %3191 = vrot.lane.b32.xlu0 %v3061, 32
  %v3192 = vpop.permute.xlu0 %3191
  %3193 = vrot.lane.b32.xlu0 %v3062, 32
  %v3194 = vpop.permute.xlu0 %3193
  %3195 = vrot.lane.b32.xlu0 %v3063, 32
  %v3196 = vpop.permute.xlu0 %3195
  %3197 = vrot.lane.b32.xlu0 %v3064, 32
  %v3198 = vpop.permute.xlu0 %3197
  %3199 = vrot.lane.b32.xlu0 %v3065, 32
  %v3200 = vpop.permute.xlu0 %3199
  %3201 = vrot.lane.b32.xlu0 %v3066, 32
  %v3202 = vpop.permute.xlu0 %3201
  %3203 = vrot.lane.b32.xlu0 %v3067, 32
  %v3204 = vpop.permute.xlu0 %3203
  %3205 = vrot.lane.b32.xlu0 %v3068, 32
  %v3206 = vpop.permute.xlu0 %3205
  %3207 = vrot.lane.b32.xlu0 %v3069, 32
  %v3208 = vpop.permute.xlu0 %3207
  %3209 = vrot.lane.b32.xlu0 %v3070, 32
  %v3210 = vpop.permute.xlu0 %3209
  %3211 = vrot.lane.b32.xlu0 %v3071, 32
  %v3212 = vpop.permute.xlu0 %3211
  %3213 = vrot.lane.b32.xlu0 %v3072, 32
  %v3214 = vpop.permute.xlu0 %3213
  %3215 = vrot.lane.b32.xlu0 %v3073, 32
  %v3216 = vpop.permute.xlu0 %3215
  %3217 = vrot.lane.b32.xlu0 %v3074, 32
  %v3218 = vpop.permute.xlu0 %3217
  %3219 = vrot.lane.b32.xlu0 %v3075, 32
  %v3220 = vpop.permute.xlu0 %3219
  %3221 = vrot.lane.b32.xlu0 %v3076, 32
  %v3222 = vpop.permute.xlu0 %3221
  %3223 = vrot.lane.b32.xlu0 %v3077, 32
  %v3224 = vpop.permute.xlu0 %3223
  %3225 = vrot.lane.b32.xlu0 %v3078, 32
  %v3226 = vpop.permute.xlu0 %3225
  %3227 = vrot.lane.b32.xlu0 %v3079, 32
  %v3228 = vpop.permute.xlu0 %3227
  %3229 = vrot.lane.b32.xlu0 %v3080, 32
  %v3230 = vpop.permute.xlu0 %3229
  %3231 = vrot.lane.b32.xlu0 %v3081, 32
  %v3232 = vpop.permute.xlu0 %3231
  %3233 = vrot.lane.b32.xlu0 %v3082, 32
  %v3234 = vpop.permute.xlu0 %3233
  %3235 = vrot.lane.b32.xlu0 %v3083, 32
  %v3236 = vpop.permute.xlu0 %3235
  %3237 = vrot.lane.b32.xlu0 %v3084, 32
  %v3238 = vpop.permute.xlu0 %3237
  %3239 = vrot.lane.b32.xlu0 %v3085, 32
  %v3240 = vpop.permute.xlu0 %3239
  %3241 = vrot.lane.b32.xlu0 %v3086, 32
  %v3242 = vpop.permute.xlu0 %3241
  %3243 = vrot.lane.b32.xlu0 %v3087, 32
  %v3244 = vpop.permute.xlu0 %3243
  %3245 = vrot.lane.b32.xlu0 %v3088, 32
  %v3246 = vpop.permute.xlu0 %3245
  %3247 = vrot.lane.b32.xlu0 %v3089, 32
  %v3248 = vpop.permute.xlu0 %3247
  %3249 = vrot.lane.b32.xlu0 %v3090, 32
  %v3250 = vpop.permute.xlu0 %3249
  %3251 = vrot.lane.b32.xlu0 %v3091, 32
  %v3252 = vpop.permute.xlu0 %3251
  %3253 = vrot.lane.b32.xlu0 %v3092, 32
  %v3254 = vpop.permute.xlu0 %3253
  %3255 = vrot.lane.b32.xlu0 %v3093, 32
  %v3256 = vpop.permute.xlu0 %3255
  %3257 = vrot.lane.b32.xlu0 %v3094, 32
  %v3258 = vpop.permute.xlu0 %3257
  %3259 = vrot.lane.b32.xlu0 %v3095, 32
  %v3260 = vpop.permute.xlu0 %3259
  %3261 = vrot.lane.b32.xlu0 %v3096, 32
  %v3262 = vpop.permute.xlu0 %3261
  %3263 = vrot.lane.b32.xlu0 %v3097, 32
  %v3264 = vpop.permute.xlu0 %3263
  %3265 = vrot.lane.b32.xlu0 %v3098, 32
  %v3266 = vpop.permute.xlu0 %3265
  %3267 = vrot.lane.b32.xlu0 %v3099, 32
  %v3268 = vpop.permute.xlu0 %3267
  %3269 = vrot.lane.b32.xlu0 %v3100, 32
  %v3270 = vpop.permute.xlu0 %3269
  %3271 = vrot.lane.b32.xlu0 %v3101, 32
  %v3272 = vpop.permute.xlu0 %3271
  %3273 = vrot.lane.b32.xlu0 %v3102, 32
  %v3274 = vpop.permute.xlu0 %3273
  %3275 = vrot.lane.b32.xlu0 %v3103, 32
  %v3276 = vpop.permute.xlu0 %3275
  %3277 = vrot.lane.b32.xlu0 %v3104, 32
  %v3278 = vpop.permute.xlu0 %3277
  %3279 = vrot.lane.b32.xlu0 %v3105, 32
  %v3280 = vpop.permute.xlu0 %3279
  %3281 = vrot.lane.b32.xlu0 %v3106, 32
  %v3282 = vpop.permute.xlu0 %3281
  %3283 = vrot.lane.b32.xlu0 %v3107, 32
  %v3284 = vpop.permute.xlu0 %3283
  %3285 = vrot.lane.b32.xlu0 %v3108, 32
  %v3286 = vpop.permute.xlu0 %3285
  %3287 = vrot.lane.b32.xlu0 %v3109, 32
  %v3288 = vpop.permute.xlu0 %3287
  %3289 = vrot.lane.b32.xlu0 %v3110, 32
  %v3290 = vpop.permute.xlu0 %3289
  %3291 = vrot.lane.b32.xlu0 %v3111, 32
  %v3292 = vpop.permute.xlu0 %3291
  %3293 = vrot.lane.b32.xlu0 %v3112, 32
  %v3294 = vpop.permute.xlu0 %3293
  %3295 = vrot.lane.b32.xlu0 %v3113, 32
  %v3296 = vpop.permute.xlu0 %3295
  %3297 = vrot.lane.b32.xlu0 %v3114, 32
  %v3298 = vpop.permute.xlu0 %3297
  %3299 = vrot.lane.b32.xlu0 %v3115, 32
  %v3300 = vpop.permute.xlu0 %3299
  %3301 = vrot.lane.b32.xlu0 %v3116, 32
  %v3302 = vpop.permute.xlu0 %3301
  %3303 = vrot.lane.b32.xlu0 %v3117, 32
  %v3304 = vpop.permute.xlu0 %3303
  %3305 = vrot.lane.b32.xlu0 %v3118, 32
  %v3306 = vpop.permute.xlu0 %3305
  %3307 = vrot.lane.b32.xlu0 %v3119, 32
  %v3308 = vpop.permute.xlu0 %3307
  %3309 = vrot.lane.b32.xlu0 %v3120, 32
  %v3310 = vpop.permute.xlu0 %3309
  %3311 = vrot.lane.b32.xlu0 %v3121, 32
  %v3312 = vpop.permute.xlu0 %3311
  %3313 = vrot.lane.b32.xlu0 %v3122, 32
  %v3314 = vpop.permute.xlu0 %3313
  %vm3379 = vcmask 294144
  %3380 = vst.msk [vmem:[#allocation3] sm:$0xff] %vm3379, %v3188
  %3381 = vst.msk [vmem:[#allocation3 + $0x8] sm:$0xff] %vm3379, %v3190
  %3382 = vst.msk [vmem:[#allocation3 + $0x10] sm:$0xff] %vm3379, %v3192
  %3383 = vst.msk [vmem:[#allocation3 + $0x18] sm:$0xff] %vm3379, %v3194
  %3384 = vst.msk [vmem:[#allocation3 + $0x20] sm:$0xff] %vm3379, %v3196
  %3385 = vst.msk [vmem:[#allocation3 + $0x28] sm:$0xff] %vm3379, %v3198
  %3386 = vst.msk [vmem:[#allocation3 + $0x30] sm:$0xff] %vm3379, %v3200
  %3387 = vst.msk [vmem:[#allocation3 + $0x38] sm:$0xff] %vm3379, %v3202
  %3388 = vst.msk [vmem:[#allocation3 + $0x40] sm:$0xff] %vm3379, %v3204
  %3389 = vst.msk [vmem:[#allocation3 + $0x48] sm:$0xff] %vm3379, %v3206
  %3390 = vst.msk [vmem:[#allocation3 + $0x50] sm:$0xff] %vm3379, %v3208
  %3391 = vst.msk [vmem:[#allocation3 + $0x58] sm:$0xff] %vm3379, %v3210
  %3392 = vst.msk [vmem:[#allocation3 + $0x60] sm:$0xff] %vm3379, %v3212
  %3393 = vst.msk [vmem:[#allocation3 + $0x68] sm:$0xff] %vm3379, %v3214
  %3394 = vst.msk [vmem:[#allocation3 + $0x70] sm:$0xff] %vm3379, %v3216
  %3395 = vst.msk [vmem:[#allocation3 + $0x78] sm:$0xff] %vm3379, %v3218
  %3396 = vst.msk [vmem:[#allocation3 + $0x80] sm:$0xff] %vm3379, %v3220
  %3397 = vst.msk [vmem:[#allocation3 + $0x88] sm:$0xff] %vm3379, %v3222
  %3398 = vst.msk [vmem:[#allocation3 + $0x90] sm:$0xff] %vm3379, %v3224
  %3399 = vst.msk [vmem:[#allocation3 + $0x98] sm:$0xff] %vm3379, %v3226
  %3400 = vst.msk [vmem:[#allocation3 + $0xa0] sm:$0xff] %vm3379, %v3228
  %3401 = vst.msk [vmem:[#allocation3 + $0xa8] sm:$0xff] %vm3379, %v3230
  %3402 = vst.msk [vmem:[#allocation3 + $0xb0] sm:$0xff] %vm3379, %v3232
  %3403 = vst.msk [vmem:[#allocation3 + $0xb8] sm:$0xff] %vm3379, %v3234
  %3404 = vst.msk [vmem:[#allocation3 + $0xc0] sm:$0xff] %vm3379, %v3236
  %3405 = vst.msk [vmem:[#allocation3 + $0xc8] sm:$0xff] %vm3379, %v3238
  %3406 = vst.msk [vmem:[#allocation3 + $0xd0] sm:$0xff] %vm3379, %v3240
  %3407 = vst.msk [vmem:[#allocation3 + $0xd8] sm:$0xff] %vm3379, %v3242
  %3408 = vst.msk [vmem:[#allocation3 + $0xe0] sm:$0xff] %vm3379, %v3244
  %3409 = vst.msk [vmem:[#allocation3 + $0xe8] sm:$0xff] %vm3379, %v3246
  %3410 = vst.msk [vmem:[#allocation3 + $0xf0] sm:$0xff] %vm3379, %v3248
  %3411 = vst.msk [vmem:[#allocation3 + $0xf8] sm:$0xff] %vm3379, %v3250
  %3412 = vst.msk [vmem:[#allocation3 + $0x100] sm:$0xff] %vm3379, %v3252
  %3413 = vst.msk [vmem:[#allocation3 + $0x108] sm:$0xff] %vm3379, %v3254
  %3414 = vst.msk [vmem:[#allocation3 + $0x110] sm:$0xff] %vm3379, %v3256
  %3415 = vst.msk [vmem:[#allocation3 + $0x118] sm:$0xff] %vm3379, %v3258
  %3416 = vst.msk [vmem:[#allocation3 + $0x120] sm:$0xff] %vm3379, %v3260
  %3417 = vst.msk [vmem:[#allocation3 + $0x128] sm:$0xff] %vm3379, %v3262
  %3418 = vst.msk [vmem:[#allocation3 + $0x130] sm:$0xff] %vm3379, %v3264
  %3419 = vst.msk [vmem:[#allocation3 + $0x138] sm:$0xff] %vm3379, %v3266
  %3420 = vst.msk [vmem:[#allocation3 + $0x140] sm:$0xff] %vm3379, %v3268
  %3421 = vst.msk [vmem:[#allocation3 + $0x148] sm:$0xff] %vm3379, %v3270
  %3422 = vst.msk [vmem:[#allocation3 + $0x150] sm:$0xff] %vm3379, %v3272
  %3423 = vst.msk [vmem:[#allocation3 + $0x158] sm:$0xff] %vm3379, %v3274
  %3424 = vst.msk [vmem:[#allocation3 + $0x160] sm:$0xff] %vm3379, %v3276
  %3425 = vst.msk [vmem:[#allocation3 + $0x168] sm:$0xff] %vm3379, %v3278
  %3426 = vst.msk [vmem:[#allocation3 + $0x170] sm:$0xff] %vm3379, %v3280
  %3427 = vst.msk [vmem:[#allocation3 + $0x178] sm:$0xff] %vm3379, %v3282
  %3428 = vst.msk [vmem:[#allocation3 + $0x180] sm:$0xff] %vm3379, %v3284
  %3429 = vst.msk [vmem:[#allocation3 + $0x188] sm:$0xff] %vm3379, %v3286
  %3430 = vst.msk [vmem:[#allocation3 + $0x190] sm:$0xff] %vm3379, %v3288
  %3431 = vst.msk [vmem:[#allocation3 + $0x198] sm:$0xff] %vm3379, %v3290
  %3432 = vst.msk [vmem:[#allocation3 + $0x1a0] sm:$0xff] %vm3379, %v3292
  %3433 = vst.msk [vmem:[#allocation3 + $0x1a8] sm:$0xff] %vm3379, %v3294
  %3434 = vst.msk [vmem:[#allocation3 + $0x1b0] sm:$0xff] %vm3379, %v3296
  %3435 = vst.msk [vmem:[#allocation3 + $0x1b8] sm:$0xff] %vm3379, %v3298
  %3436 = vst.msk [vmem:[#allocation3 + $0x1c0] sm:$0xff] %vm3379, %v3300
  %3437 = vst.msk [vmem:[#allocation3 + $0x1c8] sm:$0xff] %vm3379, %v3302
  %3438 = vst.msk [vmem:[#allocation3 + $0x1d0] sm:$0xff] %vm3379, %v3304
  %3439 = vst.msk [vmem:[#allocation3 + $0x1d8] sm:$0xff] %vm3379, %v3306
  %3440 = vst.msk [vmem:[#allocation3 + $0x1e0] sm:$0xff] %vm3379, %v3308
  %3441 = vst.msk [vmem:[#allocation3 + $0x1e8] sm:$0xff] %vm3379, %v3310
  %3442 = vst.msk [vmem:[#allocation3 + $0x1f0] sm:$0xff] %vm3379, %v3312
  %3443 = vst.msk [vmem:[#allocation3 + $0x1f8] sm:$0xff] %vm3379, %v3314
  %v3444 = vld [vmem:[#allocation3] sm:$0xff]
  %v3445 = vld [vmem:[#allocation3 + $0x8] sm:$0xff]
  %v3446 = vld [vmem:[#allocation3 + $0x10] sm:$0xff]
  %v3447 = vld [vmem:[#allocation3 + $0x18] sm:$0xff]
  %v3448 = vld [vmem:[#allocation3 + $0x20] sm:$0xff]
  %v3449 = vld [vmem:[#allocation3 + $0x28] sm:$0xff]
  %v3450 = vld [vmem:[#allocation3 + $0x30] sm:$0xff]
  %v3451 = vld [vmem:[#allocation3 + $0x38] sm:$0xff]
  %v3452 = vld [vmem:[#allocation3 + $0x40] sm:$0xff]
  %v3453 = vld [vmem:[#allocation3 + $0x48] sm:$0xff]
  %v3454 = vld [vmem:[#allocation3 + $0x50] sm:$0xff]
  %v3455 = vld [vmem:[#allocation3 + $0x58] sm:$0xff]
  %v3456 = vld [vmem:[#allocation3 + $0x60] sm:$0xff]
  %v3457 = vld [vmem:[#allocation3 + $0x68] sm:$0xff]
  %v3458 = vld [vmem:[#allocation3 + $0x70] sm:$0xff]
  %v3459 = vld [vmem:[#allocation3 + $0x78] sm:$0xff]
  %v3460 = vld [vmem:[#allocation3 + $0x80] sm:$0xff]
  %v3461 = vld [vmem:[#allocation3 + $0x88] sm:$0xff]
  %v3462 = vld [vmem:[#allocation3 + $0x90] sm:$0xff]
  %v3463 = vld [vmem:[#allocation3 + $0x98] sm:$0xff]
  %v3464 = vld [vmem:[#allocation3 + $0xa0] sm:$0xff]
  %v3465 = vld [vmem:[#allocation3 + $0xa8] sm:$0xff]
  %v3466 = vld [vmem:[#allocation3 + $0xb0] sm:$0xff]
  %v3467 = vld [vmem:[#allocation3 + $0xb8] sm:$0xff]
  %v3468 = vld [vmem:[#allocation3 + $0xc0] sm:$0xff]
  %v3469 = vld [vmem:[#allocation3 + $0xc8] sm:$0xff]
  %v3470 = vld [vmem:[#allocation3 + $0xd0] sm:$0xff]
  %v3471 = vld [vmem:[#allocation3 + $0xd8] sm:$0xff]
  %v3472 = vld [vmem:[#allocation3 + $0xe0] sm:$0xff]
  %v3473 = vld [vmem:[#allocation3 + $0xe8] sm:$0xff]
  %v3474 = vld [vmem:[#allocation3 + $0xf0] sm:$0xff]
  %v3475 = vld [vmem:[#allocation3 + $0xf8] sm:$0xff]
  %v3476 = vld [vmem:[#allocation3 + $0x100] sm:$0xff]
  %v3477 = vld [vmem:[#allocation3 + $0x108] sm:$0xff]
  %v3478 = vld [vmem:[#allocation3 + $0x110] sm:$0xff]
  %v3479 = vld [vmem:[#allocation3 + $0x118] sm:$0xff]
  %v3480 = vld [vmem:[#allocation3 + $0x120] sm:$0xff]
  %v3481 = vld [vmem:[#allocation3 + $0x128] sm:$0xff]
  %v3482 = vld [vmem:[#allocation3 + $0x130] sm:$0xff]
  %v3483 = vld [vmem:[#allocation3 + $0x138] sm:$0xff]
  %v3484 = vld [vmem:[#allocation3 + $0x140] sm:$0xff]
  %v3485 = vld [vmem:[#allocation3 + $0x148] sm:$0xff]
  %v3486 = vld [vmem:[#allocation3 + $0x150] sm:$0xff]
  %v3487 = vld [vmem:[#allocation3 + $0x158] sm:$0xff]
  %v3488 = vld [vmem:[#allocation3 + $0x160] sm:$0xff]
  %v3489 = vld [vmem:[#allocation3 + $0x168] sm:$0xff]
  %v3490 = vld [vmem:[#allocation3 + $0x170] sm:$0xff]
  %v3491 = vld [vmem:[#allocation3 + $0x178] sm:$0xff]
  %v3492 = vld [vmem:[#allocation3 + $0x180] sm:$0xff]
  %v3493 = vld [vmem:[#allocation3 + $0x188] sm:$0xff]
  %v3494 = vld [vmem:[#allocation3 + $0x190] sm:$0xff]
  %v3495 = vld [vmem:[#allocation3 + $0x198] sm:$0xff]
  %v3496 = vld [vmem:[#allocation3 + $0x1a0] sm:$0xff]
  %v3497 = vld [vmem:[#allocation3 + $0x1a8] sm:$0xff]
  %v3498 = vld [vmem:[#allocation3 + $0x1b0] sm:$0xff]
  %v3499 = vld [vmem:[#allocation3 + $0x1b8] sm:$0xff]
  %v3500 = vld [vmem:[#allocation3 + $0x1c0] sm:$0xff]
  %v3501 = vld [vmem:[#allocation3 + $0x1c8] sm:$0xff]
  %v3502 = vld [vmem:[#allocation3 + $0x1d0] sm:$0xff]
  %v3503 = vld [vmem:[#allocation3 + $0x1d8] sm:$0xff]
  %v3504 = vld [vmem:[#allocation3 + $0x1e0] sm:$0xff]
  %v3505 = vld [vmem:[#allocation3 + $0x1e8] sm:$0xff]
  %v3506 = vld [vmem:[#allocation3 + $0x1f0] sm:$0xff]
  %v3507 = vld [vmem:[#allocation3 + $0x1f8] sm:$0xff]
  %v3508 = vld [vmem:[%s1] sm:$0xff]
  %v3509 = vld [vmem:[%s1 + $0x8] sm:$0xff]
  %v3510 = vld [vmem:[%s1 + $0x10] sm:$0xff]
  %v3511 = vld [vmem:[%s1 + $0x18] sm:$0xff]
  %v3512 = vld [vmem:[%s1 + $0x20] sm:$0xf]
  %vm3513 = vcmask 293888
  %v3515 = vsel %vm3513, %v3444, 0
  %v3518 = vsel %vm3513, %v3445, 0
  %v3521 = vsel %vm3513, %v3446, 0
  %v3524 = vsel %vm3513, %v3447, 0
  %v3527 = vsel %vm3513, %v3448, 0
  %v3530 = vsel %vm3513, %v3449, 0
  %v3533 = vsel %vm3513, %v3450, 0
  %v3536 = vsel %vm3513, %v3451, 0
  %v3539 = vsel %vm3513, %v3452, 0
  %v3542 = vsel %vm3513, %v3453, 0
  %v3545 = vsel %vm3513, %v3454, 0
  %v3548 = vsel %vm3513, %v3455, 0
  %v3551 = vsel %vm3513, %v3456, 0
  %v3554 = vsel %vm3513, %v3457, 0
  %v3557 = vsel %vm3513, %v3458, 0
  %v3560 = vsel %vm3513, %v3459, 0
  %v3563 = vsel %vm3513, %v3460, 0
  %v3566 = vsel %vm3513, %v3461, 0
  %v3569 = vsel %vm3513, %v3462, 0
  %v3572 = vsel %vm3513, %v3463, 0
  %v3575 = vsel %vm3513, %v3464, 0
  %v3578 = vsel %vm3513, %v3465, 0
  %v3581 = vsel %vm3513, %v3466, 0
  %v3584 = vsel %vm3513, %v3467, 0
  %v3587 = vsel %vm3513, %v3468, 0
  %v3590 = vsel %vm3513, %v3469, 0
  %v3593 = vsel %vm3513, %v3470, 0
  %v3596 = vsel %vm3513, %v3471, 0
  %v3599 = vsel %vm3513, %v3472, 0
  %v3602 = vsel %vm3513, %v3473, 0
  %v3605 = vsel %vm3513, %v3474, 0
  %v3608 = vsel %vm3513, %v3475, 0
  %v3611 = vsel %vm3513, %v3476, 0
  %v3614 = vsel %vm3513, %v3477, 0
  %v3617 = vsel %vm3513, %v3478, 0
  %v3620 = vsel %vm3513, %v3479, 0
  %v3623 = vsel %vm3513, %v3480, 0
  %v3626 = vsel %vm3513, %v3481, 0
  %v3629 = vsel %vm3513, %v3482, 0
  %v3632 = vsel %vm3513, %v3483, 0
  %v3635 = vsel %vm3513, %v3484, 0
  %v3638 = vsel %vm3513, %v3485, 0
  %v3641 = vsel %vm3513, %v3486, 0
  %v3644 = vsel %vm3513, %v3487, 0
  %v3647 = vsel %vm3513, %v3488, 0
  %v3650 = vsel %vm3513, %v3489, 0
  %v3653 = vsel %vm3513, %v3490, 0
  %v3656 = vsel %vm3513, %v3491, 0
  %v3659 = vsel %vm3513, %v3492, 0
  %v3662 = vsel %vm3513, %v3493, 0
  %v3665 = vsel %vm3513, %v3494, 0
  %v3668 = vsel %vm3513, %v3495, 0
  %v3671 = vsel %vm3513, %v3496, 0
  %v3674 = vsel %vm3513, %v3497, 0
  %v3677 = vsel %vm3513, %v3498, 0
  %v3680 = vsel %vm3513, %v3499, 0
  %v3683 = vsel %vm3513, %v3500, 0
  %v3686 = vsel %vm3513, %v3501, 0
  %v3689 = vsel %vm3513, %v3502, 0
  %v3692 = vsel %vm3513, %v3503, 0
  %v3695 = vsel %vm3513, %v3504, 0
  %v3698 = vsel %vm3513, %v3505, 0
  %v3701 = vsel %vm3513, %v3506, 0
  %v3704 = vsel %vm3513, %v3507, 0
  %vm3706 = vcmask 1043456
  %v3708 = vsel %vm3706, %v3512, 0
  %3710 = vmatprep.subr.mxu0 0.0
  %3711 = vmatpush1.msra.mxu0 %v3508
  %3712 = vmatprep.subr.mxu0 0.0
  %3713 = vmatpush1.msra.mxu0 %v3509
  %3714 = vmatprep.subr.mxu0 0.0
  %3715 = vmatpush1.msra.mxu0 %v3510
  %3716 = vmatprep.subr.mxu0 0.0
  %3717 = vmatpush1.msra.mxu0 %v3511
  %3718 = vmatprep.subr.mxu0 0.0
  %3719 = vmatpush1.msra.mxu0 %v3708
  %3720 = vmatprep.subr.mxu0 0.0
  %3721 = vmatpush1.msra.mxu0 0.0
  %3722 = vmatprep.subr.mxu0 0.0
  %3723 = vmatpush1.msra.mxu0 0.0
  %3724 = vmatprep.subr.mxu0 0.0
  %3725 = vmatpush1.msra.mxu0 0.0
  %3726 = vmatprep.subr.mxu0 0.0
  %3727 = vmatpush1.msra.mxu0 0.0
  %3728 = vmatprep.subr.mxu0 0.0
  %3729 = vmatpush1.msra.mxu0 0.0
  %3730 = vmatprep.subr.mxu0 0.0
  %3731 = vmatpush1.msra.mxu0 0.0
  %3732 = vmatprep.subr.mxu0 0.0
  %3733 = vmatpush1.msra.mxu0 0.0
  %3734 = vmatprep.subr.mxu0 0.0
  %3735 = vmatpush1.msra.mxu0 0.0
  %3736 = vmatprep.subr.mxu0 0.0
  %3737 = vmatpush1.msra.mxu0 0.0
  %3738 = vmatprep.subr.mxu0 0.0
  %3739 = vmatpush1.msra.mxu0 0.0
  %3740 = vmatprep.subr.mxu0 0.0
  %3741 = vmatpush1.msra.mxu0 0.0
  %3742 = vmatprep.subr.mxu0 0.0
  %3743 = vmatpush1.msra.mxu0 0.0
  %3744 = vmatprep.subr.mxu0 0.0
  %3745 = vmatpush1.msra.mxu0 0.0
  %3746 = vmatprep.subr.mxu0 0.0
  %3747 = vmatpush1.msra.mxu0 0.0
  %3748 = vmatprep.subr.mxu0 0.0
  %3749 = vmatpush1.msra.mxu0 0.0
  %3750 = vmatprep.subr.mxu0 0.0
  %3751 = vmatpush1.msra.mxu0 0.0
  %3752 = vmatprep.subr.mxu0 0.0
  %3753 = vmatpush1.msra.mxu0 0.0
  %3754 = vmatprep.subr.mxu0 0.0
  %3755 = vmatpush1.msra.mxu0 0.0
  %3756 = vmatprep.subr.mxu0 0.0
  %3757 = vmatpush1.msra.mxu0 0.0
  %3758 = vmatprep.subr.mxu0 0.0
  %3759 = vmatpush1.msra.mxu0 0.0
  %3760 = vmatprep.subr.mxu0 0.0
  %3761 = vmatpush1.msra.mxu0 0.0
  %3762 = vmatprep.subr.mxu0 0.0
  %3763 = vmatpush1.msra.mxu0 0.0
  %3764 = vmatprep.subr.mxu0 0.0
  %3765 = vmatpush1.msra.mxu0 0.0
  %3766 = vmatprep.subr.mxu0 0.0
  %3767 = vmatpush1.msra.mxu0 0.0
  %3768 = vmatprep.subr.mxu0 0.0
  %3769 = vmatpush1.msra.mxu0 0.0
  %3770 = vmatprep.subr.mxu0 0.0
  %3771 = vmatpush1.msra.mxu0 0.0
  %3772 = vmatprep.subr.mxu0 0.0
  %3773 = vmatpush1.msra.mxu0 0.0
  %3774 = vmatprep.mubr.f32.mxu0 0.0
  %3775 = vmatmul.mubr.f32.gmra.mrb[0].mxu0 %v3515
  %v3776 = vpop.f32.mrb[0].mxu0
  %v3777 = vadd.f32 0.0, %v3776
  %v3778 = vpop.f32.mrb[0].mxu0
  %3779 = vmatprep.mubr.f32.mxu0 0.0
  %3780 = vmatmul.mubr.f32.gmra.mrb[0].mxu0 %v3518
  %v3781 = vpop.f32.mrb[0].mxu0
  %v3782 = vadd.f32 0.0, %v3781
  %v3783 = vpop.f32.mrb[0].mxu0
  %3784 = vmatprep.mubr.f32.mxu0 0.0
  %3785 = vmatmul.mubr.f32.gmra.mrb[0].mxu0 %v3521
  %v3786 = vpop.f32.mrb[0].mxu0
  %v3787 = vadd.f32 0.0, %v3786
  %v3788 = vpop.f32.mrb[0].mxu0
  %3789 = vmatprep.mubr.f32.mxu0 0.0
  %3790 = vmatmul.mubr.f32.gmra.mrb[0].mxu0 %v3524
  %v3791 = vpop.f32.mrb[0].mxu0
  %v3792 = vadd.f32 0.0, %v3791
  %v3793 = vpop.f32.mrb[0].mxu0
  %3794 = vmatprep.mubr.f32.mxu0 0.0
  %3795 = vmatmul.mubr.f32.gmra.mrb[0].mxu0 %v3527
  %v3796 = vpop.f32.mrb[0].mxu0
  %v3797 = vadd.f32 0.0, %v3796
  %v3798 = vpop.f32.mrb[0].mxu0
  %3799 = vmatprep.mubr.f32.mxu0 0.0
  %3800 = vmatmul.mubr.f32.gmra.mrb[0].mxu0 %v3530
  %v3801 = vpop.f32.mrb[0].mxu0
  %v3802 = vadd.f32 0.0, %v3801
  %v3803 = vpop.f32.mrb[0].mxu0
  %3804 = vmatprep.mubr.f32.mxu0 0.0
  %3805 = vmatmul.mubr.f32.gmra.mrb[0].mxu0 %v3533
  %v3806 = vpop.f32.mrb[0].mxu0
  %v3807 = vadd.f32 0.0, %v3806
  %v3808 = vpop.f32.mrb[0].mxu0
  %3809 = vmatprep.mubr.f32.mxu0 0.0
  %3810 = vmatmul.mubr.f32.gmra.mrb[0].mxu0 %v3536
  %v3811 = vpop.f32.mrb[0].mxu0
  %v3812 = vadd.f32 0.0, %v3811
  %v3813 = vpop.f32.mrb[0].mxu0
  %3814 = vmatprep.mubr.f32.mxu0 0.0
  %3815 = vmatmul.mubr.f32.gmra.mrb[0].mxu0 %v3539
  %v3816 = vpop.f32.mrb[0].mxu0
  %v3817 = vadd.f32 0.0, %v3816
  %v3818 = vpop.f32.mrb[0].mxu0
  %3819 = vmatprep.mubr.f32.mxu0 0.0
  %3820 = vmatmul.mubr.f32.gmra.mrb[0].mxu0 %v3542
  %v3821 = vpop.f32.mrb[0].mxu0
  %v3822 = vadd.f32 0.0, %v3821
  %v3823 = vpop.f32.mrb[0].mxu0
  %3824 = vmatprep.mubr.f32.mxu0 0.0
  %3825 = vmatmul.mubr.f32.gmra.mrb[0].mxu0 %v3545
  %v3826 = vpop.f32.mrb[0].mxu0
  %v3827 = vadd.f32 0.0, %v3826
  %v3828 = vpop.f32.mrb[0].mxu0
  %3829 = vmatprep.mubr.f32.mxu0 0.0
  %3830 = vmatmul.mubr.f32.gmra.mrb[0].mxu0 %v3548
  %v3831 = vpop.f32.mrb[0].mxu0
  %v3832 = vadd.f32 0.0, %v3831
  %v3833 = vpop.f32.mrb[0].mxu0
  %3834 = vmatprep.mubr.f32.mxu0 0.0
  %3835 = vmatmul.mubr.f32.gmra.mrb[0].mxu0 %v3551
  %v3836 = vpop.f32.mrb[0].mxu0
  %v3837 = vadd.f32 0.0, %v3836
  %v3838 = vpop.f32.mrb[0].mxu0
  %3839 = vmatprep.mubr.f32.mxu0 0.0
  %3840 = vmatmul.mubr.f32.gmra.mrb[0].mxu0 %v3554
  %v3841 = vpop.f32.mrb[0].mxu0
  %v3842 = vadd.f32 0.0, %v3841
  %v3843 = vpop.f32.mrb[0].mxu0
  %3844 = vmatprep.mubr.f32.mxu0 0.0
  %3845 = vmatmul.mubr.f32.gmra.mrb[0].mxu0 %v3557
  %v3846 = vpop.f32.mrb[0].mxu0
  %v3847 = vadd.f32 0.0, %v3846
  %v3848 = vpop.f32.mrb[0].mxu0
  %3849 = vmatprep.mubr.f32.mxu0 0.0
  %3850 = vmatmul.mubr.f32.gmra.mrb[0].mxu0 %v3560
  %v3851 = vpop.f32.mrb[0].mxu0
  %v3852 = vadd.f32 0.0, %v3851
  %v3853 = vpop.f32.mrb[0].mxu0
  %3854 = vmatprep.mubr.f32.mxu0 0.0
  %3855 = vmatmul.mubr.f32.gmra.mrb[0].mxu0 %v3563
  %v3856 = vpop.f32.mrb[0].mxu0
  %v3857 = vadd.f32 0.0, %v3856
  %v3858 = vpop.f32.mrb[0].mxu0
  %3859 = vmatprep.mubr.f32.mxu0 0.0
  %3860 = vmatmul.mubr.f32.gmra.mrb[0].mxu0 %v3566
  %v3861 = vpop.f32.mrb[0].mxu0
  %v3862 = vadd.f32 0.0, %v3861
  %v3863 = vpop.f32.mrb[0].mxu0
  %3864 = vmatprep.mubr.f32.mxu0 0.0
  %3865 = vmatmul.mubr.f32.gmra.mrb[0].mxu0 %v3569
  %v3866 = vpop.f32.mrb[0].mxu0
  %v3867 = vadd.f32 0.0, %v3866
  %v3868 = vpop.f32.mrb[0].mxu0
  %3869 = vmatprep.mubr.f32.mxu0 0.0
  %3870 = vmatmul.mubr.f32.gmra.mrb[0].mxu0 %v3572
  %v3871 = vpop.f32.mrb[0].mxu0
  %v3872 = vadd.f32 0.0, %v3871
  %v3873 = vpop.f32.mrb[0].mxu0
  %3874 = vmatprep.mubr.f32.mxu0 0.0
  %3875 = vmatmul.mubr.f32.gmra.mrb[0].mxu0 %v3575
  %v3876 = vpop.f32.mrb[0].mxu0
  %v3877 = vadd.f32 0.0, %v3876
  %v3878 = vpop.f32.mrb[0].mxu0
  %3879 = vmatprep.mubr.f32.mxu0 0.0
  %3880 = vmatmul.mubr.f32.gmra.mrb[0].mxu0 %v3578
  %v3881 = vpop.f32.mrb[0].mxu0
  %v3882 = vadd.f32 0.0, %v3881
  %v3883 = vpop.f32.mrb[0].mxu0
  %3884 = vmatprep.mubr.f32.mxu0 0.0
  %3885 = vmatmul.mubr.f32.gmra.mrb[0].mxu0 %v3581
  %v3886 = vpop.f32.mrb[0].mxu0
  %v3887 = vadd.f32 0.0, %v3886
  %v3888 = vpop.f32.mrb[0].mxu0
  %3889 = vmatprep.mubr.f32.mxu0 0.0
  %3890 = vmatmul.mubr.f32.gmra.mrb[0].mxu0 %v3584
  %v3891 = vpop.f32.mrb[0].mxu0
  %v3892 = vadd.f32 0.0, %v3891
  %v3893 = vpop.f32.mrb[0].mxu0
  %3894 = vmatprep.mubr.f32.mxu0 0.0
  %3895 = vmatmul.mubr.f32.gmra.mrb[0].mxu0 %v3587
  %v3896 = vpop.f32.mrb[0].mxu0
  %v3897 = vadd.f32 0.0, %v3896
  %v3898 = vpop.f32.mrb[0].mxu0
  %3899 = vmatprep.mubr.f32.mxu0 0.0
  %3900 = vmatmul.mubr.f32.gmra.mrb[0].mxu0 %v3590
  %v3901 = vpop.f32.mrb[0].mxu0
  %v3902 = vadd.f32 0.0, %v3901
  %v3903 = vpop.f32.mrb[0].mxu0
  %3904 = vmatprep.mubr.f32.mxu0 0.0
  %3905 = vmatmul.mubr.f32.gmra.mrb[0].mxu0 %v3593
  %v3906 = vpop.f32.mrb[0].mxu0
  %v3907 = vadd.f32 0.0, %v3906
  %v3908 = vpop.f32.mrb[0].mxu0
  %3909 = vmatprep.mubr.f32.mxu0 0.0
  %3910 = vmatmul.mubr.f32.gmra.mrb[0].mxu0 %v3596
  %v3911 = vpop.f32.mrb[0].mxu0
  %v3912 = vadd.f32 0.0, %v3911
  %v3913 = vpop.f32.mrb[0].mxu0
  %3914 = vmatprep.mubr.f32.mxu0 0.0
  %3915 = vmatmul.mubr.f32.gmra.mrb[0].mxu0 %v3599
  %v3916 = vpop.f32.mrb[0].mxu0
  %v3917 = vadd.f32 0.0, %v3916
  %v3918 = vpop.f32.mrb[0].mxu0
  %3919 = vmatprep.mubr.f32.mxu0 0.0
  %3920 = vmatmul.mubr.f32.gmra.mrb[0].mxu0 %v3602
  %v3921 = vpop.f32.mrb[0].mxu0
  %v3922 = vadd.f32 0.0, %v3921
  %v3923 = vpop.f32.mrb[0].mxu0
  %3924 = vmatprep.mubr.f32.mxu0 0.0
  %3925 = vmatmul.mubr.f32.gmra.mrb[0].mxu0 %v3605
  %v3926 = vpop.f32.mrb[0].mxu0
  %v3927 = vadd.f32 0.0, %v3926
  %v3928 = vpop.f32.mrb[0].mxu0
  %3929 = vmatprep.mubr.f32.mxu0 0.0
  %3930 = vmatmul.mubr.f32.gmra.mrb[0].mxu0 %v3608
  %v3931 = vpop.f32.mrb[0].mxu0
  %v3932 = vadd.f32 0.0, %v3931
  %v3933 = vpop.f32.mrb[0].mxu0
  %3934 = vmatprep.mubr.f32.mxu0 0.0
  %3935 = vmatmul.mubr.f32.gmra.mrb[0].mxu0 %v3611
  %v3936 = vpop.f32.mrb[0].mxu0
  %v3937 = vadd.f32 0.0, %v3936
  %v3938 = vpop.f32.mrb[0].mxu0
  %3939 = vmatprep.mubr.f32.mxu0 0.0
  %3940 = vmatmul.mubr.f32.gmra.mrb[0].mxu0 %v3614
  %v3941 = vpop.f32.mrb[0].mxu0
  %v3942 = vadd.f32 0.0, %v3941
  %v3943 = vpop.f32.mrb[0].mxu0
  %3944 = vmatprep.mubr.f32.mxu0 0.0
  %3945 = vmatmul.mubr.f32.gmra.mrb[0].mxu0 %v3617
  %v3946 = vpop.f32.mrb[0].mxu0
  %v3947 = vadd.f32 0.0, %v3946
  %v3948 = vpop.f32.mrb[0].mxu0
  %3949 = vmatprep.mubr.f32.mxu0 0.0
  %3950 = vmatmul.mubr.f32.gmra.mrb[0].mxu0 %v3620
  %v3951 = vpop.f32.mrb[0].mxu0
  %v3952 = vadd.f32 0.0, %v3951
  %v3953 = vpop.f32.mrb[0].mxu0
  %3954 = vmatprep.mubr.f32.mxu0 0.0
  %3955 = vmatmul.mubr.f32.gmra.mrb[0].mxu0 %v3623
  %v3956 = vpop.f32.mrb[0].mxu0
  %v3957 = vadd.f32 0.0, %v3956
  %v3958 = vpop.f32.mrb[0].mxu0
  %3959 = vmatprep.mubr.f32.mxu0 0.0
  %3960 = vmatmul.mubr.f32.gmra.mrb[0].mxu0 %v3626
  %v3961 = vpop.f32.mrb[0].mxu0
  %v3962 = vadd.f32 0.0, %v3961
  %v3963 = vpop.f32.mrb[0].mxu0
  %3964 = vmatprep.mubr.f32.mxu0 0.0
  %3965 = vmatmul.mubr.f32.gmra.mrb[0].mxu0 %v3629
  %v3966 = vpop.f32.mrb[0].mxu0
  %v3967 = vadd.f32 0.0, %v3966
  %v3968 = vpop.f32.mrb[0].mxu0
  %3969 = vmatprep.mubr.f32.mxu0 0.0
  %3970 = vmatmul.mubr.f32.gmra.mrb[0].mxu0 %v3632
  %v3971 = vpop.f32.mrb[0].mxu0
  %v3972 = vadd.f32 0.0, %v3971
  %v3973 = vpop.f32.mrb[0].mxu0
  %3974 = vmatprep.mubr.f32.mxu0 0.0
  %3975 = vmatmul.mubr.f32.gmra.mrb[0].mxu0 %v3635
  %v3976 = vpop.f32.mrb[0].mxu0
  %v3977 = vadd.f32 0.0, %v3976
  %v3978 = vpop.f32.mrb[0].mxu0
  %3979 = vmatprep.mubr.f32.mxu0 0.0
  %3980 = vmatmul.mubr.f32.gmra.mrb[0].mxu0 %v3638
  %v3981 = vpop.f32.mrb[0].mxu0
  %v3982 = vadd.f32 0.0, %v3981
  %v3983 = vpop.f32.mrb[0].mxu0
  %3984 = vmatprep.mubr.f32.mxu0 0.0
  %3985 = vmatmul.mubr.f32.gmra.mrb[0].mxu0 %v3641
  %v3986 = vpop.f32.mrb[0].mxu0
  %v3987 = vadd.f32 0.0, %v3986
  %v3988 = vpop.f32.mrb[0].mxu0
  %3989 = vmatprep.mubr.f32.mxu0 0.0
  %3990 = vmatmul.mubr.f32.gmra.mrb[0].mxu0 %v3644
  %v3991 = vpop.f32.mrb[0].mxu0
  %v3992 = vadd.f32 0.0, %v3991
  %v3993 = vpop.f32.mrb[0].mxu0
  %3994 = vmatprep.mubr.f32.mxu0 0.0
  %3995 = vmatmul.mubr.f32.gmra.mrb[0].mxu0 %v3647
  %v3996 = vpop.f32.mrb[0].mxu0
  %v3997 = vadd.f32 0.0, %v3996
  %v3998 = vpop.f32.mrb[0].mxu0
  %3999 = vmatprep.mubr.f32.mxu0 0.0
  %4000 = vmatmul.mubr.f32.gmra.mrb[0].mxu0 %v3650
  %v4001 = vpop.f32.mrb[0].mxu0
  %v4002 = vadd.f32 0.0, %v4001
  %v4003 = vpop.f32.mrb[0].mxu0
  %4004 = vmatprep.mubr.f32.mxu0 0.0
  %4005 = vmatmul.mubr.f32.gmra.mrb[0].mxu0 %v3653
  %v4006 = vpop.f32.mrb[0].mxu0
  %v4007 = vadd.f32 0.0, %v4006
  %v4008 = vpop.f32.mrb[0].mxu0
  %4009 = vmatprep.mubr.f32.mxu0 0.0
  %4010 = vmatmul.mubr.f32.gmra.mrb[0].mxu0 %v3656
  %v4011 = vpop.f32.mrb[0].mxu0
  %v4012 = vadd.f32 0.0, %v4011
  %v4013 = vpop.f32.mrb[0].mxu0
  %4014 = vmatprep.mubr.f32.mxu0 0.0
  %4015 = vmatmul.mubr.f32.gmra.mrb[0].mxu0 %v3659
  %v4016 = vpop.f32.mrb[0].mxu0
  %v4017 = vadd.f32 0.0, %v4016
  %v4018 = vpop.f32.mrb[0].mxu0
  %4019 = vmatprep.mubr.f32.mxu0 0.0
  %4020 = vmatmul.mubr.f32.gmra.mrb[0].mxu0 %v3662
  %v4021 = vpop.f32.mrb[0].mxu0
  %v4022 = vadd.f32 0.0, %v4021
  %v4023 = vpop.f32.mrb[0].mxu0
  %4024 = vmatprep.mubr.f32.mxu0 0.0
  %4025 = vmatmul.mubr.f32.gmra.mrb[0].mxu0 %v3665
  %v4026 = vpop.f32.mrb[0].mxu0
  %v4027 = vadd.f32 0.0, %v4026
  %v4028 = vpop.f32.mrb[0].mxu0
  %4029 = vmatprep.mubr.f32.mxu0 0.0
  %4030 = vmatmul.mubr.f32.gmra.mrb[0].mxu0 %v3668
  %v4031 = vpop.f32.mrb[0].mxu0
  %v4032 = vadd.f32 0.0, %v4031
  %v4033 = vpop.f32.mrb[0].mxu0
  %4034 = vmatprep.mubr.f32.mxu0 0.0
  %4035 = vmatmul.mubr.f32.gmra.mrb[0].mxu0 %v3671
  %v4036 = vpop.f32.mrb[0].mxu0
  %v4037 = vadd.f32 0.0, %v4036
  %v4038 = vpop.f32.mrb[0].mxu0
  %4039 = vmatprep.mubr.f32.mxu0 0.0
  %4040 = vmatmul.mubr.f32.gmra.mrb[0].mxu0 %v3674
  %v4041 = vpop.f32.mrb[0].mxu0
  %v4042 = vadd.f32 0.0, %v4041
  %v4043 = vpop.f32.mrb[0].mxu0
  %4044 = vmatprep.mubr.f32.mxu0 0.0
  %4045 = vmatmul.mubr.f32.gmra.mrb[0].mxu0 %v3677
  %v4046 = vpop.f32.mrb[0].mxu0
  %v4047 = vadd.f32 0.0, %v4046
  %v4048 = vpop.f32.mrb[0].mxu0
  %4049 = vmatprep.mubr.f32.mxu0 0.0
  %4050 = vmatmul.mubr.f32.gmra.mrb[0].mxu0 %v3680
  %v4051 = vpop.f32.mrb[0].mxu0
  %v4052 = vadd.f32 0.0, %v4051
  %v4053 = vpop.f32.mrb[0].mxu0
  %4054 = vmatprep.mubr.f32.mxu0 0.0
  %4055 = vmatmul.mubr.f32.gmra.mrb[0].mxu0 %v3683
  %v4056 = vpop.f32.mrb[0].mxu0
  %v4057 = vadd.f32 0.0, %v4056
  %v4058 = vpop.f32.mrb[0].mxu0
  %4059 = vmatprep.mubr.f32.mxu0 0.0
  %4060 = vmatmul.mubr.f32.gmra.mrb[0].mxu0 %v3686
  %v4061 = vpop.f32.mrb[0].mxu0
  %v4062 = vadd.f32 0.0, %v4061
  %v4063 = vpop.f32.mrb[0].mxu0
  %4064 = vmatprep.mubr.f32.mxu0 0.0
  %4065 = vmatmul.mubr.f32.gmra.mrb[0].mxu0 %v3689
  %v4066 = vpop.f32.mrb[0].mxu0
  %v4067 = vadd.f32 0.0, %v4066
  %v4068 = vpop.f32.mrb[0].mxu0
  %4069 = vmatprep.mubr.f32.mxu0 0.0
  %4070 = vmatmul.mubr.f32.gmra.mrb[0].mxu0 %v3692
  %v4071 = vpop.f32.mrb[0].mxu0
  %v4072 = vadd.f32 0.0, %v4071
  %v4073 = vpop.f32.mrb[0].mxu0
  %4074 = vmatprep.mubr.f32.mxu0 0.0
  %4075 = vmatmul.mubr.f32.gmra.mrb[0].mxu0 %v3695
  %v4076 = vpop.f32.mrb[0].mxu0
  %v4077 = vadd.f32 0.0, %v4076
  %v4078 = vpop.f32.mrb[0].mxu0
  %4079 = vmatprep.mubr.f32.mxu0 0.0
  %4080 = vmatmul.mubr.f32.gmra.mrb[0].mxu0 %v3698
  %v4081 = vpop.f32.mrb[0].mxu0
  %v4082 = vadd.f32 0.0, %v4081
  %v4083 = vpop.f32.mrb[0].mxu0
  %4084 = vmatprep.mubr.f32.mxu0 0.0
  %4085 = vmatmul.mubr.f32.gmra.mrb[0].mxu0 %v3701
  %v4086 = vpop.f32.mrb[0].mxu0
  %v4087 = vadd.f32 0.0, %v4086
  %v4088 = vpop.f32.mrb[0].mxu0
  %4089 = vmatprep.mubr.f32.mxu0 0.0
  %4090 = vmatmul.mubr.f32.gmra.mrb[0].mxu0 %v3704
  %v4091 = vpop.f32.mrb[0].mxu0
  %v4092 = vadd.f32 0.0, %v4091
  %v4093 = vpop.f32.mrb[0].mxu0
  %4094 = vdwg.mxu0
  %v4095 = vsel %vm26, %v3777, 0.0
  %v4096 = vsel %vm26, %v3782, 0.0
  %v4097 = vadd.f32 %v4095, %v4096
  %v4098 = vsel %vm26, %v3787, 0.0
  %v4099 = vadd.f32 %v4097, %v4098
  %v4100 = vsel %vm26, %v3792, 0.0
  %v4101 = vadd.f32 %v4099, %v4100
  %v4102 = vsel %vm26, %v3797, 0.0
  %v4103 = vadd.f32 %v4101, %v4102
  %v4104 = vsel %vm26, %v3802, 0.0
  %v4105 = vadd.f32 %v4103, %v4104
  %v4106 = vsel %vm26, %v3807, 0.0
  %v4107 = vadd.f32 %v4105, %v4106
  %v4108 = vsel %vm26, %v3812, 0.0
  %v4109 = vadd.f32 %v4107, %v4108
  %v4110 = vsel %vm26, %v3817, 0.0
  %v4111 = vadd.f32 %v4109, %v4110
  %v4112 = vsel %vm26, %v3822, 0.0
  %v4113 = vadd.f32 %v4111, %v4112
  %v4114 = vsel %vm26, %v3827, 0.0
  %v4115 = vadd.f32 %v4113, %v4114
  %v4116 = vsel %vm26, %v3832, 0.0
  %v4117 = vadd.f32 %v4115, %v4116
  %v4118 = vsel %vm26, %v3837, 0.0
  %v4119 = vadd.f32 %v4117, %v4118
  %v4120 = vsel %vm26, %v3842, 0.0
  %v4121 = vadd.f32 %v4119, %v4120
  %v4122 = vsel %vm26, %v3847, 0.0
  %v4123 = vadd.f32 %v4121, %v4122
  %v4124 = vsel %vm26, %v3852, 0.0
  %v4125 = vadd.f32 %v4123, %v4124
  %v4126 = vsel %vm26, %v3857, 0.0
  %v4127 = vadd.f32 %v4125, %v4126
  %v4128 = vsel %vm26, %v3862, 0.0
  %v4129 = vadd.f32 %v4127, %v4128
  %v4130 = vsel %vm26, %v3867, 0.0
  %v4131 = vadd.f32 %v4129, %v4130
  %v4132 = vsel %vm26, %v3872, 0.0
  %v4133 = vadd.f32 %v4131, %v4132
  %v4134 = vsel %vm26, %v3877, 0.0
  %v4135 = vadd.f32 %v4133, %v4134
  %v4136 = vsel %vm26, %v3882, 0.0
  %v4137 = vadd.f32 %v4135, %v4136
  %v4138 = vsel %vm26, %v3887, 0.0
  %v4139 = vadd.f32 %v4137, %v4138
  %v4140 = vsel %vm26, %v3892, 0.0
  %v4141 = vadd.f32 %v4139, %v4140
  %v4142 = vsel %vm26, %v3897, 0.0
  %v4143 = vadd.f32 %v4141, %v4142
  %v4144 = vsel %vm26, %v3902, 0.0
  %v4145 = vadd.f32 %v4143, %v4144
  %v4146 = vsel %vm26, %v3907, 0.0
  %v4147 = vadd.f32 %v4145, %v4146
  %v4148 = vsel %vm26, %v3912, 0.0
  %v4149 = vadd.f32 %v4147, %v4148
  %v4150 = vsel %vm26, %v3917, 0.0
  %v4151 = vadd.f32 %v4149, %v4150
  %v4152 = vsel %vm26, %v3922, 0.0
  %v4153 = vadd.f32 %v4151, %v4152
  %v4154 = vsel %vm26, %v3927, 0.0
  %v4155 = vadd.f32 %v4153, %v4154
  %v4156 = vsel %vm26, %v3932, 0.0
  %v4157 = vadd.f32 %v4155, %v4156
  %v4158 = vsel %vm26, %v3937, 0.0
  %v4159 = vadd.f32 %v4157, %v4158
  %v4160 = vsel %vm26, %v3942, 0.0
  %v4161 = vadd.f32 %v4159, %v4160
  %v4162 = vsel %vm26, %v3947, 0.0
  %v4163 = vadd.f32 %v4161, %v4162
  %v4164 = vsel %vm26, %v3952, 0.0
  %v4165 = vadd.f32 %v4163, %v4164
  %v4166 = vsel %vm26, %v3957, 0.0
  %v4167 = vadd.f32 %v4165, %v4166
  %v4168 = vsel %vm26, %v3962, 0.0
  %v4169 = vadd.f32 %v4167, %v4168
  %v4170 = vsel %vm26, %v3967, 0.0
  %v4171 = vadd.f32 %v4169, %v4170
  %v4172 = vsel %vm26, %v3972, 0.0
  %v4173 = vadd.f32 %v4171, %v4172
  %v4174 = vsel %vm26, %v3977, 0.0
  %v4175 = vadd.f32 %v4173, %v4174
  %v4176 = vsel %vm26, %v3982, 0.0
  %v4177 = vadd.f32 %v4175, %v4176
  %v4178 = vsel %vm26, %v3987, 0.0
  %v4179 = vadd.f32 %v4177, %v4178
  %v4180 = vsel %vm26, %v3992, 0.0
  %v4181 = vadd.f32 %v4179, %v4180
  %v4182 = vsel %vm26, %v3997, 0.0
  %v4183 = vadd.f32 %v4181, %v4182
  %v4184 = vsel %vm26, %v4002, 0.0
  %v4185 = vadd.f32 %v4183, %v4184
  %v4186 = vsel %vm26, %v4007, 0.0
  %v4187 = vadd.f32 %v4185, %v4186
  %v4188 = vsel %vm26, %v4012, 0.0
  %v4189 = vadd.f32 %v4187, %v4188
  %v4190 = vsel %vm26, %v4017, 0.0
  %v4191 = vadd.f32 %v4189, %v4190
  %v4192 = vsel %vm26, %v4022, 0.0
  %v4193 = vadd.f32 %v4191, %v4192
  %v4194 = vsel %vm26, %v4027, 0.0
  %v4195 = vadd.f32 %v4193, %v4194
  %v4196 = vsel %vm26, %v4032, 0.0
  %v4197 = vadd.f32 %v4195, %v4196
  %v4198 = vsel %vm26, %v4037, 0.0
  %v4199 = vadd.f32 %v4197, %v4198
  %v4200 = vsel %vm26, %v4042, 0.0
  %v4201 = vadd.f32 %v4199, %v4200
  %v4202 = vsel %vm26, %v4047, 0.0
  %v4203 = vadd.f32 %v4201, %v4202
  %v4204 = vsel %vm26, %v4052, 0.0
  %v4205 = vadd.f32 %v4203, %v4204
  %v4206 = vsel %vm26, %v4057, 0.0
  %v4207 = vadd.f32 %v4205, %v4206
  %v4208 = vsel %vm26, %v4062, 0.0
  %v4209 = vadd.f32 %v4207, %v4208
  %v4210 = vsel %vm26, %v4067, 0.0
  %v4211 = vadd.f32 %v4209, %v4210
  %v4212 = vsel %vm26, %v4072, 0.0
  %v4213 = vadd.f32 %v4211, %v4212
  %v4214 = vsel %vm26, %v4077, 0.0
  %v4215 = vadd.f32 %v4213, %v4214
  %v4216 = vsel %vm26, %v4082, 0.0
  %v4217 = vadd.f32 %v4215, %v4216
  %v4218 = vsel %vm26, %v4087, 0.0
  %v4219 = vadd.f32 %v4217, %v4218
  %v4220 = vsel %vm26, %v4092, 0.0
  %v4221 = vadd.f32 %v4219, %v4220
  %v4222 = vrot.slane %v4221, 4
  %v4223 = vadd.f32 %v4221, %v4222
  %v4224 = vrot.slane %v4223, 2
  %v4225 = vadd.f32 %v4223, %v4224
  %v4226 = vrot.slane %v4225, 1
  %v4227 = vadd.f32 %v4225, %v4226
  %v4228 = vrcp.pop 512.0
  %v4229 = vmul.f32 %v4227, %v4228
  %v4230 = vsub.f32 %v3777, %v4229
  %v4231 = vsub.f32 %v3782, %v4229
  %v4232 = vsub.f32 %v3787, %v4229
  %v4233 = vsub.f32 %v3792, %v4229
  %v4234 = vsub.f32 %v3797, %v4229
  %v4235 = vsub.f32 %v3802, %v4229
  %v4236 = vsub.f32 %v3807, %v4229
  %v4237 = vsub.f32 %v3812, %v4229
  %v4238 = vsub.f32 %v3817, %v4229
  %v4239 = vsub.f32 %v3822, %v4229
  %v4240 = vsub.f32 %v3827, %v4229
  %v4241 = vsub.f32 %v3832, %v4229
  %v4242 = vsub.f32 %v3837, %v4229
  %v4243 = vsub.f32 %v3842, %v4229
  %v4244 = vsub.f32 %v3847, %v4229
  %v4245 = vsub.f32 %v3852, %v4229
  %v4246 = vsub.f32 %v3857, %v4229
  %v4247 = vsub.f32 %v3862, %v4229
  %v4248 = vsub.f32 %v3867, %v4229
  %v4249 = vsub.f32 %v3872, %v4229
  %v4250 = vsub.f32 %v3877, %v4229
  %v4251 = vsub.f32 %v3882, %v4229
  %v4252 = vsub.f32 %v3887, %v4229
  %v4253 = vsub.f32 %v3892, %v4229
  %v4254 = vsub.f32 %v3897, %v4229
  %v4255 = vsub.f32 %v3902, %v4229
  %v4256 = vsub.f32 %v3907, %v4229
  %v4257 = vsub.f32 %v3912, %v4229
  %v4258 = vsub.f32 %v3917, %v4229
  %v4259 = vsub.f32 %v3922, %v4229
  %v4260 = vsub.f32 %v3927, %v4229
  %v4261 = vsub.f32 %v3932, %v4229
  %v4262 = vsub.f32 %v3937, %v4229
  %v4263 = vsub.f32 %v3942, %v4229
  %v4264 = vsub.f32 %v3947, %v4229
  %v4265 = vsub.f32 %v3952, %v4229
  %v4266 = vsub.f32 %v3957, %v4229
  %v4267 = vsub.f32 %v3962, %v4229
  %v4268 = vsub.f32 %v3967, %v4229
  %v4269 = vsub.f32 %v3972, %v4229
  %v4270 = vsub.f32 %v3977, %v4229
  %v4271 = vsub.f32 %v3982, %v4229
  %v4272 = vsub.f32 %v3987, %v4229
  %v4273 = vsub.f32 %v3992, %v4229
  %v4274 = vsub.f32 %v3997, %v4229
  %v4275 = vsub.f32 %v4002, %v4229
  %v4276 = vsub.f32 %v4007, %v4229
  %v4277 = vsub.f32 %v4012, %v4229
  %v4278 = vsub.f32 %v4017, %v4229
  %v4279 = vsub.f32 %v4022, %v4229
  %v4280 = vsub.f32 %v4027, %v4229
  %v4281 = vsub.f32 %v4032, %v4229
  %v4282 = vsub.f32 %v4037, %v4229
  %v4283 = vsub.f32 %v4042, %v4229
  %v4284 = vsub.f32 %v4047, %v4229
  %v4285 = vsub.f32 %v4052, %v4229
  %v4286 = vsub.f32 %v4057, %v4229
  %v4287 = vsub.f32 %v4062, %v4229
  %v4288 = vsub.f32 %v4067, %v4229
  %v4289 = vsub.f32 %v4072, %v4229
  %v4290 = vsub.f32 %v4077, %v4229
  %v4291 = vsub.f32 %v4082, %v4229
  %v4292 = vsub.f32 %v4087, %v4229
  %v4293 = vsub.f32 %v4092, %v4229
  %v4294 = vmul.f32 %v4230, %v4230
  %v4295 = vmul.f32 %v4231, %v4231
  %v4296 = vmul.f32 %v4232, %v4232
  %v4297 = vmul.f32 %v4233, %v4233
  %v4298 = vmul.f32 %v4234, %v4234
  %v4299 = vmul.f32 %v4235, %v4235
  %v4300 = vmul.f32 %v4236, %v4236
  %v4301 = vmul.f32 %v4237, %v4237
  %v4302 = vmul.f32 %v4238, %v4238
  %v4303 = vmul.f32 %v4239, %v4239
  %v4304 = vmul.f32 %v4240, %v4240
  %v4305 = vmul.f32 %v4241, %v4241
  %v4306 = vmul.f32 %v4242, %v4242
  %v4307 = vmul.f32 %v4243, %v4243
  %v4308 = vmul.f32 %v4244, %v4244
  %v4309 = vmul.f32 %v4245, %v4245
  %v4310 = vmul.f32 %v4246, %v4246
  %v4311 = vmul.f32 %v4247, %v4247
  %v4312 = vmul.f32 %v4248, %v4248
  %v4313 = vmul.f32 %v4249, %v4249
  %v4314 = vmul.f32 %v4250, %v4250
  %v4315 = vmul.f32 %v4251, %v4251
  %v4316 = vmul.f32 %v4252, %v4252
  %v4317 = vmul.f32 %v4253, %v4253
  %v4318 = vmul.f32 %v4254, %v4254
  %v4319 = vmul.f32 %v4255, %v4255
  %v4320 = vmul.f32 %v4256, %v4256
  %v4321 = vmul.f32 %v4257, %v4257
  %v4322 = vmul.f32 %v4258, %v4258
  %v4323 = vmul.f32 %v4259, %v4259
  %v4324 = vmul.f32 %v4260, %v4260
  %v4325 = vmul.f32 %v4261, %v4261
  %v4326 = vmul.f32 %v4262, %v4262
  %v4327 = vmul.f32 %v4263, %v4263
  %v4328 = vmul.f32 %v4264, %v4264
  %v4329 = vmul.f32 %v4265, %v4265
  %v4330 = vmul.f32 %v4266, %v4266
  %v4331 = vmul.f32 %v4267, %v4267
  %v4332 = vmul.f32 %v4268, %v4268
  %v4333 = vmul.f32 %v4269, %v4269
  %v4334 = vmul.f32 %v4270, %v4270
  %v4335 = vmul.f32 %v4271, %v4271
  %v4336 = vmul.f32 %v4272, %v4272
  %v4337 = vmul.f32 %v4273, %v4273
  %v4338 = vmul.f32 %v4274, %v4274
  %v4339 = vmul.f32 %v4275, %v4275
  %v4340 = vmul.f32 %v4276, %v4276
  %v4341 = vmul.f32 %v4277, %v4277
  %v4342 = vmul.f32 %v4278, %v4278
  %v4343 = vmul.f32 %v4279, %v4279
  %v4344 = vmul.f32 %v4280, %v4280
  %v4345 = vmul.f32 %v4281, %v4281
  %v4346 = vmul.f32 %v4282, %v4282
  %v4347 = vmul.f32 %v4283, %v4283
  %v4348 = vmul.f32 %v4284, %v4284
  %v4349 = vmul.f32 %v4285, %v4285
  %v4350 = vmul.f32 %v4286, %v4286
  %v4351 = vmul.f32 %v4287, %v4287
  %v4352 = vmul.f32 %v4288, %v4288
  %v4353 = vmul.f32 %v4289, %v4289
  %v4354 = vmul.f32 %v4290, %v4290
  %v4355 = vmul.f32 %v4291, %v4291
  %v4356 = vmul.f32 %v4292, %v4292
  %v4357 = vmul.f32 %v4293, %v4293
  %v4358 = vsel %vm26, %v4294, 0.0
  %v4359 = vsel %vm26, %v4295, 0.0
  %v4360 = vadd.f32 %v4358, %v4359
  %v4361 = vsel %vm26, %v4296, 0.0
  %v4362 = vadd.f32 %v4360, %v4361
  %v4363 = vsel %vm26, %v4297, 0.0
  %v4364 = vadd.f32 %v4362, %v4363
  %v4365 = vsel %vm26, %v4298, 0.0
  %v4366 = vadd.f32 %v4364, %v4365
  %v4367 = vsel %vm26, %v4299, 0.0
  %v4368 = vadd.f32 %v4366, %v4367
  %v4369 = vsel %vm26, %v4300, 0.0
  %v4370 = vadd.f32 %v4368, %v4369
  %v4371 = vsel %vm26, %v4301, 0.0
  %v4372 = vadd.f32 %v4370, %v4371
  %v4373 = vsel %vm26, %v4302, 0.0
  %v4374 = vadd.f32 %v4372, %v4373
  %v4375 = vsel %vm26, %v4303, 0.0
  %v4376 = vadd.f32 %v4374, %v4375
  %v4377 = vsel %vm26, %v4304, 0.0
  %v4378 = vadd.f32 %v4376, %v4377
  %v4379 = vsel %vm26, %v4305, 0.0
  %v4380 = vadd.f32 %v4378, %v4379
  %v4381 = vsel %vm26, %v4306, 0.0
  %v4382 = vadd.f32 %v4380, %v4381
  %v4383 = vsel %vm26, %v4307, 0.0
  %v4384 = vadd.f32 %v4382, %v4383
  %v4385 = vsel %vm26, %v4308, 0.0
  %v4386 = vadd.f32 %v4384, %v4385
  %v4387 = vsel %vm26, %v4309, 0.0
  %v4388 = vadd.f32 %v4386, %v4387
  %v4389 = vsel %vm26, %v4310, 0.0
  %v4390 = vadd.f32 %v4388, %v4389
  %v4391 = vsel %vm26, %v4311, 0.0
  %v4392 = vadd.f32 %v4390, %v4391
  %v4393 = vsel %vm26, %v4312, 0.0
  %v4394 = vadd.f32 %v4392, %v4393
  %v4395 = vsel %vm26, %v4313, 0.0
  %v4396 = vadd.f32 %v4394, %v4395
  %v4397 = vsel %vm26, %v4314, 0.0
  %v4398 = vadd.f32 %v4396, %v4397
  %v4399 = vsel %vm26, %v4315, 0.0
  %v4400 = vadd.f32 %v4398, %v4399
  %v4401 = vsel %vm26, %v4316, 0.0
  %v4402 = vadd.f32 %v4400, %v4401
  %v4403 = vsel %vm26, %v4317, 0.0
  %v4404 = vadd.f32 %v4402, %v4403
  %v4405 = vsel %vm26, %v4318, 0.0
  %v4406 = vadd.f32 %v4404, %v4405
  %v4407 = vsel %vm26, %v4319, 0.0
  %v4408 = vadd.f32 %v4406, %v4407
  %v4409 = vsel %vm26, %v4320, 0.0
  %v4410 = vadd.f32 %v4408, %v4409
  %v4411 = vsel %vm26, %v4321, 0.0
  %v4412 = vadd.f32 %v4410, %v4411
  %v4413 = vsel %vm26, %v4322, 0.0
  %v4414 = vadd.f32 %v4412, %v4413
  %v4415 = vsel %vm26, %v4323, 0.0
  %v4416 = vadd.f32 %v4414, %v4415
  %v4417 = vsel %vm26, %v4324, 0.0
  %v4418 = vadd.f32 %v4416, %v4417
  %v4419 = vsel %vm26, %v4325, 0.0
  %v4420 = vadd.f32 %v4418, %v4419
  %v4421 = vsel %vm26, %v4326, 0.0
  %v4422 = vadd.f32 %v4420, %v4421
  %v4423 = vsel %vm26, %v4327, 0.0
  %v4424 = vadd.f32 %v4422, %v4423
  %v4425 = vsel %vm26, %v4328, 0.0
  %v4426 = vadd.f32 %v4424, %v4425
  %v4427 = vsel %vm26, %v4329, 0.0
  %v4428 = vadd.f32 %v4426, %v4427
  %v4429 = vsel %vm26, %v4330, 0.0
  %v4430 = vadd.f32 %v4428, %v4429
  %v4431 = vsel %vm26, %v4331, 0.0
  %v4432 = vadd.f32 %v4430, %v4431
  %v4433 = vsel %vm26, %v4332, 0.0
  %v4434 = vadd.f32 %v4432, %v4433
  %v4435 = vsel %vm26, %v4333, 0.0
  %v4436 = vadd.f32 %v4434, %v4435
  %v4437 = vsel %vm26, %v4334, 0.0
  %v4438 = vadd.f32 %v4436, %v4437
  %v4439 = vsel %vm26, %v4335, 0.0
  %v4440 = vadd.f32 %v4438, %v4439
  %v4441 = vsel %vm26, %v4336, 0.0
  %v4442 = vadd.f32 %v4440, %v4441
  %v4443 = vsel %vm26, %v4337, 0.0
  %v4444 = vadd.f32 %v4442, %v4443
  %v4445 = vsel %vm26, %v4338, 0.0
  %v4446 = vadd.f32 %v4444, %v4445
  %v4447 = vsel %vm26, %v4339, 0.0
  %v4448 = vadd.f32 %v4446, %v4447
  %v4449 = vsel %vm26, %v4340, 0.0
  %v4450 = vadd.f32 %v4448, %v4449
  %v4451 = vsel %vm26, %v4341, 0.0
  %v4452 = vadd.f32 %v4450, %v4451
  %v4453 = vsel %vm26, %v4342, 0.0
  %v4454 = vadd.f32 %v4452, %v4453
  %v4455 = vsel %vm26, %v4343, 0.0
  %v4456 = vadd.f32 %v4454, %v4455
  %v4457 = vsel %vm26, %v4344, 0.0
  %v4458 = vadd.f32 %v4456, %v4457
  %v4459 = vsel %vm26, %v4345, 0.0
  %v4460 = vadd.f32 %v4458, %v4459
  %v4461 = vsel %vm26, %v4346, 0.0
  %v4462 = vadd.f32 %v4460, %v4461
  %v4463 = vsel %vm26, %v4347, 0.0
  %v4464 = vadd.f32 %v4462, %v4463
  %v4465 = vsel %vm26, %v4348, 0.0
  %v4466 = vadd.f32 %v4464, %v4465
  %v4467 = vsel %vm26, %v4349, 0.0
  %v4468 = vadd.f32 %v4466, %v4467
  %v4469 = vsel %vm26, %v4350, 0.0
  %v4470 = vadd.f32 %v4468, %v4469
  %v4471 = vsel %vm26, %v4351, 0.0
  %v4472 = vadd.f32 %v4470, %v4471
  %v4473 = vsel %vm26, %v4352, 0.0
  %v4474 = vadd.f32 %v4472, %v4473
  %v4475 = vsel %vm26, %v4353, 0.0
  %v4476 = vadd.f32 %v4474, %v4475
  %v4477 = vsel %vm26, %v4354, 0.0
  %v4478 = vadd.f32 %v4476, %v4477
  %v4479 = vsel %vm26, %v4355, 0.0
  %v4480 = vadd.f32 %v4478, %v4479
  %v4481 = vsel %vm26, %v4356, 0.0
  %v4482 = vadd.f32 %v4480, %v4481
  %v4483 = vsel %vm26, %v4357, 0.0
  %v4484 = vadd.f32 %v4482, %v4483
  %v4485 = vrot.slane %v4484, 4
  %v4486 = vadd.f32 %v4484, %v4485
  %v4487 = vrot.slane %v4486, 2
  %v4488 = vadd.f32 %v4486, %v4487
  %v4489 = vrot.slane %v4488, 1
  %v4490 = vadd.f32 %v4488, %v4489
  %v4491 = vmul.f32 %v4490, %v4228
  %v4492 = vld [vmem:[%s3] sm:$0x1]
  %v4493 = vadd.f32 %v4491, 1e-05
  %v4494 = vrsqrt.pop %v4493
  %v4495 = vmul.f32 %v4492, %v4494
  %v4497 = vlaneseq
  %v4498 = vshrl.u32 %v4497, 7
  %v4499 = vsub.s32 0, %v4498
  %v4500 = vrot.slane %v4495, %v4499
  %v4502 = vmul.f32 %v3777, %v4500
  %v4503 = vmul.f32 %v3782, %v4500
  %v4504 = vmul.f32 %v3787, %v4500
  %v4505 = vmul.f32 %v3792, %v4500
  %v4506 = vmul.f32 %v3797, %v4500
  %v4507 = vmul.f32 %v3802, %v4500
  %v4508 = vmul.f32 %v3807, %v4500
  %v4509 = vmul.f32 %v3812, %v4500
  %v4510 = vmul.f32 %v3817, %v4500
  %v4511 = vmul.f32 %v3822, %v4500
  %v4512 = vmul.f32 %v3827, %v4500
  %v4513 = vmul.f32 %v3832, %v4500
  %v4514 = vmul.f32 %v3837, %v4500
  %v4515 = vmul.f32 %v3842, %v4500
  %v4516 = vmul.f32 %v3847, %v4500
  %v4517 = vmul.f32 %v3852, %v4500
  %v4518 = vmul.f32 %v3857, %v4500
  %v4519 = vmul.f32 %v3862, %v4500
  %v4520 = vmul.f32 %v3867, %v4500
  %v4521 = vmul.f32 %v3872, %v4500
  %v4522 = vmul.f32 %v3877, %v4500
  %v4523 = vmul.f32 %v3882, %v4500
  %v4524 = vmul.f32 %v3887, %v4500
  %v4525 = vmul.f32 %v3892, %v4500
  %v4526 = vmul.f32 %v3897, %v4500
  %v4527 = vmul.f32 %v3902, %v4500
  %v4528 = vmul.f32 %v3907, %v4500
  %v4529 = vmul.f32 %v3912, %v4500
  %v4530 = vmul.f32 %v3917, %v4500
  %v4531 = vmul.f32 %v3922, %v4500
  %v4532 = vmul.f32 %v3927, %v4500
  %v4533 = vmul.f32 %v3932, %v4500
  %v4534 = vmul.f32 %v3937, %v4500
  %v4535 = vmul.f32 %v3942, %v4500
  %v4536 = vmul.f32 %v3947, %v4500
  %v4537 = vmul.f32 %v3952, %v4500
  %v4538 = vmul.f32 %v3957, %v4500
  %v4539 = vmul.f32 %v3962, %v4500
  %v4540 = vmul.f32 %v3967, %v4500
  %v4541 = vmul.f32 %v3972, %v4500
  %v4542 = vmul.f32 %v3977, %v4500
  %v4543 = vmul.f32 %v3982, %v4500
  %v4544 = vmul.f32 %v3987, %v4500
  %v4545 = vmul.f32 %v3992, %v4500
  %v4546 = vmul.f32 %v3997, %v4500
  %v4547 = vmul.f32 %v4002, %v4500
  %v4548 = vmul.f32 %v4007, %v4500
  %v4549 = vmul.f32 %v4012, %v4500
  %v4550 = vmul.f32 %v4017, %v4500
  %v4551 = vmul.f32 %v4022, %v4500
  %v4552 = vmul.f32 %v4027, %v4500
  %v4553 = vmul.f32 %v4032, %v4500
  %v4554 = vmul.f32 %v4037, %v4500
  %v4555 = vmul.f32 %v4042, %v4500
  %v4556 = vmul.f32 %v4047, %v4500
  %v4557 = vmul.f32 %v4052, %v4500
  %v4558 = vmul.f32 %v4057, %v4500
  %v4559 = vmul.f32 %v4062, %v4500
  %v4560 = vmul.f32 %v4067, %v4500
  %v4561 = vmul.f32 %v4072, %v4500
  %v4562 = vmul.f32 %v4077, %v4500
  %v4563 = vmul.f32 %v4082, %v4500
  %v4564 = vmul.f32 %v4087, %v4500
  %v4565 = vmul.f32 %v4092, %v4500
  %v4566 = vld [vmem:[%s4] sm:$0x1]
  %v4567 = vmul.f32 %v4229, %v4495
  %v4568 = vsub.f32 %v4566, %v4567
  %v4570 = vlaneseq
  %v4571 = vshrl.u32 %v4570, 7
  %v4572 = vsub.s32 0, %v4571
  %v4573 = vrot.slane %v4568, %v4572
  %v4575 = vadd.f32 %v4502, %v4573
  %v4576 = vadd.f32 %v4503, %v4573
  %v4577 = vadd.f32 %v4504, %v4573
  %v4578 = vadd.f32 %v4505, %v4573
  %v4579 = vadd.f32 %v4506, %v4573
  %v4580 = vadd.f32 %v4507, %v4573
  %v4581 = vadd.f32 %v4508, %v4573
  %v4582 = vadd.f32 %v4509, %v4573
  %v4583 = vadd.f32 %v4510, %v4573
  %v4584 = vadd.f32 %v4511, %v4573
  %v4585 = vadd.f32 %v4512, %v4573
  %v4586 = vadd.f32 %v4513, %v4573
  %v4587 = vadd.f32 %v4514, %v4573
  %v4588 = vadd.f32 %v4515, %v4573
  %v4589 = vadd.f32 %v4516, %v4573
  %v4590 = vadd.f32 %v4517, %v4573
  %v4591 = vadd.f32 %v4518, %v4573
  %v4592 = vadd.f32 %v4519, %v4573
  %v4593 = vadd.f32 %v4520, %v4573
  %v4594 = vadd.f32 %v4521, %v4573
  %v4595 = vadd.f32 %v4522, %v4573
  %v4596 = vadd.f32 %v4523, %v4573
  %v4597 = vadd.f32 %v4524, %v4573
  %v4598 = vadd.f32 %v4525, %v4573
  %v4599 = vadd.f32 %v4526, %v4573
  %v4600 = vadd.f32 %v4527, %v4573
  %v4601 = vadd.f32 %v4528, %v4573
  %v4602 = vadd.f32 %v4529, %v4573
  %v4603 = vadd.f32 %v4530, %v4573
  %v4604 = vadd.f32 %v4531, %v4573
  %v4605 = vadd.f32 %v4532, %v4573
  %v4606 = vadd.f32 %v4533, %v4573
  %v4607 = vadd.f32 %v4534, %v4573
  %v4608 = vadd.f32 %v4535, %v4573
  %v4609 = vadd.f32 %v4536, %v4573
  %v4610 = vadd.f32 %v4537, %v4573
  %v4611 = vadd.f32 %v4538, %v4573
  %v4612 = vadd.f32 %v4539, %v4573
  %v4613 = vadd.f32 %v4540, %v4573
  %v4614 = vadd.f32 %v4541, %v4573
  %v4615 = vadd.f32 %v4542, %v4573
  %v4616 = vadd.f32 %v4543, %v4573
  %v4617 = vadd.f32 %v4544, %v4573
  %v4618 = vadd.f32 %v4545, %v4573
  %v4619 = vadd.f32 %v4546, %v4573
  %v4620 = vadd.f32 %v4547, %v4573
  %v4621 = vadd.f32 %v4548, %v4573
  %v4622 = vadd.f32 %v4549, %v4573
  %v4623 = vadd.f32 %v4550, %v4573
  %v4624 = vadd.f32 %v4551, %v4573
  %v4625 = vadd.f32 %v4552, %v4573
  %v4626 = vadd.f32 %v4553, %v4573
  %v4627 = vadd.f32 %v4554, %v4573
  %v4628 = vadd.f32 %v4555, %v4573
  %v4629 = vadd.f32 %v4556, %v4573
  %v4630 = vadd.f32 %v4557, %v4573
  %v4631 = vadd.f32 %v4558, %v4573
  %v4632 = vadd.f32 %v4559, %v4573
  %v4633 = vadd.f32 %v4560, %v4573
  %v4634 = vadd.f32 %v4561, %v4573
  %v4635 = vadd.f32 %v4562, %v4573
  %v4636 = vadd.f32 %v4563, %v4573
  %v4637 = vadd.f32 %v4564, %v4573
  %v4638 = vadd.f32 %v4565, %v4573
  %v4639 = vmax.f32 %v4575, 0.0
  %v4640 = vmax.f32 %v4576, 0.0
  %v4641 = vmax.f32 %v4577, 0.0
  %v4642 = vmax.f32 %v4578, 0.0
  %v4643 = vmax.f32 %v4579, 0.0
  %v4644 = vmax.f32 %v4580, 0.0
  %v4645 = vmax.f32 %v4581, 0.0
  %v4646 = vmax.f32 %v4582, 0.0
  %v4647 = vmax.f32 %v4583, 0.0
  %v4648 = vmax.f32 %v4584, 0.0
  %v4649 = vmax.f32 %v4585, 0.0
  %v4650 = vmax.f32 %v4586, 0.0
  %v4651 = vmax.f32 %v4587, 0.0
  %v4652 = vmax.f32 %v4588, 0.0
  %v4653 = vmax.f32 %v4589, 0.0
  %v4654 = vmax.f32 %v4590, 0.0
  %v4655 = vmax.f32 %v4591, 0.0
  %v4656 = vmax.f32 %v4592, 0.0
  %v4657 = vmax.f32 %v4593, 0.0
  %v4658 = vmax.f32 %v4594, 0.0
  %v4659 = vmax.f32 %v4595, 0.0
  %v4660 = vmax.f32 %v4596, 0.0
  %v4661 = vmax.f32 %v4597, 0.0
  %v4662 = vmax.f32 %v4598, 0.0
  %v4663 = vmax.f32 %v4599, 0.0
  %v4664 = vmax.f32 %v4600, 0.0
  %v4665 = vmax.f32 %v4601, 0.0
  %v4666 = vmax.f32 %v4602, 0.0
  %v4667 = vmax.f32 %v4603, 0.0
  %v4668 = vmax.f32 %v4604, 0.0
  %v4669 = vmax.f32 %v4605, 0.0
  %v4670 = vmax.f32 %v4606, 0.0
  %v4671 = vmax.f32 %v4607, 0.0
  %v4672 = vmax.f32 %v4608, 0.0
  %v4673 = vmax.f32 %v4609, 0.0
  %v4674 = vmax.f32 %v4610, 0.0
  %v4675 = vmax.f32 %v4611, 0.0
  %v4676 = vmax.f32 %v4612, 0.0
  %v4677 = vmax.f32 %v4613, 0.0
  %v4678 = vmax.f32 %v4614, 0.0
  %v4679 = vmax.f32 %v4615, 0.0
  %v4680 = vmax.f32 %v4616, 0.0
  %v4681 = vmax.f32 %v4617, 0.0
  %v4682 = vmax.f32 %v4618, 0.0
  %v4683 = vmax.f32 %v4619, 0.0
  %v4684 = vmax.f32 %v4620, 0.0
  %v4685 = vmax.f32 %v4621, 0.0
  %v4686 = vmax.f32 %v4622, 0.0
  %v4687 = vmax.f32 %v4623, 0.0
  %v4688 = vmax.f32 %v4624, 0.0
  %v4689 = vmax.f32 %v4625, 0.0
  %v4690 = vmax.f32 %v4626, 0.0
  %v4691 = vmax.f32 %v4627, 0.0
  %v4692 = vmax.f32 %v4628, 0.0
  %v4693 = vmax.f32 %v4629, 0.0
  %v4694 = vmax.f32 %v4630, 0.0
  %v4695 = vmax.f32 %v4631, 0.0
  %v4696 = vmax.f32 %v4632, 0.0
  %v4697 = vmax.f32 %v4633, 0.0
  %v4698 = vmax.f32 %v4634, 0.0
  %v4699 = vmax.f32 %v4635, 0.0
  %v4700 = vmax.f32 %v4636, 0.0
  %v4701 = vmax.f32 %v4637, 0.0
  %v4702 = vmax.f32 %v4638, 0.0
  %4703 = vst.msk [vmem:[%s41 + $0x1] sm:$0xff] %vm26, %v4639
  %4704 = vst.msk [vmem:[%s41 + $0x9] sm:$0xff] %vm26, %v4640
  %4705 = vst.msk [vmem:[%s41 + $0x19] sm:$0xff] %vm26, %v4641
  %4706 = vst.msk [vmem:[%s41 + $0x21] sm:$0xff] %vm26, %v4642
  %4707 = vst.msk [vmem:[%s41 + $0x31] sm:$0xff] %vm26, %v4643
  %4708 = vst.msk [vmem:[%s41 + $0x39] sm:$0xff] %vm26, %v4644
  %4709 = vst.msk [vmem:[%s41 + $0x49] sm:$0xff] %vm26, %v4645
  %4710 = vst.msk [vmem:[%s41 + $0x51] sm:$0xff] %vm26, %v4646
  %4711 = vst.msk [vmem:[%s41 + $0x61] sm:$0xff] %vm26, %v4647
  %4712 = vst.msk [vmem:[%s41 + $0x69] sm:$0xff] %vm26, %v4648
  %4713 = vst.msk [vmem:[%s41 + $0x79] sm:$0xff] %vm26, %v4649
  %4714 = vst.msk [vmem:[%s41 + $0x81] sm:$0xff] %vm26, %v4650
  %4715 = vst.msk [vmem:[%s41 + $0x91] sm:$0xff] %vm26, %v4651
  %4716 = vst.msk [vmem:[%s41 + $0x99] sm:$0xff] %vm26, %v4652
  %4717 = vst.msk [vmem:[%s41 + $0xa9] sm:$0xff] %vm26, %v4653
  %4718 = vst.msk [vmem:[%s41 + $0xb1] sm:$0xff] %vm26, %v4654
  %4719 = vst.msk [vmem:[%s41 + $0xc1] sm:$0xff] %vm26, %v4655
  %4720 = vst.msk [vmem:[%s41 + $0xc9] sm:$0xff] %vm26, %v4656
  %4721 = vst.msk [vmem:[%s41 + $0xd9] sm:$0xff] %vm26, %v4657
  %4722 = vst.msk [vmem:[%s41 + $0xe1] sm:$0xff] %vm26, %v4658
  %4723 = vst.msk [vmem:[%s41 + $0xf1] sm:$0xff] %vm26, %v4659
  %4724 = vst.msk [vmem:[%s41 + $0xf9] sm:$0xff] %vm26, %v4660
  %4725 = vst.msk [vmem:[%s41 + $0x109] sm:$0xff] %vm26, %v4661
  %4726 = vst.msk [vmem:[%s41 + $0x111] sm:$0xff] %vm26, %v4662
  %4727 = vst.msk [vmem:[%s41 + $0x121] sm:$0xff] %vm26, %v4663
  %4728 = vst.msk [vmem:[%s41 + $0x129] sm:$0xff] %vm26, %v4664
  %4729 = vst.msk [vmem:[%s41 + $0x139] sm:$0xff] %vm26, %v4665
  %4730 = vst.msk [vmem:[%s41 + $0x141] sm:$0xff] %vm26, %v4666
  %4731 = vst.msk [vmem:[%s41 + $0x151] sm:$0xff] %vm26, %v4667
  %4732 = vst.msk [vmem:[%s41 + $0x159] sm:$0xff] %vm26, %v4668
  %4733 = vst.msk [vmem:[%s41 + $0x169] sm:$0xff] %vm26, %v4669
  %4734 = vst.msk [vmem:[%s41 + $0x171] sm:$0xff] %vm26, %v4670
  %4735 = vst.msk [vmem:[%s41 + $0x1b1] sm:$0xff] %vm26, %v4671
  %4736 = vst.msk [vmem:[%s41 + $0x1b9] sm:$0xff] %vm26, %v4672
  %4737 = vst.msk [vmem:[%s41 + $0x1c9] sm:$0xff] %vm26, %v4673
  %4738 = vst.msk [vmem:[%s41 + $0x1d1] sm:$0xff] %vm26, %v4674
  %4739 = vst.msk [vmem:[%s41 + $0x1e1] sm:$0xff] %vm26, %v4675
  %4740 = vst.msk [vmem:[%s41 + $0x1e9] sm:$0xff] %vm26, %v4676
  %4741 = vst.msk [vmem:[%s41 + $0x1f9] sm:$0xff] %vm26, %v4677
  %4742 = vst.msk [vmem:[%s41 + $0x201] sm:$0xff] %vm26, %v4678
  %4743 = vst.msk [vmem:[%s41 + $0x211] sm:$0xff] %vm26, %v4679
  %4744 = vst.msk [vmem:[%s41 + $0x219] sm:$0xff] %vm26, %v4680
  %4745 = vst.msk [vmem:[%s41 + $0x229] sm:$0xff] %vm26, %v4681
  %4746 = vst.msk [vmem:[%s41 + $0x231] sm:$0xff] %vm26, %v4682
  %4747 = vst.msk [vmem:[%s41 + $0x241] sm:$0xff] %vm26, %v4683
  %4748 = vst.msk [vmem:[%s41 + $0x249] sm:$0xff] %vm26, %v4684
  %4749 = vst.msk [vmem:[%s41 + $0x259] sm:$0xff] %vm26, %v4685
  %4750 = vst.msk [vmem:[%s41 + $0x261] sm:$0xff] %vm26, %v4686
  %4751 = vst.msk [vmem:[%s41 + $0x271] sm:$0xff] %vm26, %v4687
  %4752 = vst.msk [vmem:[%s41 + $0x279] sm:$0xff] %vm26, %v4688
  %4753 = vst.msk [vmem:[%s41 + $0x289] sm:$0xff] %vm26, %v4689
  %4754 = vst.msk [vmem:[%s41 + $0x291] sm:$0xff] %vm26, %v4690
  %4755 = vst.msk [vmem:[%s41 + $0x2a1] sm:$0xff] %vm26, %v4691
  %4756 = vst.msk [vmem:[%s41 + $0x2a9] sm:$0xff] %vm26, %v4692
  %4757 = vst.msk [vmem:[%s41 + $0x2b9] sm:$0xff] %vm26, %v4693
  %4758 = vst.msk [vmem:[%s41 + $0x2c1] sm:$0xff] %vm26, %v4694
  %4759 = vst.msk [vmem:[%s41 + $0x2d1] sm:$0xff] %vm26, %v4695
  %4760 = vst.msk [vmem:[%s41 + $0x2d9] sm:$0xff] %vm26, %v4696
  %4761 = vst.msk [vmem:[%s41 + $0x2e9] sm:$0xff] %vm26, %v4697
  %4762 = vst.msk [vmem:[%s41 + $0x2f1] sm:$0xff] %vm26, %v4698
  %4763 = vst.msk [vmem:[%s41 + $0x301] sm:$0xff] %vm26, %v4699
  %4764 = vst.msk [vmem:[%s41 + $0x309] sm:$0xff] %vm26, %v4700
  %4765 = vst.msk [vmem:[%s41 + $0x319] sm:$0xff] %vm26, %v4701
  %4766 = vst.msk [vmem:[%s41 + $0x321] sm:$0xff] %vm26, %v4702
  %v4767 = vld [vmem:[#allocation2] sm:$0xff]
  %v4768 = vld [vmem:[#allocation2 + $0x8] sm:$0xff]
  %v4769 = vld [vmem:[#allocation2 + $0x18] sm:$0xff]
  %v4770 = vld [vmem:[#allocation2 + $0x20] sm:$0xff]
  %v4771 = vld [vmem:[#allocation2 + $0x30] sm:$0xff]
  %v4772 = vld [vmem:[#allocation2 + $0x38] sm:$0xff]
  %v4773 = vld [vmem:[#allocation2 + $0x48] sm:$0xff]
  %v4774 = vld [vmem:[#allocation2 + $0x50] sm:$0xff]
  %v4775 = vld [vmem:[#allocation2 + $0x60] sm:$0xff]
  %v4776 = vld [vmem:[#allocation2 + $0x68] sm:$0xff]
  %v4777 = vld [vmem:[#allocation2 + $0x78] sm:$0xff]
  %v4778 = vld [vmem:[#allocation2 + $0x80] sm:$0xff]
  %v4779 = vld [vmem:[#allocation2 + $0x90] sm:$0xff]
  %v4780 = vld [vmem:[#allocation2 + $0x98] sm:$0xff]
  %v4781 = vld [vmem:[#allocation2 + $0xa8] sm:$0xff]
  %v4782 = vld [vmem:[#allocation2 + $0xb0] sm:$0xff]
  %v4783 = vld [vmem:[#allocation2 + $0xc0] sm:$0xff]
  %v4784 = vld [vmem:[#allocation2 + $0xc8] sm:$0xff]
  %v4785 = vld [vmem:[#allocation2 + $0xd8] sm:$0xff]
  %v4786 = vld [vmem:[#allocation2 + $0xe0] sm:$0xff]
  %v4787 = vld [vmem:[#allocation2 + $0xf0] sm:$0xff]
  %v4788 = vld [vmem:[#allocation2 + $0xf8] sm:$0xff]
  %v4789 = vld [vmem:[#allocation2 + $0x108] sm:$0xff]
  %v4790 = vld [vmem:[#allocation2 + $0x110] sm:$0xff]
  %v4791 = vld [vmem:[#allocation2 + $0x120] sm:$0xff]
  %v4792 = vld [vmem:[#allocation2 + $0x128] sm:$0xff]
  %v4793 = vld [vmem:[#allocation2 + $0x138] sm:$0xff]
  %v4794 = vld [vmem:[#allocation2 + $0x140] sm:$0xff]
  %v4795 = vld [vmem:[#allocation2 + $0x150] sm:$0xff]
  %v4796 = vld [vmem:[#allocation2 + $0x158] sm:$0xff]
  %v4797 = vld [vmem:[#allocation2 + $0x168] sm:$0xff]
  %v4798 = vld [vmem:[#allocation2 + $0x170] sm:$0xff]
  %v4799 = vld [vmem:[#allocation2 + $0x1b0] sm:$0xff]
  %v4800 = vld [vmem:[#allocation2 + $0x1b8] sm:$0xff]
  %v4801 = vld [vmem:[#allocation2 + $0x1c8] sm:$0xff]
  %v4802 = vld [vmem:[#allocation2 + $0x1d0] sm:$0xff]
  %v4803 = vld [vmem:[#allocation2 + $0x1e0] sm:$0xff]
  %v4804 = vld [vmem:[#allocation2 + $0x1e8] sm:$0xff]
  %v4805 = vld [vmem:[#allocation2 + $0x1f8] sm:$0xff]
  %v4806 = vld [vmem:[#allocation2 + $0x200] sm:$0xff]
  %v4807 = vld [vmem:[#allocation2 + $0x210] sm:$0xff]
  %v4808 = vld [vmem:[#allocation2 + $0x218] sm:$0xff]
  %v4809 = vld [vmem:[#allocation2 + $0x228] sm:$0xff]
  %v4810 = vld [vmem:[#allocation2 + $0x230] sm:$0xff]
  %v4811 = vld [vmem:[#allocation2 + $0x240] sm:$0xff]
  %v4812 = vld [vmem:[#allocation2 + $0x248] sm:$0xff]
  %v4813 = vld [vmem:[#allocation2 + $0x258] sm:$0xff]
  %v4814 = vld [vmem:[#allocation2 + $0x260] sm:$0xff]
  %v4815 = vld [vmem:[#allocation2 + $0x270] sm:$0xff]
  %v4816 = vld [vmem:[#allocation2 + $0x278] sm:$0xff]
  %v4817 = vld [vmem:[#allocation2 + $0x288] sm:$0xff]
  %v4818 = vld [vmem:[#allocation2 + $0x290] sm:$0xff]
  %v4819 = vld [vmem:[#allocation2 + $0x2a0] sm:$0xff]
  %v4820 = vld [vmem:[#allocation2 + $0x2a8] sm:$0xff]
  %v4821 = vld [vmem:[#allocation2 + $0x2b8] sm:$0xff]
  %v4822 = vld [vmem:[#allocation2 + $0x2c0] sm:$0xff]
  %v4823 = vld [vmem:[#allocation2 + $0x2d0] sm:$0xff]
  %v4824 = vld [vmem:[#allocation2 + $0x2d8] sm:$0xff]
  %v4825 = vld [vmem:[#allocation2 + $0x2e8] sm:$0xff]
  %v4826 = vld [vmem:[#allocation2 + $0x2f0] sm:$0xff]
  %v4827 = vld [vmem:[#allocation2 + $0x300] sm:$0xff]
  %v4828 = vld [vmem:[#allocation2 + $0x308] sm:$0xff]
  %v4829 = vld [vmem:[#allocation2 + $0x318] sm:$0xff]
  %v4830 = vld [vmem:[#allocation2 + $0x320] sm:$0xff]
  %4831 = vst.msk [vmem:[#allocation3] sm:$0xff] %vm26, %v4767
  %4832 = vst.msk [vmem:[#allocation3 + $0x8] sm:$0xff] %vm26, %v4768
  %4833 = vst.msk [vmem:[#allocation3 + $0x10] sm:$0xff] %vm26, %v4769
  %4834 = vst.msk [vmem:[#allocation3 + $0x18] sm:$0xff] %vm26, %v4770
  %4835 = vst.msk [vmem:[#allocation3 + $0x20] sm:$0xff] %vm26, %v4771
  %4836 = vst.msk [vmem:[#allocation3 + $0x28] sm:$0xff] %vm26, %v4772
  %4837 = vst.msk [vmem:[#allocation3 + $0x30] sm:$0xff] %vm26, %v4773
  %4838 = vst.msk [vmem:[#allocation3 + $0x38] sm:$0xff] %vm26, %v4774
  %4839 = vst.msk [vmem:[#allocation3 + $0x40] sm:$0xff] %vm26, %v4775
  %4840 = vst.msk [vmem:[#allocation3 + $0x48] sm:$0xff] %vm26, %v4776
  %4841 = vst.msk [vmem:[#allocation3 + $0x50] sm:$0xff] %vm26, %v4777
  %4842 = vst.msk [vmem:[#allocation3 + $0x58] sm:$0xff] %vm26, %v4778
  %4843 = vst.msk [vmem:[#allocation3 + $0x60] sm:$0xff] %vm26, %v4779
  %4844 = vst.msk [vmem:[#allocation3 + $0x68] sm:$0xff] %vm26, %v4780
  %4845 = vst.msk [vmem:[#allocation3 + $0x70] sm:$0xff] %vm26, %v4781
  %4846 = vst.msk [vmem:[#allocation3 + $0x78] sm:$0xff] %vm26, %v4782
  %4847 = vst.msk [vmem:[#allocation3 + $0x80] sm:$0xff] %vm26, %v4783
  %4848 = vst.msk [vmem:[#allocation3 + $0x88] sm:$0xff] %vm26, %v4784
  %4849 = vst.msk [vmem:[#allocation3 + $0x90] sm:$0xff] %vm26, %v4785
  %4850 = vst.msk [vmem:[#allocation3 + $0x98] sm:$0xff] %vm26, %v4786
  %4851 = vst.msk [vmem:[#allocation3 + $0xa0] sm:$0xff] %vm26, %v4787
  %4852 = vst.msk [vmem:[#allocation3 + $0xa8] sm:$0xff] %vm26, %v4788
  %4853 = vst.msk [vmem:[#allocation3 + $0xb0] sm:$0xff] %vm26, %v4789
  %4854 = vst.msk [vmem:[#allocation3 + $0xb8] sm:$0xff] %vm26, %v4790
  %4855 = vst.msk [vmem:[#allocation3 + $0xc0] sm:$0xff] %vm26, %v4791
  %4856 = vst.msk [vmem:[#allocation3 + $0xc8] sm:$0xff] %vm26, %v4792
  %4857 = vst.msk [vmem:[#allocation3 + $0xd0] sm:$0xff] %vm26, %v4793
  %4858 = vst.msk [vmem:[#allocation3 + $0xd8] sm:$0xff] %vm26, %v4794
  %4859 = vst.msk [vmem:[#allocation3 + $0xe0] sm:$0xff] %vm26, %v4795
  %4860 = vst.msk [vmem:[#allocation3 + $0xe8] sm:$0xff] %vm26, %v4796
  %4861 = vst.msk [vmem:[#allocation3 + $0xf0] sm:$0xff] %vm26, %v4797
  %4862 = vst.msk [vmem:[#allocation3 + $0xf8] sm:$0xff] %vm26, %v4798
  %4863 = vst.msk [vmem:[#allocation3 + $0x100] sm:$0xff] %vm26, %v4799
  %4864 = vst.msk [vmem:[#allocation3 + $0x108] sm:$0xff] %vm26, %v4800
  %4865 = vst.msk [vmem:[#allocation3 + $0x110] sm:$0xff] %vm26, %v4801
  %4866 = vst.msk [vmem:[#allocation3 + $0x118] sm:$0xff] %vm26, %v4802
  %4867 = vst.msk [vmem:[#allocation3 + $0x120] sm:$0xff] %vm26, %v4803
  %4868 = vst.msk [vmem:[#allocation3 + $0x128] sm:$0xff] %vm26, %v4804
  %4869 = vst.msk [vmem:[#allocation3 + $0x130] sm:$0xff] %vm26, %v4805
  %4870 = vst.msk [vmem:[#allocation3 + $0x138] sm:$0xff] %vm26, %v4806
  %4871 = vst.msk [vmem:[#allocation3 + $0x140] sm:$0xff] %vm26, %v4807
  %4872 = vst.msk [vmem:[#allocation3 + $0x148] sm:$0xff] %vm26, %v4808
  %4873 = vst.msk [vmem:[#allocation3 + $0x150] sm:$0xff] %vm26, %v4809
  %4874 = vst.msk [vmem:[#allocation3 + $0x158] sm:$0xff] %vm26, %v4810
  %4875 = vst.msk [vmem:[#allocation3 + $0x160] sm:$0xff] %vm26, %v4811
  %4876 = vst.msk [vmem:[#allocation3 + $0x168] sm:$0xff] %vm26, %v4812
  %4877 = vst.msk [vmem:[#allocation3 + $0x170] sm:$0xff] %vm26, %v4813
  %4878 = vst.msk [vmem:[#allocation3 + $0x178] sm:$0xff] %vm26, %v4814
  %4879 = vst.msk [vmem:[#allocation3 + $0x180] sm:$0xff] %vm26, %v4815
  %4880 = vst.msk [vmem:[#allocation3 + $0x188] sm:$0xff] %vm26, %v4816
  %4881 = vst.msk [vmem:[#allocation3 + $0x190] sm:$0xff] %vm26, %v4817
  %4882 = vst.msk [vmem:[#allocation3 + $0x198] sm:$0xff] %vm26, %v4818
  %4883 = vst.msk [vmem:[#allocation3 + $0x1a0] sm:$0xff] %vm26, %v4819
  %4884 = vst.msk [vmem:[#allocation3 + $0x1a8] sm:$0xff] %vm26, %v4820
  %4885 = vst.msk [vmem:[#allocation3 + $0x1b0] sm:$0xff] %vm26, %v4821
  %4886 = vst.msk [vmem:[#allocation3 + $0x1b8] sm:$0xff] %vm26, %v4822
  %4887 = vst.msk [vmem:[#allocation3 + $0x1c0] sm:$0xff] %vm26, %v4823
  %4888 = vst.msk [vmem:[#allocation3 + $0x1c8] sm:$0xff] %vm26, %v4824
  %4889 = vst.msk [vmem:[#allocation3 + $0x1d0] sm:$0xff] %vm26, %v4825
  %4890 = vst.msk [vmem:[#allocation3 + $0x1d8] sm:$0xff] %vm26, %v4826
  %4891 = vst.msk [vmem:[#allocation3 + $0x1e0] sm:$0xff] %vm26, %v4827
  %4892 = vst.msk [vmem:[#allocation3 + $0x1e8] sm:$0xff] %vm26, %v4828
  %4893 = vst.msk [vmem:[#allocation3 + $0x1f0] sm:$0xff] %vm26, %v4829
  %4894 = vst.msk [vmem:[#allocation3 + $0x1f8] sm:$0xff] %vm26, %v4830
  %v4895 = vld [vmem:[#allocation2 + $0x1] sm:$0xff]
  %v4896 = vld [vmem:[#allocation2 + $0x9] sm:$0xff]
  %v4897 = vld [vmem:[#allocation2 + $0x19] sm:$0xff]
  %v4898 = vld [vmem:[#allocation2 + $0x21] sm:$0xff]
  %v4899 = vld [vmem:[#allocation2 + $0x31] sm:$0xff]
  %v4900 = vld [vmem:[#allocation2 + $0x39] sm:$0xff]
  %v4901 = vld [vmem:[#allocation2 + $0x49] sm:$0xff]
  %v4902 = vld [vmem:[#allocation2 + $0x51] sm:$0xff]
  %v4903 = vld [vmem:[#allocation2 + $0x61] sm:$0xff]
  %v4904 = vld [vmem:[#allocation2 + $0x69] sm:$0xff]
  %v4905 = vld [vmem:[#allocation2 + $0x79] sm:$0xff]
  %v4906 = vld [vmem:[#allocation2 + $0x81] sm:$0xff]
  %v4907 = vld [vmem:[#allocation2 + $0x91] sm:$0xff]
  %v4908 = vld [vmem:[#allocation2 + $0x99] sm:$0xff]
  %v4909 = vld [vmem:[#allocation2 + $0xa9] sm:$0xff]
  %v4910 = vld [vmem:[#allocation2 + $0xb1] sm:$0xff]
  %v4911 = vld [vmem:[#allocation2 + $0xc1] sm:$0xff]
  %v4912 = vld [vmem:[#allocation2 + $0xc9] sm:$0xff]
  %v4913 = vld [vmem:[#allocation2 + $0xd9] sm:$0xff]
  %v4914 = vld [vmem:[#allocation2 + $0xe1] sm:$0xff]
  %v4915 = vld [vmem:[#allocation2 + $0xf1] sm:$0xff]
  %v4916 = vld [vmem:[#allocation2 + $0xf9] sm:$0xff]
  %v4917 = vld [vmem:[#allocation2 + $0x109] sm:$0xff]
  %v4918 = vld [vmem:[#allocation2 + $0x111] sm:$0xff]
  %v4919 = vld [vmem:[#allocation2 + $0x121] sm:$0xff]
  %v4920 = vld [vmem:[#allocation2 + $0x129] sm:$0xff]
  %v4921 = vld [vmem:[#allocation2 + $0x139] sm:$0xff]
  %v4922 = vld [vmem:[#allocation2 + $0x141] sm:$0xff]
  %v4923 = vld [vmem:[#allocation2 + $0x151] sm:$0xff]
  %v4924 = vld [vmem:[#allocation2 + $0x159] sm:$0xff]
  %v4925 = vld [vmem:[#allocation2 + $0x169] sm:$0xff]
  %v4926 = vld [vmem:[#allocation2 + $0x171] sm:$0xff]
  %v4927 = vld [vmem:[#allocation2 + $0x1b1] sm:$0xff]
  %v4928 = vld [vmem:[#allocation2 + $0x1b9] sm:$0xff]
  %v4929 = vld [vmem:[#allocation2 + $0x1c9] sm:$0xff]
  %v4930 = vld [vmem:[#allocation2 + $0x1d1] sm:$0xff]
  %v4931 = vld [vmem:[#allocation2 + $0x1e1] sm:$0xff]
  %v4932 = vld [vmem:[#allocation2 + $0x1e9] sm:$0xff]
  %v4933 = vld [vmem:[#allocation2 + $0x1f9] sm:$0xff]
  %v4934 = vld [vmem:[#allocation2 + $0x201] sm:$0xff]
  %v4935 = vld [vmem:[#allocation2 + $0x211] sm:$0xff]
  %v4936 = vld [vmem:[#allocation2 + $0x219] sm:$0xff]
  %v4937 = vld [vmem:[#allocation2 + $0x229] sm:$0xff]
  %v4938 = vld [vmem:[#allocation2 + $0x231] sm:$0xff]
  %v4939 = vld [vmem:[#allocation2 + $0x241] sm:$0xff]
  %v4940 = vld [vmem:[#allocation2 + $0x249] sm:$0xff]
  %v4941 = vld [vmem:[#allocation2 + $0x259] sm:$0xff]
  %v4942 = vld [vmem:[#allocation2 + $0x261] sm:$0xff]
  %v4943 = vld [vmem:[#allocation2 + $0x271] sm:$0xff]
  %v4944 = vld [vmem:[#allocation2 + $0x279] sm:$0xff]
  %v4945 = vld [vmem:[#allocation2 + $0x289] sm:$0xff]
  %v4946 = vld [vmem:[#allocation2 + $0x291] sm:$0xff]
  %v4947 = vld [vmem:[#allocation2 + $0x2a1] sm:$0xff]
  %v4948 = vld [vmem:[#allocation2 + $0x2a9] sm:$0xff]
  %v4949 = vld [vmem:[#allocation2 + $0x2b9] sm:$0xff]
  %v4950 = vld [vmem:[#allocation2 + $0x2c1] sm:$0xff]
  %v4951 = vld [vmem:[#allocation2 + $0x2d1] sm:$0xff]
  %v4952 = vld [vmem:[#allocation2 + $0x2d9] sm:$0xff]
  %v4953 = vld [vmem:[#allocation2 + $0x2e9] sm:$0xff]
  %v4954 = vld [vmem:[#allocation2 + $0x2f1] sm:$0xff]
  %v4955 = vld [vmem:[#allocation2 + $0x301] sm:$0xff]
  %v4956 = vld [vmem:[#allocation2 + $0x309] sm:$0xff]
  %v4957 = vld [vmem:[#allocation2 + $0x319] sm:$0xff]
  %v4958 = vld [vmem:[#allocation2 + $0x321] sm:$0xff]
  %5023 = vrot.lane.b32.xlu0 %v4895, 4
  %v5024 = vpop.permute.xlu0 %5023
  %5025 = vrot.lane.b32.xlu0 %v4896, 4
  %v5026 = vpop.permute.xlu0 %5025
  %5027 = vrot.lane.b32.xlu0 %v4897, 4
  %v5028 = vpop.permute.xlu0 %5027
  %5029 = vrot.lane.b32.xlu0 %v4898, 4
  %v5030 = vpop.permute.xlu0 %5029
  %5031 = vrot.lane.b32.xlu0 %v4899, 4
  %v5032 = vpop.permute.xlu0 %5031
  %5033 = vrot.lane.b32.xlu0 %v4900, 4
  %v5034 = vpop.permute.xlu0 %5033
  %5035 = vrot.lane.b32.xlu0 %v4901, 4
  %v5036 = vpop.permute.xlu0 %5035
  %5037 = vrot.lane.b32.xlu0 %v4902, 4
  %v5038 = vpop.permute.xlu0 %5037
  %5039 = vrot.lane.b32.xlu0 %v4903, 4
  %v5040 = vpop.permute.xlu0 %5039
  %5041 = vrot.lane.b32.xlu0 %v4904, 4
  %v5042 = vpop.permute.xlu0 %5041
  %5043 = vrot.lane.b32.xlu0 %v4905, 4
  %v5044 = vpop.permute.xlu0 %5043
  %5045 = vrot.lane.b32.xlu0 %v4906, 4
  %v5046 = vpop.permute.xlu0 %5045
  %5047 = vrot.lane.b32.xlu0 %v4907, 4
  %v5048 = vpop.permute.xlu0 %5047
  %5049 = vrot.lane.b32.xlu0 %v4908, 4
  %v5050 = vpop.permute.xlu0 %5049
  %5051 = vrot.lane.b32.xlu0 %v4909, 4
  %v5052 = vpop.permute.xlu0 %5051
  %5053 = vrot.lane.b32.xlu0 %v4910, 4
  %v5054 = vpop.permute.xlu0 %5053
  %5055 = vrot.lane.b32.xlu0 %v4911, 4
  %v5056 = vpop.permute.xlu0 %5055
  %5057 = vrot.lane.b32.xlu0 %v4912, 4
  %v5058 = vpop.permute.xlu0 %5057
  %5059 = vrot.lane.b32.xlu0 %v4913, 4
  %v5060 = vpop.permute.xlu0 %5059
  %5061 = vrot.lane.b32.xlu0 %v4914, 4
  %v5062 = vpop.permute.xlu0 %5061
  %5063 = vrot.lane.b32.xlu0 %v4915, 4
  %v5064 = vpop.permute.xlu0 %5063
  %5065 = vrot.lane.b32.xlu0 %v4916, 4
  %v5066 = vpop.permute.xlu0 %5065
  %5067 = vrot.lane.b32.xlu0 %v4917, 4
  %v5068 = vpop.permute.xlu0 %5067
  %5069 = vrot.lane.b32.xlu0 %v4918, 4
  %v5070 = vpop.permute.xlu0 %5069
  %5071 = vrot.lane.b32.xlu0 %v4919, 4
  %v5072 = vpop.permute.xlu0 %5071
  %5073 = vrot.lane.b32.xlu0 %v4920, 4
  %v5074 = vpop.permute.xlu0 %5073
  %5075 = vrot.lane.b32.xlu0 %v4921, 4
  %v5076 = vpop.permute.xlu0 %5075
  %5077 = vrot.lane.b32.xlu0 %v4922, 4
  %v5078 = vpop.permute.xlu0 %5077
  %5079 = vrot.lane.b32.xlu0 %v4923, 4
  %v5080 = vpop.permute.xlu0 %5079
  %5081 = vrot.lane.b32.xlu0 %v4924, 4
  %v5082 = vpop.permute.xlu0 %5081
  %5083 = vrot.lane.b32.xlu0 %v4925, 4
  %v5084 = vpop.permute.xlu0 %5083
  %5085 = vrot.lane.b32.xlu0 %v4926, 4
  %v5086 = vpop.permute.xlu0 %5085
  %5087 = vrot.lane.b32.xlu0 %v4927, 4
  %v5088 = vpop.permute.xlu0 %5087
  %5089 = vrot.lane.b32.xlu0 %v4928, 4
  %v5090 = vpop.permute.xlu0 %5089
  %5091 = vrot.lane.b32.xlu0 %v4929, 4
  %v5092 = vpop.permute.xlu0 %5091
  %5093 = vrot.lane.b32.xlu0 %v4930, 4
  %v5094 = vpop.permute.xlu0 %5093
  %5095 = vrot.lane.b32.xlu0 %v4931, 4
  %v5096 = vpop.permute.xlu0 %5095
  %5097 = vrot.lane.b32.xlu0 %v4932, 4
  %v5098 = vpop.permute.xlu0 %5097
  %5099 = vrot.lane.b32.xlu0 %v4933, 4
  %v5100 = vpop.permute.xlu0 %5099
  %5101 = vrot.lane.b32.xlu0 %v4934, 4
  %v5102 = vpop.permute.xlu0 %5101
  %5103 = vrot.lane.b32.xlu0 %v4935, 4
  %v5104 = vpop.permute.xlu0 %5103
  %5105 = vrot.lane.b32.xlu0 %v4936, 4
  %v5106 = vpop.permute.xlu0 %5105
  %5107 = vrot.lane.b32.xlu0 %v4937, 4
  %v5108 = vpop.permute.xlu0 %5107
  %5109 = vrot.lane.b32.xlu0 %v4938, 4
  %v5110 = vpop.permute.xlu0 %5109
  %5111 = vrot.lane.b32.xlu0 %v4939, 4
  %v5112 = vpop.permute.xlu0 %5111
  %5113 = vrot.lane.b32.xlu0 %v4940, 4
  %v5114 = vpop.permute.xlu0 %5113
  %5115 = vrot.lane.b32.xlu0 %v4941, 4
  %v5116 = vpop.permute.xlu0 %5115
  %5117 = vrot.lane.b32.xlu0 %v4942, 4
  %v5118 = vpop.permute.xlu0 %5117
  %5119 = vrot.lane.b32.xlu0 %v4943, 4
  %v5120 = vpop.permute.xlu0 %5119
  %5121 = vrot.lane.b32.xlu0 %v4944, 4
  %v5122 = vpop.permute.xlu0 %5121
  %5123 = vrot.lane.b32.xlu0 %v4945, 4
  %v5124 = vpop.permute.xlu0 %5123
  %5125 = vrot.lane.b32.xlu0 %v4946, 4
  %v5126 = vpop.permute.xlu0 %5125
  %5127 = vrot.lane.b32.xlu0 %v4947, 4
  %v5128 = vpop.permute.xlu0 %5127
  %5129 = vrot.lane.b32.xlu0 %v4948, 4
  %v5130 = vpop.permute.xlu0 %5129
  %5131 = vrot.lane.b32.xlu0 %v4949, 4
  %v5132 = vpop.permute.xlu0 %5131
  %5133 = vrot.lane.b32.xlu0 %v4950, 4
  %v5134 = vpop.permute.xlu0 %5133
  %5135 = vrot.lane.b32.xlu0 %v4951, 4
  %v5136 = vpop.permute.xlu0 %5135
  %5137 = vrot.lane.b32.xlu0 %v4952, 4
  %v5138 = vpop.permute.xlu0 %5137
  %5139 = vrot.lane.b32.xlu0 %v4953, 4
  %v5140 = vpop.permute.xlu0 %5139
  %5141 = vrot.lane.b32.xlu0 %v4954, 4
  %v5142 = vpop.permute.xlu0 %5141
  %5143 = vrot.lane.b32.xlu0 %v4955, 4
  %v5144 = vpop.permute.xlu0 %5143
  %5145 = vrot.lane.b32.xlu0 %v4956, 4
  %v5146 = vpop.permute.xlu0 %5145
  %5147 = vrot.lane.b32.xlu0 %v4957, 4
  %v5148 = vpop.permute.xlu0 %5147
  %5149 = vrot.lane.b32.xlu0 %v4958, 4
  %v5150 = vpop.permute.xlu0 %5149
  %5215 = vst.msk [vmem:[#allocation3] sm:$0xff] %vm683, %v5024
  %5216 = vst.msk [vmem:[#allocation3 + $0x8] sm:$0xff] %vm683, %v5026
  %5217 = vst.msk [vmem:[#allocation3 + $0x10] sm:$0xff] %vm683, %v5028
  %5218 = vst.msk [vmem:[#allocation3 + $0x18] sm:$0xff] %vm683, %v5030
  %5219 = vst.msk [vmem:[#allocation3 + $0x20] sm:$0xff] %vm683, %v5032
  %5220 = vst.msk [vmem:[#allocation3 + $0x28] sm:$0xff] %vm683, %v5034
  %5221 = vst.msk [vmem:[#allocation3 + $0x30] sm:$0xff] %vm683, %v5036
  %5222 = vst.msk [vmem:[#allocation3 + $0x38] sm:$0xff] %vm683, %v5038
  %5223 = vst.msk [vmem:[#allocation3 + $0x40] sm:$0xff] %vm683, %v5040
  %5224 = vst.msk [vmem:[#allocation3 + $0x48] sm:$0xff] %vm683, %v5042
  %5225 = vst.msk [vmem:[#allocation3 + $0x50] sm:$0xff] %vm683, %v5044
  %5226 = vst.msk [vmem:[#allocation3 + $0x58] sm:$0xff] %vm683, %v5046
  %5227 = vst.msk [vmem:[#allocation3 + $0x60] sm:$0xff] %vm683, %v5048
  %5228 = vst.msk [vmem:[#allocation3 + $0x68] sm:$0xff] %vm683, %v5050
  %5229 = vst.msk [vmem:[#allocation3 + $0x70] sm:$0xff] %vm683, %v5052
  %5230 = vst.msk [vmem:[#allocation3 + $0x78] sm:$0xff] %vm683, %v5054
  %5231 = vst.msk [vmem:[#allocation3 + $0x80] sm:$0xff] %vm683, %v5056
  %5232 = vst.msk [vmem:[#allocation3 + $0x88] sm:$0xff] %vm683, %v5058
  %5233 = vst.msk [vmem:[#allocation3 + $0x90] sm:$0xff] %vm683, %v5060
  %5234 = vst.msk [vmem:[#allocation3 + $0x98] sm:$0xff] %vm683, %v5062
  %5235 = vst.msk [vmem:[#allocation3 + $0xa0] sm:$0xff] %vm683, %v5064
  %5236 = vst.msk [vmem:[#allocation3 + $0xa8] sm:$0xff] %vm683, %v5066
  %5237 = vst.msk [vmem:[#allocation3 + $0xb0] sm:$0xff] %vm683, %v5068
  %5238 = vst.msk [vmem:[#allocation3 + $0xb8] sm:$0xff] %vm683, %v5070
  %5239 = vst.msk [vmem:[#allocation3 + $0xc0] sm:$0xff] %vm683, %v5072
  %5240 = vst.msk [vmem:[#allocation3 + $0xc8] sm:$0xff] %vm683, %v5074
  %5241 = vst.msk [vmem:[#allocation3 + $0xd0] sm:$0xff] %vm683, %v5076
  %5242 = vst.msk [vmem:[#allocation3 + $0xd8] sm:$0xff] %vm683, %v5078
  %5243 = vst.msk [vmem:[#allocation3 + $0xe0] sm:$0xff] %vm683, %v5080
  %5244 = vst.msk [vmem:[#allocation3 + $0xe8] sm:$0xff] %vm683, %v5082
  %5245 = vst.msk [vmem:[#allocation3 + $0xf0] sm:$0xff] %vm683, %v5084
  %5246 = vst.msk [vmem:[#allocation3 + $0xf8] sm:$0xff] %vm683, %v5086
  %5247 = vst.msk [vmem:[#allocation3 + $0x100] sm:$0xff] %vm683, %v5088
  %5248 = vst.msk [vmem:[#allocation3 + $0x108] sm:$0xff] %vm683, %v5090
  %5249 = vst.msk [vmem:[#allocation3 + $0x110] sm:$0xff] %vm683, %v5092
  %5250 = vst.msk [vmem:[#allocation3 + $0x118] sm:$0xff] %vm683, %v5094
  %5251 = vst.msk [vmem:[#allocation3 + $0x120] sm:$0xff] %vm683, %v5096
  %5252 = vst.msk [vmem:[#allocation3 + $0x128] sm:$0xff] %vm683, %v5098
  %5253 = vst.msk [vmem:[#allocation3 + $0x130] sm:$0xff] %vm683, %v5100
  %5254 = vst.msk [vmem:[#allocation3 + $0x138] sm:$0xff] %vm683, %v5102
  %5255 = vst.msk [vmem:[#allocation3 + $0x140] sm:$0xff] %vm683, %v5104
  %5256 = vst.msk [vmem:[#allocation3 + $0x148] sm:$0xff] %vm683, %v5106
  %5257 = vst.msk [vmem:[#allocation3 + $0x150] sm:$0xff] %vm683, %v5108
  %5258 = vst.msk [vmem:[#allocation3 + $0x158] sm:$0xff] %vm683, %v5110
  %5259 = vst.msk [vmem:[#allocation3 + $0x160] sm:$0xff] %vm683, %v5112
  %5260 = vst.msk [vmem:[#allocation3 + $0x168] sm:$0xff] %vm683, %v5114
  %5261 = vst.msk [vmem:[#allocation3 + $0x170] sm:$0xff] %vm683, %v5116
  %5262 = vst.msk [vmem:[#allocation3 + $0x178] sm:$0xff] %vm683, %v5118
  %5263 = vst.msk [vmem:[#allocation3 + $0x180] sm:$0xff] %vm683, %v5120
  %5264 = vst.msk [vmem:[#allocation3 + $0x188] sm:$0xff] %vm683, %v5122
  %5265 = vst.msk [vmem:[#allocation3 + $0x190] sm:$0xff] %vm683, %v5124
  %5266 = vst.msk [vmem:[#allocation3 + $0x198] sm:$0xff] %vm683, %v5126
  %5267 = vst.msk [vmem:[#allocation3 + $0x1a0] sm:$0xff] %vm683, %v5128
  %5268 = vst.msk [vmem:[#allocation3 + $0x1a8] sm:$0xff] %vm683, %v5130
  %5269 = vst.msk [vmem:[#allocation3 + $0x1b0] sm:$0xff] %vm683, %v5132
  %5270 = vst.msk [vmem:[#allocation3 + $0x1b8] sm:$0xff] %vm683, %v5134
  %5271 = vst.msk [vmem:[#allocation3 + $0x1c0] sm:$0xff] %vm683, %v5136
  %5272 = vst.msk [vmem:[#allocation3 + $0x1c8] sm:$0xff] %vm683, %v5138
  %5273 = vst.msk [vmem:[#allocation3 + $0x1d0] sm:$0xff] %vm683, %v5140
  %5274 = vst.msk [vmem:[#allocation3 + $0x1d8] sm:$0xff] %vm683, %v5142
  %5275 = vst.msk [vmem:[#allocation3 + $0x1e0] sm:$0xff] %vm683, %v5144
  %5276 = vst.msk [vmem:[#allocation3 + $0x1e8] sm:$0xff] %vm683, %v5146
  %5277 = vst.msk [vmem:[#allocation3 + $0x1f0] sm:$0xff] %vm683, %v5148
  %5278 = vst.msk [vmem:[#allocation3 + $0x1f8] sm:$0xff] %vm683, %v5150
  %v5279 = vld [vmem:[#allocation2 + $0x2] sm:$0xff]
  %v5280 = vld [vmem:[#allocation2 + $0xa] sm:$0xff]
  %v5281 = vld [vmem:[#allocation2 + $0x1a] sm:$0xff]
  %v5282 = vld [vmem:[#allocation2 + $0x22] sm:$0xff]
  %v5283 = vld [vmem:[#allocation2 + $0x32] sm:$0xff]
  %v5284 = vld [vmem:[#allocation2 + $0x3a] sm:$0xff]
  %v5285 = vld [vmem:[#allocation2 + $0x4a] sm:$0xff]
  %v5286 = vld [vmem:[#allocation2 + $0x52] sm:$0xff]
  %v5287 = vld [vmem:[#allocation2 + $0x62] sm:$0xff]
  %v5288 = vld [vmem:[#allocation2 + $0x6a] sm:$0xff]
  %v5289 = vld [vmem:[#allocation2 + $0x7a] sm:$0xff]
  %v5290 = vld [vmem:[#allocation2 + $0x82] sm:$0xff]
  %v5291 = vld [vmem:[#allocation2 + $0x92] sm:$0xff]
  %v5292 = vld [vmem:[#allocation2 + $0x9a] sm:$0xff]
  %v5293 = vld [vmem:[#allocation2 + $0xaa] sm:$0xff]
  %v5294 = vld [vmem:[#allocation2 + $0xb2] sm:$0xff]
  %v5295 = vld [vmem:[#allocation2 + $0xc2] sm:$0xff]
  %v5296 = vld [vmem:[#allocation2 + $0xca] sm:$0xff]
  %v5297 = vld [vmem:[#allocation2 + $0xda] sm:$0xff]
  %v5298 = vld [vmem:[#allocation2 + $0xe2] sm:$0xff]
  %v5299 = vld [vmem:[#allocation2 + $0xf2] sm:$0xff]
  %v5300 = vld [vmem:[#allocation2 + $0xfa] sm:$0xff]
  %v5301 = vld [vmem:[#allocation2 + $0x10a] sm:$0xff]
  %v5302 = vld [vmem:[#allocation2 + $0x112] sm:$0xff]
  %v5303 = vld [vmem:[#allocation2 + $0x122] sm:$0xff]
  %v5304 = vld [vmem:[#allocation2 + $0x12a] sm:$0xff]
  %v5305 = vld [vmem:[#allocation2 + $0x13a] sm:$0xff]
  %v5306 = vld [vmem:[#allocation2 + $0x142] sm:$0xff]
  %v5307 = vld [vmem:[#allocation2 + $0x152] sm:$0xff]
  %v5308 = vld [vmem:[#allocation2 + $0x15a] sm:$0xff]
  %v5309 = vld [vmem:[#allocation2 + $0x16a] sm:$0xff]
  %v5310 = vld [vmem:[#allocation2 + $0x172] sm:$0xff]
  %v5311 = vld [vmem:[#allocation2 + $0x1b2] sm:$0xff]
  %v5312 = vld [vmem:[#allocation2 + $0x1ba] sm:$0xff]
  %v5313 = vld [vmem:[#allocation2 + $0x1ca] sm:$0xff]
  %v5314 = vld [vmem:[#allocation2 + $0x1d2] sm:$0xff]
  %v5315 = vld [vmem:[#allocation2 + $0x1e2] sm:$0xff]
  %v5316 = vld [vmem:[#allocation2 + $0x1ea] sm:$0xff]
  %v5317 = vld [vmem:[#allocation2 + $0x1fa] sm:$0xff]
  %v5318 = vld [vmem:[#allocation2 + $0x202] sm:$0xff]
  %v5319 = vld [vmem:[#allocation2 + $0x212] sm:$0xff]
  %v5320 = vld [vmem:[#allocation2 + $0x21a] sm:$0xff]
  %v5321 = vld [vmem:[#allocation2 + $0x22a] sm:$0xff]
  %v5322 = vld [vmem:[#allocation2 + $0x232] sm:$0xff]
  %v5323 = vld [vmem:[#allocation2 + $0x242] sm:$0xff]
  %v5324 = vld [vmem:[#allocation2 + $0x24a] sm:$0xff]
  %v5325 = vld [vmem:[#allocation2 + $0x25a] sm:$0xff]
  %v5326 = vld [vmem:[#allocation2 + $0x262] sm:$0xff]
  %v5327 = vld [vmem:[#allocation2 + $0x272] sm:$0xff]
  %v5328 = vld [vmem:[#allocation2 + $0x27a] sm:$0xff]
  %v5329 = vld [vmem:[#allocation2 + $0x28a] sm:$0xff]
  %v5330 = vld [vmem:[#allocation2 + $0x292] sm:$0xff]
  %v5331 = vld [vmem:[#allocation2 + $0x2a2] sm:$0xff]
  %v5332 = vld [vmem:[#allocation2 + $0x2aa] sm:$0xff]
  %v5333 = vld [vmem:[#allocation2 + $0x2ba] sm:$0xff]
  %v5334 = vld [vmem:[#allocation2 + $0x2c2] sm:$0xff]
  %v5335 = vld [vmem:[#allocation2 + $0x2d2] sm:$0xff]
  %v5336 = vld [vmem:[#allocation2 + $0x2da] sm:$0xff]
  %v5337 = vld [vmem:[#allocation2 + $0x2ea] sm:$0xff]
  %v5338 = vld [vmem:[#allocation2 + $0x2f2] sm:$0xff]
  %v5339 = vld [vmem:[#allocation2 + $0x302] sm:$0xff]
  %v5340 = vld [vmem:[#allocation2 + $0x30a] sm:$0xff]
  %v5341 = vld [vmem:[#allocation2 + $0x31a] sm:$0xff]
  %v5342 = vld [vmem:[#allocation2 + $0x322] sm:$0xff]
  %5407 = vrot.lane.b32.xlu0 %v5279, 8
  %v5408 = vpop.permute.xlu0 %5407
  %5409 = vrot.lane.b32.xlu0 %v5280, 8
  %v5410 = vpop.permute.xlu0 %5409
  %5411 = vrot.lane.b32.xlu0 %v5281, 8
  %v5412 = vpop.permute.xlu0 %5411
  %5413 = vrot.lane.b32.xlu0 %v5282, 8
  %v5414 = vpop.permute.xlu0 %5413
  %5415 = vrot.lane.b32.xlu0 %v5283, 8
  %v5416 = vpop.permute.xlu0 %5415
  %5417 = vrot.lane.b32.xlu0 %v5284, 8
  %v5418 = vpop.permute.xlu0 %5417
  %5419 = vrot.lane.b32.xlu0 %v5285, 8
  %v5420 = vpop.permute.xlu0 %5419
  %5421 = vrot.lane.b32.xlu0 %v5286, 8
  %v5422 = vpop.permute.xlu0 %5421
  %5423 = vrot.lane.b32.xlu0 %v5287, 8
  %v5424 = vpop.permute.xlu0 %5423
  %5425 = vrot.lane.b32.xlu0 %v5288, 8
  %v5426 = vpop.permute.xlu0 %5425
  %5427 = vrot.lane.b32.xlu0 %v5289, 8
  %v5428 = vpop.permute.xlu0 %5427
  %5429 = vrot.lane.b32.xlu0 %v5290, 8
  %v5430 = vpop.permute.xlu0 %5429
  %5431 = vrot.lane.b32.xlu0 %v5291, 8
  %v5432 = vpop.permute.xlu0 %5431
  %5433 = vrot.lane.b32.xlu0 %v5292, 8
  %v5434 = vpop.permute.xlu0 %5433
  %5435 = vrot.lane.b32.xlu0 %v5293, 8
  %v5436 = vpop.permute.xlu0 %5435
  %5437 = vrot.lane.b32.xlu0 %v5294, 8
  %v5438 = vpop.permute.xlu0 %5437
  %5439 = vrot.lane.b32.xlu0 %v5295, 8
  %v5440 = vpop.permute.xlu0 %5439
  %5441 = vrot.lane.b32.xlu0 %v5296, 8
  %v5442 = vpop.permute.xlu0 %5441
  %5443 = vrot.lane.b32.xlu0 %v5297, 8
  %v5444 = vpop.permute.xlu0 %5443
  %5445 = vrot.lane.b32.xlu0 %v5298, 8
  %v5446 = vpop.permute.xlu0 %5445
  %5447 = vrot.lane.b32.xlu0 %v5299, 8
  %v5448 = vpop.permute.xlu0 %5447
  %5449 = vrot.lane.b32.xlu0 %v5300, 8
  %v5450 = vpop.permute.xlu0 %5449
  %5451 = vrot.lane.b32.xlu0 %v5301, 8
  %v5452 = vpop.permute.xlu0 %5451
  %5453 = vrot.lane.b32.xlu0 %v5302, 8
  %v5454 = vpop.permute.xlu0 %5453
  %5455 = vrot.lane.b32.xlu0 %v5303, 8
  %v5456 = vpop.permute.xlu0 %5455
  %5457 = vrot.lane.b32.xlu0 %v5304, 8
  %v5458 = vpop.permute.xlu0 %5457
  %5459 = vrot.lane.b32.xlu0 %v5305, 8
  %v5460 = vpop.permute.xlu0 %5459
  %5461 = vrot.lane.b32.xlu0 %v5306, 8
  %v5462 = vpop.permute.xlu0 %5461
  %5463 = vrot.lane.b32.xlu0 %v5307, 8
  %v5464 = vpop.permute.xlu0 %5463
  %5465 = vrot.lane.b32.xlu0 %v5308, 8
  %v5466 = vpop.permute.xlu0 %5465
  %5467 = vrot.lane.b32.xlu0 %v5309, 8
  %v5468 = vpop.permute.xlu0 %5467
  %5469 = vrot.lane.b32.xlu0 %v5310, 8
  %v5470 = vpop.permute.xlu0 %5469
  %5471 = vrot.lane.b32.xlu0 %v5311, 8
  %v5472 = vpop.permute.xlu0 %5471
  %5473 = vrot.lane.b32.xlu0 %v5312, 8
  %v5474 = vpop.permute.xlu0 %5473
  %5475 = vrot.lane.b32.xlu0 %v5313, 8
  %v5476 = vpop.permute.xlu0 %5475
  %5477 = vrot.lane.b32.xlu0 %v5314, 8
  %v5478 = vpop.permute.xlu0 %5477
  %5479 = vrot.lane.b32.xlu0 %v5315, 8
  %v5480 = vpop.permute.xlu0 %5479
  %5481 = vrot.lane.b32.xlu0 %v5316, 8
  %v5482 = vpop.permute.xlu0 %5481
  %5483 = vrot.lane.b32.xlu0 %v5317, 8
  %v5484 = vpop.permute.xlu0 %5483
  %5485 = vrot.lane.b32.xlu0 %v5318, 8
  %v5486 = vpop.permute.xlu0 %5485
  %5487 = vrot.lane.b32.xlu0 %v5319, 8
  %v5488 = vpop.permute.xlu0 %5487
  %5489 = vrot.lane.b32.xlu0 %v5320, 8
  %v5490 = vpop.permute.xlu0 %5489
  %5491 = vrot.lane.b32.xlu0 %v5321, 8
  %v5492 = vpop.permute.xlu0 %5491
  %5493 = vrot.lane.b32.xlu0 %v5322, 8
  %v5494 = vpop.permute.xlu0 %5493
  %5495 = vrot.lane.b32.xlu0 %v5323, 8
  %v5496 = vpop.permute.xlu0 %5495
  %5497 = vrot.lane.b32.xlu0 %v5324, 8
  %v5498 = vpop.permute.xlu0 %5497
  %5499 = vrot.lane.b32.xlu0 %v5325, 8
  %v5500 = vpop.permute.xlu0 %5499
  %5501 = vrot.lane.b32.xlu0 %v5326, 8
  %v5502 = vpop.permute.xlu0 %5501
  %5503 = vrot.lane.b32.xlu0 %v5327, 8
  %v5504 = vpop.permute.xlu0 %5503
  %5505 = vrot.lane.b32.xlu0 %v5328, 8
  %v5506 = vpop.permute.xlu0 %5505
  %5507 = vrot.lane.b32.xlu0 %v5329, 8
  %v5508 = vpop.permute.xlu0 %5507
  %5509 = vrot.lane.b32.xlu0 %v5330, 8
  %v5510 = vpop.permute.xlu0 %5509
  %5511 = vrot.lane.b32.xlu0 %v5331, 8
  %v5512 = vpop.permute.xlu0 %5511
  %5513 = vrot.lane.b32.xlu0 %v5332, 8
  %v5514 = vpop.permute.xlu0 %5513
  %5515 = vrot.lane.b32.xlu0 %v5333, 8
  %v5516 = vpop.permute.xlu0 %5515
  %5517 = vrot.lane.b32.xlu0 %v5334, 8
  %v5518 = vpop.permute.xlu0 %5517
  %5519 = vrot.lane.b32.xlu0 %v5335, 8
  %v5520 = vpop.permute.xlu0 %5519
  %5521 = vrot.lane.b32.xlu0 %v5336, 8
  %v5522 = vpop.permute.xlu0 %5521
  %5523 = vrot.lane.b32.xlu0 %v5337, 8
  %v5524 = vpop.permute.xlu0 %5523
  %5525 = vrot.lane.b32.xlu0 %v5338, 8
  %v5526 = vpop.permute.xlu0 %5525
  %5527 = vrot.lane.b32.xlu0 %v5339, 8
  %v5528 = vpop.permute.xlu0 %5527
  %5529 = vrot.lane.b32.xlu0 %v5340, 8
  %v5530 = vpop.permute.xlu0 %5529
  %5531 = vrot.lane.b32.xlu0 %v5341, 8
  %v5532 = vpop.permute.xlu0 %5531
  %5533 = vrot.lane.b32.xlu0 %v5342, 8
  %v5534 = vpop.permute.xlu0 %5533
  %5599 = vst.msk [vmem:[#allocation3] sm:$0xff] %vm1068, %v5408
  %5600 = vst.msk [vmem:[#allocation3 + $0x8] sm:$0xff] %vm1068, %v5410
  %5601 = vst.msk [vmem:[#allocation3 + $0x10] sm:$0xff] %vm1068, %v5412
  %5602 = vst.msk [vmem:[#allocation3 + $0x18] sm:$0xff] %vm1068, %v5414
  %5603 = vst.msk [vmem:[#allocation3 + $0x20] sm:$0xff] %vm1068, %v5416
  %5604 = vst.msk [vmem:[#allocation3 + $0x28] sm:$0xff] %vm1068, %v5418
  %5605 = vst.msk [vmem:[#allocation3 + $0x30] sm:$0xff] %vm1068, %v5420
  %5606 = vst.msk [vmem:[#allocation3 + $0x38] sm:$0xff] %vm1068, %v5422
  %5607 = vst.msk [vmem:[#allocation3 + $0x40] sm:$0xff] %vm1068, %v5424
  %5608 = vst.msk [vmem:[#allocation3 + $0x48] sm:$0xff] %vm1068, %v5426
  %5609 = vst.msk [vmem:[#allocation3 + $0x50] sm:$0xff] %vm1068, %v5428
  %5610 = vst.msk [vmem:[#allocation3 + $0x58] sm:$0xff] %vm1068, %v5430
  %5611 = vst.msk [vmem:[#allocation3 + $0x60] sm:$0xff] %vm1068, %v5432
  %5612 = vst.msk [vmem:[#allocation3 + $0x68] sm:$0xff] %vm1068, %v5434
  %5613 = vst.msk [vmem:[#allocation3 + $0x70] sm:$0xff] %vm1068, %v5436
  %5614 = vst.msk [vmem:[#allocation3 + $0x78] sm:$0xff] %vm1068, %v5438
  %5615 = vst.msk [vmem:[#allocation3 + $0x80] sm:$0xff] %vm1068, %v5440
  %5616 = vst.msk [vmem:[#allocation3 + $0x88] sm:$0xff] %vm1068, %v5442
  %5617 = vst.msk [vmem:[#allocation3 + $0x90] sm:$0xff] %vm1068, %v5444
  %5618 = vst.msk [vmem:[#allocation3 + $0x98] sm:$0xff] %vm1068, %v5446
  %5619 = vst.msk [vmem:[#allocation3 + $0xa0] sm:$0xff] %vm1068, %v5448
  %5620 = vst.msk [vmem:[#allocation3 + $0xa8] sm:$0xff] %vm1068, %v5450
  %5621 = vst.msk [vmem:[#allocation3 + $0xb0] sm:$0xff] %vm1068, %v5452
  %5622 = vst.msk [vmem:[#allocation3 + $0xb8] sm:$0xff] %vm1068, %v5454
  %5623 = vst.msk [vmem:[#allocation3 + $0xc0] sm:$0xff] %vm1068, %v5456
  %5624 = vst.msk [vmem:[#allocation3 + $0xc8] sm:$0xff] %vm1068, %v5458
  %5625 = vst.msk [vmem:[#allocation3 + $0xd0] sm:$0xff] %vm1068, %v5460
  %5626 = vst.msk [vmem:[#allocation3 + $0xd8] sm:$0xff] %vm1068, %v5462
  %5627 = vst.msk [vmem:[#allocation3 + $0xe0] sm:$0xff] %vm1068, %v5464
  %5628 = vst.msk [vmem:[#allocation3 + $0xe8] sm:$0xff] %vm1068, %v5466
  %5629 = vst.msk [vmem:[#allocation3 + $0xf0] sm:$0xff] %vm1068, %v5468
  %5630 = vst.msk [vmem:[#allocation3 + $0xf8] sm:$0xff] %vm1068, %v5470
  %5631 = vst.msk [vmem:[#allocation3 + $0x100] sm:$0xff] %vm1068, %v5472
  %5632 = vst.msk [vmem:[#allocation3 + $0x108] sm:$0xff] %vm1068, %v5474
  %5633 = vst.msk [vmem:[#allocation3 + $0x110] sm:$0xff] %vm1068, %v5476
  %5634 = vst.msk [vmem:[#allocation3 + $0x118] sm:$0xff] %vm1068, %v5478
  %5635 = vst.msk [vmem:[#allocation3 + $0x120] sm:$0xff] %vm1068, %v5480
  %5636 = vst.msk [vmem:[#allocation3 + $0x128] sm:$0xff] %vm1068, %v5482
  %5637 = vst.msk [vmem:[#allocation3 + $0x130] sm:$0xff] %vm1068, %v5484
  %5638 = vst.msk [vmem:[#allocation3 + $0x138] sm:$0xff] %vm1068, %v5486
  %5639 = vst.msk [vmem:[#allocation3 + $0x140] sm:$0xff] %vm1068, %v5488
  %5640 = vst.msk [vmem:[#allocation3 + $0x148] sm:$0xff] %vm1068, %v5490
  %5641 = vst.msk [vmem:[#allocation3 + $0x150] sm:$0xff] %vm1068, %v5492
  %5642 = vst.msk [vmem:[#allocation3 + $0x158] sm:$0xff] %vm1068, %v5494
  %5643 = vst.msk [vmem:[#allocation3 + $0x160] sm:$0xff] %vm1068, %v5496
  %5644 = vst.msk [vmem:[#allocation3 + $0x168] sm:$0xff] %vm1068, %v5498
  %5645 = vst.msk [vmem:[#allocation3 + $0x170] sm:$0xff] %vm1068, %v5500
  %5646 = vst.msk [vmem:[#allocation3 + $0x178] sm:$0xff] %vm1068, %v5502
  %5647 = vst.msk [vmem:[#allocation3 + $0x180] sm:$0xff] %vm1068, %v5504
  %5648 = vst.msk [vmem:[#allocation3 + $0x188] sm:$0xff] %vm1068, %v5506
  %5649 = vst.msk [vmem:[#allocation3 + $0x190] sm:$0xff] %vm1068, %v5508
  %5650 = vst.msk [vmem:[#allocation3 + $0x198] sm:$0xff] %vm1068, %v5510
  %5651 = vst.msk [vmem:[#allocation3 + $0x1a0] sm:$0xff] %vm1068, %v5512
  %5652 = vst.msk [vmem:[#allocation3 + $0x1a8] sm:$0xff] %vm1068, %v5514
  %5653 = vst.msk [vmem:[#allocation3 + $0x1b0] sm:$0xff] %vm1068, %v5516
  %5654 = vst.msk [vmem:[#allocation3 + $0x1b8] sm:$0xff] %vm1068, %v5518
  %5655 = vst.msk [vmem:[#allocation3 + $0x1c0] sm:$0xff] %vm1068, %v5520
  %5656 = vst.msk [vmem:[#allocation3 + $0x1c8] sm:$0xff] %vm1068, %v5522
  %5657 = vst.msk [vmem:[#allocation3 + $0x1d0] sm:$0xff] %vm1068, %v5524
  %5658 = vst.msk [vmem:[#allocation3 + $0x1d8] sm:$0xff] %vm1068, %v5526
  %5659 = vst.msk [vmem:[#allocation3 + $0x1e0] sm:$0xff] %vm1068, %v5528
  %5660 = vst.msk [vmem:[#allocation3 + $0x1e8] sm:$0xff] %vm1068, %v5530
  %5661 = vst.msk [vmem:[#allocation3 + $0x1f0] sm:$0xff] %vm1068, %v5532
  %5662 = vst.msk [vmem:[#allocation3 + $0x1f8] sm:$0xff] %vm1068, %v5534
  %v5663 = vld [vmem:[%s41] sm:$0xff]
  %v5664 = vld [vmem:[%s41 + $0x8] sm:$0xff]
  %v5665 = vld [vmem:[%s41 + $0x18] sm:$0xff]
  %v5666 = vld [vmem:[%s41 + $0x20] sm:$0xff]
  %v5667 = vld [vmem:[%s41 + $0x30] sm:$0xff]
  %v5668 = vld [vmem:[%s41 + $0x38] sm:$0xff]
  %v5669 = vld [vmem:[%s41 + $0x48] sm:$0xff]
  %v5670 = vld [vmem:[%s41 + $0x50] sm:$0xff]
  %v5671 = vld [vmem:[%s41 + $0x60] sm:$0xff]
  %v5672 = vld [vmem:[%s41 + $0x68] sm:$0xff]
  %v5673 = vld [vmem:[%s41 + $0x78] sm:$0xff]
  %v5674 = vld [vmem:[%s41 + $0x80] sm:$0xff]
  %v5675 = vld [vmem:[%s41 + $0x90] sm:$0xff]
  %v5676 = vld [vmem:[%s41 + $0x98] sm:$0xff]
  %v5677 = vld [vmem:[%s41 + $0xa8] sm:$0xff]
  %v5678 = vld [vmem:[%s41 + $0xb0] sm:$0xff]
  %v5679 = vld [vmem:[%s41 + $0xc0] sm:$0xff]
  %v5680 = vld [vmem:[%s41 + $0xc8] sm:$0xff]
  %v5681 = vld [vmem:[%s41 + $0xd8] sm:$0xff]
  %v5682 = vld [vmem:[%s41 + $0xe0] sm:$0xff]
  %v5683 = vld [vmem:[%s41 + $0xf0] sm:$0xff]
  %v5684 = vld [vmem:[%s41 + $0xf8] sm:$0xff]
  %v5685 = vld [vmem:[%s41 + $0x108] sm:$0xff]
  %v5686 = vld [vmem:[%s41 + $0x110] sm:$0xff]
  %v5687 = vld [vmem:[%s41 + $0x120] sm:$0xff]
  %v5688 = vld [vmem:[%s41 + $0x128] sm:$0xff]
  %v5689 = vld [vmem:[%s41 + $0x138] sm:$0xff]
  %v5690 = vld [vmem:[%s41 + $0x140] sm:$0xff]
  %v5691 = vld [vmem:[%s41 + $0x150] sm:$0xff]
  %v5692 = vld [vmem:[%s41 + $0x158] sm:$0xff]
  %v5693 = vld [vmem:[%s41 + $0x168] sm:$0xff]
  %v5694 = vld [vmem:[%s41 + $0x170] sm:$0xff]
  %v5695 = vld [vmem:[%s41 + $0x1b0] sm:$0xff]
  %v5696 = vld [vmem:[%s41 + $0x1b8] sm:$0xff]
  %v5697 = vld [vmem:[%s41 + $0x1c8] sm:$0xff]
  %v5698 = vld [vmem:[%s41 + $0x1d0] sm:$0xff]
  %v5699 = vld [vmem:[%s41 + $0x1e0] sm:$0xff]
  %v5700 = vld [vmem:[%s41 + $0x1e8] sm:$0xff]
  %v5701 = vld [vmem:[%s41 + $0x1f8] sm:$0xff]
  %v5702 = vld [vmem:[%s41 + $0x200] sm:$0xff]
  %v5703 = vld [vmem:[%s41 + $0x210] sm:$0xff]
  %v5704 = vld [vmem:[%s41 + $0x218] sm:$0xff]
  %v5705 = vld [vmem:[%s41 + $0x228] sm:$0xff]
  %v5706 = vld [vmem:[%s41 + $0x230] sm:$0xff]
  %v5707 = vld [vmem:[%s41 + $0x240] sm:$0xff]
  %v5708 = vld [vmem:[%s41 + $0x248] sm:$0xff]
  %v5709 = vld [vmem:[%s41 + $0x258] sm:$0xff]
  %v5710 = vld [vmem:[%s41 + $0x260] sm:$0xff]
  %v5711 = vld [vmem:[%s41 + $0x270] sm:$0xff]
  %v5712 = vld [vmem:[%s41 + $0x278] sm:$0xff]
  %v5713 = vld [vmem:[%s41 + $0x288] sm:$0xff]
  %v5714 = vld [vmem:[%s41 + $0x290] sm:$0xff]
  %v5715 = vld [vmem:[%s41 + $0x2a0] sm:$0xff]
  %v5716 = vld [vmem:[%s41 + $0x2a8] sm:$0xff]
  %v5717 = vld [vmem:[%s41 + $0x2b8] sm:$0xff]
  %v5718 = vld [vmem:[%s41 + $0x2c0] sm:$0xff]
  %v5719 = vld [vmem:[%s41 + $0x2d0] sm:$0xff]
  %v5720 = vld [vmem:[%s41 + $0x2d8] sm:$0xff]
  %v5721 = vld [vmem:[%s41 + $0x2e8] sm:$0xff]
  %v5722 = vld [vmem:[%s41 + $0x2f0] sm:$0xff]
  %v5723 = vld [vmem:[%s41 + $0x300] sm:$0xff]
  %v5724 = vld [vmem:[%s41 + $0x308] sm:$0xff]
  %v5725 = vld [vmem:[%s41 + $0x318] sm:$0xff]
  %v5726 = vld [vmem:[%s41 + $0x320] sm:$0xff]
  %5791 = vrot.lane.b32.xlu0 %v5663, 12
  %v5792 = vpop.permute.xlu0 %5791
  %5793 = vrot.lane.b32.xlu0 %v5664, 12
  %v5794 = vpop.permute.xlu0 %5793
  %5795 = vrot.lane.b32.xlu0 %v5665, 12
  %v5796 = vpop.permute.xlu0 %5795
  %5797 = vrot.lane.b32.xlu0 %v5666, 12
  %v5798 = vpop.permute.xlu0 %5797
  %5799 = vrot.lane.b32.xlu0 %v5667, 12
  %v5800 = vpop.permute.xlu0 %5799
  %5801 = vrot.lane.b32.xlu0 %v5668, 12
  %v5802 = vpop.permute.xlu0 %5801
  %5803 = vrot.lane.b32.xlu0 %v5669, 12
  %v5804 = vpop.permute.xlu0 %5803
  %5805 = vrot.lane.b32.xlu0 %v5670, 12
  %v5806 = vpop.permute.xlu0 %5805
  %5807 = vrot.lane.b32.xlu0 %v5671, 12
  %v5808 = vpop.permute.xlu0 %5807
  %5809 = vrot.lane.b32.xlu0 %v5672, 12
  %v5810 = vpop.permute.xlu0 %5809
  %5811 = vrot.lane.b32.xlu0 %v5673, 12
  %v5812 = vpop.permute.xlu0 %5811
  %5813 = vrot.lane.b32.xlu0 %v5674, 12
  %v5814 = vpop.permute.xlu0 %5813
  %5815 = vrot.lane.b32.xlu0 %v5675, 12
  %v5816 = vpop.permute.xlu0 %5815
  %5817 = vrot.lane.b32.xlu0 %v5676, 12
  %v5818 = vpop.permute.xlu0 %5817
  %5819 = vrot.lane.b32.xlu0 %v5677, 12
  %v5820 = vpop.permute.xlu0 %5819
  %5821 = vrot.lane.b32.xlu0 %v5678, 12
  %v5822 = vpop.permute.xlu0 %5821
  %5823 = vrot.lane.b32.xlu0 %v5679, 12
  %v5824 = vpop.permute.xlu0 %5823
  %5825 = vrot.lane.b32.xlu0 %v5680, 12
  %v5826 = vpop.permute.xlu0 %5825
  %5827 = vrot.lane.b32.xlu0 %v5681, 12
  %v5828 = vpop.permute.xlu0 %5827
  %5829 = vrot.lane.b32.xlu0 %v5682, 12
  %v5830 = vpop.permute.xlu0 %5829
  %5831 = vrot.lane.b32.xlu0 %v5683, 12
  %v5832 = vpop.permute.xlu0 %5831
  %5833 = vrot.lane.b32.xlu0 %v5684, 12
  %v5834 = vpop.permute.xlu0 %5833
  %5835 = vrot.lane.b32.xlu0 %v5685, 12
  %v5836 = vpop.permute.xlu0 %5835
  %5837 = vrot.lane.b32.xlu0 %v5686, 12
  %v5838 = vpop.permute.xlu0 %5837
  %5839 = vrot.lane.b32.xlu0 %v5687, 12
  %v5840 = vpop.permute.xlu0 %5839
  %5841 = vrot.lane.b32.xlu0 %v5688, 12
  %v5842 = vpop.permute.xlu0 %5841
  %5843 = vrot.lane.b32.xlu0 %v5689, 12
  %v5844 = vpop.permute.xlu0 %5843
  %5845 = vrot.lane.b32.xlu0 %v5690, 12
  %v5846 = vpop.permute.xlu0 %5845
  %5847 = vrot.lane.b32.xlu0 %v5691, 12
  %v5848 = vpop.permute.xlu0 %5847
  %5849 = vrot.lane.b32.xlu0 %v5692, 12
  %v5850 = vpop.permute.xlu0 %5849
  %5851 = vrot.lane.b32.xlu0 %v5693, 12
  %v5852 = vpop.permute.xlu0 %5851
  %5853 = vrot.lane.b32.xlu0 %v5694, 12
  %v5854 = vpop.permute.xlu0 %5853
  %5855 = vrot.lane.b32.xlu0 %v5695, 12
  %v5856 = vpop.permute.xlu0 %5855
  %5857 = vrot.lane.b32.xlu0 %v5696, 12
  %v5858 = vpop.permute.xlu0 %5857
  %5859 = vrot.lane.b32.xlu0 %v5697, 12
  %v5860 = vpop.permute.xlu0 %5859
  %5861 = vrot.lane.b32.xlu0 %v5698, 12
  %v5862 = vpop.permute.xlu0 %5861
  %5863 = vrot.lane.b32.xlu0 %v5699, 12
  %v5864 = vpop.permute.xlu0 %5863
  %5865 = vrot.lane.b32.xlu0 %v5700, 12
  %v5866 = vpop.permute.xlu0 %5865
  %5867 = vrot.lane.b32.xlu0 %v5701, 12
  %v5868 = vpop.permute.xlu0 %5867
  %5869 = vrot.lane.b32.xlu0 %v5702, 12
  %v5870 = vpop.permute.xlu0 %5869
  %5871 = vrot.lane.b32.xlu0 %v5703, 12
  %v5872 = vpop.permute.xlu0 %5871
  %5873 = vrot.lane.b32.xlu0 %v5704, 12
  %v5874 = vpop.permute.xlu0 %5873
  %5875 = vrot.lane.b32.xlu0 %v5705, 12
  %v5876 = vpop.permute.xlu0 %5875
  %5877 = vrot.lane.b32.xlu0 %v5706, 12
  %v5878 = vpop.permute.xlu0 %5877
  %5879 = vrot.lane.b32.xlu0 %v5707, 12
  %v5880 = vpop.permute.xlu0 %5879
  %5881 = vrot.lane.b32.xlu0 %v5708, 12
  %v5882 = vpop.permute.xlu0 %5881
  %5883 = vrot.lane.b32.xlu0 %v5709, 12
  %v5884 = vpop.permute.xlu0 %5883
  %5885 = vrot.lane.b32.xlu0 %v5710, 12
  %v5886 = vpop.permute.xlu0 %5885
  %5887 = vrot.lane.b32.xlu0 %v5711, 12
  %v5888 = vpop.permute.xlu0 %5887
  %5889 = vrot.lane.b32.xlu0 %v5712, 12
  %v5890 = vpop.permute.xlu0 %5889
  %5891 = vrot.lane.b32.xlu0 %v5713, 12
  %v5892 = vpop.permute.xlu0 %5891
  %5893 = vrot.lane.b32.xlu0 %v5714, 12
  %v5894 = vpop.permute.xlu0 %5893
  %5895 = vrot.lane.b32.xlu0 %v5715, 12
  %v5896 = vpop.permute.xlu0 %5895
  %5897 = vrot.lane.b32.xlu0 %v5716, 12
  %v5898 = vpop.permute.xlu0 %5897
  %5899 = vrot.lane.b32.xlu0 %v5717, 12
  %v5900 = vpop.permute.xlu0 %5899
  %5901 = vrot.lane.b32.xlu0 %v5718, 12
  %v5902 = vpop.permute.xlu0 %5901
  %5903 = vrot.lane.b32.xlu0 %v5719, 12
  %v5904 = vpop.permute.xlu0 %5903
  %5905 = vrot.lane.b32.xlu0 %v5720, 12
  %v5906 = vpop.permute.xlu0 %5905
  %5907 = vrot.lane.b32.xlu0 %v5721, 12
  %v5908 = vpop.permute.xlu0 %5907
  %5909 = vrot.lane.b32.xlu0 %v5722, 12
  %v5910 = vpop.permute.xlu0 %5909
  %5911 = vrot.lane.b32.xlu0 %v5723, 12
  %v5912 = vpop.permute.xlu0 %5911
  %5913 = vrot.lane.b32.xlu0 %v5724, 12
  %v5914 = vpop.permute.xlu0 %5913
  %5915 = vrot.lane.b32.xlu0 %v5725, 12
  %v5916 = vpop.permute.xlu0 %5915
  %5917 = vrot.lane.b32.xlu0 %v5726, 12
  %v5918 = vpop.permute.xlu0 %5917
  %5983 = vst.msk [vmem:[#allocation3] sm:$0xff] %vm1453, %v5792
  %5984 = vst.msk [vmem:[#allocation3 + $0x8] sm:$0xff] %vm1453, %v5794
  %5985 = vst.msk [vmem:[#allocation3 + $0x10] sm:$0xff] %vm1453, %v5796
  %5986 = vst.msk [vmem:[#allocation3 + $0x18] sm:$0xff] %vm1453, %v5798
  %5987 = vst.msk [vmem:[#allocation3 + $0x20] sm:$0xff] %vm1453, %v5800
  %5988 = vst.msk [vmem:[#allocation3 + $0x28] sm:$0xff] %vm1453, %v5802
  %5989 = vst.msk [vmem:[#allocation3 + $0x30] sm:$0xff] %vm1453, %v5804
  %5990 = vst.msk [vmem:[#allocation3 + $0x38] sm:$0xff] %vm1453, %v5806
  %5991 = vst.msk [vmem:[#allocation3 + $0x40] sm:$0xff] %vm1453, %v5808
  %5992 = vst.msk [vmem:[#allocation3 + $0x48] sm:$0xff] %vm1453, %v5810
  %5993 = vst.msk [vmem:[#allocation3 + $0x50] sm:$0xff] %vm1453, %v5812
  %5994 = vst.msk [vmem:[#allocation3 + $0x58] sm:$0xff] %vm1453, %v5814
  %5995 = vst.msk [vmem:[#allocation3 + $0x60] sm:$0xff] %vm1453, %v5816
  %5996 = vst.msk [vmem:[#allocation3 + $0x68] sm:$0xff] %vm1453, %v5818
  %5997 = vst.msk [vmem:[#allocation3 + $0x70] sm:$0xff] %vm1453, %v5820
  %5998 = vst.msk [vmem:[#allocation3 + $0x78] sm:$0xff] %vm1453, %v5822
  %5999 = vst.msk [vmem:[#allocation3 + $0x80] sm:$0xff] %vm1453, %v5824
  %6000 = vst.msk [vmem:[#allocation3 + $0x88] sm:$0xff] %vm1453, %v5826
  %6001 = vst.msk [vmem:[#allocation3 + $0x90] sm:$0xff] %vm1453, %v5828
  %6002 = vst.msk [vmem:[#allocation3 + $0x98] sm:$0xff] %vm1453, %v5830
  %6003 = vst.msk [vmem:[#allocation3 + $0xa0] sm:$0xff] %vm1453, %v5832
  %6004 = vst.msk [vmem:[#allocation3 + $0xa8] sm:$0xff] %vm1453, %v5834
  %6005 = vst.msk [vmem:[#allocation3 + $0xb0] sm:$0xff] %vm1453, %v5836
  %6006 = vst.msk [vmem:[#allocation3 + $0xb8] sm:$0xff] %vm1453, %v5838
  %6007 = vst.msk [vmem:[#allocation3 + $0xc0] sm:$0xff] %vm1453, %v5840
  %6008 = vst.msk [vmem:[#allocation3 + $0xc8] sm:$0xff] %vm1453, %v5842
  %6009 = vst.msk [vmem:[#allocation3 + $0xd0] sm:$0xff] %vm1453, %v5844
  %6010 = vst.msk [vmem:[#allocation3 + $0xd8] sm:$0xff] %vm1453, %v5846
  %6011 = vst.msk [vmem:[#allocation3 + $0xe0] sm:$0xff] %vm1453, %v5848
  %6012 = vst.msk [vmem:[#allocation3 + $0xe8] sm:$0xff] %vm1453, %v5850
  %6013 = vst.msk [vmem:[#allocation3 + $0xf0] sm:$0xff] %vm1453, %v5852
  %6014 = vst.msk [vmem:[#allocation3 + $0xf8] sm:$0xff] %vm1453, %v5854
  %6015 = vst.msk [vmem:[#allocation3 + $0x100] sm:$0xff] %vm1453, %v5856
  %6016 = vst.msk [vmem:[#allocation3 + $0x108] sm:$0xff] %vm1453, %v5858
  %6017 = vst.msk [vmem:[#allocation3 + $0x110] sm:$0xff] %vm1453, %v5860
  %6018 = vst.msk [vmem:[#allocation3 + $0x118] sm:$0xff] %vm1453, %v5862
  %6019 = vst.msk [vmem:[#allocation3 + $0x120] sm:$0xff] %vm1453, %v5864
  %6020 = vst.msk [vmem:[#allocation3 + $0x128] sm:$0xff] %vm1453, %v5866
  %6021 = vst.msk [vmem:[#allocation3 + $0x130] sm:$0xff] %vm1453, %v5868
  %6022 = vst.msk [vmem:[#allocation3 + $0x138] sm:$0xff] %vm1453, %v5870
  %6023 = vst.msk [vmem:[#allocation3 + $0x140] sm:$0xff] %vm1453, %v5872
  %6024 = vst.msk [vmem:[#allocation3 + $0x148] sm:$0xff] %vm1453, %v5874
  %6025 = vst.msk [vmem:[#allocation3 + $0x150] sm:$0xff] %vm1453, %v5876
  %6026 = vst.msk [vmem:[#allocation3 + $0x158] sm:$0xff] %vm1453, %v5878
  %6027 = vst.msk [vmem:[#allocation3 + $0x160] sm:$0xff] %vm1453, %v5880
  %6028 = vst.msk [vmem:[#allocation3 + $0x168] sm:$0xff] %vm1453, %v5882
  %6029 = vst.msk [vmem:[#allocation3 + $0x170] sm:$0xff] %vm1453, %v5884
  %6030 = vst.msk [vmem:[#allocation3 + $0x178] sm:$0xff] %vm1453, %v5886
  %6031 = vst.msk [vmem:[#allocation3 + $0x180] sm:$0xff] %vm1453, %v5888
  %6032 = vst.msk [vmem:[#allocation3 + $0x188] sm:$0xff] %vm1453, %v5890
  %6033 = vst.msk [vmem:[#allocation3 + $0x190] sm:$0xff] %vm1453, %v5892
  %6034 = vst.msk [vmem:[#allocation3 + $0x198] sm:$0xff] %vm1453, %v5894
  %6035 = vst.msk [vmem:[#allocation3 + $0x1a0] sm:$0xff] %vm1453, %v5896
  %6036 = vst.msk [vmem:[#allocation3 + $0x1a8] sm:$0xff] %vm1453, %v5898
  %6037 = vst.msk [vmem:[#allocation3 + $0x1b0] sm:$0xff] %vm1453, %v5900
  %6038 = vst.msk [vmem:[#allocation3 + $0x1b8] sm:$0xff] %vm1453, %v5902
  %6039 = vst.msk [vmem:[#allocation3 + $0x1c0] sm:$0xff] %vm1453, %v5904
  %6040 = vst.msk [vmem:[#allocation3 + $0x1c8] sm:$0xff] %vm1453, %v5906
  %6041 = vst.msk [vmem:[#allocation3 + $0x1d0] sm:$0xff] %vm1453, %v5908
  %6042 = vst.msk [vmem:[#allocation3 + $0x1d8] sm:$0xff] %vm1453, %v5910
  %6043 = vst.msk [vmem:[#allocation3 + $0x1e0] sm:$0xff] %vm1453, %v5912
  %6044 = vst.msk [vmem:[#allocation3 + $0x1e8] sm:$0xff] %vm1453, %v5914
  %6045 = vst.msk [vmem:[#allocation3 + $0x1f0] sm:$0xff] %vm1453, %v5916
  %6046 = vst.msk [vmem:[#allocation3 + $0x1f8] sm:$0xff] %vm1453, %v5918
  %v6047 = vld [vmem:[%s41 + $0x1] sm:$0xff]
  %v6048 = vld [vmem:[%s41 + $0x9] sm:$0xff]
  %v6049 = vld [vmem:[%s41 + $0x19] sm:$0xff]
  %v6050 = vld [vmem:[%s41 + $0x21] sm:$0xff]
  %v6051 = vld [vmem:[%s41 + $0x31] sm:$0xff]
  %v6052 = vld [vmem:[%s41 + $0x39] sm:$0xff]
  %v6053 = vld [vmem:[%s41 + $0x49] sm:$0xff]
  %v6054 = vld [vmem:[%s41 + $0x51] sm:$0xff]
  %v6055 = vld [vmem:[%s41 + $0x61] sm:$0xff]
  %v6056 = vld [vmem:[%s41 + $0x69] sm:$0xff]
  %v6057 = vld [vmem:[%s41 + $0x79] sm:$0xff]
  %v6058 = vld [vmem:[%s41 + $0x81] sm:$0xff]
  %v6059 = vld [vmem:[%s41 + $0x91] sm:$0xff]
  %v6060 = vld [vmem:[%s41 + $0x99] sm:$0xff]
  %v6061 = vld [vmem:[%s41 + $0xa9] sm:$0xff]
  %v6062 = vld [vmem:[%s41 + $0xb1] sm:$0xff]
  %v6063 = vld [vmem:[%s41 + $0xc1] sm:$0xff]
  %v6064 = vld [vmem:[%s41 + $0xc9] sm:$0xff]
  %v6065 = vld [vmem:[%s41 + $0xd9] sm:$0xff]
  %v6066 = vld [vmem:[%s41 + $0xe1] sm:$0xff]
  %v6067 = vld [vmem:[%s41 + $0xf1] sm:$0xff]
  %v6068 = vld [vmem:[%s41 + $0xf9] sm:$0xff]
  %v6069 = vld [vmem:[%s41 + $0x109] sm:$0xff]
  %v6070 = vld [vmem:[%s41 + $0x111] sm:$0xff]
  %v6071 = vld [vmem:[%s41 + $0x121] sm:$0xff]
  %v6072 = vld [vmem:[%s41 + $0x129] sm:$0xff]
  %v6073 = vld [vmem:[%s41 + $0x139] sm:$0xff]
  %v6074 = vld [vmem:[%s41 + $0x141] sm:$0xff]
  %v6075 = vld [vmem:[%s41 + $0x151] sm:$0xff]
  %v6076 = vld [vmem:[%s41 + $0x159] sm:$0xff]
  %v6077 = vld [vmem:[%s41 + $0x169] sm:$0xff]
  %v6078 = vld [vmem:[%s41 + $0x171] sm:$0xff]
  %v6079 = vld [vmem:[%s41 + $0x1b1] sm:$0xff]
  %v6080 = vld [vmem:[%s41 + $0x1b9] sm:$0xff]
  %v6081 = vld [vmem:[%s41 + $0x1c9] sm:$0xff]
  %v6082 = vld [vmem:[%s41 + $0x1d1] sm:$0xff]
  %v6083 = vld [vmem:[%s41 + $0x1e1] sm:$0xff]
  %v6084 = vld [vmem:[%s41 + $0x1e9] sm:$0xff]
  %v6085 = vld [vmem:[%s41 + $0x1f9] sm:$0xff]
  %v6086 = vld [vmem:[%s41 + $0x201] sm:$0xff]
  %v6087 = vld [vmem:[%s41 + $0x211] sm:$0xff]
  %v6088 = vld [vmem:[%s41 + $0x219] sm:$0xff]
  %v6089 = vld [vmem:[%s41 + $0x229] sm:$0xff]
  %v6090 = vld [vmem:[%s41 + $0x231] sm:$0xff]
  %v6091 = vld [vmem:[%s41 + $0x241] sm:$0xff]
  %v6092 = vld [vmem:[%s41 + $0x249] sm:$0xff]
  %v6093 = vld [vmem:[%s41 + $0x259] sm:$0xff]
  %v6094 = vld [vmem:[%s41 + $0x261] sm:$0xff]
  %v6095 = vld [vmem:[%s41 + $0x271] sm:$0xff]
  %v6096 = vld [vmem:[%s41 + $0x279] sm:$0xff]
  %v6097 = vld [vmem:[%s41 + $0x289] sm:$0xff]
  %v6098 = vld [vmem:[%s41 + $0x291] sm:$0xff]
  %v6099 = vld [vmem:[%s41 + $0x2a1] sm:$0xff]
  %v6100 = vld [vmem:[%s41 + $0x2a9] sm:$0xff]
  %v6101 = vld [vmem:[%s41 + $0x2b9] sm:$0xff]
  %v6102 = vld [vmem:[%s41 + $0x2c1] sm:$0xff]
  %v6103 = vld [vmem:[%s41 + $0x2d1] sm:$0xff]
  %v6104 = vld [vmem:[%s41 + $0x2d9] sm:$0xff]
  %v6105 = vld [vmem:[%s41 + $0x2e9] sm:$0xff]
  %v6106 = vld [vmem:[%s41 + $0x2f1] sm:$0xff]
  %v6107 = vld [vmem:[%s41 + $0x301] sm:$0xff]
  %v6108 = vld [vmem:[%s41 + $0x309] sm:$0xff]
  %v6109 = vld [vmem:[%s41 + $0x319] sm:$0xff]
  %v6110 = vld [vmem:[%s41 + $0x321] sm:$0xff]
  %6175 = vrot.lane.b32.xlu0 %v6047, 16
  %v6176 = vpop.permute.xlu0 %6175
  %6177 = vrot.lane.b32.xlu0 %v6048, 16
  %v6178 = vpop.permute.xlu0 %6177
  %6179 = vrot.lane.b32.xlu0 %v6049, 16
  %v6180 = vpop.permute.xlu0 %6179
  %6181 = vrot.lane.b32.xlu0 %v6050, 16
  %v6182 = vpop.permute.xlu0 %6181
  %6183 = vrot.lane.b32.xlu0 %v6051, 16
  %v6184 = vpop.permute.xlu0 %6183
  %6185 = vrot.lane.b32.xlu0 %v6052, 16
  %v6186 = vpop.permute.xlu0 %6185
  %6187 = vrot.lane.b32.xlu0 %v6053, 16
  %v6188 = vpop.permute.xlu0 %6187
  %6189 = vrot.lane.b32.xlu0 %v6054, 16
  %v6190 = vpop.permute.xlu0 %6189
  %6191 = vrot.lane.b32.xlu0 %v6055, 16
  %v6192 = vpop.permute.xlu0 %6191
  %6193 = vrot.lane.b32.xlu0 %v6056, 16
  %v6194 = vpop.permute.xlu0 %6193
  %6195 = vrot.lane.b32.xlu0 %v6057, 16
  %v6196 = vpop.permute.xlu0 %6195
  %6197 = vrot.lane.b32.xlu0 %v6058, 16
  %v6198 = vpop.permute.xlu0 %6197
  %6199 = vrot.lane.b32.xlu0 %v6059, 16
  %v6200 = vpop.permute.xlu0 %6199
  %6201 = vrot.lane.b32.xlu0 %v6060, 16
  %v6202 = vpop.permute.xlu0 %6201
  %6203 = vrot.lane.b32.xlu0 %v6061, 16
  %v6204 = vpop.permute.xlu0 %6203
  %6205 = vrot.lane.b32.xlu0 %v6062, 16
  %v6206 = vpop.permute.xlu0 %6205
  %6207 = vrot.lane.b32.xlu0 %v6063, 16
  %v6208 = vpop.permute.xlu0 %6207
  %6209 = vrot.lane.b32.xlu0 %v6064, 16
  %v6210 = vpop.permute.xlu0 %6209
  %6211 = vrot.lane.b32.xlu0 %v6065, 16
  %v6212 = vpop.permute.xlu0 %6211
  %6213 = vrot.lane.b32.xlu0 %v6066, 16
  %v6214 = vpop.permute.xlu0 %6213
  %6215 = vrot.lane.b32.xlu0 %v6067, 16
  %v6216 = vpop.permute.xlu0 %6215
  %6217 = vrot.lane.b32.xlu0 %v6068, 16
  %v6218 = vpop.permute.xlu0 %6217
  %6219 = vrot.lane.b32.xlu0 %v6069, 16
  %v6220 = vpop.permute.xlu0 %6219
  %6221 = vrot.lane.b32.xlu0 %v6070, 16
  %v6222 = vpop.permute.xlu0 %6221
  %6223 = vrot.lane.b32.xlu0 %v6071, 16
  %v6224 = vpop.permute.xlu0 %6223
  %6225 = vrot.lane.b32.xlu0 %v6072, 16
  %v6226 = vpop.permute.xlu0 %6225
  %6227 = vrot.lane.b32.xlu0 %v6073, 16
  %v6228 = vpop.permute.xlu0 %6227
  %6229 = vrot.lane.b32.xlu0 %v6074, 16
  %v6230 = vpop.permute.xlu0 %6229
  %6231 = vrot.lane.b32.xlu0 %v6075, 16
  %v6232 = vpop.permute.xlu0 %6231
  %6233 = vrot.lane.b32.xlu0 %v6076, 16
  %v6234 = vpop.permute.xlu0 %6233
  %6235 = vrot.lane.b32.xlu0 %v6077, 16
  %v6236 = vpop.permute.xlu0 %6235
  %6237 = vrot.lane.b32.xlu0 %v6078, 16
  %v6238 = vpop.permute.xlu0 %6237
  %6239 = vrot.lane.b32.xlu0 %v6079, 16
  %v6240 = vpop.permute.xlu0 %6239
  %6241 = vrot.lane.b32.xlu0 %v6080, 16
  %v6242 = vpop.permute.xlu0 %6241
  %6243 = vrot.lane.b32.xlu0 %v6081, 16
  %v6244 = vpop.permute.xlu0 %6243
  %6245 = vrot.lane.b32.xlu0 %v6082, 16
  %v6246 = vpop.permute.xlu0 %6245
  %6247 = vrot.lane.b32.xlu0 %v6083, 16
  %v6248 = vpop.permute.xlu0 %6247
  %6249 = vrot.lane.b32.xlu0 %v6084, 16
  %v6250 = vpop.permute.xlu0 %6249
  %6251 = vrot.lane.b32.xlu0 %v6085, 16
  %v6252 = vpop.permute.xlu0 %6251
  %6253 = vrot.lane.b32.xlu0 %v6086, 16
  %v6254 = vpop.permute.xlu0 %6253
  %6255 = vrot.lane.b32.xlu0 %v6087, 16
  %v6256 = vpop.permute.xlu0 %6255
  %6257 = vrot.lane.b32.xlu0 %v6088, 16
  %v6258 = vpop.permute.xlu0 %6257
  %6259 = vrot.lane.b32.xlu0 %v6089, 16
  %v6260 = vpop.permute.xlu0 %6259
  %6261 = vrot.lane.b32.xlu0 %v6090, 16
  %v6262 = vpop.permute.xlu0 %6261
  %6263 = vrot.lane.b32.xlu0 %v6091, 16
  %v6264 = vpop.permute.xlu0 %6263
  %6265 = vrot.lane.b32.xlu0 %v6092, 16
  %v6266 = vpop.permute.xlu0 %6265
  %6267 = vrot.lane.b32.xlu0 %v6093, 16
  %v6268 = vpop.permute.xlu0 %6267
  %6269 = vrot.lane.b32.xlu0 %v6094, 16
  %v6270 = vpop.permute.xlu0 %6269
  %6271 = vrot.lane.b32.xlu0 %v6095, 16
  %v6272 = vpop.permute.xlu0 %6271
  %6273 = vrot.lane.b32.xlu0 %v6096, 16
  %v6274 = vpop.permute.xlu0 %6273
  %6275 = vrot.lane.b32.xlu0 %v6097, 16
  %v6276 = vpop.permute.xlu0 %6275
  %6277 = vrot.lane.b32.xlu0 %v6098, 16
  %v6278 = vpop.permute.xlu0 %6277
  %6279 = vrot.lane.b32.xlu0 %v6099, 16
  %v6280 = vpop.permute.xlu0 %6279
  %6281 = vrot.lane.b32.xlu0 %v6100, 16
  %v6282 = vpop.permute.xlu0 %6281
  %6283 = vrot.lane.b32.xlu0 %v6101, 16
  %v6284 = vpop.permute.xlu0 %6283
  %6285 = vrot.lane.b32.xlu0 %v6102, 16
  %v6286 = vpop.permute.xlu0 %6285
  %6287 = vrot.lane.b32.xlu0 %v6103, 16
  %v6288 = vpop.permute.xlu0 %6287
  %6289 = vrot.lane.b32.xlu0 %v6104, 16
  %v6290 = vpop.permute.xlu0 %6289
  %6291 = vrot.lane.b32.xlu0 %v6105, 16
  %v6292 = vpop.permute.xlu0 %6291
  %6293 = vrot.lane.b32.xlu0 %v6106, 16
  %v6294 = vpop.permute.xlu0 %6293
  %6295 = vrot.lane.b32.xlu0 %v6107, 16
  %v6296 = vpop.permute.xlu0 %6295
  %6297 = vrot.lane.b32.xlu0 %v6108, 16
  %v6298 = vpop.permute.xlu0 %6297
  %6299 = vrot.lane.b32.xlu0 %v6109, 16
  %v6300 = vpop.permute.xlu0 %6299
  %6301 = vrot.lane.b32.xlu0 %v6110, 16
  %v6302 = vpop.permute.xlu0 %6301
  %6367 = vst.msk [vmem:[#allocation3] sm:$0xff] %vm1838, %v6176
  %6368 = vst.msk [vmem:[#allocation3 + $0x8] sm:$0xff] %vm1838, %v6178
  %6369 = vst.msk [vmem:[#allocation3 + $0x10] sm:$0xff] %vm1838, %v6180
  %6370 = vst.msk [vmem:[#allocation3 + $0x18] sm:$0xff] %vm1838, %v6182
  %6371 = vst.msk [vmem:[#allocation3 + $0x20] sm:$0xff] %vm1838, %v6184
  %6372 = vst.msk [vmem:[#allocation3 + $0x28] sm:$0xff] %vm1838, %v6186
  %6373 = vst.msk [vmem:[#allocation3 + $0x30] sm:$0xff] %vm1838, %v6188
  %6374 = vst.msk [vmem:[#allocation3 + $0x38] sm:$0xff] %vm1838, %v6190
  %6375 = vst.msk [vmem:[#allocation3 + $0x40] sm:$0xff] %vm1838, %v6192
  %6376 = vst.msk [vmem:[#allocation3 + $0x48] sm:$0xff] %vm1838, %v6194
  %6377 = vst.msk [vmem:[#allocation3 + $0x50] sm:$0xff] %vm1838, %v6196
  %6378 = vst.msk [vmem:[#allocation3 + $0x58] sm:$0xff] %vm1838, %v6198
  %6379 = vst.msk [vmem:[#allocation3 + $0x60] sm:$0xff] %vm1838, %v6200
  %6380 = vst.msk [vmem:[#allocation3 + $0x68] sm:$0xff] %vm1838, %v6202
  %6381 = vst.msk [vmem:[#allocation3 + $0x70] sm:$0xff] %vm1838, %v6204
  %6382 = vst.msk [vmem:[#allocation3 + $0x78] sm:$0xff] %vm1838, %v6206
  %6383 = vst.msk [vmem:[#allocation3 + $0x80] sm:$0xff] %vm1838, %v6208
  %6384 = vst.msk [vmem:[#allocation3 + $0x88] sm:$0xff] %vm1838, %v6210
  %6385 = vst.msk [vmem:[#allocation3 + $0x90] sm:$0xff] %vm1838, %v6212
  %6386 = vst.msk [vmem:[#allocation3 + $0x98] sm:$0xff] %vm1838, %v6214
  %6387 = vst.msk [vmem:[#allocation3 + $0xa0] sm:$0xff] %vm1838, %v6216
  %6388 = vst.msk [vmem:[#allocation3 + $0xa8] sm:$0xff] %vm1838, %v6218
  %6389 = vst.msk [vmem:[#allocation3 + $0xb0] sm:$0xff] %vm1838, %v6220
  %6390 = vst.msk [vmem:[#allocation3 + $0xb8] sm:$0xff] %vm1838, %v6222
  %6391 = vst.msk [vmem:[#allocation3 + $0xc0] sm:$0xff] %vm1838, %v6224
  %6392 = vst.msk [vmem:[#allocation3 + $0xc8] sm:$0xff] %vm1838, %v6226
  %6393 = vst.msk [vmem:[#allocation3 + $0xd0] sm:$0xff] %vm1838, %v6228
  %6394 = vst.msk [vmem:[#allocation3 + $0xd8] sm:$0xff] %vm1838, %v6230
  %6395 = vst.msk [vmem:[#allocation3 + $0xe0] sm:$0xff] %vm1838, %v6232
  %6396 = vst.msk [vmem:[#allocation3 + $0xe8] sm:$0xff] %vm1838, %v6234
  %6397 = vst.msk [vmem:[#allocation3 + $0xf0] sm:$0xff] %vm1838, %v6236
  %6398 = vst.msk [vmem:[#allocation3 + $0xf8] sm:$0xff] %vm1838, %v6238
  %6399 = vst.msk [vmem:[#allocation3 + $0x100] sm:$0xff] %vm1838, %v6240
  %6400 = vst.msk [vmem:[#allocation3 + $0x108] sm:$0xff] %vm1838, %v6242
  %6401 = vst.msk [vmem:[#allocation3 + $0x110] sm:$0xff] %vm1838, %v6244
  %6402 = vst.msk [vmem:[#allocation3 + $0x118] sm:$0xff] %vm1838, %v6246
  %6403 = vst.msk [vmem:[#allocation3 + $0x120] sm:$0xff] %vm1838, %v6248
  %6404 = vst.msk [vmem:[#allocation3 + $0x128] sm:$0xff] %vm1838, %v6250
  %6405 = vst.msk [vmem:[#allocation3 + $0x130] sm:$0xff] %vm1838, %v6252
  %6406 = vst.msk [vmem:[#allocation3 + $0x138] sm:$0xff] %vm1838, %v6254
  %6407 = vst.msk [vmem:[#allocation3 + $0x140] sm:$0xff] %vm1838, %v6256
  %6408 = vst.msk [vmem:[#allocation3 + $0x148] sm:$0xff] %vm1838, %v6258
  %6409 = vst.msk [vmem:[#allocation3 + $0x150] sm:$0xff] %vm1838, %v6260
  %6410 = vst.msk [vmem:[#allocation3 + $0x158] sm:$0xff] %vm1838, %v6262
  %6411 = vst.msk [vmem:[#allocation3 + $0x160] sm:$0xff] %vm1838, %v6264
  %6412 = vst.msk [vmem:[#allocation3 + $0x168] sm:$0xff] %vm1838, %v6266
  %6413 = vst.msk [vmem:[#allocation3 + $0x170] sm:$0xff] %vm1838, %v6268
  %6414 = vst.msk [vmem:[#allocation3 + $0x178] sm:$0xff] %vm1838, %v6270
  %6415 = vst.msk [vmem:[#allocation3 + $0x180] sm:$0xff] %vm1838, %v6272
  %6416 = vst.msk [vmem:[#allocation3 + $0x188] sm:$0xff] %vm1838, %v6274
  %6417 = vst.msk [vmem:[#allocation3 + $0x190] sm:$0xff] %vm1838, %v6276
  %6418 = vst.msk [vmem:[#allocation3 + $0x198] sm:$0xff] %vm1838, %v6278
  %6419 = vst.msk [vmem:[#allocation3 + $0x1a0] sm:$0xff] %vm1838, %v6280
  %6420 = vst.msk [vmem:[#allocation3 + $0x1a8] sm:$0xff] %vm1838, %v6282
  %6421 = vst.msk [vmem:[#allocation3 + $0x1b0] sm:$0xff] %vm1838, %v6284
  %6422 = vst.msk [vmem:[#allocation3 + $0x1b8] sm:$0xff] %vm1838, %v6286
  %6423 = vst.msk [vmem:[#allocation3 + $0x1c0] sm:$0xff] %vm1838, %v6288
  %6424 = vst.msk [vmem:[#allocation3 + $0x1c8] sm:$0xff] %vm1838, %v6290
  %6425 = vst.msk [vmem:[#allocation3 + $0x1d0] sm:$0xff] %vm1838, %v6292
  %6426 = vst.msk [vmem:[#allocation3 + $0x1d8] sm:$0xff] %vm1838, %v6294
  %6427 = vst.msk [vmem:[#allocation3 + $0x1e0] sm:$0xff] %vm1838, %v6296
  %6428 = vst.msk [vmem:[#allocation3 + $0x1e8] sm:$0xff] %vm1838, %v6298
  %6429 = vst.msk [vmem:[#allocation3 + $0x1f0] sm:$0xff] %vm1838, %v6300
  %6430 = vst.msk [vmem:[#allocation3 + $0x1f8] sm:$0xff] %vm1838, %v6302
  %v6431 = vld [vmem:[%s41 + $0x2] sm:$0xff]
  %v6432 = vld [vmem:[%s41 + $0xa] sm:$0xff]
  %v6433 = vld [vmem:[%s41 + $0x1a] sm:$0xff]
  %v6434 = vld [vmem:[%s41 + $0x22] sm:$0xff]
  %v6435 = vld [vmem:[%s41 + $0x32] sm:$0xff]
  %v6436 = vld [vmem:[%s41 + $0x3a] sm:$0xff]
  %v6437 = vld [vmem:[%s41 + $0x4a] sm:$0xff]
  %v6438 = vld [vmem:[%s41 + $0x52] sm:$0xff]
  %v6439 = vld [vmem:[%s41 + $0x62] sm:$0xff]
  %v6440 = vld [vmem:[%s41 + $0x6a] sm:$0xff]
  %v6441 = vld [vmem:[%s41 + $0x7a] sm:$0xff]
  %v6442 = vld [vmem:[%s41 + $0x82] sm:$0xff]
  %v6443 = vld [vmem:[%s41 + $0x92] sm:$0xff]
  %v6444 = vld [vmem:[%s41 + $0x9a] sm:$0xff]
  %v6445 = vld [vmem:[%s41 + $0xaa] sm:$0xff]
  %v6446 = vld [vmem:[%s41 + $0xb2] sm:$0xff]
  %v6447 = vld [vmem:[%s41 + $0xc2] sm:$0xff]
  %v6448 = vld [vmem:[%s41 + $0xca] sm:$0xff]
  %v6449 = vld [vmem:[%s41 + $0xda] sm:$0xff]
  %v6450 = vld [vmem:[%s41 + $0xe2] sm:$0xff]
  %v6451 = vld [vmem:[%s41 + $0xf2] sm:$0xff]
  %v6452 = vld [vmem:[%s41 + $0xfa] sm:$0xff]
  %v6453 = vld [vmem:[%s41 + $0x10a] sm:$0xff]
  %v6454 = vld [vmem:[%s41 + $0x112] sm:$0xff]
  %v6455 = vld [vmem:[%s41 + $0x122] sm:$0xff]
  %v6456 = vld [vmem:[%s41 + $0x12a] sm:$0xff]
  %v6457 = vld [vmem:[%s41 + $0x13a] sm:$0xff]
  %v6458 = vld [vmem:[%s41 + $0x142] sm:$0xff]
  %v6459 = vld [vmem:[%s41 + $0x152] sm:$0xff]
  %v6460 = vld [vmem:[%s41 + $0x15a] sm:$0xff]
  %v6461 = vld [vmem:[%s41 + $0x16a] sm:$0xff]
  %v6462 = vld [vmem:[%s41 + $0x172] sm:$0xff]
  %v6463 = vld [vmem:[%s41 + $0x1b2] sm:$0xff]
  %v6464 = vld [vmem:[%s41 + $0x1ba] sm:$0xff]
  %v6465 = vld [vmem:[%s41 + $0x1ca] sm:$0xff]
  %v6466 = vld [vmem:[%s41 + $0x1d2] sm:$0xff]
  %v6467 = vld [vmem:[%s41 + $0x1e2] sm:$0xff]
  %v6468 = vld [vmem:[%s41 + $0x1ea] sm:$0xff]
  %v6469 = vld [vmem:[%s41 + $0x1fa] sm:$0xff]
  %v6470 = vld [vmem:[%s41 + $0x202] sm:$0xff]
  %v6471 = vld [vmem:[%s41 + $0x212] sm:$0xff]
  %v6472 = vld [vmem:[%s41 + $0x21a] sm:$0xff]
  %v6473 = vld [vmem:[%s41 + $0x22a] sm:$0xff]
  %v6474 = vld [vmem:[%s41 + $0x232] sm:$0xff]
  %v6475 = vld [vmem:[%s41 + $0x242] sm:$0xff]
  %v6476 = vld [vmem:[%s41 + $0x24a] sm:$0xff]
  %v6477 = vld [vmem:[%s41 + $0x25a] sm:$0xff]
  %v6478 = vld [vmem:[%s41 + $0x262] sm:$0xff]
  %v6479 = vld [vmem:[%s41 + $0x272] sm:$0xff]
  %v6480 = vld [vmem:[%s41 + $0x27a] sm:$0xff]
  %v6481 = vld [vmem:[%s41 + $0x28a] sm:$0xff]
  %v6482 = vld [vmem:[%s41 + $0x292] sm:$0xff]
  %v6483 = vld [vmem:[%s41 + $0x2a2] sm:$0xff]
  %v6484 = vld [vmem:[%s41 + $0x2aa] sm:$0xff]
  %v6485 = vld [vmem:[%s41 + $0x2ba] sm:$0xff]
  %v6486 = vld [vmem:[%s41 + $0x2c2] sm:$0xff]
  %v6487 = vld [vmem:[%s41 + $0x2d2] sm:$0xff]
  %v6488 = vld [vmem:[%s41 + $0x2da] sm:$0xff]
  %v6489 = vld [vmem:[%s41 + $0x2ea] sm:$0xff]
  %v6490 = vld [vmem:[%s41 + $0x2f2] sm:$0xff]
  %v6491 = vld [vmem:[%s41 + $0x302] sm:$0xff]
  %v6492 = vld [vmem:[%s41 + $0x30a] sm:$0xff]
  %v6493 = vld [vmem:[%s41 + $0x31a] sm:$0xff]
  %v6494 = vld [vmem:[%s41 + $0x322] sm:$0xff]
  %6559 = vrot.lane.b32.xlu0 %v6431, 20
  %v6560 = vpop.permute.xlu0 %6559
  %6561 = vrot.lane.b32.xlu0 %v6432, 20
  %v6562 = vpop.permute.xlu0 %6561
  %6563 = vrot.lane.b32.xlu0 %v6433, 20
  %v6564 = vpop.permute.xlu0 %6563
  %6565 = vrot.lane.b32.xlu0 %v6434, 20
  %v6566 = vpop.permute.xlu0 %6565
  %6567 = vrot.lane.b32.xlu0 %v6435, 20
  %v6568 = vpop.permute.xlu0 %6567
  %6569 = vrot.lane.b32.xlu0 %v6436, 20
  %v6570 = vpop.permute.xlu0 %6569
  %6571 = vrot.lane.b32.xlu0 %v6437, 20
  %v6572 = vpop.permute.xlu0 %6571
  %6573 = vrot.lane.b32.xlu0 %v6438, 20
  %v6574 = vpop.permute.xlu0 %6573
  %6575 = vrot.lane.b32.xlu0 %v6439, 20
  %v6576 = vpop.permute.xlu0 %6575
  %6577 = vrot.lane.b32.xlu0 %v6440, 20
  %v6578 = vpop.permute.xlu0 %6577
  %6579 = vrot.lane.b32.xlu0 %v6441, 20
  %v6580 = vpop.permute.xlu0 %6579
  %6581 = vrot.lane.b32.xlu0 %v6442, 20
  %v6582 = vpop.permute.xlu0 %6581
  %6583 = vrot.lane.b32.xlu0 %v6443, 20
  %v6584 = vpop.permute.xlu0 %6583
  %6585 = vrot.lane.b32.xlu0 %v6444, 20
  %v6586 = vpop.permute.xlu0 %6585
  %6587 = vrot.lane.b32.xlu0 %v6445, 20
  %v6588 = vpop.permute.xlu0 %6587
  %6589 = vrot.lane.b32.xlu0 %v6446, 20
  %v6590 = vpop.permute.xlu0 %6589
  %6591 = vrot.lane.b32.xlu0 %v6447, 20
  %v6592 = vpop.permute.xlu0 %6591
  %6593 = vrot.lane.b32.xlu0 %v6448, 20
  %v6594 = vpop.permute.xlu0 %6593
  %6595 = vrot.lane.b32.xlu0 %v6449, 20
  %v6596 = vpop.permute.xlu0 %6595
  %6597 = vrot.lane.b32.xlu0 %v6450, 20
  %v6598 = vpop.permute.xlu0 %6597
  %6599 = vrot.lane.b32.xlu0 %v6451, 20
  %v6600 = vpop.permute.xlu0 %6599
  %6601 = vrot.lane.b32.xlu0 %v6452, 20
  %v6602 = vpop.permute.xlu0 %6601
  %6603 = vrot.lane.b32.xlu0 %v6453, 20
  %v6604 = vpop.permute.xlu0 %6603
  %6605 = vrot.lane.b32.xlu0 %v6454, 20
  %v6606 = vpop.permute.xlu0 %6605
  %6607 = vrot.lane.b32.xlu0 %v6455, 20
  %v6608 = vpop.permute.xlu0 %6607
  %6609 = vrot.lane.b32.xlu0 %v6456, 20
  %v6610 = vpop.permute.xlu0 %6609
  %6611 = vrot.lane.b32.xlu0 %v6457, 20
  %v6612 = vpop.permute.xlu0 %6611
  %6613 = vrot.lane.b32.xlu0 %v6458, 20
  %v6614 = vpop.permute.xlu0 %6613
  %6615 = vrot.lane.b32.xlu0 %v6459, 20
  %v6616 = vpop.permute.xlu0 %6615
  %6617 = vrot.lane.b32.xlu0 %v6460, 20
  %v6618 = vpop.permute.xlu0 %6617
  %6619 = vrot.lane.b32.xlu0 %v6461, 20
  %v6620 = vpop.permute.xlu0 %6619
  %6621 = vrot.lane.b32.xlu0 %v6462, 20
  %v6622 = vpop.permute.xlu0 %6621
  %6623 = vrot.lane.b32.xlu0 %v6463, 20
  %v6624 = vpop.permute.xlu0 %6623
  %6625 = vrot.lane.b32.xlu0 %v6464, 20
  %v6626 = vpop.permute.xlu0 %6625
  %6627 = vrot.lane.b32.xlu0 %v6465, 20
  %v6628 = vpop.permute.xlu0 %6627
  %6629 = vrot.lane.b32.xlu0 %v6466, 20
  %v6630 = vpop.permute.xlu0 %6629
  %6631 = vrot.lane.b32.xlu0 %v6467, 20
  %v6632 = vpop.permute.xlu0 %6631
  %6633 = vrot.lane.b32.xlu0 %v6468, 20
  %v6634 = vpop.permute.xlu0 %6633
  %6635 = vrot.lane.b32.xlu0 %v6469, 20
  %v6636 = vpop.permute.xlu0 %6635
  %6637 = vrot.lane.b32.xlu0 %v6470, 20
  %v6638 = vpop.permute.xlu0 %6637
  %6639 = vrot.lane.b32.xlu0 %v6471, 20
  %v6640 = vpop.permute.xlu0 %6639
  %6641 = vrot.lane.b32.xlu0 %v6472, 20
  %v6642 = vpop.permute.xlu0 %6641
  %6643 = vrot.lane.b32.xlu0 %v6473, 20
  %v6644 = vpop.permute.xlu0 %6643
  %6645 = vrot.lane.b32.xlu0 %v6474, 20
  %v6646 = vpop.permute.xlu0 %6645
  %6647 = vrot.lane.b32.xlu0 %v6475, 20
  %v6648 = vpop.permute.xlu0 %6647
  %6649 = vrot.lane.b32.xlu0 %v6476, 20
  %v6650 = vpop.permute.xlu0 %6649
  %6651 = vrot.lane.b32.xlu0 %v6477, 20
  %v6652 = vpop.permute.xlu0 %6651
  %6653 = vrot.lane.b32.xlu0 %v6478, 20
  %v6654 = vpop.permute.xlu0 %6653
  %6655 = vrot.lane.b32.xlu0 %v6479, 20
  %v6656 = vpop.permute.xlu0 %6655
  %6657 = vrot.lane.b32.xlu0 %v6480, 20
  %v6658 = vpop.permute.xlu0 %6657
  %6659 = vrot.lane.b32.xlu0 %v6481, 20
  %v6660 = vpop.permute.xlu0 %6659
  %6661 = vrot.lane.b32.xlu0 %v6482, 20
  %v6662 = vpop.permute.xlu0 %6661
  %6663 = vrot.lane.b32.xlu0 %v6483, 20
  %v6664 = vpop.permute.xlu0 %6663
  %6665 = vrot.lane.b32.xlu0 %v6484, 20
  %v6666 = vpop.permute.xlu0 %6665
  %6667 = vrot.lane.b32.xlu0 %v6485, 20
  %v6668 = vpop.permute.xlu0 %6667
  %6669 = vrot.lane.b32.xlu0 %v6486, 20
  %v6670 = vpop.permute.xlu0 %6669
  %6671 = vrot.lane.b32.xlu0 %v6487, 20
  %v6672 = vpop.permute.xlu0 %6671
  %6673 = vrot.lane.b32.xlu0 %v6488, 20
  %v6674 = vpop.permute.xlu0 %6673
  %6675 = vrot.lane.b32.xlu0 %v6489, 20
  %v6676 = vpop.permute.xlu0 %6675
  %6677 = vrot.lane.b32.xlu0 %v6490, 20
  %v6678 = vpop.permute.xlu0 %6677
  %6679 = vrot.lane.b32.xlu0 %v6491, 20
  %v6680 = vpop.permute.xlu0 %6679
  %6681 = vrot.lane.b32.xlu0 %v6492, 20
  %v6682 = vpop.permute.xlu0 %6681
  %6683 = vrot.lane.b32.xlu0 %v6493, 20
  %v6684 = vpop.permute.xlu0 %6683
  %6685 = vrot.lane.b32.xlu0 %v6494, 20
  %v6686 = vpop.permute.xlu0 %6685
  %6751 = vst.msk [vmem:[#allocation3] sm:$0xff] %vm2223, %v6560
  %6752 = vst.msk [vmem:[#allocation3 + $0x8] sm:$0xff] %vm2223, %v6562
  %6753 = vst.msk [vmem:[#allocation3 + $0x10] sm:$0xff] %vm2223, %v6564
  %6754 = vst.msk [vmem:[#allocation3 + $0x18] sm:$0xff] %vm2223, %v6566
  %6755 = vst.msk [vmem:[#allocation3 + $0x20] sm:$0xff] %vm2223, %v6568
  %6756 = vst.msk [vmem:[#allocation3 + $0x28] sm:$0xff] %vm2223, %v6570
  %6757 = vst.msk [vmem:[#allocation3 + $0x30] sm:$0xff] %vm2223, %v6572
  %6758 = vst.msk [vmem:[#allocation3 + $0x38] sm:$0xff] %vm2223, %v6574
  %6759 = vst.msk [vmem:[#allocation3 + $0x40] sm:$0xff] %vm2223, %v6576
  %6760 = vst.msk [vmem:[#allocation3 + $0x48] sm:$0xff] %vm2223, %v6578
  %6761 = vst.msk [vmem:[#allocation3 + $0x50] sm:$0xff] %vm2223, %v6580
  %6762 = vst.msk [vmem:[#allocation3 + $0x58] sm:$0xff] %vm2223, %v6582
  %6763 = vst.msk [vmem:[#allocation3 + $0x60] sm:$0xff] %vm2223, %v6584
  %6764 = vst.msk [vmem:[#allocation3 + $0x68] sm:$0xff] %vm2223, %v6586
  %6765 = vst.msk [vmem:[#allocation3 + $0x70] sm:$0xff] %vm2223, %v6588
  %6766 = vst.msk [vmem:[#allocation3 + $0x78] sm:$0xff] %vm2223, %v6590
  %6767 = vst.msk [vmem:[#allocation3 + $0x80] sm:$0xff] %vm2223, %v6592
  %6768 = vst.msk [vmem:[#allocation3 + $0x88] sm:$0xff] %vm2223, %v6594
  %6769 = vst.msk [vmem:[#allocation3 + $0x90] sm:$0xff] %vm2223, %v6596
  %6770 = vst.msk [vmem:[#allocation3 + $0x98] sm:$0xff] %vm2223, %v6598
  %6771 = vst.msk [vmem:[#allocation3 + $0xa0] sm:$0xff] %vm2223, %v6600
  %6772 = vst.msk [vmem:[#allocation3 + $0xa8] sm:$0xff] %vm2223, %v6602
  %6773 = vst.msk [vmem:[#allocation3 + $0xb0] sm:$0xff] %vm2223, %v6604
  %6774 = vst.msk [vmem:[#allocation3 + $0xb8] sm:$0xff] %vm2223, %v6606
  %6775 = vst.msk [vmem:[#allocation3 + $0xc0] sm:$0xff] %vm2223, %v6608
  %6776 = vst.msk [vmem:[#allocation3 + $0xc8] sm:$0xff] %vm2223, %v6610
  %6777 = vst.msk [vmem:[#allocation3 + $0xd0] sm:$0xff] %vm2223, %v6612
  %6778 = vst.msk [vmem:[#allocation3 + $0xd8] sm:$0xff] %vm2223, %v6614
  %6779 = vst.msk [vmem:[#allocation3 + $0xe0] sm:$0xff] %vm2223, %v6616
  %6780 = vst.msk [vmem:[#allocation3 + $0xe8] sm:$0xff] %vm2223, %v6618
  %6781 = vst.msk [vmem:[#allocation3 + $0xf0] sm:$0xff] %vm2223, %v6620
  %6782 = vst.msk [vmem:[#allocation3 + $0xf8] sm:$0xff] %vm2223, %v6622
  %6783 = vst.msk [vmem:[#allocation3 + $0x100] sm:$0xff] %vm2223, %v6624
  %6784 = vst.msk [vmem:[#allocation3 + $0x108] sm:$0xff] %vm2223, %v6626
  %6785 = vst.msk [vmem:[#allocation3 + $0x110] sm:$0xff] %vm2223, %v6628
  %6786 = vst.msk [vmem:[#allocation3 + $0x118] sm:$0xff] %vm2223, %v6630
  %6787 = vst.msk [vmem:[#allocation3 + $0x120] sm:$0xff] %vm2223, %v6632
  %6788 = vst.msk [vmem:[#allocation3 + $0x128] sm:$0xff] %vm2223, %v6634
  %6789 = vst.msk [vmem:[#allocation3 + $0x130] sm:$0xff] %vm2223, %v6636
  %6790 = vst.msk [vmem:[#allocation3 + $0x138] sm:$0xff] %vm2223, %v6638
  %6791 = vst.msk [vmem:[#allocation3 + $0x140] sm:$0xff] %vm2223, %v6640
  %6792 = vst.msk [vmem:[#allocation3 + $0x148] sm:$0xff] %vm2223, %v6642
  %6793 = vst.msk [vmem:[#allocation3 + $0x150] sm:$0xff] %vm2223, %v6644
  %6794 = vst.msk [vmem:[#allocation3 + $0x158] sm:$0xff] %vm2223, %v6646
  %6795 = vst.msk [vmem:[#allocation3 + $0x160] sm:$0xff] %vm2223, %v6648
  %6796 = vst.msk [vmem:[#allocation3 + $0x168] sm:$0xff] %vm2223, %v6650
  %6797 = vst.msk [vmem:[#allocation3 + $0x170] sm:$0xff] %vm2223, %v6652
  %6798 = vst.msk [vmem:[#allocation3 + $0x178] sm:$0xff] %vm2223, %v6654
  %6799 = vst.msk [vmem:[#allocation3 + $0x180] sm:$0xff] %vm2223, %v6656
  %6800 = vst.msk [vmem:[#allocation3 + $0x188] sm:$0xff] %vm2223, %v6658
  %6801 = vst.msk [vmem:[#allocation3 + $0x190] sm:$0xff] %vm2223, %v6660
  %6802 = vst.msk [vmem:[#allocation3 + $0x198] sm:$0xff] %vm2223, %v6662
  %6803 = vst.msk [vmem:[#allocation3 + $0x1a0] sm:$0xff] %vm2223, %v6664
  %6804 = vst.msk [vmem:[#allocation3 + $0x1a8] sm:$0xff] %vm2223, %v6666
  %6805 = vst.msk [vmem:[#allocation3 + $0x1b0] sm:$0xff] %vm2223, %v6668
  %6806 = vst.msk [vmem:[#allocation3 + $0x1b8] sm:$0xff] %vm2223, %v6670
  %6807 = vst.msk [vmem:[#allocation3 + $0x1c0] sm:$0xff] %vm2223, %v6672
  %6808 = vst.msk [vmem:[#allocation3 + $0x1c8] sm:$0xff] %vm2223, %v6674
  %6809 = vst.msk [vmem:[#allocation3 + $0x1d0] sm:$0xff] %vm2223, %v6676
  %6810 = vst.msk [vmem:[#allocation3 + $0x1d8] sm:$0xff] %vm2223, %v6678
  %6811 = vst.msk [vmem:[#allocation3 + $0x1e0] sm:$0xff] %vm2223, %v6680
  %6812 = vst.msk [vmem:[#allocation3 + $0x1e8] sm:$0xff] %vm2223, %v6682
  %6813 = vst.msk [vmem:[#allocation3 + $0x1f0] sm:$0xff] %vm2223, %v6684
  %6814 = vst.msk [vmem:[#allocation3 + $0x1f8] sm:$0xff] %vm2223, %v6686
  %v6815 = vld [vmem:[%s2288] sm:$0xff]
  %v6816 = vld [vmem:[%s2288 + $0x8] sm:$0xff]
  %v6817 = vld [vmem:[%s2288 + $0x18] sm:$0xff]
  %v6818 = vld [vmem:[%s2288 + $0x20] sm:$0xff]
  %v6819 = vld [vmem:[%s2288 + $0x30] sm:$0xff]
  %v6820 = vld [vmem:[%s2288 + $0x38] sm:$0xff]
  %v6821 = vld [vmem:[%s2288 + $0x48] sm:$0xff]
  %v6822 = vld [vmem:[%s2288 + $0x50] sm:$0xff]
  %v6823 = vld [vmem:[%s2288 + $0x60] sm:$0xff]
  %v6824 = vld [vmem:[%s2288 + $0x68] sm:$0xff]
  %v6825 = vld [vmem:[%s2288 + $0x78] sm:$0xff]
  %v6826 = vld [vmem:[%s2288 + $0x80] sm:$0xff]
  %v6827 = vld [vmem:[%s2288 + $0x90] sm:$0xff]
  %v6828 = vld [vmem:[%s2288 + $0x98] sm:$0xff]
  %v6829 = vld [vmem:[%s2288 + $0xa8] sm:$0xff]
  %v6830 = vld [vmem:[%s2288 + $0xb0] sm:$0xff]
  %v6831 = vld [vmem:[%s2288 + $0xc0] sm:$0xff]
  %v6832 = vld [vmem:[%s2288 + $0xc8] sm:$0xff]
  %v6833 = vld [vmem:[%s2288 + $0xd8] sm:$0xff]
  %v6834 = vld [vmem:[%s2288 + $0xe0] sm:$0xff]
  %v6835 = vld [vmem:[%s2288 + $0xf0] sm:$0xff]
  %v6836 = vld [vmem:[%s2288 + $0xf8] sm:$0xff]
  %v6837 = vld [vmem:[%s2288 + $0x108] sm:$0xff]
  %v6838 = vld [vmem:[%s2288 + $0x110] sm:$0xff]
  %v6839 = vld [vmem:[%s2288 + $0x120] sm:$0xff]
  %v6840 = vld [vmem:[%s2288 + $0x128] sm:$0xff]
  %v6841 = vld [vmem:[%s2288 + $0x138] sm:$0xff]
  %v6842 = vld [vmem:[%s2288 + $0x140] sm:$0xff]
  %v6843 = vld [vmem:[%s2288 + $0x150] sm:$0xff]
  %v6844 = vld [vmem:[%s2288 + $0x158] sm:$0xff]
  %v6845 = vld [vmem:[%s2288 + $0x168] sm:$0xff]
  %v6846 = vld [vmem:[%s2288 + $0x170] sm:$0xff]
  %v6847 = vld [vmem:[%s2288 + $0x1b0] sm:$0xff]
  %v6848 = vld [vmem:[%s2288 + $0x1b8] sm:$0xff]
  %v6849 = vld [vmem:[%s2288 + $0x1c8] sm:$0xff]
  %v6850 = vld [vmem:[%s2288 + $0x1d0] sm:$0xff]
  %v6851 = vld [vmem:[%s2288 + $0x1e0] sm:$0xff]
  %v6852 = vld [vmem:[%s2288 + $0x1e8] sm:$0xff]
  %v6853 = vld [vmem:[%s2288 + $0x1f8] sm:$0xff]
  %v6854 = vld [vmem:[%s2288 + $0x200] sm:$0xff]
  %v6855 = vld [vmem:[%s2288 + $0x210] sm:$0xff]
  %v6856 = vld [vmem:[%s2288 + $0x218] sm:$0xff]
  %v6857 = vld [vmem:[%s2288 + $0x228] sm:$0xff]
  %v6858 = vld [vmem:[%s2288 + $0x230] sm:$0xff]
  %v6859 = vld [vmem:[%s2288 + $0x240] sm:$0xff]
  %v6860 = vld [vmem:[%s2288 + $0x248] sm:$0xff]
  %v6861 = vld [vmem:[%s2288 + $0x258] sm:$0xff]
  %v6862 = vld [vmem:[%s2288 + $0x260] sm:$0xff]
  %v6863 = vld [vmem:[%s2288 + $0x270] sm:$0xff]
  %v6864 = vld [vmem:[%s2288 + $0x278] sm:$0xff]
  %v6865 = vld [vmem:[%s2288 + $0x288] sm:$0xff]
  %v6866 = vld [vmem:[%s2288 + $0x290] sm:$0xff]
  %v6867 = vld [vmem:[%s2288 + $0x2a0] sm:$0xff]
  %v6868 = vld [vmem:[%s2288 + $0x2a8] sm:$0xff]
  %v6869 = vld [vmem:[%s2288 + $0x2b8] sm:$0xff]
  %v6870 = vld [vmem:[%s2288 + $0x2c0] sm:$0xff]
  %v6871 = vld [vmem:[%s2288 + $0x2d0] sm:$0xff]
  %v6872 = vld [vmem:[%s2288 + $0x2d8] sm:$0xff]
  %v6873 = vld [vmem:[%s2288 + $0x2e8] sm:$0xff]
  %v6874 = vld [vmem:[%s2288 + $0x2f0] sm:$0xff]
  %v6875 = vld [vmem:[%s2288 + $0x300] sm:$0xff]
  %v6876 = vld [vmem:[%s2288 + $0x308] sm:$0xff]
  %v6877 = vld [vmem:[%s2288 + $0x318] sm:$0xff]
  %v6878 = vld [vmem:[%s2288 + $0x320] sm:$0xff]
  %6943 = vrot.lane.b32.xlu0 %v6815, 24
  %v6944 = vpop.permute.xlu0 %6943
  %6945 = vrot.lane.b32.xlu0 %v6816, 24
  %v6946 = vpop.permute.xlu0 %6945
  %6947 = vrot.lane.b32.xlu0 %v6817, 24
  %v6948 = vpop.permute.xlu0 %6947
  %6949 = vrot.lane.b32.xlu0 %v6818, 24
  %v6950 = vpop.permute.xlu0 %6949
  %6951 = vrot.lane.b32.xlu0 %v6819, 24
  %v6952 = vpop.permute.xlu0 %6951
  %6953 = vrot.lane.b32.xlu0 %v6820, 24
  %v6954 = vpop.permute.xlu0 %6953
  %6955 = vrot.lane.b32.xlu0 %v6821, 24
  %v6956 = vpop.permute.xlu0 %6955
  %6957 = vrot.lane.b32.xlu0 %v6822, 24
  %v6958 = vpop.permute.xlu0 %6957
  %6959 = vrot.lane.b32.xlu0 %v6823, 24
  %v6960 = vpop.permute.xlu0 %6959
  %6961 = vrot.lane.b32.xlu0 %v6824, 24
  %v6962 = vpop.permute.xlu0 %6961
  %6963 = vrot.lane.b32.xlu0 %v6825, 24
  %v6964 = vpop.permute.xlu0 %6963
  %6965 = vrot.lane.b32.xlu0 %v6826, 24
  %v6966 = vpop.permute.xlu0 %6965
  %6967 = vrot.lane.b32.xlu0 %v6827, 24
  %v6968 = vpop.permute.xlu0 %6967
  %6969 = vrot.lane.b32.xlu0 %v6828, 24
  %v6970 = vpop.permute.xlu0 %6969
  %6971 = vrot.lane.b32.xlu0 %v6829, 24
  %v6972 = vpop.permute.xlu0 %6971
  %6973 = vrot.lane.b32.xlu0 %v6830, 24
  %v6974 = vpop.permute.xlu0 %6973
  %6975 = vrot.lane.b32.xlu0 %v6831, 24
  %v6976 = vpop.permute.xlu0 %6975
  %6977 = vrot.lane.b32.xlu0 %v6832, 24
  %v6978 = vpop.permute.xlu0 %6977
  %6979 = vrot.lane.b32.xlu0 %v6833, 24
  %v6980 = vpop.permute.xlu0 %6979
  %6981 = vrot.lane.b32.xlu0 %v6834, 24
  %v6982 = vpop.permute.xlu0 %6981
  %6983 = vrot.lane.b32.xlu0 %v6835, 24
  %v6984 = vpop.permute.xlu0 %6983
  %6985 = vrot.lane.b32.xlu0 %v6836, 24
  %v6986 = vpop.permute.xlu0 %6985
  %6987 = vrot.lane.b32.xlu0 %v6837, 24
  %v6988 = vpop.permute.xlu0 %6987
  %6989 = vrot.lane.b32.xlu0 %v6838, 24
  %v6990 = vpop.permute.xlu0 %6989
  %6991 = vrot.lane.b32.xlu0 %v6839, 24
  %v6992 = vpop.permute.xlu0 %6991
  %6993 = vrot.lane.b32.xlu0 %v6840, 24
  %v6994 = vpop.permute.xlu0 %6993
  %6995 = vrot.lane.b32.xlu0 %v6841, 24
  %v6996 = vpop.permute.xlu0 %6995
  %6997 = vrot.lane.b32.xlu0 %v6842, 24
  %v6998 = vpop.permute.xlu0 %6997
  %6999 = vrot.lane.b32.xlu0 %v6843, 24
  %v7000 = vpop.permute.xlu0 %6999
  %7001 = vrot.lane.b32.xlu0 %v6844, 24
  %v7002 = vpop.permute.xlu0 %7001
  %7003 = vrot.lane.b32.xlu0 %v6845, 24
  %v7004 = vpop.permute.xlu0 %7003
  %7005 = vrot.lane.b32.xlu0 %v6846, 24
  %v7006 = vpop.permute.xlu0 %7005
  %7007 = vrot.lane.b32.xlu0 %v6847, 24
  %v7008 = vpop.permute.xlu0 %7007
  %7009 = vrot.lane.b32.xlu0 %v6848, 24
  %v7010 = vpop.permute.xlu0 %7009
  %7011 = vrot.lane.b32.xlu0 %v6849, 24
  %v7012 = vpop.permute.xlu0 %7011
  %7013 = vrot.lane.b32.xlu0 %v6850, 24
  %v7014 = vpop.permute.xlu0 %7013
  %7015 = vrot.lane.b32.xlu0 %v6851, 24
  %v7016 = vpop.permute.xlu0 %7015
  %7017 = vrot.lane.b32.xlu0 %v6852, 24
  %v7018 = vpop.permute.xlu0 %7017
  %7019 = vrot.lane.b32.xlu0 %v6853, 24
  %v7020 = vpop.permute.xlu0 %7019
  %7021 = vrot.lane.b32.xlu0 %v6854, 24
  %v7022 = vpop.permute.xlu0 %7021
  %7023 = vrot.lane.b32.xlu0 %v6855, 24
  %v7024 = vpop.permute.xlu0 %7023
  %7025 = vrot.lane.b32.xlu0 %v6856, 24
  %v7026 = vpop.permute.xlu0 %7025
  %7027 = vrot.lane.b32.xlu0 %v6857, 24
  %v7028 = vpop.permute.xlu0 %7027
  %7029 = vrot.lane.b32.xlu0 %v6858, 24
  %v7030 = vpop.permute.xlu0 %7029
  %7031 = vrot.lane.b32.xlu0 %v6859, 24
  %v7032 = vpop.permute.xlu0 %7031
  %7033 = vrot.lane.b32.xlu0 %v6860, 24
  %v7034 = vpop.permute.xlu0 %7033
  %7035 = vrot.lane.b32.xlu0 %v6861, 24
  %v7036 = vpop.permute.xlu0 %7035
  %7037 = vrot.lane.b32.xlu0 %v6862, 24
  %v7038 = vpop.permute.xlu0 %7037
  %7039 = vrot.lane.b32.xlu0 %v6863, 24
  %v7040 = vpop.permute.xlu0 %7039
  %7041 = vrot.lane.b32.xlu0 %v6864, 24
  %v7042 = vpop.permute.xlu0 %7041
  %7043 = vrot.lane.b32.xlu0 %v6865, 24
  %v7044 = vpop.permute.xlu0 %7043
  %7045 = vrot.lane.b32.xlu0 %v6866, 24
  %v7046 = vpop.permute.xlu0 %7045
  %7047 = vrot.lane.b32.xlu0 %v6867, 24
  %v7048 = vpop.permute.xlu0 %7047
  %7049 = vrot.lane.b32.xlu0 %v6868, 24
  %v7050 = vpop.permute.xlu0 %7049
  %7051 = vrot.lane.b32.xlu0 %v6869, 24
  %v7052 = vpop.permute.xlu0 %7051
  %7053 = vrot.lane.b32.xlu0 %v6870, 24
  %v7054 = vpop.permute.xlu0 %7053
  %7055 = vrot.lane.b32.xlu0 %v6871, 24
  %v7056 = vpop.permute.xlu0 %7055
  %7057 = vrot.lane.b32.xlu0 %v6872, 24
  %v7058 = vpop.permute.xlu0 %7057
  %7059 = vrot.lane.b32.xlu0 %v6873, 24
  %v7060 = vpop.permute.xlu0 %7059
  %7061 = vrot.lane.b32.xlu0 %v6874, 24
  %v7062 = vpop.permute.xlu0 %7061
  %7063 = vrot.lane.b32.xlu0 %v6875, 24
  %v7064 = vpop.permute.xlu0 %7063
  %7065 = vrot.lane.b32.xlu0 %v6876, 24
  %v7066 = vpop.permute.xlu0 %7065
  %7067 = vrot.lane.b32.xlu0 %v6877, 24
  %v7068 = vpop.permute.xlu0 %7067
  %7069 = vrot.lane.b32.xlu0 %v6878, 24
  %v7070 = vpop.permute.xlu0 %7069
  %7135 = vst.msk [vmem:[#allocation3] sm:$0xff] %vm2609, %v6944
  %7136 = vst.msk [vmem:[#allocation3 + $0x8] sm:$0xff] %vm2609, %v6946
  %7137 = vst.msk [vmem:[#allocation3 + $0x10] sm:$0xff] %vm2609, %v6948
  %7138 = vst.msk [vmem:[#allocation3 + $0x18] sm:$0xff] %vm2609, %v6950
  %7139 = vst.msk [vmem:[#allocation3 + $0x20] sm:$0xff] %vm2609, %v6952
  %7140 = vst.msk [vmem:[#allocation3 + $0x28] sm:$0xff] %vm2609, %v6954
  %7141 = vst.msk [vmem:[#allocation3 + $0x30] sm:$0xff] %vm2609, %v6956
  %7142 = vst.msk [vmem:[#allocation3 + $0x38] sm:$0xff] %vm2609, %v6958
  %7143 = vst.msk [vmem:[#allocation3 + $0x40] sm:$0xff] %vm2609, %v6960
  %7144 = vst.msk [vmem:[#allocation3 + $0x48] sm:$0xff] %vm2609, %v6962
  %7145 = vst.msk [vmem:[#allocation3 + $0x50] sm:$0xff] %vm2609, %v6964
  %7146 = vst.msk [vmem:[#allocation3 + $0x58] sm:$0xff] %vm2609, %v6966
  %7147 = vst.msk [vmem:[#allocation3 + $0x60] sm:$0xff] %vm2609, %v6968
  %7148 = vst.msk [vmem:[#allocation3 + $0x68] sm:$0xff] %vm2609, %v6970
  %7149 = vst.msk [vmem:[#allocation3 + $0x70] sm:$0xff] %vm2609, %v6972
  %7150 = vst.msk [vmem:[#allocation3 + $0x78] sm:$0xff] %vm2609, %v6974
  %7151 = vst.msk [vmem:[#allocation3 + $0x80] sm:$0xff] %vm2609, %v6976
  %7152 = vst.msk [vmem:[#allocation3 + $0x88] sm:$0xff] %vm2609, %v6978
  %7153 = vst.msk [vmem:[#allocation3 + $0x90] sm:$0xff] %vm2609, %v6980
  %7154 = vst.msk [vmem:[#allocation3 + $0x98] sm:$0xff] %vm2609, %v6982
  %7155 = vst.msk [vmem:[#allocation3 + $0xa0] sm:$0xff] %vm2609, %v6984
  %7156 = vst.msk [vmem:[#allocation3 + $0xa8] sm:$0xff] %vm2609, %v6986
  %7157 = vst.msk [vmem:[#allocation3 + $0xb0] sm:$0xff] %vm2609, %v6988
  %7158 = vst.msk [vmem:[#allocation3 + $0xb8] sm:$0xff] %vm2609, %v6990
  %7159 = vst.msk [vmem:[#allocation3 + $0xc0] sm:$0xff] %vm2609, %v6992
  %7160 = vst.msk [vmem:[#allocation3 + $0xc8] sm:$0xff] %vm2609, %v6994
  %7161 = vst.msk [vmem:[#allocation3 + $0xd0] sm:$0xff] %vm2609, %v6996
  %7162 = vst.msk [vmem:[#allocation3 + $0xd8] sm:$0xff] %vm2609, %v6998
  %7163 = vst.msk [vmem:[#allocation3 + $0xe0] sm:$0xff] %vm2609, %v7000
  %7164 = vst.msk [vmem:[#allocation3 + $0xe8] sm:$0xff] %vm2609, %v7002
  %7165 = vst.msk [vmem:[#allocation3 + $0xf0] sm:$0xff] %vm2609, %v7004
  %7166 = vst.msk [vmem:[#allocation3 + $0xf8] sm:$0xff] %vm2609, %v7006
  %7167 = vst.msk [vmem:[#allocation3 + $0x100] sm:$0xff] %vm2609, %v7008
  %7168 = vst.msk [vmem:[#allocation3 + $0x108] sm:$0xff] %vm2609, %v7010
  %7169 = vst.msk [vmem:[#allocation3 + $0x110] sm:$0xff] %vm2609, %v7012
  %7170 = vst.msk [vmem:[#allocation3 + $0x118] sm:$0xff] %vm2609, %v7014
  %7171 = vst.msk [vmem:[#allocation3 + $0x120] sm:$0xff] %vm2609, %v7016
  %7172 = vst.msk [vmem:[#allocation3 + $0x128] sm:$0xff] %vm2609, %v7018
  %7173 = vst.msk [vmem:[#allocation3 + $0x130] sm:$0xff] %vm2609, %v7020
  %7174 = vst.msk [vmem:[#allocation3 + $0x138] sm:$0xff] %vm2609, %v7022
  %7175 = vst.msk [vmem:[#allocation3 + $0x140] sm:$0xff] %vm2609, %v7024
  %7176 = vst.msk [vmem:[#allocation3 + $0x148] sm:$0xff] %vm2609, %v7026
  %7177 = vst.msk [vmem:[#allocation3 + $0x150] sm:$0xff] %vm2609, %v7028
  %7178 = vst.msk [vmem:[#allocation3 + $0x158] sm:$0xff] %vm2609, %v7030
  %7179 = vst.msk [vmem:[#allocation3 + $0x160] sm:$0xff] %vm2609, %v7032
  %7180 = vst.msk [vmem:[#allocation3 + $0x168] sm:$0xff] %vm2609, %v7034
  %7181 = vst.msk [vmem:[#allocation3 + $0x170] sm:$0xff] %vm2609, %v7036
  %7182 = vst.msk [vmem:[#allocation3 + $0x178] sm:$0xff] %vm2609, %v7038
  %7183 = vst.msk [vmem:[#allocation3 + $0x180] sm:$0xff] %vm2609, %v7040
  %7184 = vst.msk [vmem:[#allocation3 + $0x188] sm:$0xff] %vm2609, %v7042
  %7185 = vst.msk [vmem:[#allocation3 + $0x190] sm:$0xff] %vm2609, %v7044
  %7186 = vst.msk [vmem:[#allocation3 + $0x198] sm:$0xff] %vm2609, %v7046
  %7187 = vst.msk [vmem:[#allocation3 + $0x1a0] sm:$0xff] %vm2609, %v7048
  %7188 = vst.msk [vmem:[#allocation3 + $0x1a8] sm:$0xff] %vm2609, %v7050
  %7189 = vst.msk [vmem:[#allocation3 + $0x1b0] sm:$0xff] %vm2609, %v7052
  %7190 = vst.msk [vmem:[#allocation3 + $0x1b8] sm:$0xff] %vm2609, %v7054
  %7191 = vst.msk [vmem:[#allocation3 + $0x1c0] sm:$0xff] %vm2609, %v7056
  %7192 = vst.msk [vmem:[#allocation3 + $0x1c8] sm:$0xff] %vm2609, %v7058
  %7193 = vst.msk [vmem:[#allocation3 + $0x1d0] sm:$0xff] %vm2609, %v7060
  %7194 = vst.msk [vmem:[#allocation3 + $0x1d8] sm:$0xff] %vm2609, %v7062
  %7195 = vst.msk [vmem:[#allocation3 + $0x1e0] sm:$0xff] %vm2609, %v7064
  %7196 = vst.msk [vmem:[#allocation3 + $0x1e8] sm:$0xff] %vm2609, %v7066
  %7197 = vst.msk [vmem:[#allocation3 + $0x1f0] sm:$0xff] %vm2609, %v7068
  %7198 = vst.msk [vmem:[#allocation3 + $0x1f8] sm:$0xff] %vm2609, %v7070
  %v7199 = vld [vmem:[%s2288 + $0x1] sm:$0xff]
  %v7200 = vld [vmem:[%s2288 + $0x9] sm:$0xff]
  %v7201 = vld [vmem:[%s2288 + $0x19] sm:$0xff]
  %v7202 = vld [vmem:[%s2288 + $0x21] sm:$0xff]
  %v7203 = vld [vmem:[%s2288 + $0x31] sm:$0xff]
  %v7204 = vld [vmem:[%s2288 + $0x39] sm:$0xff]
  %v7205 = vld [vmem:[%s2288 + $0x49] sm:$0xff]
  %v7206 = vld [vmem:[%s2288 + $0x51] sm:$0xff]
  %v7207 = vld [vmem:[%s2288 + $0x61] sm:$0xff]
  %v7208 = vld [vmem:[%s2288 + $0x69] sm:$0xff]
  %v7209 = vld [vmem:[%s2288 + $0x79] sm:$0xff]
  %v7210 = vld [vmem:[%s2288 + $0x81] sm:$0xff]
  %v7211 = vld [vmem:[%s2288 + $0x91] sm:$0xff]
  %v7212 = vld [vmem:[%s2288 + $0x99] sm:$0xff]
  %v7213 = vld [vmem:[%s2288 + $0xa9] sm:$0xff]
  %v7214 = vld [vmem:[%s2288 + $0xb1] sm:$0xff]
  %v7215 = vld [vmem:[%s2288 + $0xc1] sm:$0xff]
  %v7216 = vld [vmem:[%s2288 + $0xc9] sm:$0xff]
  %v7217 = vld [vmem:[%s2288 + $0xd9] sm:$0xff]
  %v7218 = vld [vmem:[%s2288 + $0xe1] sm:$0xff]
  %v7219 = vld [vmem:[%s2288 + $0xf1] sm:$0xff]
  %v7220 = vld [vmem:[%s2288 + $0xf9] sm:$0xff]
  %v7221 = vld [vmem:[%s2288 + $0x109] sm:$0xff]
  %v7222 = vld [vmem:[%s2288 + $0x111] sm:$0xff]
  %v7223 = vld [vmem:[%s2288 + $0x121] sm:$0xff]
  %v7224 = vld [vmem:[%s2288 + $0x129] sm:$0xff]
  %v7225 = vld [vmem:[%s2288 + $0x139] sm:$0xff]
  %v7226 = vld [vmem:[%s2288 + $0x141] sm:$0xff]
  %v7227 = vld [vmem:[%s2288 + $0x151] sm:$0xff]
  %v7228 = vld [vmem:[%s2288 + $0x159] sm:$0xff]
  %v7229 = vld [vmem:[%s2288 + $0x169] sm:$0xff]
  %v7230 = vld [vmem:[%s2288 + $0x171] sm:$0xff]
  %v7231 = vld [vmem:[%s2288 + $0x1b1] sm:$0xff]
  %v7232 = vld [vmem:[%s2288 + $0x1b9] sm:$0xff]
  %v7233 = vld [vmem:[%s2288 + $0x1c9] sm:$0xff]
  %v7234 = vld [vmem:[%s2288 + $0x1d1] sm:$0xff]
  %v7235 = vld [vmem:[%s2288 + $0x1e1] sm:$0xff]
  %v7236 = vld [vmem:[%s2288 + $0x1e9] sm:$0xff]
  %v7237 = vld [vmem:[%s2288 + $0x1f9] sm:$0xff]
  %v7238 = vld [vmem:[%s2288 + $0x201] sm:$0xff]
  %v7239 = vld [vmem:[%s2288 + $0x211] sm:$0xff]
  %v7240 = vld [vmem:[%s2288 + $0x219] sm:$0xff]
  %v7241 = vld [vmem:[%s2288 + $0x229] sm:$0xff]
  %v7242 = vld [vmem:[%s2288 + $0x231] sm:$0xff]
  %v7243 = vld [vmem:[%s2288 + $0x241] sm:$0xff]
  %v7244 = vld [vmem:[%s2288 + $0x249] sm:$0xff]
  %v7245 = vld [vmem:[%s2288 + $0x259] sm:$0xff]
  %v7246 = vld [vmem:[%s2288 + $0x261] sm:$0xff]
  %v7247 = vld [vmem:[%s2288 + $0x271] sm:$0xff]
  %v7248 = vld [vmem:[%s2288 + $0x279] sm:$0xff]
  %v7249 = vld [vmem:[%s2288 + $0x289] sm:$0xff]
  %v7250 = vld [vmem:[%s2288 + $0x291] sm:$0xff]
  %v7251 = vld [vmem:[%s2288 + $0x2a1] sm:$0xff]
  %v7252 = vld [vmem:[%s2288 + $0x2a9] sm:$0xff]
  %v7253 = vld [vmem:[%s2288 + $0x2b9] sm:$0xff]
  %v7254 = vld [vmem:[%s2288 + $0x2c1] sm:$0xff]
  %v7255 = vld [vmem:[%s2288 + $0x2d1] sm:$0xff]
  %v7256 = vld [vmem:[%s2288 + $0x2d9] sm:$0xff]
  %v7257 = vld [vmem:[%s2288 + $0x2e9] sm:$0xff]
  %v7258 = vld [vmem:[%s2288 + $0x2f1] sm:$0xff]
  %v7259 = vld [vmem:[%s2288 + $0x301] sm:$0xff]
  %v7260 = vld [vmem:[%s2288 + $0x309] sm:$0xff]
  %v7261 = vld [vmem:[%s2288 + $0x319] sm:$0xff]
  %v7262 = vld [vmem:[%s2288 + $0x321] sm:$0xff]
  %7327 = vrot.lane.b32.xlu0 %v7199, 28
  %v7328 = vpop.permute.xlu0 %7327
  %7329 = vrot.lane.b32.xlu0 %v7200, 28
  %v7330 = vpop.permute.xlu0 %7329
  %7331 = vrot.lane.b32.xlu0 %v7201, 28
  %v7332 = vpop.permute.xlu0 %7331
  %7333 = vrot.lane.b32.xlu0 %v7202, 28
  %v7334 = vpop.permute.xlu0 %7333
  %7335 = vrot.lane.b32.xlu0 %v7203, 28
  %v7336 = vpop.permute.xlu0 %7335
  %7337 = vrot.lane.b32.xlu0 %v7204, 28
  %v7338 = vpop.permute.xlu0 %7337
  %7339 = vrot.lane.b32.xlu0 %v7205, 28
  %v7340 = vpop.permute.xlu0 %7339
  %7341 = vrot.lane.b32.xlu0 %v7206, 28
  %v7342 = vpop.permute.xlu0 %7341
  %7343 = vrot.lane.b32.xlu0 %v7207, 28
  %v7344 = vpop.permute.xlu0 %7343
  %7345 = vrot.lane.b32.xlu0 %v7208, 28
  %v7346 = vpop.permute.xlu0 %7345
  %7347 = vrot.lane.b32.xlu0 %v7209, 28
  %v7348 = vpop.permute.xlu0 %7347
  %7349 = vrot.lane.b32.xlu0 %v7210, 28
  %v7350 = vpop.permute.xlu0 %7349
  %7351 = vrot.lane.b32.xlu0 %v7211, 28
  %v7352 = vpop.permute.xlu0 %7351
  %7353 = vrot.lane.b32.xlu0 %v7212, 28
  %v7354 = vpop.permute.xlu0 %7353
  %7355 = vrot.lane.b32.xlu0 %v7213, 28
  %v7356 = vpop.permute.xlu0 %7355
  %7357 = vrot.lane.b32.xlu0 %v7214, 28
  %v7358 = vpop.permute.xlu0 %7357
  %7359 = vrot.lane.b32.xlu0 %v7215, 28
  %v7360 = vpop.permute.xlu0 %7359
  %7361 = vrot.lane.b32.xlu0 %v7216, 28
  %v7362 = vpop.permute.xlu0 %7361
  %7363 = vrot.lane.b32.xlu0 %v7217, 28
  %v7364 = vpop.permute.xlu0 %7363
  %7365 = vrot.lane.b32.xlu0 %v7218, 28
  %v7366 = vpop.permute.xlu0 %7365
  %7367 = vrot.lane.b32.xlu0 %v7219, 28
  %v7368 = vpop.permute.xlu0 %7367
  %7369 = vrot.lane.b32.xlu0 %v7220, 28
  %v7370 = vpop.permute.xlu0 %7369
  %7371 = vrot.lane.b32.xlu0 %v7221, 28
  %v7372 = vpop.permute.xlu0 %7371
  %7373 = vrot.lane.b32.xlu0 %v7222, 28
  %v7374 = vpop.permute.xlu0 %7373
  %7375 = vrot.lane.b32.xlu0 %v7223, 28
  %v7376 = vpop.permute.xlu0 %7375
  %7377 = vrot.lane.b32.xlu0 %v7224, 28
  %v7378 = vpop.permute.xlu0 %7377
  %7379 = vrot.lane.b32.xlu0 %v7225, 28
  %v7380 = vpop.permute.xlu0 %7379
  %7381 = vrot.lane.b32.xlu0 %v7226, 28
  %v7382 = vpop.permute.xlu0 %7381
  %7383 = vrot.lane.b32.xlu0 %v7227, 28
  %v7384 = vpop.permute.xlu0 %7383
  %7385 = vrot.lane.b32.xlu0 %v7228, 28
  %v7386 = vpop.permute.xlu0 %7385
  %7387 = vrot.lane.b32.xlu0 %v7229, 28
  %v7388 = vpop.permute.xlu0 %7387
  %7389 = vrot.lane.b32.xlu0 %v7230, 28
  %v7390 = vpop.permute.xlu0 %7389
  %7391 = vrot.lane.b32.xlu0 %v7231, 28
  %v7392 = vpop.permute.xlu0 %7391
  %7393 = vrot.lane.b32.xlu0 %v7232, 28
  %v7394 = vpop.permute.xlu0 %7393
  %7395 = vrot.lane.b32.xlu0 %v7233, 28
  %v7396 = vpop.permute.xlu0 %7395
  %7397 = vrot.lane.b32.xlu0 %v7234, 28
  %v7398 = vpop.permute.xlu0 %7397
  %7399 = vrot.lane.b32.xlu0 %v7235, 28
  %v7400 = vpop.permute.xlu0 %7399
  %7401 = vrot.lane.b32.xlu0 %v7236, 28
  %v7402 = vpop.permute.xlu0 %7401
  %7403 = vrot.lane.b32.xlu0 %v7237, 28
  %v7404 = vpop.permute.xlu0 %7403
  %7405 = vrot.lane.b32.xlu0 %v7238, 28
  %v7406 = vpop.permute.xlu0 %7405
  %7407 = vrot.lane.b32.xlu0 %v7239, 28
  %v7408 = vpop.permute.xlu0 %7407
  %7409 = vrot.lane.b32.xlu0 %v7240, 28
  %v7410 = vpop.permute.xlu0 %7409
  %7411 = vrot.lane.b32.xlu0 %v7241, 28
  %v7412 = vpop.permute.xlu0 %7411
  %7413 = vrot.lane.b32.xlu0 %v7242, 28
  %v7414 = vpop.permute.xlu0 %7413
  %7415 = vrot.lane.b32.xlu0 %v7243, 28
  %v7416 = vpop.permute.xlu0 %7415
  %7417 = vrot.lane.b32.xlu0 %v7244, 28
  %v7418 = vpop.permute.xlu0 %7417
  %7419 = vrot.lane.b32.xlu0 %v7245, 28
  %v7420 = vpop.permute.xlu0 %7419
  %7421 = vrot.lane.b32.xlu0 %v7246, 28
  %v7422 = vpop.permute.xlu0 %7421
  %7423 = vrot.lane.b32.xlu0 %v7247, 28
  %v7424 = vpop.permute.xlu0 %7423
  %7425 = vrot.lane.b32.xlu0 %v7248, 28
  %v7426 = vpop.permute.xlu0 %7425
  %7427 = vrot.lane.b32.xlu0 %v7249, 28
  %v7428 = vpop.permute.xlu0 %7427
  %7429 = vrot.lane.b32.xlu0 %v7250, 28
  %v7430 = vpop.permute.xlu0 %7429
  %7431 = vrot.lane.b32.xlu0 %v7251, 28
  %v7432 = vpop.permute.xlu0 %7431
  %7433 = vrot.lane.b32.xlu0 %v7252, 28
  %v7434 = vpop.permute.xlu0 %7433
  %7435 = vrot.lane.b32.xlu0 %v7253, 28
  %v7436 = vpop.permute.xlu0 %7435
  %7437 = vrot.lane.b32.xlu0 %v7254, 28
  %v7438 = vpop.permute.xlu0 %7437
  %7439 = vrot.lane.b32.xlu0 %v7255, 28
  %v7440 = vpop.permute.xlu0 %7439
  %7441 = vrot.lane.b32.xlu0 %v7256, 28
  %v7442 = vpop.permute.xlu0 %7441
  %7443 = vrot.lane.b32.xlu0 %v7257, 28
  %v7444 = vpop.permute.xlu0 %7443
  %7445 = vrot.lane.b32.xlu0 %v7258, 28
  %v7446 = vpop.permute.xlu0 %7445
  %7447 = vrot.lane.b32.xlu0 %v7259, 28
  %v7448 = vpop.permute.xlu0 %7447
  %7449 = vrot.lane.b32.xlu0 %v7260, 28
  %v7450 = vpop.permute.xlu0 %7449
  %7451 = vrot.lane.b32.xlu0 %v7261, 28
  %v7452 = vpop.permute.xlu0 %7451
  %7453 = vrot.lane.b32.xlu0 %v7262, 28
  %v7454 = vpop.permute.xlu0 %7453
  %7519 = vst.msk [vmem:[#allocation3] sm:$0xff] %vm2994, %v7328
  %7520 = vst.msk [vmem:[#allocation3 + $0x8] sm:$0xff] %vm2994, %v7330
  %7521 = vst.msk [vmem:[#allocation3 + $0x10] sm:$0xff] %vm2994, %v7332
  %7522 = vst.msk [vmem:[#allocation3 + $0x18] sm:$0xff] %vm2994, %v7334
  %7523 = vst.msk [vmem:[#allocation3 + $0x20] sm:$0xff] %vm2994, %v7336
  %7524 = vst.msk [vmem:[#allocation3 + $0x28] sm:$0xff] %vm2994, %v7338
  %7525 = vst.msk [vmem:[#allocation3 + $0x30] sm:$0xff] %vm2994, %v7340
  %7526 = vst.msk [vmem:[#allocation3 + $0x38] sm:$0xff] %vm2994, %v7342
  %7527 = vst.msk [vmem:[#allocation3 + $0x40] sm:$0xff] %vm2994, %v7344
  %7528 = vst.msk [vmem:[#allocation3 + $0x48] sm:$0xff] %vm2994, %v7346
  %7529 = vst.msk [vmem:[#allocation3 + $0x50] sm:$0xff] %vm2994, %v7348
  %7530 = vst.msk [vmem:[#allocation3 + $0x58] sm:$0xff] %vm2994, %v7350
  %7531 = vst.msk [vmem:[#allocation3 + $0x60] sm:$0xff] %vm2994, %v7352
  %7532 = vst.msk [vmem:[#allocation3 + $0x68] sm:$0xff] %vm2994, %v7354
  %7533 = vst.msk [vmem:[#allocation3 + $0x70] sm:$0xff] %vm2994, %v7356
  %7534 = vst.msk [vmem:[#allocation3 + $0x78] sm:$0xff] %vm2994, %v7358
  %7535 = vst.msk [vmem:[#allocation3 + $0x80] sm:$0xff] %vm2994, %v7360
  %7536 = vst.msk [vmem:[#allocation3 + $0x88] sm:$0xff] %vm2994, %v7362
  %7537 = vst.msk [vmem:[#allocation3 + $0x90] sm:$0xff] %vm2994, %v7364
  %7538 = vst.msk [vmem:[#allocation3 + $0x98] sm:$0xff] %vm2994, %v7366
  %7539 = vst.msk [vmem:[#allocation3 + $0xa0] sm:$0xff] %vm2994, %v7368
  %7540 = vst.msk [vmem:[#allocation3 + $0xa8] sm:$0xff] %vm2994, %v7370
  %7541 = vst.msk [vmem:[#allocation3 + $0xb0] sm:$0xff] %vm2994, %v7372
  %7542 = vst.msk [vmem:[#allocation3 + $0xb8] sm:$0xff] %vm2994, %v7374
  %7543 = vst.msk [vmem:[#allocation3 + $0xc0] sm:$0xff] %vm2994, %v7376
  %7544 = vst.msk [vmem:[#allocation3 + $0xc8] sm:$0xff] %vm2994, %v7378
  %7545 = vst.msk [vmem:[#allocation3 + $0xd0] sm:$0xff] %vm2994, %v7380
  %7546 = vst.msk [vmem:[#allocation3 + $0xd8] sm:$0xff] %vm2994, %v7382
  %7547 = vst.msk [vmem:[#allocation3 + $0xe0] sm:$0xff] %vm2994, %v7384
  %7548 = vst.msk [vmem:[#allocation3 + $0xe8] sm:$0xff] %vm2994, %v7386
  %7549 = vst.msk [vmem:[#allocation3 + $0xf0] sm:$0xff] %vm2994, %v7388
  %7550 = vst.msk [vmem:[#allocation3 + $0xf8] sm:$0xff] %vm2994, %v7390
  %7551 = vst.msk [vmem:[#allocation3 + $0x100] sm:$0xff] %vm2994, %v7392
  %7552 = vst.msk [vmem:[#allocation3 + $0x108] sm:$0xff] %vm2994, %v7394
  %7553 = vst.msk [vmem:[#allocation3 + $0x110] sm:$0xff] %vm2994, %v7396
  %7554 = vst.msk [vmem:[#allocation3 + $0x118] sm:$0xff] %vm2994, %v7398
  %7555 = vst.msk [vmem:[#allocation3 + $0x120] sm:$0xff] %vm2994, %v7400
  %7556 = vst.msk [vmem:[#allocation3 + $0x128] sm:$0xff] %vm2994, %v7402
  %7557 = vst.msk [vmem:[#allocation3 + $0x130] sm:$0xff] %vm2994, %v7404
  %7558 = vst.msk [vmem:[#allocation3 + $0x138] sm:$0xff] %vm2994, %v7406
  %7559 = vst.msk [vmem:[#allocation3 + $0x140] sm:$0xff] %vm2994, %v7408
  %7560 = vst.msk [vmem:[#allocation3 + $0x148] sm:$0xff] %vm2994, %v7410
  %7561 = vst.msk [vmem:[#allocation3 + $0x150] sm:$0xff] %vm2994, %v7412
  %7562 = vst.msk [vmem:[#allocation3 + $0x158] sm:$0xff] %vm2994, %v7414
  %7563 = vst.msk [vmem:[#allocation3 + $0x160] sm:$0xff] %vm2994, %v7416
  %7564 = vst.msk [vmem:[#allocation3 + $0x168] sm:$0xff] %vm2994, %v7418
  %7565 = vst.msk [vmem:[#allocation3 + $0x170] sm:$0xff] %vm2994, %v7420
  %7566 = vst.msk [vmem:[#allocation3 + $0x178] sm:$0xff] %vm2994, %v7422
  %7567 = vst.msk [vmem:[#allocation3 + $0x180] sm:$0xff] %vm2994, %v7424
  %7568 = vst.msk [vmem:[#allocation3 + $0x188] sm:$0xff] %vm2994, %v7426
  %7569 = vst.msk [vmem:[#allocation3 + $0x190] sm:$0xff] %vm2994, %v7428
  %7570 = vst.msk [vmem:[#allocation3 + $0x198] sm:$0xff] %vm2994, %v7430
  %7571 = vst.msk [vmem:[#allocation3 + $0x1a0] sm:$0xff] %vm2994, %v7432
  %7572 = vst.msk [vmem:[#allocation3 + $0x1a8] sm:$0xff] %vm2994, %v7434
  %7573 = vst.msk [vmem:[#allocation3 + $0x1b0] sm:$0xff] %vm2994, %v7436
  %7574 = vst.msk [vmem:[#allocation3 + $0x1b8] sm:$0xff] %vm2994, %v7438
  %7575 = vst.msk [vmem:[#allocation3 + $0x1c0] sm:$0xff] %vm2994, %v7440
  %7576 = vst.msk [vmem:[#allocation3 + $0x1c8] sm:$0xff] %vm2994, %v7442
  %7577 = vst.msk [vmem:[#allocation3 + $0x1d0] sm:$0xff] %vm2994, %v7444
  %7578 = vst.msk [vmem:[#allocation3 + $0x1d8] sm:$0xff] %vm2994, %v7446
  %7579 = vst.msk [vmem:[#allocation3 + $0x1e0] sm:$0xff] %vm2994, %v7448
  %7580 = vst.msk [vmem:[#allocation3 + $0x1e8] sm:$0xff] %vm2994, %v7450
  %7581 = vst.msk [vmem:[#allocation3 + $0x1f0] sm:$0xff] %vm2994, %v7452
  %7582 = vst.msk [vmem:[#allocation3 + $0x1f8] sm:$0xff] %vm2994, %v7454
  %v7583 = vld [vmem:[%s2288 + $0x2] sm:$0xff]
  %v7584 = vld [vmem:[%s2288 + $0xa] sm:$0xff]
  %v7585 = vld [vmem:[%s2288 + $0x1a] sm:$0xff]
  %v7586 = vld [vmem:[%s2288 + $0x22] sm:$0xff]
  %v7587 = vld [vmem:[%s2288 + $0x32] sm:$0xff]
  %v7588 = vld [vmem:[%s2288 + $0x3a] sm:$0xff]
  %v7589 = vld [vmem:[%s2288 + $0x4a] sm:$0xff]
  %v7590 = vld [vmem:[%s2288 + $0x52] sm:$0xff]
  %v7591 = vld [vmem:[%s2288 + $0x62] sm:$0xff]
  %v7592 = vld [vmem:[%s2288 + $0x6a] sm:$0xff]
  %v7593 = vld [vmem:[%s2288 + $0x7a] sm:$0xff]
  %v7594 = vld [vmem:[%s2288 + $0x82] sm:$0xff]
  %v7595 = vld [vmem:[%s2288 + $0x92] sm:$0xff]
  %v7596 = vld [vmem:[%s2288 + $0x9a] sm:$0xff]
  %v7597 = vld [vmem:[%s2288 + $0xaa] sm:$0xff]
  %v7598 = vld [vmem:[%s2288 + $0xb2] sm:$0xff]
  %v7599 = vld [vmem:[%s2288 + $0xc2] sm:$0xff]
  %v7600 = vld [vmem:[%s2288 + $0xca] sm:$0xff]
  %v7601 = vld [vmem:[%s2288 + $0xda] sm:$0xff]
  %v7602 = vld [vmem:[%s2288 + $0xe2] sm:$0xff]
  %v7603 = vld [vmem:[%s2288 + $0xf2] sm:$0xff]
  %v7604 = vld [vmem:[%s2288 + $0xfa] sm:$0xff]
  %v7605 = vld [vmem:[%s2288 + $0x10a] sm:$0xff]
  %v7606 = vld [vmem:[%s2288 + $0x112] sm:$0xff]
  %v7607 = vld [vmem:[%s2288 + $0x122] sm:$0xff]
  %v7608 = vld [vmem:[%s2288 + $0x12a] sm:$0xff]
  %v7609 = vld [vmem:[%s2288 + $0x13a] sm:$0xff]
  %v7610 = vld [vmem:[%s2288 + $0x142] sm:$0xff]
  %v7611 = vld [vmem:[%s2288 + $0x152] sm:$0xff]
  %v7612 = vld [vmem:[%s2288 + $0x15a] sm:$0xff]
  %v7613 = vld [vmem:[%s2288 + $0x16a] sm:$0xff]
  %v7614 = vld [vmem:[%s2288 + $0x172] sm:$0xff]
  %v7615 = vld [vmem:[%s2288 + $0x1b2] sm:$0xff]
  %v7616 = vld [vmem:[%s2288 + $0x1ba] sm:$0xff]
  %v7617 = vld [vmem:[%s2288 + $0x1ca] sm:$0xff]
  %v7618 = vld [vmem:[%s2288 + $0x1d2] sm:$0xff]
  %v7619 = vld [vmem:[%s2288 + $0x1e2] sm:$0xff]
  %v7620 = vld [vmem:[%s2288 + $0x1ea] sm:$0xff]
  %v7621 = vld [vmem:[%s2288 + $0x1fa] sm:$0xff]
  %v7622 = vld [vmem:[%s2288 + $0x202] sm:$0xff]
  %v7623 = vld [vmem:[%s2288 + $0x212] sm:$0xff]
  %v7624 = vld [vmem:[%s2288 + $0x21a] sm:$0xff]
  %v7625 = vld [vmem:[%s2288 + $0x22a] sm:$0xff]
  %v7626 = vld [vmem:[%s2288 + $0x232] sm:$0xff]
  %v7627 = vld [vmem:[%s2288 + $0x242] sm:$0xff]
  %v7628 = vld [vmem:[%s2288 + $0x24a] sm:$0xff]
  %v7629 = vld [vmem:[%s2288 + $0x25a] sm:$0xff]
  %v7630 = vld [vmem:[%s2288 + $0x262] sm:$0xff]
  %v7631 = vld [vmem:[%s2288 + $0x272] sm:$0xff]
  %v7632 = vld [vmem:[%s2288 + $0x27a] sm:$0xff]
  %v7633 = vld [vmem:[%s2288 + $0x28a] sm:$0xff]
  %v7634 = vld [vmem:[%s2288 + $0x292] sm:$0xff]
  %v7635 = vld [vmem:[%s2288 + $0x2a2] sm:$0xff]
  %v7636 = vld [vmem:[%s2288 + $0x2aa] sm:$0xff]
  %v7637 = vld [vmem:[%s2288 + $0x2ba] sm:$0xff]
  %v7638 = vld [vmem:[%s2288 + $0x2c2] sm:$0xff]
  %v7639 = vld [vmem:[%s2288 + $0x2d2] sm:$0xff]
  %v7640 = vld [vmem:[%s2288 + $0x2da] sm:$0xff]
  %v7641 = vld [vmem:[%s2288 + $0x2ea] sm:$0xff]
  %v7642 = vld [vmem:[%s2288 + $0x2f2] sm:$0xff]
  %v7643 = vld [vmem:[%s2288 + $0x302] sm:$0xff]
  %v7644 = vld [vmem:[%s2288 + $0x30a] sm:$0xff]
  %v7645 = vld [vmem:[%s2288 + $0x31a] sm:$0xff]
  %v7646 = vld [vmem:[%s2288 + $0x322] sm:$0xff]
  %7711 = vrot.lane.b32.xlu0 %v7583, 32
  %v7712 = vpop.permute.xlu0 %7711
  %7713 = vrot.lane.b32.xlu0 %v7584, 32
  %v7714 = vpop.permute.xlu0 %7713
  %7715 = vrot.lane.b32.xlu0 %v7585, 32
  %v7716 = vpop.permute.xlu0 %7715
  %7717 = vrot.lane.b32.xlu0 %v7586, 32
  %v7718 = vpop.permute.xlu0 %7717
  %7719 = vrot.lane.b32.xlu0 %v7587, 32
  %v7720 = vpop.permute.xlu0 %7719
  %7721 = vrot.lane.b32.xlu0 %v7588, 32
  %v7722 = vpop.permute.xlu0 %7721
  %7723 = vrot.lane.b32.xlu0 %v7589, 32
  %v7724 = vpop.permute.xlu0 %7723
  %7725 = vrot.lane.b32.xlu0 %v7590, 32
  %v7726 = vpop.permute.xlu0 %7725
  %7727 = vrot.lane.b32.xlu0 %v7591, 32
  %v7728 = vpop.permute.xlu0 %7727
  %7729 = vrot.lane.b32.xlu0 %v7592, 32
  %v7730 = vpop.permute.xlu0 %7729
  %7731 = vrot.lane.b32.xlu0 %v7593, 32
  %v7732 = vpop.permute.xlu0 %7731
  %7733 = vrot.lane.b32.xlu0 %v7594, 32
  %v7734 = vpop.permute.xlu0 %7733
  %7735 = vrot.lane.b32.xlu0 %v7595, 32
  %v7736 = vpop.permute.xlu0 %7735
  %7737 = vrot.lane.b32.xlu0 %v7596, 32
  %v7738 = vpop.permute.xlu0 %7737
  %7739 = vrot.lane.b32.xlu0 %v7597, 32
  %v7740 = vpop.permute.xlu0 %7739
  %7741 = vrot.lane.b32.xlu0 %v7598, 32
  %v7742 = vpop.permute.xlu0 %7741
  %7743 = vrot.lane.b32.xlu0 %v7599, 32
  %v7744 = vpop.permute.xlu0 %7743
  %7745 = vrot.lane.b32.xlu0 %v7600, 32
  %v7746 = vpop.permute.xlu0 %7745
  %7747 = vrot.lane.b32.xlu0 %v7601, 32
  %v7748 = vpop.permute.xlu0 %7747
  %7749 = vrot.lane.b32.xlu0 %v7602, 32
  %v7750 = vpop.permute.xlu0 %7749
  %7751 = vrot.lane.b32.xlu0 %v7603, 32
  %v7752 = vpop.permute.xlu0 %7751
  %7753 = vrot.lane.b32.xlu0 %v7604, 32
  %v7754 = vpop.permute.xlu0 %7753
  %7755 = vrot.lane.b32.xlu0 %v7605, 32
  %v7756 = vpop.permute.xlu0 %7755
  %7757 = vrot.lane.b32.xlu0 %v7606, 32
  %v7758 = vpop.permute.xlu0 %7757
  %7759 = vrot.lane.b32.xlu0 %v7607, 32
  %v7760 = vpop.permute.xlu0 %7759
  %7761 = vrot.lane.b32.xlu0 %v7608, 32
  %v7762 = vpop.permute.xlu0 %7761
  %7763 = vrot.lane.b32.xlu0 %v7609, 32
  %v7764 = vpop.permute.xlu0 %7763
  %7765 = vrot.lane.b32.xlu0 %v7610, 32
  %v7766 = vpop.permute.xlu0 %7765
  %7767 = vrot.lane.b32.xlu0 %v7611, 32
  %v7768 = vpop.permute.xlu0 %7767
  %7769 = vrot.lane.b32.xlu0 %v7612, 32
  %v7770 = vpop.permute.xlu0 %7769
  %7771 = vrot.lane.b32.xlu0 %v7613, 32
  %v7772 = vpop.permute.xlu0 %7771
  %7773 = vrot.lane.b32.xlu0 %v7614, 32
  %v7774 = vpop.permute.xlu0 %7773
  %7775 = vrot.lane.b32.xlu0 %v7615, 32
  %v7776 = vpop.permute.xlu0 %7775
  %7777 = vrot.lane.b32.xlu0 %v7616, 32
  %v7778 = vpop.permute.xlu0 %7777
  %7779 = vrot.lane.b32.xlu0 %v7617, 32
  %v7780 = vpop.permute.xlu0 %7779
  %7781 = vrot.lane.b32.xlu0 %v7618, 32
  %v7782 = vpop.permute.xlu0 %7781
  %7783 = vrot.lane.b32.xlu0 %v7619, 32
  %v7784 = vpop.permute.xlu0 %7783
  %7785 = vrot.lane.b32.xlu0 %v7620, 32
  %v7786 = vpop.permute.xlu0 %7785
  %7787 = vrot.lane.b32.xlu0 %v7621, 32
  %v7788 = vpop.permute.xlu0 %7787
  %7789 = vrot.lane.b32.xlu0 %v7622, 32
  %v7790 = vpop.permute.xlu0 %7789
  %7791 = vrot.lane.b32.xlu0 %v7623, 32
  %v7792 = vpop.permute.xlu0 %7791
  %7793 = vrot.lane.b32.xlu0 %v7624, 32
  %v7794 = vpop.permute.xlu0 %7793
  %7795 = vrot.lane.b32.xlu0 %v7625, 32
  %v7796 = vpop.permute.xlu0 %7795
  %7797 = vrot.lane.b32.xlu0 %v7626, 32
  %v7798 = vpop.permute.xlu0 %7797
  %7799 = vrot.lane.b32.xlu0 %v7627, 32
  %v7800 = vpop.permute.xlu0 %7799
  %7801 = vrot.lane.b32.xlu0 %v7628, 32
  %v7802 = vpop.permute.xlu0 %7801
  %7803 = vrot.lane.b32.xlu0 %v7629, 32
  %v7804 = vpop.permute.xlu0 %7803
  %7805 = vrot.lane.b32.xlu0 %v7630, 32
  %v7806 = vpop.permute.xlu0 %7805
  %7807 = vrot.lane.b32.xlu0 %v7631, 32
  %v7808 = vpop.permute.xlu0 %7807
  %7809 = vrot.lane.b32.xlu0 %v7632, 32
  %v7810 = vpop.permute.xlu0 %7809
  %7811 = vrot.lane.b32.xlu0 %v7633, 32
  %v7812 = vpop.permute.xlu0 %7811
  %7813 = vrot.lane.b32.xlu0 %v7634, 32
  %v7814 = vpop.permute.xlu0 %7813
  %7815 = vrot.lane.b32.xlu0 %v7635, 32
  %v7816 = vpop.permute.xlu0 %7815
  %7817 = vrot.lane.b32.xlu0 %v7636, 32
  %v7818 = vpop.permute.xlu0 %7817
  %7819 = vrot.lane.b32.xlu0 %v7637, 32
  %v7820 = vpop.permute.xlu0 %7819
  %7821 = vrot.lane.b32.xlu0 %v7638, 32
  %v7822 = vpop.permute.xlu0 %7821
  %7823 = vrot.lane.b32.xlu0 %v7639, 32
  %v7824 = vpop.permute.xlu0 %7823
  %7825 = vrot.lane.b32.xlu0 %v7640, 32
  %v7826 = vpop.permute.xlu0 %7825
  %7827 = vrot.lane.b32.xlu0 %v7641, 32
  %v7828 = vpop.permute.xlu0 %7827
  %7829 = vrot.lane.b32.xlu0 %v7642, 32
  %v7830 = vpop.permute.xlu0 %7829
  %7831 = vrot.lane.b32.xlu0 %v7643, 32
  %v7832 = vpop.permute.xlu0 %7831
  %7833 = vrot.lane.b32.xlu0 %v7644, 32
  %v7834 = vpop.permute.xlu0 %7833
  %7835 = vrot.lane.b32.xlu0 %v7645, 32
  %v7836 = vpop.permute.xlu0 %7835
  %7837 = vrot.lane.b32.xlu0 %v7646, 32
  %v7838 = vpop.permute.xlu0 %7837
  %7903 = vst.msk [vmem:[#allocation3] sm:$0xff] %vm3379, %v7712
  %7904 = vst.msk [vmem:[#allocation3 + $0x8] sm:$0xff] %vm3379, %v7714
  %7905 = vst.msk [vmem:[#allocation3 + $0x10] sm:$0xff] %vm3379, %v7716
  %7906 = vst.msk [vmem:[#allocation3 + $0x18] sm:$0xff] %vm3379, %v7718
  %7907 = vst.msk [vmem:[#allocation3 + $0x20] sm:$0xff] %vm3379, %v7720
  %7908 = vst.msk [vmem:[#allocation3 + $0x28] sm:$0xff] %vm3379, %v7722
  %7909 = vst.msk [vmem:[#allocation3 + $0x30] sm:$0xff] %vm3379, %v7724
  %7910 = vst.msk [vmem:[#allocation3 + $0x38] sm:$0xff] %vm3379, %v7726
  %7911 = vst.msk [vmem:[#allocation3 + $0x40] sm:$0xff] %vm3379, %v7728
  %7912 = vst.msk [vmem:[#allocation3 + $0x48] sm:$0xff] %vm3379, %v7730
  %7913 = vst.msk [vmem:[#allocation3 + $0x50] sm:$0xff] %vm3379, %v7732
  %7914 = vst.msk [vmem:[#allocation3 + $0x58] sm:$0xff] %vm3379, %v7734
  %7915 = vst.msk [vmem:[#allocation3 + $0x60] sm:$0xff] %vm3379, %v7736
  %7916 = vst.msk [vmem:[#allocation3 + $0x68] sm:$0xff] %vm3379, %v7738
  %7917 = vst.msk [vmem:[#allocation3 + $0x70] sm:$0xff] %vm3379, %v7740
  %7918 = vst.msk [vmem:[#allocation3 + $0x78] sm:$0xff] %vm3379, %v7742
  %7919 = vst.msk [vmem:[#allocation3 + $0x80] sm:$0xff] %vm3379, %v7744
  %7920 = vst.msk [vmem:[#allocation3 + $0x88] sm:$0xff] %vm3379, %v7746
  %7921 = vst.msk [vmem:[#allocation3 + $0x90] sm:$0xff] %vm3379, %v7748
  %7922 = vst.msk [vmem:[#allocation3 + $0x98] sm:$0xff] %vm3379, %v7750
  %7923 = vst.msk [vmem:[#allocation3 + $0xa0] sm:$0xff] %vm3379, %v7752
  %7924 = vst.msk [vmem:[#allocation3 + $0xa8] sm:$0xff] %vm3379, %v7754
  %7925 = vst.msk [vmem:[#allocation3 + $0xb0] sm:$0xff] %vm3379, %v7756
  %7926 = vst.msk [vmem:[#allocation3 + $0xb8] sm:$0xff] %vm3379, %v7758
  %7927 = vst.msk [vmem:[#allocation3 + $0xc0] sm:$0xff] %vm3379, %v7760
  %7928 = vst.msk [vmem:[#allocation3 + $0xc8] sm:$0xff] %vm3379, %v7762
  %7929 = vst.msk [vmem:[#allocation3 + $0xd0] sm:$0xff] %vm3379, %v7764
  %7930 = vst.msk [vmem:[#allocation3 + $0xd8] sm:$0xff] %vm3379, %v7766
  %7931 = vst.msk [vmem:[#allocation3 + $0xe0] sm:$0xff] %vm3379, %v7768
  %7932 = vst.msk [vmem:[#allocation3 + $0xe8] sm:$0xff] %vm3379, %v7770
  %7933 = vst.msk [vmem:[#allocation3 + $0xf0] sm:$0xff] %vm3379, %v7772
  %7934 = vst.msk [vmem:[#allocation3 + $0xf8] sm:$0xff] %vm3379, %v7774
  %7935 = vst.msk [vmem:[#allocation3 + $0x100] sm:$0xff] %vm3379, %v7776
  %7936 = vst.msk [vmem:[#allocation3 + $0x108] sm:$0xff] %vm3379, %v7778
  %7937 = vst.msk [vmem:[#allocation3 + $0x110] sm:$0xff] %vm3379, %v7780
  %7938 = vst.msk [vmem:[#allocation3 + $0x118] sm:$0xff] %vm3379, %v7782
  %7939 = vst.msk [vmem:[#allocation3 + $0x120] sm:$0xff] %vm3379, %v7784
  %7940 = vst.msk [vmem:[#allocation3 + $0x128] sm:$0xff] %vm3379, %v7786
  %7941 = vst.msk [vmem:[#allocation3 + $0x130] sm:$0xff] %vm3379, %v7788
  %7942 = vst.msk [vmem:[#allocation3 + $0x138] sm:$0xff] %vm3379, %v7790
  %7943 = vst.msk [vmem:[#allocation3 + $0x140] sm:$0xff] %vm3379, %v7792
  %7944 = vst.msk [vmem:[#allocation3 + $0x148] sm:$0xff] %vm3379, %v7794
  %7945 = vst.msk [vmem:[#allocation3 + $0x150] sm:$0xff] %vm3379, %v7796
  %7946 = vst.msk [vmem:[#allocation3 + $0x158] sm:$0xff] %vm3379, %v7798
  %7947 = vst.msk [vmem:[#allocation3 + $0x160] sm:$0xff] %vm3379, %v7800
  %7948 = vst.msk [vmem:[#allocation3 + $0x168] sm:$0xff] %vm3379, %v7802
  %7949 = vst.msk [vmem:[#allocation3 + $0x170] sm:$0xff] %vm3379, %v7804
  %7950 = vst.msk [vmem:[#allocation3 + $0x178] sm:$0xff] %vm3379, %v7806
  %7951 = vst.msk [vmem:[#allocation3 + $0x180] sm:$0xff] %vm3379, %v7808
  %7952 = vst.msk [vmem:[#allocation3 + $0x188] sm:$0xff] %vm3379, %v7810
  %7953 = vst.msk [vmem:[#allocation3 + $0x190] sm:$0xff] %vm3379, %v7812
  %7954 = vst.msk [vmem:[#allocation3 + $0x198] sm:$0xff] %vm3379, %v7814
  %7955 = vst.msk [vmem:[#allocation3 + $0x1a0] sm:$0xff] %vm3379, %v7816
  %7956 = vst.msk [vmem:[#allocation3 + $0x1a8] sm:$0xff] %vm3379, %v7818
  %7957 = vst.msk [vmem:[#allocation3 + $0x1b0] sm:$0xff] %vm3379, %v7820
  %7958 = vst.msk [vmem:[#allocation3 + $0x1b8] sm:$0xff] %vm3379, %v7822
  %7959 = vst.msk [vmem:[#allocation3 + $0x1c0] sm:$0xff] %vm3379, %v7824
  %7960 = vst.msk [vmem:[#allocation3 + $0x1c8] sm:$0xff] %vm3379, %v7826
  %7961 = vst.msk [vmem:[#allocation3 + $0x1d0] sm:$0xff] %vm3379, %v7828
  %7962 = vst.msk [vmem:[#allocation3 + $0x1d8] sm:$0xff] %vm3379, %v7830
  %7963 = vst.msk [vmem:[#allocation3 + $0x1e0] sm:$0xff] %vm3379, %v7832
  %7964 = vst.msk [vmem:[#allocation3 + $0x1e8] sm:$0xff] %vm3379, %v7834
  %7965 = vst.msk [vmem:[#allocation3 + $0x1f0] sm:$0xff] %vm3379, %v7836
  %7966 = vst.msk [vmem:[#allocation3 + $0x1f8] sm:$0xff] %vm3379, %v7838
  %v7967 = vld [vmem:[#allocation3] sm:$0xff]
  %v7968 = vld [vmem:[#allocation3 + $0x8] sm:$0xff]
  %v7969 = vld [vmem:[#allocation3 + $0x10] sm:$0xff]
  %v7970 = vld [vmem:[#allocation3 + $0x18] sm:$0xff]
  %v7971 = vld [vmem:[#allocation3 + $0x20] sm:$0xff]
  %v7972 = vld [vmem:[#allocation3 + $0x28] sm:$0xff]
  %v7973 = vld [vmem:[#allocation3 + $0x30] sm:$0xff]
  %v7974 = vld [vmem:[#allocation3 + $0x38] sm:$0xff]
  %v7975 = vld [vmem:[#allocation3 + $0x40] sm:$0xff]
  %v7976 = vld [vmem:[#allocation3 + $0x48] sm:$0xff]
  %v7977 = vld [vmem:[#allocation3 + $0x50] sm:$0xff]
  %v7978 = vld [vmem:[#allocation3 + $0x58] sm:$0xff]
  %v7979 = vld [vmem:[#allocation3 + $0x60] sm:$0xff]
  %v7980 = vld [vmem:[#allocation3 + $0x68] sm:$0xff]
  %v7981 = vld [vmem:[#allocation3 + $0x70] sm:$0xff]
  %v7982 = vld [vmem:[#allocation3 + $0x78] sm:$0xff]
  %v7983 = vld [vmem:[#allocation3 + $0x80] sm:$0xff]
  %v7984 = vld [vmem:[#allocation3 + $0x88] sm:$0xff]
  %v7985 = vld [vmem:[#allocation3 + $0x90] sm:$0xff]
  %v7986 = vld [vmem:[#allocation3 + $0x98] sm:$0xff]
  %v7987 = vld [vmem:[#allocation3 + $0xa0] sm:$0xff]
  %v7988 = vld [vmem:[#allocation3 + $0xa8] sm:$0xff]
  %v7989 = vld [vmem:[#allocation3 + $0xb0] sm:$0xff]
  %v7990 = vld [vmem:[#allocation3 + $0xb8] sm:$0xff]
  %v7991 = vld [vmem:[#allocation3 + $0xc0] sm:$0xff]
  %v7992 = vld [vmem:[#allocation3 + $0xc8] sm:$0xff]
  %v7993 = vld [vmem:[#allocation3 + $0xd0] sm:$0xff]
  %v7994 = vld [vmem:[#allocation3 + $0xd8] sm:$0xff]
  %v7995 = vld [vmem:[#allocation3 + $0xe0] sm:$0xff]
  %v7996 = vld [vmem:[#allocation3 + $0xe8] sm:$0xff]
  %v7997 = vld [vmem:[#allocation3 + $0xf0] sm:$0xff]
  %v7998 = vld [vmem:[#allocation3 + $0xf8] sm:$0xff]
  %v7999 = vld [vmem:[#allocation3 + $0x100] sm:$0xff]
  %v8000 = vld [vmem:[#allocation3 + $0x108] sm:$0xff]
  %v8001 = vld [vmem:[#allocation3 + $0x110] sm:$0xff]
  %v8002 = vld [vmem:[#allocation3 + $0x118] sm:$0xff]
  %v8003 = vld [vmem:[#allocation3 + $0x120] sm:$0xff]
  %v8004 = vld [vmem:[#allocation3 + $0x128] sm:$0xff]
  %v8005 = vld [vmem:[#allocation3 + $0x130] sm:$0xff]
  %v8006 = vld [vmem:[#allocation3 + $0x138] sm:$0xff]
  %v8007 = vld [vmem:[#allocation3 + $0x140] sm:$0xff]
  %v8008 = vld [vmem:[#allocation3 + $0x148] sm:$0xff]
  %v8009 = vld [vmem:[#allocation3 + $0x150] sm:$0xff]
  %v8010 = vld [vmem:[#allocation3 + $0x158] sm:$0xff]
  %v8011 = vld [vmem:[#allocation3 + $0x160] sm:$0xff]
  %v8012 = vld [vmem:[#allocation3 + $0x168] sm:$0xff]
  %v8013 = vld [vmem:[#allocation3 + $0x170] sm:$0xff]
  %v8014 = vld [vmem:[#allocation3 + $0x178] sm:$0xff]
  %v8015 = vld [vmem:[#allocation3 + $0x180] sm:$0xff]
  %v8016 = vld [vmem:[#allocation3 + $0x188] sm:$0xff]
  %v8017 = vld [vmem:[#allocation3 + $0x190] sm:$0xff]
  %v8018 = vld [vmem:[#allocation3 + $0x198] sm:$0xff]
  %v8019 = vld [vmem:[#allocation3 + $0x1a0] sm:$0xff]
  %v8020 = vld [vmem:[#allocation3 + $0x1a8] sm:$0xff]
  %v8021 = vld [vmem:[#allocation3 + $0x1b0] sm:$0xff]
  %v8022 = vld [vmem:[#allocation3 + $0x1b8] sm:$0xff]
  %v8023 = vld [vmem:[#allocation3 + $0x1c0] sm:$0xff]
  %v8024 = vld [vmem:[#allocation3 + $0x1c8] sm:$0xff]
  %v8025 = vld [vmem:[#allocation3 + $0x1d0] sm:$0xff]
  %v8026 = vld [vmem:[#allocation3 + $0x1d8] sm:$0xff]
  %v8027 = vld [vmem:[#allocation3 + $0x1e0] sm:$0xff]
  %v8028 = vld [vmem:[#allocation3 + $0x1e8] sm:$0xff]
  %v8029 = vld [vmem:[#allocation3 + $0x1f0] sm:$0xff]
  %v8030 = vld [vmem:[#allocation3 + $0x1f8] sm:$0xff]
  %v8031 = vld [vmem:[%s2] sm:$0xff]
  %v8032 = vld [vmem:[%s2 + $0x8] sm:$0xff]
  %v8033 = vld [vmem:[%s2 + $0x10] sm:$0xff]
  %v8034 = vld [vmem:[%s2 + $0x18] sm:$0xff]
  %v8035 = vld [vmem:[%s2 + $0x20] sm:$0xf]
  %v8037 = vsel %vm3513, %v7967, 0
  %v8040 = vsel %vm3513, %v7968, 0
  %v8043 = vsel %vm3513, %v7969, 0
  %v8046 = vsel %vm3513, %v7970, 0
  %v8049 = vsel %vm3513, %v7971, 0
  %v8052 = vsel %vm3513, %v7972, 0
  %v8055 = vsel %vm3513, %v7973, 0
  %v8058 = vsel %vm3513, %v7974, 0
  %v8061 = vsel %vm3513, %v7975, 0
  %v8064 = vsel %vm3513, %v7976, 0
  %v8067 = vsel %vm3513, %v7977, 0
  %v8070 = vsel %vm3513, %v7978, 0
  %v8073 = vsel %vm3513, %v7979, 0
  %v8076 = vsel %vm3513, %v7980, 0
  %v8079 = vsel %vm3513, %v7981, 0
  %v8082 = vsel %vm3513, %v7982, 0
  %v8085 = vsel %vm3513, %v7983, 0
  %v8088 = vsel %vm3513, %v7984, 0
  %v8091 = vsel %vm3513, %v7985, 0
  %v8094 = vsel %vm3513, %v7986, 0
  %v8097 = vsel %vm3513, %v7987, 0
  %v8100 = vsel %vm3513, %v7988, 0
  %v8103 = vsel %vm3513, %v7989, 0
  %v8106 = vsel %vm3513, %v7990, 0
  %v8109 = vsel %vm3513, %v7991, 0
  %v8112 = vsel %vm3513, %v7992, 0
  %v8115 = vsel %vm3513, %v7993, 0
  %v8118 = vsel %vm3513, %v7994, 0
  %v8121 = vsel %vm3513, %v7995, 0
  %v8124 = vsel %vm3513, %v7996, 0
  %v8127 = vsel %vm3513, %v7997, 0
  %v8130 = vsel %vm3513, %v7998, 0
  %v8133 = vsel %vm3513, %v7999, 0
  %v8136 = vsel %vm3513, %v8000, 0
  %v8139 = vsel %vm3513, %v8001, 0
  %v8142 = vsel %vm3513, %v8002, 0
  %v8145 = vsel %vm3513, %v8003, 0
  %v8148 = vsel %vm3513, %v8004, 0
  %v8151 = vsel %vm3513, %v8005, 0
  %v8154 = vsel %vm3513, %v8006, 0
  %v8157 = vsel %vm3513, %v8007, 0
  %v8160 = vsel %vm3513, %v8008, 0
  %v8163 = vsel %vm3513, %v8009, 0
  %v8166 = vsel %vm3513, %v8010, 0
  %v8169 = vsel %vm3513, %v8011, 0
  %v8172 = vsel %vm3513, %v8012, 0
  %v8175 = vsel %vm3513, %v8013, 0
  %v8178 = vsel %vm3513, %v8014, 0
  %v8181 = vsel %vm3513, %v8015, 0
  %v8184 = vsel %vm3513, %v8016, 0
  %v8187 = vsel %vm3513, %v8017, 0
  %v8190 = vsel %vm3513, %v8018, 0
  %v8193 = vsel %vm3513, %v8019, 0
  %v8196 = vsel %vm3513, %v8020, 0
  %v8199 = vsel %vm3513, %v8021, 0
  %v8202 = vsel %vm3513, %v8022, 0
  %v8205 = vsel %vm3513, %v8023, 0
  %v8208 = vsel %vm3513, %v8024, 0
  %v8211 = vsel %vm3513, %v8025, 0
  %v8214 = vsel %vm3513, %v8026, 0
  %v8217 = vsel %vm3513, %v8027, 0
  %v8220 = vsel %vm3513, %v8028, 0
  %v8223 = vsel %vm3513, %v8029, 0
  %v8226 = vsel %vm3513, %v8030, 0
  %v8229 = vsel %vm3706, %v8035, 0
  %8231 = vmatprep.subr.mxu0 0.0
  %8232 = vmatpush1.msra.mxu0 %v8031
  %8233 = vmatprep.subr.mxu0 0.0
  %8234 = vmatpush1.msra.mxu0 %v8032
  %8235 = vmatprep.subr.mxu0 0.0
  %8236 = vmatpush1.msra.mxu0 %v8033
  %8237 = vmatprep.subr.mxu0 0.0
  %8238 = vmatpush1.msra.mxu0 %v8034
  %8239 = vmatprep.subr.mxu0 0.0
  %8240 = vmatpush1.msra.mxu0 %v8229
  %8241 = vmatprep.subr.mxu0 0.0
  %8242 = vmatpush1.msra.mxu0 0.0
  %8243 = vmatprep.subr.mxu0 0.0
  %8244 = vmatpush1.msra.mxu0 0.0
  %8245 = vmatprep.subr.mxu0 0.0
  %8246 = vmatpush1.msra.mxu0 0.0
  %8247 = vmatprep.subr.mxu0 0.0
  %8248 = vmatpush1.msra.mxu0 0.0
  %8249 = vmatprep.subr.mxu0 0.0
  %8250 = vmatpush1.msra.mxu0 0.0
  %8251 = vmatprep.subr.mxu0 0.0
  %8252 = vmatpush1.msra.mxu0 0.0
  %8253 = vmatprep.subr.mxu0 0.0
  %8254 = vmatpush1.msra.mxu0 0.0
  %8255 = vmatprep.subr.mxu0 0.0
  %8256 = vmatpush1.msra.mxu0 0.0
  %8257 = vmatprep.subr.mxu0 0.0
  %8258 = vmatpush1.msra.mxu0 0.0
  %8259 = vmatprep.subr.mxu0 0.0
  %8260 = vmatpush1.msra.mxu0 0.0
  %8261 = vmatprep.subr.mxu0 0.0
  %8262 = vmatpush1.msra.mxu0 0.0
  %8263 = vmatprep.subr.mxu0 0.0
  %8264 = vmatpush1.msra.mxu0 0.0
  %8265 = vmatprep.subr.mxu0 0.0
  %8266 = vmatpush1.msra.mxu0 0.0
  %8267 = vmatprep.subr.mxu0 0.0
  %8268 = vmatpush1.msra.mxu0 0.0
  %8269 = vmatprep.subr.mxu0 0.0
  %8270 = vmatpush1.msra.mxu0 0.0
  %8271 = vmatprep.subr.mxu0 0.0
  %8272 = vmatpush1.msra.mxu0 0.0
  %8273 = vmatprep.subr.mxu0 0.0
  %8274 = vmatpush1.msra.mxu0 0.0
  %8275 = vmatprep.subr.mxu0 0.0
  %8276 = vmatpush1.msra.mxu0 0.0
  %8277 = vmatprep.subr.mxu0 0.0
  %8278 = vmatpush1.msra.mxu0 0.0
  %8279 = vmatprep.subr.mxu0 0.0
  %8280 = vmatpush1.msra.mxu0 0.0
  %8281 = vmatprep.subr.mxu0 0.0
  %8282 = vmatpush1.msra.mxu0 0.0
  %8283 = vmatprep.subr.mxu0 0.0
  %8284 = vmatpush1.msra.mxu0 0.0
  %8285 = vmatprep.subr.mxu0 0.0
  %8286 = vmatpush1.msra.mxu0 0.0
  %8287 = vmatprep.subr.mxu0 0.0
  %8288 = vmatpush1.msra.mxu0 0.0
  %8289 = vmatprep.subr.mxu0 0.0
  %8290 = vmatpush1.msra.mxu0 0.0
  %8291 = vmatprep.subr.mxu0 0.0
  %8292 = vmatpush1.msra.mxu0 0.0
  %8293 = vmatprep.subr.mxu0 0.0
  %8294 = vmatpush1.msra.mxu0 0.0
  %8295 = vmatprep.mubr.f32.mxu0 0.0
  %8296 = vmatmul.mubr.f32.gmra.mrb[0].mxu0 %v8037
  %v8297 = vpop.f32.mrb[0].mxu0
  %v8298 = vadd.f32 0.0, %v8297
  %v8299 = vpop.f32.mrb[0].mxu0
  %8300 = vmatprep.mubr.f32.mxu0 0.0
  %8301 = vmatmul.mubr.f32.gmra.mrb[0].mxu0 %v8040
  %v8302 = vpop.f32.mrb[0].mxu0
  %v8303 = vadd.f32 0.0, %v8302
  %v8304 = vpop.f32.mrb[0].mxu0
  %8305 = vmatprep.mubr.f32.mxu0 0.0
  %8306 = vmatmul.mubr.f32.gmra.mrb[0].mxu0 %v8043
  %v8307 = vpop.f32.mrb[0].mxu0
  %v8308 = vadd.f32 0.0, %v8307
  %v8309 = vpop.f32.mrb[0].mxu0
  %8310 = vmatprep.mubr.f32.mxu0 0.0
  %8311 = vmatmul.mubr.f32.gmra.mrb[0].mxu0 %v8046
  %v8312 = vpop.f32.mrb[0].mxu0
  %v8313 = vadd.f32 0.0, %v8312
  %v8314 = vpop.f32.mrb[0].mxu0
  %8315 = vmatprep.mubr.f32.mxu0 0.0
  %8316 = vmatmul.mubr.f32.gmra.mrb[0].mxu0 %v8049
  %v8317 = vpop.f32.mrb[0].mxu0
  %v8318 = vadd.f32 0.0, %v8317
  %v8319 = vpop.f32.mrb[0].mxu0
  %8320 = vmatprep.mubr.f32.mxu0 0.0
  %8321 = vmatmul.mubr.f32.gmra.mrb[0].mxu0 %v8052
  %v8322 = vpop.f32.mrb[0].mxu0
  %v8323 = vadd.f32 0.0, %v8322
  %v8324 = vpop.f32.mrb[0].mxu0
  %8325 = vmatprep.mubr.f32.mxu0 0.0
  %8326 = vmatmul.mubr.f32.gmra.mrb[0].mxu0 %v8055
  %v8327 = vpop.f32.mrb[0].mxu0
  %v8328 = vadd.f32 0.0, %v8327
  %v8329 = vpop.f32.mrb[0].mxu0
  %8330 = vmatprep.mubr.f32.mxu0 0.0
  %8331 = vmatmul.mubr.f32.gmra.mrb[0].mxu0 %v8058
  %v8332 = vpop.f32.mrb[0].mxu0
  %v8333 = vadd.f32 0.0, %v8332
  %v8334 = vpop.f32.mrb[0].mxu0
  %8335 = vmatprep.mubr.f32.mxu0 0.0
  %8336 = vmatmul.mubr.f32.gmra.mrb[0].mxu0 %v8061
  %v8337 = vpop.f32.mrb[0].mxu0
  %v8338 = vadd.f32 0.0, %v8337
  %v8339 = vpop.f32.mrb[0].mxu0
  %8340 = vmatprep.mubr.f32.mxu0 0.0
  %8341 = vmatmul.mubr.f32.gmra.mrb[0].mxu0 %v8064
  %v8342 = vpop.f32.mrb[0].mxu0
  %v8343 = vadd.f32 0.0, %v8342
  %v8344 = vpop.f32.mrb[0].mxu0
  %8345 = vmatprep.mubr.f32.mxu0 0.0
  %8346 = vmatmul.mubr.f32.gmra.mrb[0].mxu0 %v8067
  %v8347 = vpop.f32.mrb[0].mxu0
  %v8348 = vadd.f32 0.0, %v8347
  %v8349 = vpop.f32.mrb[0].mxu0
  %8350 = vmatprep.mubr.f32.mxu0 0.0
  %8351 = vmatmul.mubr.f32.gmra.mrb[0].mxu0 %v8070
  %v8352 = vpop.f32.mrb[0].mxu0
  %v8353 = vadd.f32 0.0, %v8352
  %v8354 = vpop.f32.mrb[0].mxu0
  %8355 = vmatprep.mubr.f32.mxu0 0.0
  %8356 = vmatmul.mubr.f32.gmra.mrb[0].mxu0 %v8073
  %v8357 = vpop.f32.mrb[0].mxu0
  %v8358 = vadd.f32 0.0, %v8357
  %v8359 = vpop.f32.mrb[0].mxu0
  %8360 = vmatprep.mubr.f32.mxu0 0.0
  %8361 = vmatmul.mubr.f32.gmra.mrb[0].mxu0 %v8076
  %v8362 = vpop.f32.mrb[0].mxu0
  %v8363 = vadd.f32 0.0, %v8362
  %v8364 = vpop.f32.mrb[0].mxu0
  %8365 = vmatprep.mubr.f32.mxu0 0.0
  %8366 = vmatmul.mubr.f32.gmra.mrb[0].mxu0 %v8079
  %v8367 = vpop.f32.mrb[0].mxu0
  %v8368 = vadd.f32 0.0, %v8367
  %v8369 = vpop.f32.mrb[0].mxu0
  %8370 = vmatprep.mubr.f32.mxu0 0.0
  %8371 = vmatmul.mubr.f32.gmra.mrb[0].mxu0 %v8082
  %v8372 = vpop.f32.mrb[0].mxu0
  %v8373 = vadd.f32 0.0, %v8372
  %v8374 = vpop.f32.mrb[0].mxu0
  %8375 = vmatprep.mubr.f32.mxu0 0.0
  %8376 = vmatmul.mubr.f32.gmra.mrb[0].mxu0 %v8085
  %v8377 = vpop.f32.mrb[0].mxu0
  %v8378 = vadd.f32 0.0, %v8377
  %v8379 = vpop.f32.mrb[0].mxu0
  %8380 = vmatprep.mubr.f32.mxu0 0.0
  %8381 = vmatmul.mubr.f32.gmra.mrb[0].mxu0 %v8088
  %v8382 = vpop.f32.mrb[0].mxu0
  %v8383 = vadd.f32 0.0, %v8382
  %v8384 = vpop.f32.mrb[0].mxu0
  %8385 = vmatprep.mubr.f32.mxu0 0.0
  %8386 = vmatmul.mubr.f32.gmra.mrb[0].mxu0 %v8091
  %v8387 = vpop.f32.mrb[0].mxu0
  %v8388 = vadd.f32 0.0, %v8387
  %v8389 = vpop.f32.mrb[0].mxu0
  %8390 = vmatprep.mubr.f32.mxu0 0.0
  %8391 = vmatmul.mubr.f32.gmra.mrb[0].mxu0 %v8094
  %v8392 = vpop.f32.mrb[0].mxu0
  %v8393 = vadd.f32 0.0, %v8392
  %v8394 = vpop.f32.mrb[0].mxu0
  %8395 = vmatprep.mubr.f32.mxu0 0.0
  %8396 = vmatmul.mubr.f32.gmra.mrb[0].mxu0 %v8097
  %v8397 = vpop.f32.mrb[0].mxu0
  %v8398 = vadd.f32 0.0, %v8397
  %v8399 = vpop.f32.mrb[0].mxu0
  %8400 = vmatprep.mubr.f32.mxu0 0.0
  %8401 = vmatmul.mubr.f32.gmra.mrb[0].mxu0 %v8100
  %v8402 = vpop.f32.mrb[0].mxu0
  %v8403 = vadd.f32 0.0, %v8402
  %v8404 = vpop.f32.mrb[0].mxu0
  %8405 = vmatprep.mubr.f32.mxu0 0.0
  %8406 = vmatmul.mubr.f32.gmra.mrb[0].mxu0 %v8103
  %v8407 = vpop.f32.mrb[0].mxu0
  %v8408 = vadd.f32 0.0, %v8407
  %v8409 = vpop.f32.mrb[0].mxu0
  %8410 = vmatprep.mubr.f32.mxu0 0.0
  %8411 = vmatmul.mubr.f32.gmra.mrb[0].mxu0 %v8106
  %v8412 = vpop.f32.mrb[0].mxu0
  %v8413 = vadd.f32 0.0, %v8412
  %v8414 = vpop.f32.mrb[0].mxu0
  %8415 = vmatprep.mubr.f32.mxu0 0.0
  %8416 = vmatmul.mubr.f32.gmra.mrb[0].mxu0 %v8109
  %v8417 = vpop.f32.mrb[0].mxu0
  %v8418 = vadd.f32 0.0, %v8417
  %v8419 = vpop.f32.mrb[0].mxu0
  %8420 = vmatprep.mubr.f32.mxu0 0.0
  %8421 = vmatmul.mubr.f32.gmra.mrb[0].mxu0 %v8112
  %v8422 = vpop.f32.mrb[0].mxu0
  %v8423 = vadd.f32 0.0, %v8422
  %v8424 = vpop.f32.mrb[0].mxu0
  %8425 = vmatprep.mubr.f32.mxu0 0.0
  %8426 = vmatmul.mubr.f32.gmra.mrb[0].mxu0 %v8115
  %v8427 = vpop.f32.mrb[0].mxu0
  %v8428 = vadd.f32 0.0, %v8427
  %v8429 = vpop.f32.mrb[0].mxu0
  %8430 = vmatprep.mubr.f32.mxu0 0.0
  %8431 = vmatmul.mubr.f32.gmra.mrb[0].mxu0 %v8118
  %v8432 = vpop.f32.mrb[0].mxu0
  %v8433 = vadd.f32 0.0, %v8432
  %v8434 = vpop.f32.mrb[0].mxu0
  %8435 = vmatprep.mubr.f32.mxu0 0.0
  %8436 = vmatmul.mubr.f32.gmra.mrb[0].mxu0 %v8121
  %v8437 = vpop.f32.mrb[0].mxu0
  %v8438 = vadd.f32 0.0, %v8437
  %v8439 = vpop.f32.mrb[0].mxu0
  %8440 = vmatprep.mubr.f32.mxu0 0.0
  %8441 = vmatmul.mubr.f32.gmra.mrb[0].mxu0 %v8124
  %v8442 = vpop.f32.mrb[0].mxu0
  %v8443 = vadd.f32 0.0, %v8442
  %v8444 = vpop.f32.mrb[0].mxu0
  %8445 = vmatprep.mubr.f32.mxu0 0.0
  %8446 = vmatmul.mubr.f32.gmra.mrb[0].mxu0 %v8127
  %v8447 = vpop.f32.mrb[0].mxu0
  %v8448 = vadd.f32 0.0, %v8447
  %v8449 = vpop.f32.mrb[0].mxu0
  %8450 = vmatprep.mubr.f32.mxu0 0.0
  %8451 = vmatmul.mubr.f32.gmra.mrb[0].mxu0 %v8130
  %v8452 = vpop.f32.mrb[0].mxu0
  %v8453 = vadd.f32 0.0, %v8452
  %v8454 = vpop.f32.mrb[0].mxu0
  %8455 = vmatprep.mubr.f32.mxu0 0.0
  %8456 = vmatmul.mubr.f32.gmra.mrb[0].mxu0 %v8133
  %v8457 = vpop.f32.mrb[0].mxu0
  %v8458 = vadd.f32 0.0, %v8457
  %v8459 = vpop.f32.mrb[0].mxu0
  %8460 = vmatprep.mubr.f32.mxu0 0.0
  %8461 = vmatmul.mubr.f32.gmra.mrb[0].mxu0 %v8136
  %v8462 = vpop.f32.mrb[0].mxu0
  %v8463 = vadd.f32 0.0, %v8462
  %v8464 = vpop.f32.mrb[0].mxu0
  %8465 = vmatprep.mubr.f32.mxu0 0.0
  %8466 = vmatmul.mubr.f32.gmra.mrb[0].mxu0 %v8139
  %v8467 = vpop.f32.mrb[0].mxu0
  %v8468 = vadd.f32 0.0, %v8467
  %v8469 = vpop.f32.mrb[0].mxu0
  %8470 = vmatprep.mubr.f32.mxu0 0.0
  %8471 = vmatmul.mubr.f32.gmra.mrb[0].mxu0 %v8142
  %v8472 = vpop.f32.mrb[0].mxu0
  %v8473 = vadd.f32 0.0, %v8472
  %v8474 = vpop.f32.mrb[0].mxu0
  %8475 = vmatprep.mubr.f32.mxu0 0.0
  %8476 = vmatmul.mubr.f32.gmra.mrb[0].mxu0 %v8145
  %v8477 = vpop.f32.mrb[0].mxu0
  %v8478 = vadd.f32 0.0, %v8477
  %v8479 = vpop.f32.mrb[0].mxu0
  %8480 = vmatprep.mubr.f32.mxu0 0.0
  %8481 = vmatmul.mubr.f32.gmra.mrb[0].mxu0 %v8148
  %v8482 = vpop.f32.mrb[0].mxu0
  %v8483 = vadd.f32 0.0, %v8482
  %v8484 = vpop.f32.mrb[0].mxu0
  %8485 = vmatprep.mubr.f32.mxu0 0.0
  %8486 = vmatmul.mubr.f32.gmra.mrb[0].mxu0 %v8151
  %v8487 = vpop.f32.mrb[0].mxu0
  %v8488 = vadd.f32 0.0, %v8487
  %v8489 = vpop.f32.mrb[0].mxu0
  %8490 = vmatprep.mubr.f32.mxu0 0.0
  %8491 = vmatmul.mubr.f32.gmra.mrb[0].mxu0 %v8154
  %v8492 = vpop.f32.mrb[0].mxu0
  %v8493 = vadd.f32 0.0, %v8492
  %v8494 = vpop.f32.mrb[0].mxu0
  %8495 = vmatprep.mubr.f32.mxu0 0.0
  %8496 = vmatmul.mubr.f32.gmra.mrb[0].mxu0 %v8157
  %v8497 = vpop.f32.mrb[0].mxu0
  %v8498 = vadd.f32 0.0, %v8497
  %v8499 = vpop.f32.mrb[0].mxu0
  %8500 = vmatprep.mubr.f32.mxu0 0.0
  %8501 = vmatmul.mubr.f32.gmra.mrb[0].mxu0 %v8160
  %v8502 = vpop.f32.mrb[0].mxu0
  %v8503 = vadd.f32 0.0, %v8502
  %v8504 = vpop.f32.mrb[0].mxu0
  %8505 = vmatprep.mubr.f32.mxu0 0.0
  %8506 = vmatmul.mubr.f32.gmra.mrb[0].mxu0 %v8163
  %v8507 = vpop.f32.mrb[0].mxu0
  %v8508 = vadd.f32 0.0, %v8507
  %v8509 = vpop.f32.mrb[0].mxu0
  %8510 = vmatprep.mubr.f32.mxu0 0.0
  %8511 = vmatmul.mubr.f32.gmra.mrb[0].mxu0 %v8166
  %v8512 = vpop.f32.mrb[0].mxu0
  %v8513 = vadd.f32 0.0, %v8512
  %v8514 = vpop.f32.mrb[0].mxu0
  %8515 = vmatprep.mubr.f32.mxu0 0.0
  %8516 = vmatmul.mubr.f32.gmra.mrb[0].mxu0 %v8169
  %v8517 = vpop.f32.mrb[0].mxu0
  %v8518 = vadd.f32 0.0, %v8517
  %v8519 = vpop.f32.mrb[0].mxu0
  %8520 = vmatprep.mubr.f32.mxu0 0.0
  %8521 = vmatmul.mubr.f32.gmra.mrb[0].mxu0 %v8172
  %v8522 = vpop.f32.mrb[0].mxu0
  %v8523 = vadd.f32 0.0, %v8522
  %v8524 = vpop.f32.mrb[0].mxu0
  %8525 = vmatprep.mubr.f32.mxu0 0.0
  %8526 = vmatmul.mubr.f32.gmra.mrb[0].mxu0 %v8175
  %v8527 = vpop.f32.mrb[0].mxu0
  %v8528 = vadd.f32 0.0, %v8527
  %v8529 = vpop.f32.mrb[0].mxu0
  %8530 = vmatprep.mubr.f32.mxu0 0.0
  %8531 = vmatmul.mubr.f32.gmra.mrb[0].mxu0 %v8178
  %v8532 = vpop.f32.mrb[0].mxu0
  %v8533 = vadd.f32 0.0, %v8532
  %v8534 = vpop.f32.mrb[0].mxu0
  %8535 = vmatprep.mubr.f32.mxu0 0.0
  %8536 = vmatmul.mubr.f32.gmra.mrb[0].mxu0 %v8181
  %v8537 = vpop.f32.mrb[0].mxu0
  %v8538 = vadd.f32 0.0, %v8537
  %v8539 = vpop.f32.mrb[0].mxu0
  %8540 = vmatprep.mubr.f32.mxu0 0.0
  %8541 = vmatmul.mubr.f32.gmra.mrb[0].mxu0 %v8184
  %v8542 = vpop.f32.mrb[0].mxu0
  %v8543 = vadd.f32 0.0, %v8542
  %v8544 = vpop.f32.mrb[0].mxu0
  %8545 = vmatprep.mubr.f32.mxu0 0.0
  %8546 = vmatmul.mubr.f32.gmra.mrb[0].mxu0 %v8187
  %v8547 = vpop.f32.mrb[0].mxu0
  %v8548 = vadd.f32 0.0, %v8547
  %v8549 = vpop.f32.mrb[0].mxu0
  %8550 = vmatprep.mubr.f32.mxu0 0.0
  %8551 = vmatmul.mubr.f32.gmra.mrb[0].mxu0 %v8190
  %v8552 = vpop.f32.mrb[0].mxu0
  %v8553 = vadd.f32 0.0, %v8552
  %v8554 = vpop.f32.mrb[0].mxu0
  %8555 = vmatprep.mubr.f32.mxu0 0.0
  %8556 = vmatmul.mubr.f32.gmra.mrb[0].mxu0 %v8193
  %v8557 = vpop.f32.mrb[0].mxu0
  %v8558 = vadd.f32 0.0, %v8557
  %v8559 = vpop.f32.mrb[0].mxu0
  %8560 = vmatprep.mubr.f32.mxu0 0.0
  %8561 = vmatmul.mubr.f32.gmra.mrb[0].mxu0 %v8196
  %v8562 = vpop.f32.mrb[0].mxu0
  %v8563 = vadd.f32 0.0, %v8562
  %v8564 = vpop.f32.mrb[0].mxu0
  %8565 = vmatprep.mubr.f32.mxu0 0.0
  %8566 = vmatmul.mubr.f32.gmra.mrb[0].mxu0 %v8199
  %v8567 = vpop.f32.mrb[0].mxu0
  %v8568 = vadd.f32 0.0, %v8567
  %v8569 = vpop.f32.mrb[0].mxu0
  %8570 = vmatprep.mubr.f32.mxu0 0.0
  %8571 = vmatmul.mubr.f32.gmra.mrb[0].mxu0 %v8202
  %v8572 = vpop.f32.mrb[0].mxu0
  %v8573 = vadd.f32 0.0, %v8572
  %v8574 = vpop.f32.mrb[0].mxu0
  %8575 = vmatprep.mubr.f32.mxu0 0.0
  %8576 = vmatmul.mubr.f32.gmra.mrb[0].mxu0 %v8205
  %v8577 = vpop.f32.mrb[0].mxu0
  %v8578 = vadd.f32 0.0, %v8577
  %v8579 = vpop.f32.mrb[0].mxu0
  %8580 = vmatprep.mubr.f32.mxu0 0.0
  %8581 = vmatmul.mubr.f32.gmra.mrb[0].mxu0 %v8208
  %v8582 = vpop.f32.mrb[0].mxu0
  %v8583 = vadd.f32 0.0, %v8582
  %v8584 = vpop.f32.mrb[0].mxu0
  %8585 = vmatprep.mubr.f32.mxu0 0.0
  %8586 = vmatmul.mubr.f32.gmra.mrb[0].mxu0 %v8211
  %v8587 = vpop.f32.mrb[0].mxu0
  %v8588 = vadd.f32 0.0, %v8587
  %v8589 = vpop.f32.mrb[0].mxu0
  %8590 = vmatprep.mubr.f32.mxu0 0.0
  %8591 = vmatmul.mubr.f32.gmra.mrb[0].mxu0 %v8214
  %v8592 = vpop.f32.mrb[0].mxu0
  %v8593 = vadd.f32 0.0, %v8592
  %v8594 = vpop.f32.mrb[0].mxu0
  %8595 = vmatprep.mubr.f32.mxu0 0.0
  %8596 = vmatmul.mubr.f32.gmra.mrb[0].mxu0 %v8217
  %v8597 = vpop.f32.mrb[0].mxu0
  %v8598 = vadd.f32 0.0, %v8597
  %v8599 = vpop.f32.mrb[0].mxu0
  %8600 = vmatprep.mubr.f32.mxu0 0.0
  %8601 = vmatmul.mubr.f32.gmra.mrb[0].mxu0 %v8220
  %v8602 = vpop.f32.mrb[0].mxu0
  %v8603 = vadd.f32 0.0, %v8602
  %v8604 = vpop.f32.mrb[0].mxu0
  %8605 = vmatprep.mubr.f32.mxu0 0.0
  %8606 = vmatmul.mubr.f32.gmra.mrb[0].mxu0 %v8223
  %v8607 = vpop.f32.mrb[0].mxu0
  %v8608 = vadd.f32 0.0, %v8607
  %v8609 = vpop.f32.mrb[0].mxu0
  %8610 = vmatprep.mubr.f32.mxu0 0.0
  %8611 = vmatmul.mubr.f32.gmra.mrb[0].mxu0 %v8226
  %v8612 = vpop.f32.mrb[0].mxu0
  %v8613 = vadd.f32 0.0, %v8612
  %v8614 = vpop.f32.mrb[0].mxu0
  %8615 = vdwg.mxu0
  %v8616 = vsel %vm26, %v8298, 0.0
  %v8617 = vsel %vm26, %v8303, 0.0
  %v8618 = vadd.f32 %v8616, %v8617
  %v8619 = vsel %vm26, %v8308, 0.0
  %v8620 = vadd.f32 %v8618, %v8619
  %v8621 = vsel %vm26, %v8313, 0.0
  %v8622 = vadd.f32 %v8620, %v8621
  %v8623 = vsel %vm26, %v8318, 0.0
  %v8624 = vadd.f32 %v8622, %v8623
  %v8625 = vsel %vm26, %v8323, 0.0
  %v8626 = vadd.f32 %v8624, %v8625
  %v8627 = vsel %vm26, %v8328, 0.0
  %v8628 = vadd.f32 %v8626, %v8627
  %v8629 = vsel %vm26, %v8333, 0.0
  %v8630 = vadd.f32 %v8628, %v8629
  %v8631 = vsel %vm26, %v8338, 0.0
  %v8632 = vadd.f32 %v8630, %v8631
  %v8633 = vsel %vm26, %v8343, 0.0
  %v8634 = vadd.f32 %v8632, %v8633
  %v8635 = vsel %vm26, %v8348, 0.0
  %v8636 = vadd.f32 %v8634, %v8635
  %v8637 = vsel %vm26, %v8353, 0.0
  %v8638 = vadd.f32 %v8636, %v8637
  %v8639 = vsel %vm26, %v8358, 0.0
  %v8640 = vadd.f32 %v8638, %v8639
  %v8641 = vsel %vm26, %v8363, 0.0
  %v8642 = vadd.f32 %v8640, %v8641
  %v8643 = vsel %vm26, %v8368, 0.0
  %v8644 = vadd.f32 %v8642, %v8643
  %v8645 = vsel %vm26, %v8373, 0.0
  %v8646 = vadd.f32 %v8644, %v8645
  %v8647 = vsel %vm26, %v8378, 0.0
  %v8648 = vadd.f32 %v8646, %v8647
  %v8649 = vsel %vm26, %v8383, 0.0
  %v8650 = vadd.f32 %v8648, %v8649
  %v8651 = vsel %vm26, %v8388, 0.0
  %v8652 = vadd.f32 %v8650, %v8651
  %v8653 = vsel %vm26, %v8393, 0.0
  %v8654 = vadd.f32 %v8652, %v8653
  %v8655 = vsel %vm26, %v8398, 0.0
  %v8656 = vadd.f32 %v8654, %v8655
  %v8657 = vsel %vm26, %v8403, 0.0
  %v8658 = vadd.f32 %v8656, %v8657
  %v8659 = vsel %vm26, %v8408, 0.0
  %v8660 = vadd.f32 %v8658, %v8659
  %v8661 = vsel %vm26, %v8413, 0.0
  %v8662 = vadd.f32 %v8660, %v8661
  %v8663 = vsel %vm26, %v8418, 0.0
  %v8664 = vadd.f32 %v8662, %v8663
  %v8665 = vsel %vm26, %v8423, 0.0
  %v8666 = vadd.f32 %v8664, %v8665
  %v8667 = vsel %vm26, %v8428, 0.0
  %v8668 = vadd.f32 %v8666, %v8667
  %v8669 = vsel %vm26, %v8433, 0.0
  %v8670 = vadd.f32 %v8668, %v8669
  %v8671 = vsel %vm26, %v8438, 0.0
  %v8672 = vadd.f32 %v8670, %v8671
  %v8673 = vsel %vm26, %v8443, 0.0
  %v8674 = vadd.f32 %v8672, %v8673
  %v8675 = vsel %vm26, %v8448, 0.0
  %v8676 = vadd.f32 %v8674, %v8675
  %v8677 = vsel %vm26, %v8453, 0.0
  %v8678 = vadd.f32 %v8676, %v8677
  %v8679 = vsel %vm26, %v8458, 0.0
  %v8680 = vadd.f32 %v8678, %v8679
  %v8681 = vsel %vm26, %v8463, 0.0
  %v8682 = vadd.f32 %v8680, %v8681
  %v8683 = vsel %vm26, %v8468, 0.0
  %v8684 = vadd.f32 %v8682, %v8683
  %v8685 = vsel %vm26, %v8473, 0.0
  %v8686 = vadd.f32 %v8684, %v8685
  %v8687 = vsel %vm26, %v8478, 0.0
  %v8688 = vadd.f32 %v8686, %v8687
  %v8689 = vsel %vm26, %v8483, 0.0
  %v8690 = vadd.f32 %v8688, %v8689
  %v8691 = vsel %vm26, %v8488, 0.0
  %v8692 = vadd.f32 %v8690, %v8691
  %v8693 = vsel %vm26, %v8493, 0.0
  %v8694 = vadd.f32 %v8692, %v8693
  %v8695 = vsel %vm26, %v8498, 0.0
  %v8696 = vadd.f32 %v8694, %v8695
  %v8697 = vsel %vm26, %v8503, 0.0
  %v8698 = vadd.f32 %v8696, %v8697
  %v8699 = vsel %vm26, %v8508, 0.0
  %v8700 = vadd.f32 %v8698, %v8699
  %v8701 = vsel %vm26, %v8513, 0.0
  %v8702 = vadd.f32 %v8700, %v8701
  %v8703 = vsel %vm26, %v8518, 0.0
  %v8704 = vadd.f32 %v8702, %v8703
  %v8705 = vsel %vm26, %v8523, 0.0
  %v8706 = vadd.f32 %v8704, %v8705
  %v8707 = vsel %vm26, %v8528, 0.0
  %v8708 = vadd.f32 %v8706, %v8707
  %v8709 = vsel %vm26, %v8533, 0.0
  %v8710 = vadd.f32 %v8708, %v8709
  %v8711 = vsel %vm26, %v8538, 0.0
  %v8712 = vadd.f32 %v8710, %v8711
  %v8713 = vsel %vm26, %v8543, 0.0
  %v8714 = vadd.f32 %v8712, %v8713
  %v8715 = vsel %vm26, %v8548, 0.0
  %v8716 = vadd.f32 %v8714, %v8715
  %v8717 = vsel %vm26, %v8553, 0.0
  %v8718 = vadd.f32 %v8716, %v8717
  %v8719 = vsel %vm26, %v8558, 0.0
  %v8720 = vadd.f32 %v8718, %v8719
  %v8721 = vsel %vm26, %v8563, 0.0
  %v8722 = vadd.f32 %v8720, %v8721
  %v8723 = vsel %vm26, %v8568, 0.0
  %v8724 = vadd.f32 %v8722, %v8723
  %v8725 = vsel %vm26, %v8573, 0.0
  %v8726 = vadd.f32 %v8724, %v8725
  %v8727 = vsel %vm26, %v8578, 0.0
  %v8728 = vadd.f32 %v8726, %v8727
  %v8729 = vsel %vm26, %v8583, 0.0
  %v8730 = vadd.f32 %v8728, %v8729
  %v8731 = vsel %vm26, %v8588, 0.0
  %v8732 = vadd.f32 %v8730, %v8731
  %v8733 = vsel %vm26, %v8593, 0.0
  %v8734 = vadd.f32 %v8732, %v8733
  %v8735 = vsel %vm26, %v8598, 0.0
  %v8736 = vadd.f32 %v8734, %v8735
  %v8737 = vsel %vm26, %v8603, 0.0
  %v8738 = vadd.f32 %v8736, %v8737
  %v8739 = vsel %vm26, %v8608, 0.0
  %v8740 = vadd.f32 %v8738, %v8739
  %v8741 = vsel %vm26, %v8613, 0.0
  %v8742 = vadd.f32 %v8740, %v8741
  %v8743 = vrot.slane %v8742, 4
  %v8744 = vadd.f32 %v8742, %v8743
  %v8745 = vrot.slane %v8744, 2
  %v8746 = vadd.f32 %v8744, %v8745
  %v8747 = vrot.slane %v8746, 1
  %v8748 = vadd.f32 %v8746, %v8747
  %v8749 = vmul.f32 %v8748, %v4228
  %v8750 = vsub.f32 %v8298, %v8749
  %v8751 = vsub.f32 %v8303, %v8749
  %v8752 = vsub.f32 %v8308, %v8749
  %v8753 = vsub.f32 %v8313, %v8749
  %v8754 = vsub.f32 %v8318, %v8749
  %v8755 = vsub.f32 %v8323, %v8749
  %v8756 = vsub.f32 %v8328, %v8749
  %v8757 = vsub.f32 %v8333, %v8749
  %v8758 = vsub.f32 %v8338, %v8749
  %v8759 = vsub.f32 %v8343, %v8749
  %v8760 = vsub.f32 %v8348, %v8749
  %v8761 = vsub.f32 %v8353, %v8749
  %v8762 = vsub.f32 %v8358, %v8749
  %v8763 = vsub.f32 %v8363, %v8749
  %v8764 = vsub.f32 %v8368, %v8749
  %v8765 = vsub.f32 %v8373, %v8749
  %v8766 = vsub.f32 %v8378, %v8749
  %v8767 = vsub.f32 %v8383, %v8749
  %v8768 = vsub.f32 %v8388, %v8749
  %v8769 = vsub.f32 %v8393, %v8749
  %v8770 = vsub.f32 %v8398, %v8749
  %v8771 = vsub.f32 %v8403, %v8749
  %v8772 = vsub.f32 %v8408, %v8749
  %v8773 = vsub.f32 %v8413, %v8749
  %v8774 = vsub.f32 %v8418, %v8749
  %v8775 = vsub.f32 %v8423, %v8749
  %v8776 = vsub.f32 %v8428, %v8749
  %v8777 = vsub.f32 %v8433, %v8749
  %v8778 = vsub.f32 %v8438, %v8749
  %v8779 = vsub.f32 %v8443, %v8749
  %v8780 = vsub.f32 %v8448, %v8749
  %v8781 = vsub.f32 %v8453, %v8749
  %v8782 = vsub.f32 %v8458, %v8749
  %v8783 = vsub.f32 %v8463, %v8749
  %v8784 = vsub.f32 %v8468, %v8749
  %v8785 = vsub.f32 %v8473, %v8749
  %v8786 = vsub.f32 %v8478, %v8749
  %v8787 = vsub.f32 %v8483, %v8749
  %v8788 = vsub.f32 %v8488, %v8749
  %v8789 = vsub.f32 %v8493, %v8749
  %v8790 = vsub.f32 %v8498, %v8749
  %v8791 = vsub.f32 %v8503, %v8749
  %v8792 = vsub.f32 %v8508, %v8749
  %v8793 = vsub.f32 %v8513, %v8749
  %v8794 = vsub.f32 %v8518, %v8749
  %v8795 = vsub.f32 %v8523, %v8749
  %v8796 = vsub.f32 %v8528, %v8749
  %v8797 = vsub.f32 %v8533, %v8749
  %v8798 = vsub.f32 %v8538, %v8749
  %v8799 = vsub.f32 %v8543, %v8749
  %v8800 = vsub.f32 %v8548, %v8749
  %v8801 = vsub.f32 %v8553, %v8749
  %v8802 = vsub.f32 %v8558, %v8749
  %v8803 = vsub.f32 %v8563, %v8749
  %v8804 = vsub.f32 %v8568, %v8749
  %v8805 = vsub.f32 %v8573, %v8749
  %v8806 = vsub.f32 %v8578, %v8749
  %v8807 = vsub.f32 %v8583, %v8749
  %v8808 = vsub.f32 %v8588, %v8749
  %v8809 = vsub.f32 %v8593, %v8749
  %v8810 = vsub.f32 %v8598, %v8749
  %v8811 = vsub.f32 %v8603, %v8749
  %v8812 = vsub.f32 %v8608, %v8749
  %v8813 = vsub.f32 %v8613, %v8749
  %v8814 = vmul.f32 %v8750, %v8750
  %v8815 = vmul.f32 %v8751, %v8751
  %v8816 = vmul.f32 %v8752, %v8752
  %v8817 = vmul.f32 %v8753, %v8753
  %v8818 = vmul.f32 %v8754, %v8754
  %v8819 = vmul.f32 %v8755, %v8755
  %v8820 = vmul.f32 %v8756, %v8756
  %v8821 = vmul.f32 %v8757, %v8757
  %v8822 = vmul.f32 %v8758, %v8758
  %v8823 = vmul.f32 %v8759, %v8759
  %v8824 = vmul.f32 %v8760, %v8760
  %v8825 = vmul.f32 %v8761, %v8761
  %v8826 = vmul.f32 %v8762, %v8762
  %v8827 = vmul.f32 %v8763, %v8763
  %v8828 = vmul.f32 %v8764, %v8764
  %v8829 = vmul.f32 %v8765, %v8765
  %v8830 = vmul.f32 %v8766, %v8766
  %v8831 = vmul.f32 %v8767, %v8767
  %v8832 = vmul.f32 %v8768, %v8768
  %v8833 = vmul.f32 %v8769, %v8769
  %v8834 = vmul.f32 %v8770, %v8770
  %v8835 = vmul.f32 %v8771, %v8771
  %v8836 = vmul.f32 %v8772, %v8772
  %v8837 = vmul.f32 %v8773, %v8773
  %v8838 = vmul.f32 %v8774, %v8774
  %v8839 = vmul.f32 %v8775, %v8775
  %v8840 = vmul.f32 %v8776, %v8776
  %v8841 = vmul.f32 %v8777, %v8777
  %v8842 = vmul.f32 %v8778, %v8778
  %v8843 = vmul.f32 %v8779, %v8779
  %v8844 = vmul.f32 %v8780, %v8780
  %v8845 = vmul.f32 %v8781, %v8781
  %v8846 = vmul.f32 %v8782, %v8782
  %v8847 = vmul.f32 %v8783, %v8783
  %v8848 = vmul.f32 %v8784, %v8784
  %v8849 = vmul.f32 %v8785, %v8785
  %v8850 = vmul.f32 %v8786, %v8786
  %v8851 = vmul.f32 %v8787, %v8787
  %v8852 = vmul.f32 %v8788, %v8788
  %v8853 = vmul.f32 %v8789, %v8789
  %v8854 = vmul.f32 %v8790, %v8790
  %v8855 = vmul.f32 %v8791, %v8791
  %v8856 = vmul.f32 %v8792, %v8792
  %v8857 = vmul.f32 %v8793, %v8793
  %v8858 = vmul.f32 %v8794, %v8794
  %v8859 = vmul.f32 %v8795, %v8795
  %v8860 = vmul.f32 %v8796, %v8796
  %v8861 = vmul.f32 %v8797, %v8797
  %v8862 = vmul.f32 %v8798, %v8798
  %v8863 = vmul.f32 %v8799, %v8799
  %v8864 = vmul.f32 %v8800, %v8800
  %v8865 = vmul.f32 %v8801, %v8801
  %v8866 = vmul.f32 %v8802, %v8802
  %v8867 = vmul.f32 %v8803, %v8803
  %v8868 = vmul.f32 %v8804, %v8804
  %v8869 = vmul.f32 %v8805, %v8805
  %v8870 = vmul.f32 %v8806, %v8806
  %v8871 = vmul.f32 %v8807, %v8807
  %v8872 = vmul.f32 %v8808, %v8808
  %v8873 = vmul.f32 %v8809, %v8809
  %v8874 = vmul.f32 %v8810, %v8810
  %v8875 = vmul.f32 %v8811, %v8811
  %v8876 = vmul.f32 %v8812, %v8812
  %v8877 = vmul.f32 %v8813, %v8813
  %v8878 = vsel %vm26, %v8814, 0.0
  %v8879 = vsel %vm26, %v8815, 0.0
  %v8880 = vadd.f32 %v8878, %v8879
  %v8881 = vsel %vm26, %v8816, 0.0
  %v8882 = vadd.f32 %v8880, %v8881
  %v8883 = vsel %vm26, %v8817, 0.0
  %v8884 = vadd.f32 %v8882, %v8883
  %v8885 = vsel %vm26, %v8818, 0.0
  %v8886 = vadd.f32 %v8884, %v8885
  %v8887 = vsel %vm26, %v8819, 0.0
  %v8888 = vadd.f32 %v8886, %v8887
  %v8889 = vsel %vm26, %v8820, 0.0
  %v8890 = vadd.f32 %v8888, %v8889
  %v8891 = vsel %vm26, %v8821, 0.0
  %v8892 = vadd.f32 %v8890, %v8891
  %v8893 = vsel %vm26, %v8822, 0.0
  %v8894 = vadd.f32 %v8892, %v8893
  %v8895 = vsel %vm26, %v8823, 0.0
  %v8896 = vadd.f32 %v8894, %v8895
  %v8897 = vsel %vm26, %v8824, 0.0
  %v8898 = vadd.f32 %v8896, %v8897
  %v8899 = vsel %vm26, %v8825, 0.0
  %v8900 = vadd.f32 %v8898, %v8899
  %v8901 = vsel %vm26, %v8826, 0.0
  %v8902 = vadd.f32 %v8900, %v8901
  %v8903 = vsel %vm26, %v8827, 0.0
  %v8904 = vadd.f32 %v8902, %v8903
  %v8905 = vsel %vm26, %v8828, 0.0
  %v8906 = vadd.f32 %v8904, %v8905
  %v8907 = vsel %vm26, %v8829, 0.0
  %v8908 = vadd.f32 %v8906, %v8907
  %v8909 = vsel %vm26, %v8830, 0.0
  %v8910 = vadd.f32 %v8908, %v8909
  %v8911 = vsel %vm26, %v8831, 0.0
  %v8912 = vadd.f32 %v8910, %v8911
  %v8913 = vsel %vm26, %v8832, 0.0
  %v8914 = vadd.f32 %v8912, %v8913
  %v8915 = vsel %vm26, %v8833, 0.0
  %v8916 = vadd.f32 %v8914, %v8915
  %v8917 = vsel %vm26, %v8834, 0.0
  %v8918 = vadd.f32 %v8916, %v8917
  %v8919 = vsel %vm26, %v8835, 0.0
  %v8920 = vadd.f32 %v8918, %v8919
  %v8921 = vsel %vm26, %v8836, 0.0
  %v8922 = vadd.f32 %v8920, %v8921
  %v8923 = vsel %vm26, %v8837, 0.0
  %v8924 = vadd.f32 %v8922, %v8923
  %v8925 = vsel %vm26, %v8838, 0.0
  %v8926 = vadd.f32 %v8924, %v8925
  %v8927 = vsel %vm26, %v8839, 0.0
  %v8928 = vadd.f32 %v8926, %v8927
  %v8929 = vsel %vm26, %v8840, 0.0
  %v8930 = vadd.f32 %v8928, %v8929
  %v8931 = vsel %vm26, %v8841, 0.0
  %v8932 = vadd.f32 %v8930, %v8931
  %v8933 = vsel %vm26, %v8842, 0.0
  %v8934 = vadd.f32 %v8932, %v8933
  %v8935 = vsel %vm26, %v8843, 0.0
  %v8936 = vadd.f32 %v8934, %v8935
  %v8937 = vsel %vm26, %v8844, 0.0
  %v8938 = vadd.f32 %v8936, %v8937
  %v8939 = vsel %vm26, %v8845, 0.0
  %v8940 = vadd.f32 %v8938, %v8939
  %v8941 = vsel %vm26, %v8846, 0.0
  %v8942 = vadd.f32 %v8940, %v8941
  %v8943 = vsel %vm26, %v8847, 0.0
  %v8944 = vadd.f32 %v8942, %v8943
  %v8945 = vsel %vm26, %v8848, 0.0
  %v8946 = vadd.f32 %v8944, %v8945
  %v8947 = vsel %vm26, %v8849, 0.0
  %v8948 = vadd.f32 %v8946, %v8947
  %v8949 = vsel %vm26, %v8850, 0.0
  %v8950 = vadd.f32 %v8948, %v8949
  %v8951 = vsel %vm26, %v8851, 0.0
  %v8952 = vadd.f32 %v8950, %v8951
  %v8953 = vsel %vm26, %v8852, 0.0
  %v8954 = vadd.f32 %v8952, %v8953
  %v8955 = vsel %vm26, %v8853, 0.0
  %v8956 = vadd.f32 %v8954, %v8955
  %v8957 = vsel %vm26, %v8854, 0.0
  %v8958 = vadd.f32 %v8956, %v8957
  %v8959 = vsel %vm26, %v8855, 0.0
  %v8960 = vadd.f32 %v8958, %v8959
  %v8961 = vsel %vm26, %v8856, 0.0
  %v8962 = vadd.f32 %v8960, %v8961
  %v8963 = vsel %vm26, %v8857, 0.0
  %v8964 = vadd.f32 %v8962, %v8963
  %v8965 = vsel %vm26, %v8858, 0.0
  %v8966 = vadd.f32 %v8964, %v8965
  %v8967 = vsel %vm26, %v8859, 0.0
  %v8968 = vadd.f32 %v8966, %v8967
  %v8969 = vsel %vm26, %v8860, 0.0
  %v8970 = vadd.f32 %v8968, %v8969
  %v8971 = vsel %vm26, %v8861, 0.0
  %v8972 = vadd.f32 %v8970, %v8971
  %v8973 = vsel %vm26, %v8862, 0.0
  %v8974 = vadd.f32 %v8972, %v8973
  %v8975 = vsel %vm26, %v8863, 0.0
  %v8976 = vadd.f32 %v8974, %v8975
  %v8977 = vsel %vm26, %v8864, 0.0
  %v8978 = vadd.f32 %v8976, %v8977
  %v8979 = vsel %vm26, %v8865, 0.0
  %v8980 = vadd.f32 %v8978, %v8979
  %v8981 = vsel %vm26, %v8866, 0.0
  %v8982 = vadd.f32 %v8980, %v8981
  %v8983 = vsel %vm26, %v8867, 0.0
  %v8984 = vadd.f32 %v8982, %v8983
  %v8985 = vsel %vm26, %v8868, 0.0
  %v8986 = vadd.f32 %v8984, %v8985
  %v8987 = vsel %vm26, %v8869, 0.0
  %v8988 = vadd.f32 %v8986, %v8987
  %v8989 = vsel %vm26, %v8870, 0.0
  %v8990 = vadd.f32 %v8988, %v8989
  %v8991 = vsel %vm26, %v8871, 0.0
  %v8992 = vadd.f32 %v8990, %v8991
  %v8993 = vsel %vm26, %v8872, 0.0
  %v8994 = vadd.f32 %v8992, %v8993
  %v8995 = vsel %vm26, %v8873, 0.0
  %v8996 = vadd.f32 %v8994, %v8995
  %v8997 = vsel %vm26, %v8874, 0.0
  %v8998 = vadd.f32 %v8996, %v8997
  %v8999 = vsel %vm26, %v8875, 0.0
  %v9000 = vadd.f32 %v8998, %v8999
  %v9001 = vsel %vm26, %v8876, 0.0
  %v9002 = vadd.f32 %v9000, %v9001
  %v9003 = vsel %vm26, %v8877, 0.0
  %v9004 = vadd.f32 %v9002, %v9003
  %v9005 = vrot.slane %v9004, 4
  %v9006 = vadd.f32 %v9004, %v9005
  %v9007 = vrot.slane %v9006, 2
  %v9008 = vadd.f32 %v9006, %v9007
  %v9009 = vrot.slane %v9008, 1
  %v9010 = vadd.f32 %v9008, %v9009
  %v9011 = vmul.f32 %v9010, %v4228
  %v9012 = vld [vmem:[%s5] sm:$0x1]
  %v9013 = vadd.f32 %v9011, 1e-05
  %v9014 = vrsqrt.pop %v9013
  %v9015 = vmul.f32 %v9012, %v9014
  %v9017 = vlaneseq
  %v9018 = vshrl.u32 %v9017, 7
  %v9019 = vsub.s32 0, %v9018
  %v9020 = vrot.slane %v9015, %v9019
  %v9022 = vmul.f32 %v8298, %v9020
  %v9023 = vmul.f32 %v8303, %v9020
  %v9024 = vmul.f32 %v8308, %v9020
  %v9025 = vmul.f32 %v8313, %v9020
  %v9026 = vmul.f32 %v8318, %v9020
  %v9027 = vmul.f32 %v8323, %v9020
  %v9028 = vmul.f32 %v8328, %v9020
  %v9029 = vmul.f32 %v8333, %v9020
  %v9030 = vmul.f32 %v8338, %v9020
  %v9031 = vmul.f32 %v8343, %v9020
  %v9032 = vmul.f32 %v8348, %v9020
  %v9033 = vmul.f32 %v8353, %v9020
  %v9034 = vmul.f32 %v8358, %v9020
  %v9035 = vmul.f32 %v8363, %v9020
  %v9036 = vmul.f32 %v8368, %v9020
  %v9037 = vmul.f32 %v8373, %v9020
  %v9038 = vmul.f32 %v8378, %v9020
  %v9039 = vmul.f32 %v8383, %v9020
  %v9040 = vmul.f32 %v8388, %v9020
  %v9041 = vmul.f32 %v8393, %v9020
  %v9042 = vmul.f32 %v8398, %v9020
  %v9043 = vmul.f32 %v8403, %v9020
  %v9044 = vmul.f32 %v8408, %v9020
  %v9045 = vmul.f32 %v8413, %v9020
  %v9046 = vmul.f32 %v8418, %v9020
  %v9047 = vmul.f32 %v8423, %v9020
  %v9048 = vmul.f32 %v8428, %v9020
  %v9049 = vmul.f32 %v8433, %v9020
  %v9050 = vmul.f32 %v8438, %v9020
  %v9051 = vmul.f32 %v8443, %v9020
  %v9052 = vmul.f32 %v8448, %v9020
  %v9053 = vmul.f32 %v8453, %v9020
  %v9054 = vmul.f32 %v8458, %v9020
  %v9055 = vmul.f32 %v8463, %v9020
  %v9056 = vmul.f32 %v8468, %v9020
  %v9057 = vmul.f32 %v8473, %v9020
  %v9058 = vmul.f32 %v8478, %v9020
  %v9059 = vmul.f32 %v8483, %v9020
  %v9060 = vmul.f32 %v8488, %v9020
  %v9061 = vmul.f32 %v8493, %v9020
  %v9062 = vmul.f32 %v8498, %v9020
  %v9063 = vmul.f32 %v8503, %v9020
  %v9064 = vmul.f32 %v8508, %v9020
  %v9065 = vmul.f32 %v8513, %v9020
  %v9066 = vmul.f32 %v8518, %v9020
  %v9067 = vmul.f32 %v8523, %v9020
  %v9068 = vmul.f32 %v8528, %v9020
  %v9069 = vmul.f32 %v8533, %v9020
  %v9070 = vmul.f32 %v8538, %v9020
  %v9071 = vmul.f32 %v8543, %v9020
  %v9072 = vmul.f32 %v8548, %v9020
  %v9073 = vmul.f32 %v8553, %v9020
  %v9074 = vmul.f32 %v8558, %v9020
  %v9075 = vmul.f32 %v8563, %v9020
  %v9076 = vmul.f32 %v8568, %v9020
  %v9077 = vmul.f32 %v8573, %v9020
  %v9078 = vmul.f32 %v8578, %v9020
  %v9079 = vmul.f32 %v8583, %v9020
  %v9080 = vmul.f32 %v8588, %v9020
  %v9081 = vmul.f32 %v8593, %v9020
  %v9082 = vmul.f32 %v8598, %v9020
  %v9083 = vmul.f32 %v8603, %v9020
  %v9084 = vmul.f32 %v8608, %v9020
  %v9085 = vmul.f32 %v8613, %v9020
  %v9086 = vld [vmem:[%s6] sm:$0x1]
  %v9087 = vmul.f32 %v8749, %v9015
  %v9088 = vsub.f32 %v9086, %v9087
  %v9090 = vlaneseq
  %v9091 = vshrl.u32 %v9090, 7
  %v9092 = vsub.s32 0, %v9091
  %v9093 = vrot.slane %v9088, %v9092
  %v9095 = vadd.f32 %v9022, %v9093
  %v9096 = vadd.f32 %v9023, %v9093
  %v9097 = vadd.f32 %v9024, %v9093
  %v9098 = vadd.f32 %v9025, %v9093
  %v9099 = vadd.f32 %v9026, %v9093
  %v9100 = vadd.f32 %v9027, %v9093
  %v9101 = vadd.f32 %v9028, %v9093
  %v9102 = vadd.f32 %v9029, %v9093
  %v9103 = vadd.f32 %v9030, %v9093
  %v9104 = vadd.f32 %v9031, %v9093
  %v9105 = vadd.f32 %v9032, %v9093
  %v9106 = vadd.f32 %v9033, %v9093
  %v9107 = vadd.f32 %v9034, %v9093
  %v9108 = vadd.f32 %v9035, %v9093
  %v9109 = vadd.f32 %v9036, %v9093
  %v9110 = vadd.f32 %v9037, %v9093
  %v9111 = vadd.f32 %v9038, %v9093
  %v9112 = vadd.f32 %v9039, %v9093
  %v9113 = vadd.f32 %v9040, %v9093
  %v9114 = vadd.f32 %v9041, %v9093
  %v9115 = vadd.f32 %v9042, %v9093
  %v9116 = vadd.f32 %v9043, %v9093
  %v9117 = vadd.f32 %v9044, %v9093
  %v9118 = vadd.f32 %v9045, %v9093
  %v9119 = vadd.f32 %v9046, %v9093
  %v9120 = vadd.f32 %v9047, %v9093
  %v9121 = vadd.f32 %v9048, %v9093
  %v9122 = vadd.f32 %v9049, %v9093
  %v9123 = vadd.f32 %v9050, %v9093
  %v9124 = vadd.f32 %v9051, %v9093
  %v9125 = vadd.f32 %v9052, %v9093
  %v9126 = vadd.f32 %v9053, %v9093
  %v9127 = vadd.f32 %v9054, %v9093
  %v9128 = vadd.f32 %v9055, %v9093
  %v9129 = vadd.f32 %v9056, %v9093
  %v9130 = vadd.f32 %v9057, %v9093
  %v9131 = vadd.f32 %v9058, %v9093
  %v9132 = vadd.f32 %v9059, %v9093
  %v9133 = vadd.f32 %v9060, %v9093
  %v9134 = vadd.f32 %v9061, %v9093
  %v9135 = vadd.f32 %v9062, %v9093
  %v9136 = vadd.f32 %v9063, %v9093
  %v9137 = vadd.f32 %v9064, %v9093
  %v9138 = vadd.f32 %v9065, %v9093
  %v9139 = vadd.f32 %v9066, %v9093
  %v9140 = vadd.f32 %v9067, %v9093
  %v9141 = vadd.f32 %v9068, %v9093
  %v9142 = vadd.f32 %v9069, %v9093
  %v9143 = vadd.f32 %v9070, %v9093
  %v9144 = vadd.f32 %v9071, %v9093
  %v9145 = vadd.f32 %v9072, %v9093
  %v9146 = vadd.f32 %v9073, %v9093
  %v9147 = vadd.f32 %v9074, %v9093
  %v9148 = vadd.f32 %v9075, %v9093
  %v9149 = vadd.f32 %v9076, %v9093
  %v9150 = vadd.f32 %v9077, %v9093
  %v9151 = vadd.f32 %v9078, %v9093
  %v9152 = vadd.f32 %v9079, %v9093
  %v9153 = vadd.f32 %v9080, %v9093
  %v9154 = vadd.f32 %v9081, %v9093
  %v9155 = vadd.f32 %v9082, %v9093
  %v9156 = vadd.f32 %v9083, %v9093
  %v9157 = vadd.f32 %v9084, %v9093
  %v9158 = vadd.f32 %v9085, %v9093
  %v9159 = vld [vmem:[%s0] sm:$0xff]
  %v9160 = vld [vmem:[%s0 + $0x8] sm:$0xff]
  %v9161 = vld [vmem:[%s0 + $0x10] sm:$0xff]
  %v9162 = vld [vmem:[%s0 + $0x18] sm:$0xff]
  %v9163 = vld [vmem:[%s0 + $0x20] sm:$0xff]
  %v9164 = vld [vmem:[%s0 + $0x28] sm:$0xff]
  %v9165 = vld [vmem:[%s0 + $0x30] sm:$0xff]
  %v9166 = vld [vmem:[%s0 + $0x38] sm:$0xff]
  %v9167 = vld [vmem:[%s0 + $0x40] sm:$0xff]
  %v9168 = vld [vmem:[%s0 + $0x48] sm:$0xff]
  %v9169 = vld [vmem:[%s0 + $0x50] sm:$0xff]
  %v9170 = vld [vmem:[%s0 + $0x58] sm:$0xff]
  %v9171 = vld [vmem:[%s0 + $0x60] sm:$0xff]
  %v9172 = vld [vmem:[%s0 + $0x68] sm:$0xff]
  %v9173 = vld [vmem:[%s0 + $0x70] sm:$0xff]
  %v9174 = vld [vmem:[%s0 + $0x78] sm:$0xff]
  %v9175 = vld [vmem:[%s0 + $0x80] sm:$0xff]
  %v9176 = vld [vmem:[%s0 + $0x88] sm:$0xff]
  %v9177 = vld [vmem:[%s0 + $0x90] sm:$0xff]
  %v9178 = vld [vmem:[%s0 + $0x98] sm:$0xff]
  %v9179 = vld [vmem:[%s0 + $0xa0] sm:$0xff]
  %v9180 = vld [vmem:[%s0 + $0xa8] sm:$0xff]
  %v9181 = vld [vmem:[%s0 + $0xb0] sm:$0xff]
  %v9182 = vld [vmem:[%s0 + $0xb8] sm:$0xff]
  %v9183 = vld [vmem:[%s0 + $0xc0] sm:$0xff]
  %v9184 = vld [vmem:[%s0 + $0xc8] sm:$0xff]
  %v9185 = vld [vmem:[%s0 + $0xd0] sm:$0xff]
  %v9186 = vld [vmem:[%s0 + $0xd8] sm:$0xff]
  %v9187 = vld [vmem:[%s0 + $0xe0] sm:$0xff]
  %v9188 = vld [vmem:[%s0 + $0xe8] sm:$0xff]
  %v9189 = vld [vmem:[%s0 + $0xf0] sm:$0xff]
  %v9190 = vld [vmem:[%s0 + $0xf8] sm:$0xff]
  %v9191 = vld [vmem:[%s0 + $0x100] sm:$0xff]
  %v9192 = vld [vmem:[%s0 + $0x108] sm:$0xff]
  %v9193 = vld [vmem:[%s0 + $0x110] sm:$0xff]
  %v9194 = vld [vmem:[%s0 + $0x118] sm:$0xff]
  %v9195 = vld [vmem:[%s0 + $0x120] sm:$0xff]
  %v9196 = vld [vmem:[%s0 + $0x128] sm:$0xff]
  %v9197 = vld [vmem:[%s0 + $0x130] sm:$0xff]
  %v9198 = vld [vmem:[%s0 + $0x138] sm:$0xff]
  %v9199 = vld [vmem:[%s0 + $0x140] sm:$0xff]
  %v9200 = vld [vmem:[%s0 + $0x148] sm:$0xff]
  %v9201 = vld [vmem:[%s0 + $0x150] sm:$0xff]
  %v9202 = vld [vmem:[%s0 + $0x158] sm:$0xff]
  %v9203 = vld [vmem:[%s0 + $0x160] sm:$0xff]
  %v9204 = vld [vmem:[%s0 + $0x168] sm:$0xff]
  %v9205 = vld [vmem:[%s0 + $0x170] sm:$0xff]
  %v9206 = vld [vmem:[%s0 + $0x178] sm:$0xff]
  %v9207 = vld [vmem:[%s0 + $0x180] sm:$0xff]
  %v9208 = vld [vmem:[%s0 + $0x188] sm:$0xff]
  %v9209 = vld [vmem:[%s0 + $0x190] sm:$0xff]
  %v9210 = vld [vmem:[%s0 + $0x198] sm:$0xff]
  %v9211 = vld [vmem:[%s0 + $0x1a0] sm:$0xff]
  %v9212 = vld [vmem:[%s0 + $0x1a8] sm:$0xff]
  %v9213 = vld [vmem:[%s0 + $0x1b0] sm:$0xff]
  %v9214 = vld [vmem:[%s0 + $0x1b8] sm:$0xff]
  %v9215 = vld [vmem:[%s0 + $0x1c0] sm:$0xff]
  %v9216 = vld [vmem:[%s0 + $0x1c8] sm:$0xff]
  %v9217 = vld [vmem:[%s0 + $0x1d0] sm:$0xff]
  %v9218 = vld [vmem:[%s0 + $0x1d8] sm:$0xff]
  %v9219 = vld [vmem:[%s0 + $0x1e0] sm:$0xff]
  %v9220 = vld [vmem:[%s0 + $0x1e8] sm:$0xff]
  %v9221 = vld [vmem:[%s0 + $0x1f0] sm:$0xff]
  %v9222 = vld [vmem:[%s0 + $0x1f8] sm:$0xff]
  %v9223 = vadd.f32 %v9095, %v9159
  %v9224 = vadd.f32 %v9096, %v9160
  %v9225 = vadd.f32 %v9097, %v9161
  %v9226 = vadd.f32 %v9098, %v9162
  %v9227 = vadd.f32 %v9099, %v9163
  %v9228 = vadd.f32 %v9100, %v9164
  %v9229 = vadd.f32 %v9101, %v9165
  %v9230 = vadd.f32 %v9102, %v9166
  %v9231 = vadd.f32 %v9103, %v9167
  %v9232 = vadd.f32 %v9104, %v9168
  %v9233 = vadd.f32 %v9105, %v9169
  %v9234 = vadd.f32 %v9106, %v9170
  %v9235 = vadd.f32 %v9107, %v9171
  %v9236 = vadd.f32 %v9108, %v9172
  %v9237 = vadd.f32 %v9109, %v9173
  %v9238 = vadd.f32 %v9110, %v9174
  %v9239 = vadd.f32 %v9111, %v9175
  %v9240 = vadd.f32 %v9112, %v9176
  %v9241 = vadd.f32 %v9113, %v9177
  %v9242 = vadd.f32 %v9114, %v9178
  %v9243 = vadd.f32 %v9115, %v9179
  %v9244 = vadd.f32 %v9116, %v9180
  %v9245 = vadd.f32 %v9117, %v9181
  %v9246 = vadd.f32 %v9118, %v9182
  %v9247 = vadd.f32 %v9119, %v9183
  %v9248 = vadd.f32 %v9120, %v9184
  %v9249 = vadd.f32 %v9121, %v9185
  %v9250 = vadd.f32 %v9122, %v9186
  %v9251 = vadd.f32 %v9123, %v9187
  %v9252 = vadd.f32 %v9124, %v9188
  %v9253 = vadd.f32 %v9125, %v9189
  %v9254 = vadd.f32 %v9126, %v9190
  %v9255 = vadd.f32 %v9127, %v9191
  %v9256 = vadd.f32 %v9128, %v9192
  %v9257 = vadd.f32 %v9129, %v9193
  %v9258 = vadd.f32 %v9130, %v9194
  %v9259 = vadd.f32 %v9131, %v9195
  %v9260 = vadd.f32 %v9132, %v9196
  %v9261 = vadd.f32 %v9133, %v9197
  %v9262 = vadd.f32 %v9134, %v9198
  %v9263 = vadd.f32 %v9135, %v9199
  %v9264 = vadd.f32 %v9136, %v9200
  %v9265 = vadd.f32 %v9137, %v9201
  %v9266 = vadd.f32 %v9138, %v9202
  %v9267 = vadd.f32 %v9139, %v9203
  %v9268 = vadd.f32 %v9140, %v9204
  %v9269 = vadd.f32 %v9141, %v9205
  %v9270 = vadd.f32 %v9142, %v9206
  %v9271 = vadd.f32 %v9143, %v9207
  %v9272 = vadd.f32 %v9144, %v9208
  %v9273 = vadd.f32 %v9145, %v9209
  %v9274 = vadd.f32 %v9146, %v9210
  %v9275 = vadd.f32 %v9147, %v9211
  %v9276 = vadd.f32 %v9148, %v9212
  %v9277 = vadd.f32 %v9149, %v9213
  %v9278 = vadd.f32 %v9150, %v9214
  %v9279 = vadd.f32 %v9151, %v9215
  %v9280 = vadd.f32 %v9152, %v9216
  %v9281 = vadd.f32 %v9153, %v9217
  %v9282 = vadd.f32 %v9154, %v9218
  %v9283 = vadd.f32 %v9155, %v9219
  %v9284 = vadd.f32 %v9156, %v9220
  %v9285 = vadd.f32 %v9157, %v9221
  %v9286 = vadd.f32 %v9158, %v9222
  %v9287 = vmax.f32 %v9223, 0.0
  %v9288 = vmax.f32 %v9224, 0.0
  %v9289 = vmax.f32 %v9225, 0.0
  %v9290 = vmax.f32 %v9226, 0.0
  %v9291 = vmax.f32 %v9227, 0.0
  %v9292 = vmax.f32 %v9228, 0.0
  %v9293 = vmax.f32 %v9229, 0.0
  %v9294 = vmax.f32 %v9230, 0.0
  %v9295 = vmax.f32 %v9231, 0.0
  %v9296 = vmax.f32 %v9232, 0.0
  %v9297 = vmax.f32 %v9233, 0.0
  %v9298 = vmax.f32 %v9234, 0.0
  %v9299 = vmax.f32 %v9235, 0.0
  %v9300 = vmax.f32 %v9236, 0.0
  %v9301 = vmax.f32 %v9237, 0.0
  %v9302 = vmax.f32 %v9238, 0.0
  %v9303 = vmax.f32 %v9239, 0.0
  %v9304 = vmax.f32 %v9240, 0.0
  %v9305 = vmax.f32 %v9241, 0.0
  %v9306 = vmax.f32 %v9242, 0.0
  %v9307 = vmax.f32 %v9243, 0.0
  %v9308 = vmax.f32 %v9244, 0.0
  %v9309 = vmax.f32 %v9245, 0.0
  %v9310 = vmax.f32 %v9246, 0.0
  %v9311 = vmax.f32 %v9247, 0.0
  %v9312 = vmax.f32 %v9248, 0.0
  %v9313 = vmax.f32 %v9249, 0.0
  %v9314 = vmax.f32 %v9250, 0.0
  %v9315 = vmax.f32 %v9251, 0.0
  %v9316 = vmax.f32 %v9252, 0.0
  %v9317 = vmax.f32 %v9253, 0.0
  %v9318 = vmax.f32 %v9254, 0.0
  %v9319 = vmax.f32 %v9255, 0.0
  %v9320 = vmax.f32 %v9256, 0.0
  %v9321 = vmax.f32 %v9257, 0.0
  %v9322 = vmax.f32 %v9258, 0.0
  %v9323 = vmax.f32 %v9259, 0.0
  %v9324 = vmax.f32 %v9260, 0.0
  %v9325 = vmax.f32 %v9261, 0.0
  %v9326 = vmax.f32 %v9262, 0.0
  %v9327 = vmax.f32 %v9263, 0.0
  %v9328 = vmax.f32 %v9264, 0.0
  %v9329 = vmax.f32 %v9265, 0.0
  %v9330 = vmax.f32 %v9266, 0.0
  %v9331 = vmax.f32 %v9267, 0.0
  %v9332 = vmax.f32 %v9268, 0.0
  %v9333 = vmax.f32 %v9269, 0.0
  %v9334 = vmax.f32 %v9270, 0.0
  %v9335 = vmax.f32 %v9271, 0.0
  %v9336 = vmax.f32 %v9272, 0.0
  %v9337 = vmax.f32 %v9273, 0.0
  %v9338 = vmax.f32 %v9274, 0.0
  %v9339 = vmax.f32 %v9275, 0.0
  %v9340 = vmax.f32 %v9276, 0.0
  %v9341 = vmax.f32 %v9277, 0.0
  %v9342 = vmax.f32 %v9278, 0.0
  %v9343 = vmax.f32 %v9279, 0.0
  %v9344 = vmax.f32 %v9280, 0.0
  %v9345 = vmax.f32 %v9281, 0.0
  %v9346 = vmax.f32 %v9282, 0.0
  %v9347 = vmax.f32 %v9283, 0.0
  %v9348 = vmax.f32 %v9284, 0.0
  %v9349 = vmax.f32 %v9285, 0.0
  %v9350 = vmax.f32 %v9286, 0.0
  %9351 = vst.msk [vmem:[%s7] sm:$0xff] %vm26, %v9287
  %9352 = vst.msk [vmem:[%s7 + $0x8] sm:$0xff] %vm26, %v9288
  %9353 = vst.msk [vmem:[%s7 + $0x10] sm:$0xff] %vm26, %v9289
  %9354 = vst.msk [vmem:[%s7 + $0x18] sm:$0xff] %vm26, %v9290
  %9355 = vst.msk [vmem:[%s7 + $0x20] sm:$0xff] %vm26, %v9291
  %9356 = vst.msk [vmem:[%s7 + $0x28] sm:$0xff] %vm26, %v9292
  %9357 = vst.msk [vmem:[%s7 + $0x30] sm:$0xff] %vm26, %v9293
  %9358 = vst.msk [vmem:[%s7 + $0x38] sm:$0xff] %vm26, %v9294
  %9359 = vst.msk [vmem:[%s7 + $0x40] sm:$0xff] %vm26, %v9295
  %9360 = vst.msk [vmem:[%s7 + $0x48] sm:$0xff] %vm26, %v9296
  %9361 = vst.msk [vmem:[%s7 + $0x50] sm:$0xff] %vm26, %v9297
  %9362 = vst.msk [vmem:[%s7 + $0x58] sm:$0xff] %vm26, %v9298
  %9363 = vst.msk [vmem:[%s7 + $0x60] sm:$0xff] %vm26, %v9299
  %9364 = vst.msk [vmem:[%s7 + $0x68] sm:$0xff] %vm26, %v9300
  %9365 = vst.msk [vmem:[%s7 + $0x70] sm:$0xff] %vm26, %v9301
  %9366 = vst.msk [vmem:[%s7 + $0x78] sm:$0xff] %vm26, %v9302
  %9367 = vst.msk [vmem:[%s7 + $0x80] sm:$0xff] %vm26, %v9303
  %9368 = vst.msk [vmem:[%s7 + $0x88] sm:$0xff] %vm26, %v9304
  %9369 = vst.msk [vmem:[%s7 + $0x90] sm:$0xff] %vm26, %v9305
  %9370 = vst.msk [vmem:[%s7 + $0x98] sm:$0xff] %vm26, %v9306
  %9371 = vst.msk [vmem:[%s7 + $0xa0] sm:$0xff] %vm26, %v9307
  %9372 = vst.msk [vmem:[%s7 + $0xa8] sm:$0xff] %vm26, %v9308
  %9373 = vst.msk [vmem:[%s7 + $0xb0] sm:$0xff] %vm26, %v9309
  %9374 = vst.msk [vmem:[%s7 + $0xb8] sm:$0xff] %vm26, %v9310
  %9375 = vst.msk [vmem:[%s7 + $0xc0] sm:$0xff] %vm26, %v9311
  %9376 = vst.msk [vmem:[%s7 + $0xc8] sm:$0xff] %vm26, %v9312
  %9377 = vst.msk [vmem:[%s7 + $0xd0] sm:$0xff] %vm26, %v9313
  %9378 = vst.msk [vmem:[%s7 + $0xd8] sm:$0xff] %vm26, %v9314
  %9379 = vst.msk [vmem:[%s7 + $0xe0] sm:$0xff] %vm26, %v9315
  %9380 = vst.msk [vmem:[%s7 + $0xe8] sm:$0xff] %vm26, %v9316
  %9381 = vst.msk [vmem:[%s7 + $0xf0] sm:$0xff] %vm26, %v9317
  %9382 = vst.msk [vmem:[%s7 + $0xf8] sm:$0xff] %vm26, %v9318
  %9383 = vst.msk [vmem:[%s7 + $0x100] sm:$0xff] %vm26, %v9319
  %9384 = vst.msk [vmem:[%s7 + $0x108] sm:$0xff] %vm26, %v9320
  %9385 = vst.msk [vmem:[%s7 + $0x110] sm:$0xff] %vm26, %v9321
  %9386 = vst.msk [vmem:[%s7 + $0x118] sm:$0xff] %vm26, %v9322
  %9387 = vst.msk [vmem:[%s7 + $0x120] sm:$0xff] %vm26, %v9323
  %9388 = vst.msk [vmem:[%s7 + $0x128] sm:$0xff] %vm26, %v9324
  %9389 = vst.msk [vmem:[%s7 + $0x130] sm:$0xff] %vm26, %v9325
  %9390 = vst.msk [vmem:[%s7 + $0x138] sm:$0xff] %vm26, %v9326
  %9391 = vst.msk [vmem:[%s7 + $0x140] sm:$0xff] %vm26, %v9327
  %9392 = vst.msk [vmem:[%s7 + $0x148] sm:$0xff] %vm26, %v9328
  %9393 = vst.msk [vmem:[%s7 + $0x150] sm:$0xff] %vm26, %v9329
  %9394 = vst.msk [vmem:[%s7 + $0x158] sm:$0xff] %vm26, %v9330
  %9395 = vst.msk [vmem:[%s7 + $0x160] sm:$0xff] %vm26, %v9331
  %9396 = vst.msk [vmem:[%s7 + $0x168] sm:$0xff] %vm26, %v9332
  %9397 = vst.msk [vmem:[%s7 + $0x170] sm:$0xff] %vm26, %v9333
  %9398 = vst.msk [vmem:[%s7 + $0x178] sm:$0xff] %vm26, %v9334
  %9399 = vst.msk [vmem:[%s7 + $0x180] sm:$0xff] %vm26, %v9335
  %9400 = vst.msk [vmem:[%s7 + $0x188] sm:$0xff] %vm26, %v9336
  %9401 = vst.msk [vmem:[%s7 + $0x190] sm:$0xff] %vm26, %v9337
  %9402 = vst.msk [vmem:[%s7 + $0x198] sm:$0xff] %vm26, %v9338
  %9403 = vst.msk [vmem:[%s7 + $0x1a0] sm:$0xff] %vm26, %v9339
  %9404 = vst.msk [vmem:[%s7 + $0x1a8] sm:$0xff] %vm26, %v9340
  %9405 = vst.msk [vmem:[%s7 + $0x1b0] sm:$0xff] %vm26, %v9341
  %9406 = vst.msk [vmem:[%s7 + $0x1b8] sm:$0xff] %vm26, %v9342
  %9407 = vst.msk [vmem:[%s7 + $0x1c0] sm:$0xff] %vm26, %v9343
  %9408 = vst.msk [vmem:[%s7 + $0x1c8] sm:$0xff] %vm26, %v9344
  %9409 = vst.msk [vmem:[%s7 + $0x1d0] sm:$0xff] %vm26, %v9345
  %9410 = vst.msk [vmem:[%s7 + $0x1d8] sm:$0xff] %vm26, %v9346
  %9411 = vst.msk [vmem:[%s7 + $0x1e0] sm:$0xff] %vm26, %v9347
  %9412 = vst.msk [vmem:[%s7 + $0x1e8] sm:$0xff] %vm26, %v9348
  %9413 = vst.msk [vmem:[%s7 + $0x1f0] sm:$0xff] %vm26, %v9349
  %9414 = vst.msk [vmem:[%s7 + $0x1f8] sm:$0xff] %vm26, %v9350
  // Predicated region
  $region30: #{residual_block.1} parent=0 // pred_check
    _
  $region31: #{residual_block.1} parent=0 // pred_check_branch
    %9416 = sbr.rel (0) target = $region33
  $region32: #{residual_block.1} parent=0 // pred_region
    _
  $region33: #{residual_block.1} parent=0 // pred_fallthru
    _
  // Predicated region
  $region34: #{residual_block.1} parent=0 // pred_check
    _
  $region35: #{residual_block.1} parent=0 // pred_check_branch
    %9418 = sbr.rel (0) target = $region37
  $region36: #{residual_block.1} parent=0 // pred_region
    _
  $region37: #{residual_block.1} parent=0 // pred_fallthru
    _

</llo_original>
